<compile_context>
chip_gen: v7x
topology: tpu7x:2x2x1
jax: 0.10.0
libtpu: 0.0.40
codegen_flags: <defaults>
</compile_context>

<pallas_src>
import jax
import jax.numpy as jnp
from jax import lax
from jax.experimental import pallas as pl
from jax.experimental.pallas import tpu as pltpu


# ----------------------------------------------------------------------------
# Small helpers
# ----------------------------------------------------------------------------

def _out_dim(s):
    """Output spatial size of a 3x3 / stride 2 / pad 1 conv."""
    return (s - 1) // 2 + 1


def _divmod_const(v, d):
    """(v // d, v % d) for a positive Python int d (shift/mask when pow2)."""
    if d & (d - 1) == 0:
        sh = d.bit_length() - 1
        return v >> sh, v & (d - 1)
    return v // d, v % d


def _full_spec(shape):
    nd = len(shape)
    return pl.BlockSpec(shape, lambda i: (0,) * nd)


# ----------------------------------------------------------------------------
# In-kernel building blocks
# ----------------------------------------------------------------------------

def _gather_matrix(n, h_in, w_in, h_out, w_out, dy, dx, dtype):
    """0/1 selection matrix G so that G @ x_rows picks, for every output
    position (n, oy, ox), the input row (n, 2*oy-1+dy, 2*ox-1+dx); out-of-range
    taps (the zero-padding ring) select nothing. Rows are ordered (n, y, x)."""
    m_out = n * h_out * w_out
    m_in = n * h_in * w_in
    i = lax.broadcasted_iota(jnp.int32, (m_out, m_in), 0)
    j = lax.broadcasted_iota(jnp.int32, (m_out, m_in), 1)
    nn, rem = _divmod_const(i, h_out * w_out)
    oy, ox = _divmod_const(rem, w_out)
    iy = 2 * oy - 1 + dy
    ix = 2 * ox - 1 + dx
    valid = (iy >= 0) & (iy < h_in) & (ix >= 0) & (ix < w_in)
    src = nn * (h_in * w_in) + iy * w_in + ix
    return jnp.where(valid & (j == src), 1.0, 0.0).astype(dtype)


def _conv_rows(y, w_ref, b_ref, n, h_in, w_in, h_out, w_out):
    """3x3 / stride 2 / pad 1 conv on VMEM-resident rows y [n*h_in*w_in, cin]
    (bf16, rows ordered (n, y, x)) via 9 selection + tap matmuls.
    Returns f32 post-bias/ReLU rows [n*h_out*w_out, cout]."""
    m_out = n * h_out * w_out
    cout = w_ref.shape[-1]
    acc = jnp.zeros((m_out, cout), jnp.float32)
    for dy in range(3):
        for dx in range(3):
            sel = _gather_matrix(n, h_in, w_in, h_out, w_out, dy, dx,
                                 jnp.bfloat16)
            g = jnp.dot(sel, y, preferred_element_type=jnp.float32)
            acc = acc + jnp.dot(g.astype(jnp.bfloat16), w_ref[dy * 3 + dx],
                                preferred_element_type=jnp.float32)
    return jnp.maximum(acc + b_ref[...], 0.0)


def _make_fused_kernel(n, ho1, wo1, ho2, wo2, ho3, wo3):
    m1 = n * ho1 * wo1
    m3 = n * ho3 * wo3

    def kernel(xcol_ref, w1_ref, b1_ref, w2_ref, b2_ref, w3_ref, b3_ref,
               fcw_ref, fcb_ref, out_ref, feat_ref):
        cin1 = xcol_ref.shape[-1]
        cout1 = w1_ref.shape[-1]

        # ---- conv1: sum of 9 shifted matmuls, f32 accumulation -----------
        # xcol rows are indexed (dx, dy&1, n) on dim 0; the dy//2 shift is a
        # static outer-dim slice, so no strided VMEM access is needed.
        acc1 = jnp.zeros((m1, cout1), jnp.float32)
        for dy in range(3):
            ph, oh = dy % 2, dy // 2
            for dx in range(3):
                base = (dx * 2 + ph) * n
                v = xcol_ref[base:base + n, oh:oh + ho1, :, :]  # [n,ho1,wo1,cin1]
                # Collapse (n,ho1,wo1)->m1 through f32 so the relayout stays
                # on the natively (8,128)-tiled path (exact bf16 round trip).
                g = jnp.reshape(v.astype(jnp.float32),
                                (m1, cin1)).astype(jnp.bfloat16)
                acc1 = acc1 + jnp.dot(g, w1_ref[dy * 3 + dx],
                                      preferred_element_type=jnp.float32)
        y1 = jnp.maximum(acc1 + b1_ref[...], 0.0).astype(jnp.bfloat16)

        # ---- conv2 / conv3 (VMEM-resident, selection matmuls) ------------
        # Dropout between layers is identity in eval mode.
        y2 = _conv_rows(y1, w2_ref, b2_ref, n, ho1, wo1, ho2, wo2)
        y3 = _conv_rows(y2.astype(jnp.bfloat16), w3_ref, b3_ref,
                        n, ho2, wo2, ho3, wo3)                   # [m3, c3] f32

        # ---- global average pool (tiny in-kernel matmul) + FC ------------
        pi = lax.broadcasted_iota(jnp.int32, (n, m3), 0)
        pj = lax.broadcasted_iota(jnp.int32, (n, m3), 1)
        pjn, _ = _divmod_const(pj, ho3 * wo3)
        pool = jnp.where(pjn == pi, 1.0 / (ho3 * wo3), 0.0)      # [n, m3] f32
        feat = jnp.dot(pool, y3, preferred_element_type=jnp.float32)  # [n, c3]
        feat_ref[...] = feat
        out_ref[...] = (jnp.dot(feat, fcw_ref[...],
                                preferred_element_type=jnp.float32)
                        + fcb_ref[...])

    return kernel


# ----------------------------------------------------------------------------
# XLA-side input prep (layout plumbing only; fuses under jit)
# ----------------------------------------------------------------------------

def _prep_conv1_columns(x_nchw):
    """NCHW f32 -> bf16 column-tap tensor [3*2*N, Ho+1, Wo, Cin].
    Dim 0 index is (dx, parity(dy), n); entry [., ry, ox, c] equals
    x_padded[n, 2*ry + parity, 2*ox + dx, c]. 1.33x the input size vs. the
    2.25x of a full im2col; transpose + bf16 cast + pad are all in this pass."""
    n, c, h, w = x_nchw.shape
    assert h % 2 == 0 and w % 2 == 0, "conv1 prep assumes even H, W"
    ho, wo = h // 2, w // 2
    xh = jnp.transpose(x_nchw, (0, 2, 3, 1)).astype(jnp.bfloat16)
    xp = jnp.pad(xh, ((0, 0), (1, 1), (1, 1), (0, 0)))      # [n, h+2, w+2, c]
    cols = [xp[:, :, dx:dx + 2 * wo:2, :] for dx in range(3)]
    xs = jnp.stack(cols, axis=0)                            # [3, n, h+2, wo, c]
    xs = xs.reshape(3, n, ho + 1, 2, wo, c)                 # h+2 -> (ry, parity)
    xs = jnp.transpose(xs, (0, 3, 1, 2, 4, 5))              # [3, 2, n, ho+1, wo, c]
    return xs.reshape(3 * 2 * n, ho + 1, wo, c), ho, wo


# ----------------------------------------------------------------------------
# Parameter preparation (done ONCE per parameter set, hoisted out of forward)
# ----------------------------------------------------------------------------

def fold_bn(gamma, beta, mean, var, eps=1e-5):
    scale = gamma / jnp.sqrt(var + eps)
    return scale, beta - mean * scale


def prepare_netD_params(params):
    prep = {}
    for i in (1, 2, 3):
        w = params[f"conv{i}"]                                # [Cout, Cin, 3, 3]
        cout, cin = w.shape[0], w.shape[1]
        scale, bias = fold_bn(*params[f"bn{i}"])
        # Fold BN scale into the weights; arrange per-tap: [9, Cin, Cout] bf16.
        wt = jnp.transpose(w, (2, 3, 1, 0)) * scale[None, None, None, :]
        prep[f"w{i}"] = wt.reshape(9, cin, cout).astype(jnp.bfloat16)
        prep[f"b{i}"] = bias.reshape(1, cout).astype(jnp.float32)
    prep["fc_w"] = params["fc_w"].astype(jnp.float32)         # [128, 2]
    prep["fc_b"] = params["fc_b"].reshape(1, -1).astype(jnp.float32)
    return prep


# ----------------------------------------------------------------------------
# netD forward (eval-mode semantics) — single fused pallas_call
# ----------------------------------------------------------------------------

def netD_forward(prep, x_nchw, context=False):
    n = x_nchw.shape[0]
    xcol, ho1, wo1 = _prep_conv1_columns(x_nchw)
    ho2, wo2 = _out_dim(ho1), _out_dim(wo1)
    ho3, wo3 = _out_dim(ho2), _out_dim(wo2)
    c3 = prep["w3"].shape[-1]
    nout = prep["fc_w"].shape[-1]

    kernel = _make_fused_kernel(n, ho1, wo1, ho2, wo2, ho3, wo3)
    operands = (xcol, prep["w1"], prep["b1"], prep["w2"], prep["b2"],
                prep["w3"], prep["b3"], prep["fc_w"], prep["fc_b"])

    out, feat = pl.pallas_call(
        kernel,
        out_shape=(jax.ShapeDtypeStruct((n, nout), jnp.float32),
                   jax.ShapeDtypeStruct((n, c3), jnp.float32)),
        grid_spec=pltpu.PrefetchScalarGridSpec(
            num_scalar_prefetch=0,
            grid=(1,),
            in_specs=[_full_spec(a.shape) for a in operands],
            out_specs=[pl.BlockSpec((n, nout), lambda i: (0, 0)),
                       pl.BlockSpec((n, c3), lambda i: (0, 0))],
        ),
        compiler_params=pltpu.CompilerParams(
            dimension_semantics=("arbitrary",),
            vmem_limit_bytes=32 * 1024 * 1024),   # ~4.2 MB of operands; ample
    )(*operands)

    if context:
        return out, feat
    return out


# ----------------------------------------------------------------------------
# Pure-JAX reference (for correctness check)
# ----------------------------------------------------------------------------

def netD_reference(params, x_nchw):
    def conv(x, w):
        return lax.conv_general_dilated(
            x, w, window_strides=(2, 2), padding=[(1, 1), (1, 1)],
            dimension_numbers=("NCHW", "OIHW", "NCHW"))

    def bn_relu(x, bn):
        scale, bias = fold_bn(*bn)
        return jnp.maximum(x * scale[None, :, None, None]
                           + bias[None, :, None, None], 0.0)

    x = bn_relu(conv(x_nchw, params["conv1"]), params["bn1"])
    x = bn_relu(conv(x, params["conv2"]), params["bn2"])
    x = bn_relu(conv(x, params["conv3"]), params["bn3"])
    feat = jnp.mean(x, axis=(2, 3))                          # [N, 128]
    return feat @ params["fc_w"] + params["fc_b"], feat


# ----------------------------------------------------------------------------
# Parameter init + demo
# ----------------------------------------------------------------------------

def init_params(key):
    ks = jax.random.split(key, 16)

    def conv_w(k, cout, cin):
        std = (2.0 / (cin * 9)) ** 0.5
        return jax.random.normal(k, (cout, cin, 3, 3), jnp.float32) * std

    def bn(k, c):
        k1, k2, k3, k4 = jax.random.split(k, 4)
        gamma = jax.random.uniform(k1, (c,), jnp.float32, 0.8, 1.2)
        beta = jax.random.normal(k2, (c,), jnp.float32) * 0.05
        mean = jax.random.normal(k3, (c,), jnp.float32) * 0.05
        var = jax.random.uniform(k4, (c,), jnp.float32, 0.8, 1.2)
        return (gamma, beta, mean, var)

    fc_w = jax.random.normal(ks[6], (128, 2), jnp.float32) * (1.0 / 128 ** 0.5)
    fc_b = jax.random.normal(ks[7], (2,), jnp.float32) * 0.05
    return {
        "conv1": conv_w(ks[0], 256, 512),
        "conv2": conv_w(ks[1], 128, 256),
        "conv3": conv_w(ks[2], 128, 128),
        "bn1": bn(ks[3], 256),
        "bn2": bn(ks[4], 128),
        "bn3": bn(ks[5], 128),
        "fc_w": fc_w,          # stored as [in=128, out=2] (transposed vs torch)
        "fc_b": fc_b,
    }


if __name__ == "__main__":
    key = jax.random.PRNGKey(0)
    kp, kx = jax.random.split(key)
    params = init_params(kp)

    # conv1 requires 512 input channels; keep spatial small (16x16), batch=2.
    x = jax.random.normal(kx, (2, 512, 16, 16), jnp.float32) * 0.5

    prep = prepare_netD_params(params)          # hoisted: once per param set
    fwd = jax.jit(netD_forward, static_argnames=("context",))

    out, feat = jax.block_until_ready(fwd(prep, x, context=True))
    ref_out, ref_feat = jax.block_until_ready(netD_reference(params, x))

    assert out.shape == (2, 2), out.shape
    assert feat.shape == (2, 128), feat.shape
    # bf16 input/weights/activations (BN scale folded into bf16 weights) with
    # f32 accumulation -> ~1-2% error vs. the f32 reference.
    assert jnp.allclose(out, ref_out, rtol=3e-2, atol=3e-2), (
        "out mismatch", float(jnp.max(jnp.abs(out - ref_out))))
    assert jnp.allclose(feat, ref_feat, rtol=3e-2, atol=3e-2), (
        "feat mismatch", float(jnp.max(jnp.abs(feat - ref_feat))))

    print("KERNEL_OK")
</pallas_src>

<mosaic_0001>
module attributes {stable_mosaic.version = 11 : i64} {
  func.func @kernel(%arg0: i32, %arg1: memref<12x9x8x512xbf16, #tpu.memory_space<vmem>>, %arg2: memref<9x512x256xbf16, #tpu.memory_space<vmem>>, %arg3: memref<1x256xf32, #tpu.memory_space<vmem>>, %arg4: memref<9x256x128xbf16, #tpu.memory_space<vmem>>, %arg5: memref<1x128xf32, #tpu.memory_space<vmem>>, %arg6: memref<9x128x128xbf16, #tpu.memory_space<vmem>>, %arg7: memref<1x128xf32, #tpu.memory_space<vmem>>, %arg8: memref<128x2xf32, #tpu.memory_space<vmem>>, %arg9: memref<1x2xf32, #tpu.memory_space<vmem>>, %arg10: memref<2x2xf32, #tpu.memory_space<vmem>>, %arg11: memref<2x128xf32, #tpu.memory_space<vmem>>) attributes {dimension_semantics = [#tpu.dimension_semantics<arbitrary>], iteration_bounds = array<i64: 1>, scalar_prefetch = 0 : i64, scratch_operands = 0 : i64, tpu.core_type = #tpu.core_type<tc>, window_params = [{pipeline_mode = #tpu.pipeline_mode<synchronous>, transform_indices = @transform_0, window_bounds = array<i64: 12, 9, 8, 512>}, {pipeline_mode = #tpu.pipeline_mode<synchronous>, transform_indices = @transform_1, window_bounds = array<i64: 9, 512, 256>}, {pipeline_mode = #tpu.pipeline_mode<synchronous>, transform_indices = @transform_2, window_bounds = array<i64: 1, 256>}, {pipeline_mode = #tpu.pipeline_mode<synchronous>, transform_indices = @transform_3, window_bounds = array<i64: 9, 256, 128>}, {pipeline_mode = #tpu.pipeline_mode<synchronous>, transform_indices = @transform_4, window_bounds = array<i64: 1, 128>}, {pipeline_mode = #tpu.pipeline_mode<synchronous>, transform_indices = @transform_5, window_bounds = array<i64: 9, 128, 128>}, {pipeline_mode = #tpu.pipeline_mode<synchronous>, transform_indices = @transform_6, window_bounds = array<i64: 1, 128>}, {pipeline_mode = #tpu.pipeline_mode<synchronous>, transform_indices = @transform_7, window_bounds = array<i64: 128, 2>}, {pipeline_mode = #tpu.pipeline_mode<synchronous>, transform_indices = @transform_8, window_bounds = array<i64: 1, 2>}, {pipeline_mode = #tpu.pipeline_mode<synchronous>, transform_indices = @transform_9, window_bounds = array<i64: 2, 2>}, {pipeline_mode = #tpu.pipeline_mode<synchronous>, transform_indices = @transform_10, window_bounds = array<i64: 2, 128>}]} {
    %cst = arith.constant 0.000000e+00 : f32
    %0 = vector.broadcast %cst : f32 to vector<128x256xf32>
    %c0 = arith.constant 0 : index
    %c0_0 = arith.constant 0 : index
    %c0_1 = arith.constant 0 : index
    %c0_2 = arith.constant 0 : index
    %1 = vector.load %arg1[%c0, %c0_0, %c0_1, %c0_2] : memref<12x9x8x512xbf16, #tpu.memory_space<vmem>>, vector<2x8x8x512xbf16>
    %2 = arith.extf %1 : vector<2x8x8x512xbf16> to vector<2x8x8x512xf32>
    %3 = vector.shape_cast %2 : vector<2x8x8x512xf32> to vector<128x512xf32>
    %4 = arith.truncf %3 : vector<128x512xf32> to vector<128x512xbf16>
    %c0_3 = arith.constant 0 : index
    %c0_4 = arith.constant 0 : index
    %c0_5 = arith.constant 0 : index
    %5 = vector.load %arg2[%c0_3, %c0_4, %c0_5] : memref<9x512x256xbf16, #tpu.memory_space<vmem>>, vector<1x512x256xbf16>
    %6 = vector.shape_cast %5 : vector<1x512x256xbf16> to vector<512x256xbf16>
    %cst_6 = arith.constant dense<0.000000e+00> : vector<128x256xf32>
    %7 = tpu.matmul %4, %6, %cst_6 {dimension_numbers = #tpu.dot_dimension_numbers<[1], [0], [0], [1], [0, 0, 1, 1], [], []>} : vector<128x512xbf16>, vector<512x256xbf16>, vector<128x256xf32> -> vector<128x256xf32>
    %8 = arith.addf %0, %7 : vector<128x256xf32>
    %c4 = arith.constant 4 : index
    %c0_7 = arith.constant 0 : index
    %c0_8 = arith.constant 0 : index
    %c0_9 = arith.constant 0 : index
    %9 = vector.load %arg1[%c4, %c0_7, %c0_8, %c0_9] : memref<12x9x8x512xbf16, #tpu.memory_space<vmem>>, vector<2x8x8x512xbf16>
    %10 = arith.extf %9 : vector<2x8x8x512xbf16> to vector<2x8x8x512xf32>
    %11 = vector.shape_cast %10 : vector<2x8x8x512xf32> to vector<128x512xf32>
    %12 = arith.truncf %11 : vector<128x512xf32> to vector<128x512xbf16>
    %c1 = arith.constant 1 : index
    %c0_10 = arith.constant 0 : index
    %c0_11 = arith.constant 0 : index
    %13 = vector.load %arg2[%c1, %c0_10, %c0_11] : memref<9x512x256xbf16, #tpu.memory_space<vmem>>, vector<1x512x256xbf16>
    %14 = vector.shape_cast %13 : vector<1x512x256xbf16> to vector<512x256xbf16>
    %cst_12 = arith.constant dense<0.000000e+00> : vector<128x256xf32>
    %15 = tpu.matmul %12, %14, %cst_12 {dimension_numbers = #tpu.dot_dimension_numbers<[1], [0], [0], [1], [0, 0, 1, 1], [], []>} : vector<128x512xbf16>, vector<512x256xbf16>, vector<128x256xf32> -> vector<128x256xf32>
    %16 = arith.addf %8, %15 : vector<128x256xf32>
    %c8 = arith.constant 8 : index
    %c0_13 = arith.constant 0 : index
    %c0_14 = arith.constant 0 : index
    %c0_15 = arith.constant 0 : index
    %17 = vector.load %arg1[%c8, %c0_13, %c0_14, %c0_15] : memref<12x9x8x512xbf16, #tpu.memory_space<vmem>>, vector<2x8x8x512xbf16>
    %18 = arith.extf %17 : vector<2x8x8x512xbf16> to vector<2x8x8x512xf32>
    %19 = vector.shape_cast %18 : vector<2x8x8x512xf32> to vector<128x512xf32>
    %20 = arith.truncf %19 : vector<128x512xf32> to vector<128x512xbf16>
    %c2 = arith.constant 2 : index
    %c0_16 = arith.constant 0 : index
    %c0_17 = arith.constant 0 : index
    %21 = vector.load %arg2[%c2, %c0_16, %c0_17] : memref<9x512x256xbf16, #tpu.memory_space<vmem>>, vector<1x512x256xbf16>
    %22 = vector.shape_cast %21 : vector<1x512x256xbf16> to vector<512x256xbf16>
    %cst_18 = arith.constant dense<0.000000e+00> : vector<128x256xf32>
    %23 = tpu.matmul %20, %22, %cst_18 {dimension_numbers = #tpu.dot_dimension_numbers<[1], [0], [0], [1], [0, 0, 1, 1], [], []>} : vector<128x512xbf16>, vector<512x256xbf16>, vector<128x256xf32> -> vector<128x256xf32>
    %24 = arith.addf %16, %23 : vector<128x256xf32>
    %c2_19 = arith.constant 2 : index
    %c0_20 = arith.constant 0 : index
    %c0_21 = arith.constant 0 : index
    %c0_22 = arith.constant 0 : index
    %25 = vector.load %arg1[%c2_19, %c0_20, %c0_21, %c0_22] : memref<12x9x8x512xbf16, #tpu.memory_space<vmem>>, vector<2x8x8x512xbf16>
    %26 = arith.extf %25 : vector<2x8x8x512xbf16> to vector<2x8x8x512xf32>
    %27 = vector.shape_cast %26 : vector<2x8x8x512xf32> to vector<128x512xf32>
    %28 = arith.truncf %27 : vector<128x512xf32> to vector<128x512xbf16>
    %c3 = arith.constant 3 : index
    %c0_23 = arith.constant 0 : index
    %c0_24 = arith.constant 0 : index
    %29 = vector.load %arg2[%c3, %c0_23, %c0_24] : memref<9x512x256xbf16, #tpu.memory_space<vmem>>, vector<1x512x256xbf16>
    %30 = vector.shape_cast %29 : vector<1x512x256xbf16> to vector<512x256xbf16>
    %cst_25 = arith.constant dense<0.000000e+00> : vector<128x256xf32>
    %31 = tpu.matmul %28, %30, %cst_25 {dimension_numbers = #tpu.dot_dimension_numbers<[1], [0], [0], [1], [0, 0, 1, 1], [], []>} : vector<128x512xbf16>, vector<512x256xbf16>, vector<128x256xf32> -> vector<128x256xf32>
    %32 = arith.addf %24, %31 : vector<128x256xf32>
    %c6 = arith.constant 6 : index
    %c0_26 = arith.constant 0 : index
    %c0_27 = arith.constant 0 : index
    %c0_28 = arith.constant 0 : index
    %33 = vector.load %arg1[%c6, %c0_26, %c0_27, %c0_28] : memref<12x9x8x512xbf16, #tpu.memory_space<vmem>>, vector<2x8x8x512xbf16>
    %34 = arith.extf %33 : vector<2x8x8x512xbf16> to vector<2x8x8x512xf32>
    %35 = vector.shape_cast %34 : vector<2x8x8x512xf32> to vector<128x512xf32>
    %36 = arith.truncf %35 : vector<128x512xf32> to vector<128x512xbf16>
    %c4_29 = arith.constant 4 : index
    %c0_30 = arith.constant 0 : index
    %c0_31 = arith.constant 0 : index
    %37 = vector.load %arg2[%c4_29, %c0_30, %c0_31] : memref<9x512x256xbf16, #tpu.memory_space<vmem>>, vector<1x512x256xbf16>
    %38 = vector.shape_cast %37 : vector<1x512x256xbf16> to vector<512x256xbf16>
    %cst_32 = arith.constant dense<0.000000e+00> : vector<128x256xf32>
    %39 = tpu.matmul %36, %38, %cst_32 {dimension_numbers = #tpu.dot_dimension_numbers<[1], [0], [0], [1], [0, 0, 1, 1], [], []>} : vector<128x512xbf16>, vector<512x256xbf16>, vector<128x256xf32> -> vector<128x256xf32>
    %40 = arith.addf %32, %39 : vector<128x256xf32>
    %c10 = arith.constant 10 : index
    %c0_33 = arith.constant 0 : index
    %c0_34 = arith.constant 0 : index
    %c0_35 = arith.constant 0 : index
    %41 = vector.load %arg1[%c10, %c0_33, %c0_34, %c0_35] : memref<12x9x8x512xbf16, #tpu.memory_space<vmem>>, vector<2x8x8x512xbf16>
    %42 = arith.extf %41 : vector<2x8x8x512xbf16> to vector<2x8x8x512xf32>
    %43 = vector.shape_cast %42 : vector<2x8x8x512xf32> to vector<128x512xf32>
    %44 = arith.truncf %43 : vector<128x512xf32> to vector<128x512xbf16>
    %c5 = arith.constant 5 : index
    %c0_36 = arith.constant 0 : index
    %c0_37 = arith.constant 0 : index
    %45 = vector.load %arg2[%c5, %c0_36, %c0_37] : memref<9x512x256xbf16, #tpu.memory_space<vmem>>, vector<1x512x256xbf16>
    %46 = vector.shape_cast %45 : vector<1x512x256xbf16> to vector<512x256xbf16>
    %cst_38 = arith.constant dense<0.000000e+00> : vector<128x256xf32>
    %47 = tpu.matmul %44, %46, %cst_38 {dimension_numbers = #tpu.dot_dimension_numbers<[1], [0], [0], [1], [0, 0, 1, 1], [], []>} : vector<128x512xbf16>, vector<512x256xbf16>, vector<128x256xf32> -> vector<128x256xf32>
    %48 = arith.addf %40, %47 : vector<128x256xf32>
    %c0_39 = arith.constant 0 : index
    %c1_40 = arith.constant 1 : index
    %c0_41 = arith.constant 0 : index
    %c0_42 = arith.constant 0 : index
    %49 = vector.load %arg1[%c0_39, %c1_40, %c0_41, %c0_42] : memref<12x9x8x512xbf16, #tpu.memory_space<vmem>>, vector<2x8x8x512xbf16>
    %50 = arith.extf %49 : vector<2x8x8x512xbf16> to vector<2x8x8x512xf32>
    %51 = vector.shape_cast %50 : vector<2x8x8x512xf32> to vector<128x512xf32>
    %52 = arith.truncf %51 : vector<128x512xf32> to vector<128x512xbf16>
    %c6_43 = arith.constant 6 : index
    %c0_44 = arith.constant 0 : index
    %c0_45 = arith.constant 0 : index
    %53 = vector.load %arg2[%c6_43, %c0_44, %c0_45] : memref<9x512x256xbf16, #tpu.memory_space<vmem>>, vector<1x512x256xbf16>
    %54 = vector.shape_cast %53 : vector<1x512x256xbf16> to vector<512x256xbf16>
    %cst_46 = arith.constant dense<0.000000e+00> : vector<128x256xf32>
    %55 = tpu.matmul %52, %54, %cst_46 {dimension_numbers = #tpu.dot_dimension_numbers<[1], [0], [0], [1], [0, 0, 1, 1], [], []>} : vector<128x512xbf16>, vector<512x256xbf16>, vector<128x256xf32> -> vector<128x256xf32>
    %56 = arith.addf %48, %55 : vector<128x256xf32>
    %c4_47 = arith.constant 4 : index
    %c1_48 = arith.constant 1 : index
    %c0_49 = arith.constant 0 : index
    %c0_50 = arith.constant 0 : index
    %57 = vector.load %arg1[%c4_47, %c1_48, %c0_49, %c0_50] : memref<12x9x8x512xbf16, #tpu.memory_space<vmem>>, vector<2x8x8x512xbf16>
    %58 = arith.extf %57 : vector<2x8x8x512xbf16> to vector<2x8x8x512xf32>
    %59 = vector.shape_cast %58 : vector<2x8x8x512xf32> to vector<128x512xf32>
    %60 = arith.truncf %59 : vector<128x512xf32> to vector<128x512xbf16>
    %c7 = arith.constant 7 : index
    %c0_51 = arith.constant 0 : index
    %c0_52 = arith.constant 0 : index
    %61 = vector.load %arg2[%c7, %c0_51, %c0_52] : memref<9x512x256xbf16, #tpu.memory_space<vmem>>, vector<1x512x256xbf16>
    %62 = vector.shape_cast %61 : vector<1x512x256xbf16> to vector<512x256xbf16>
    %cst_53 = arith.constant dense<0.000000e+00> : vector<128x256xf32>
    %63 = tpu.matmul %60, %62, %cst_53 {dimension_numbers = #tpu.dot_dimension_numbers<[1], [0], [0], [1], [0, 0, 1, 1], [], []>} : vector<128x512xbf16>, vector<512x256xbf16>, vector<128x256xf32> -> vector<128x256xf32>
    %64 = arith.addf %56, %63 : vector<128x256xf32>
    %c8_54 = arith.constant 8 : index
    %c1_55 = arith.constant 1 : index
    %c0_56 = arith.constant 0 : index
    %c0_57 = arith.constant 0 : index
    %65 = vector.load %arg1[%c8_54, %c1_55, %c0_56, %c0_57] : memref<12x9x8x512xbf16, #tpu.memory_space<vmem>>, vector<2x8x8x512xbf16>
    %66 = arith.extf %65 : vector<2x8x8x512xbf16> to vector<2x8x8x512xf32>
    %67 = vector.shape_cast %66 : vector<2x8x8x512xf32> to vector<128x512xf32>
    %68 = arith.truncf %67 : vector<128x512xf32> to vector<128x512xbf16>
    %c8_58 = arith.constant 8 : index
    %c0_59 = arith.constant 0 : index
    %c0_60 = arith.constant 0 : index
    %69 = vector.load %arg2[%c8_58, %c0_59, %c0_60] : memref<9x512x256xbf16, #tpu.memory_space<vmem>>, vector<1x512x256xbf16>
    %70 = vector.shape_cast %69 : vector<1x512x256xbf16> to vector<512x256xbf16>
    %cst_61 = arith.constant dense<0.000000e+00> : vector<128x256xf32>
    %71 = tpu.matmul %68, %70, %cst_61 {dimension_numbers = #tpu.dot_dimension_numbers<[1], [0], [0], [1], [0, 0, 1, 1], [], []>} : vector<128x512xbf16>, vector<512x256xbf16>, vector<128x256xf32> -> vector<128x256xf32>
    %72 = arith.addf %64, %71 : vector<128x256xf32>
    %c0_62 = arith.constant 0 : index
    %c0_63 = arith.constant 0 : index
    %73 = vector.load %arg3[%c0_62, %c0_63] : memref<1x256xf32, #tpu.memory_space<vmem>>, vector<1x256xf32>
    %74 = vector.broadcast %73 : vector<1x256xf32> to vector<128x256xf32>
    %75 = arith.addf %72, %74 : vector<128x256xf32>
    %cst_64 = arith.constant 0.000000e+00 : f32
    %76 = vector.broadcast %cst_64 : f32 to vector<128x256xf32>
    %77 = arith.maximumf %75, %76 : vector<128x256xf32>
    %78 = arith.truncf %77 : vector<128x256xf32> to vector<128x256xbf16>
    %cst_65 = arith.constant 0.000000e+00 : f32
    %79 = vector.broadcast %cst_65 : f32 to vector<32x128xf32>
    %80 = tpu.iota {dimensions = array<i32: 0>} : vector<32x128xi32>
    %81 = tpu.iota {dimensions = array<i32: 1>} : vector<32x128xi32>
    %c4_i32 = arith.constant 4 : i32
    %82 = vector.broadcast %c4_i32 : i32 to vector<32x128xi32>
    %83 = arith.shrsi %80, %82 : vector<32x128xi32>
    %c15_i32 = arith.constant 15 : i32
    %84 = vector.broadcast %c15_i32 : i32 to vector<32x128xi32>
    %85 = arith.andi %80, %84 : vector<32x128xi32>
    %c2_i32 = arith.constant 2 : i32
    %86 = vector.broadcast %c2_i32 : i32 to vector<32x128xi32>
    %87 = arith.shrsi %85, %86 : vector<32x128xi32>
    %c3_i32 = arith.constant 3 : i32
    %88 = vector.broadcast %c3_i32 : i32 to vector<32x128xi32>
    %89 = arith.andi %85, %88 : vector<32x128xi32>
    %c2_i32_66 = arith.constant 2 : i32
    %90 = vector.broadcast %c2_i32_66 : i32 to vector<32x128xi32>
    %91 = arith.muli %90, %87 : vector<32x128xi32>
    %c1_i32 = arith.constant 1 : i32
    %92 = vector.broadcast %c1_i32 : i32 to vector<32x128xi32>
    %93 = arith.subi %91, %92 : vector<32x128xi32>
    %c0_i32 = arith.constant 0 : i32
    %94 = vector.broadcast %c0_i32 : i32 to vector<32x128xi32>
    %95 = arith.addi %93, %94 : vector<32x128xi32>
    %c2_i32_67 = arith.constant 2 : i32
    %96 = vector.broadcast %c2_i32_67 : i32 to vector<32x128xi32>
    %97 = arith.muli %96, %89 : vector<32x128xi32>
    %c1_i32_68 = arith.constant 1 : i32
    %98 = vector.broadcast %c1_i32_68 : i32 to vector<32x128xi32>
    %99 = arith.subi %97, %98 : vector<32x128xi32>
    %c0_i32_69 = arith.constant 0 : i32
    %100 = vector.broadcast %c0_i32_69 : i32 to vector<32x128xi32>
    %101 = arith.addi %99, %100 : vector<32x128xi32>
    %c0_i32_70 = arith.constant 0 : i32
    %102 = vector.broadcast %c0_i32_70 : i32 to vector<32x128xi32>
    %103 = arith.cmpi sge, %95, %102 : vector<32x128xi32>
    %c8_i32 = arith.constant 8 : i32
    %104 = vector.broadcast %c8_i32 : i32 to vector<32x128xi32>
    %105 = arith.cmpi slt, %95, %104 : vector<32x128xi32>
    %106 = arith.andi %103, %105 : vector<32x128xi1>
    %c0_i32_71 = arith.constant 0 : i32
    %107 = vector.broadcast %c0_i32_71 : i32 to vector<32x128xi32>
    %108 = arith.cmpi sge, %101, %107 : vector<32x128xi32>
    %109 = arith.andi %106, %108 : vector<32x128xi1>
    %c8_i32_72 = arith.constant 8 : i32
    %110 = vector.broadcast %c8_i32_72 : i32 to vector<32x128xi32>
    %111 = arith.cmpi slt, %101, %110 : vector<32x128xi32>
    %112 = arith.andi %109, %111 : vector<32x128xi1>
    %c64_i32 = arith.constant 64 : i32
    %113 = vector.broadcast %c64_i32 : i32 to vector<32x128xi32>
    %114 = arith.muli %83, %113 : vector<32x128xi32>
    %c8_i32_73 = arith.constant 8 : i32
    %115 = vector.broadcast %c8_i32_73 : i32 to vector<32x128xi32>
    %116 = arith.muli %95, %115 : vector<32x128xi32>
    %117 = arith.addi %114, %116 : vector<32x128xi32>
    %118 = arith.addi %117, %101 : vector<32x128xi32>
    %119 = arith.cmpi eq, %81, %118 : vector<32x128xi32>
    %120 = arith.andi %112, %119 : vector<32x128xi1>
    %cst_74 = arith.constant 1.000000e+00 : f32
    %cst_75 = arith.constant 0.000000e+00 : f32
    %121 = vector.broadcast %cst_74 : f32 to vector<32x128xf32>
    %122 = vector.broadcast %cst_75 : f32 to vector<32x128xf32>
    %123 = arith.select %120, %121, %122 : vector<32x128xi1>, vector<32x128xf32>
    %124 = arith.truncf %123 : vector<32x128xf32> to vector<32x128xbf16>
    %cst_76 = arith.constant dense<0.000000e+00> : vector<32x256xf32>
    %125 = tpu.matmul %124, %78, %cst_76 {dimension_numbers = #tpu.dot_dimension_numbers<[1], [0], [0], [1], [0, 0, 1, 1], [], []>} : vector<32x128xbf16>, vector<128x256xbf16>, vector<32x256xf32> -> vector<32x256xf32>
    %126 = arith.truncf %125 : vector<32x256xf32> to vector<32x256xbf16>
    %c0_77 = arith.constant 0 : index
    %c0_78 = arith.constant 0 : index
    %c0_79 = arith.constant 0 : index
    %127 = vector.load %arg4[%c0_77, %c0_78, %c0_79] : memref<9x256x128xbf16, #tpu.memory_space<vmem>>, vector<1x256x128xbf16>
    %128 = vector.shape_cast %127 : vector<1x256x128xbf16> to vector<256x128xbf16>
    %cst_80 = arith.constant dense<0.000000e+00> : vector<32x128xf32>
    %129 = tpu.matmul %126, %128, %cst_80 {dimension_numbers = #tpu.dot_dimension_numbers<[1], [0], [0], [1], [0, 0, 1, 1], [], []>} : vector<32x256xbf16>, vector<256x128xbf16>, vector<32x128xf32> -> vector<32x128xf32>
    %130 = arith.addf %79, %129 : vector<32x128xf32>
    %131 = tpu.iota {dimensions = array<i32: 0>} : vector<32x128xi32>
    %132 = tpu.iota {dimensions = array<i32: 1>} : vector<32x128xi32>
    %c4_i32_81 = arith.constant 4 : i32
    %133 = vector.broadcast %c4_i32_81 : i32 to vector<32x128xi32>
    %134 = arith.shrsi %131, %133 : vector<32x128xi32>
    %c15_i32_82 = arith.constant 15 : i32
    %135 = vector.broadcast %c15_i32_82 : i32 to vector<32x128xi32>
    %136 = arith.andi %131, %135 : vector<32x128xi32>
    %c2_i32_83 = arith.constant 2 : i32
    %137 = vector.broadcast %c2_i32_83 : i32 to vector<32x128xi32>
    %138 = arith.shrsi %136, %137 : vector<32x128xi32>
    %c3_i32_84 = arith.constant 3 : i32
    %139 = vector.broadcast %c3_i32_84 : i32 to vector<32x128xi32>
    %140 = arith.andi %136, %139 : vector<32x128xi32>
    %c2_i32_85 = arith.constant 2 : i32
    %141 = vector.broadcast %c2_i32_85 : i32 to vector<32x128xi32>
    %142 = arith.muli %141, %138 : vector<32x128xi32>
    %c1_i32_86 = arith.constant 1 : i32
    %143 = vector.broadcast %c1_i32_86 : i32 to vector<32x128xi32>
    %144 = arith.subi %142, %143 : vector<32x128xi32>
    %c0_i32_87 = arith.constant 0 : i32
    %145 = vector.broadcast %c0_i32_87 : i32 to vector<32x128xi32>
    %146 = arith.addi %144, %145 : vector<32x128xi32>
    %c2_i32_88 = arith.constant 2 : i32
    %147 = vector.broadcast %c2_i32_88 : i32 to vector<32x128xi32>
    %148 = arith.muli %147, %140 : vector<32x128xi32>
    %c1_i32_89 = arith.constant 1 : i32
    %149 = vector.broadcast %c1_i32_89 : i32 to vector<32x128xi32>
    %150 = arith.subi %148, %149 : vector<32x128xi32>
    %c1_i32_90 = arith.constant 1 : i32
    %151 = vector.broadcast %c1_i32_90 : i32 to vector<32x128xi32>
    %152 = arith.addi %150, %151 : vector<32x128xi32>
    %c0_i32_91 = arith.constant 0 : i32
    %153 = vector.broadcast %c0_i32_91 : i32 to vector<32x128xi32>
    %154 = arith.cmpi sge, %146, %153 : vector<32x128xi32>
    %c8_i32_92 = arith.constant 8 : i32
    %155 = vector.broadcast %c8_i32_92 : i32 to vector<32x128xi32>
    %156 = arith.cmpi slt, %146, %155 : vector<32x128xi32>
    %157 = arith.andi %154, %156 : vector<32x128xi1>
    %c0_i32_93 = arith.constant 0 : i32
    %158 = vector.broadcast %c0_i32_93 : i32 to vector<32x128xi32>
    %159 = arith.cmpi sge, %152, %158 : vector<32x128xi32>
    %160 = arith.andi %157, %159 : vector<32x128xi1>
    %c8_i32_94 = arith.constant 8 : i32
    %161 = vector.broadcast %c8_i32_94 : i32 to vector<32x128xi32>
    %162 = arith.cmpi slt, %152, %161 : vector<32x128xi32>
    %163 = arith.andi %160, %162 : vector<32x128xi1>
    %c64_i32_95 = arith.constant 64 : i32
    %164 = vector.broadcast %c64_i32_95 : i32 to vector<32x128xi32>
    %165 = arith.muli %134, %164 : vector<32x128xi32>
    %c8_i32_96 = arith.constant 8 : i32
    %166 = vector.broadcast %c8_i32_96 : i32 to vector<32x128xi32>
    %167 = arith.muli %146, %166 : vector<32x128xi32>
    %168 = arith.addi %165, %167 : vector<32x128xi32>
    %169 = arith.addi %168, %152 : vector<32x128xi32>
    %170 = arith.cmpi eq, %132, %169 : vector<32x128xi32>
    %171 = arith.andi %163, %170 : vector<32x128xi1>
    %cst_97 = arith.constant 1.000000e+00 : f32
    %cst_98 = arith.constant 0.000000e+00 : f32
    %172 = vector.broadcast %cst_97 : f32 to vector<32x128xf32>
    %173 = vector.broadcast %cst_98 : f32 to vector<32x128xf32>
    %174 = arith.select %171, %172, %173 : vector<32x128xi1>, vector<32x128xf32>
    %175 = arith.truncf %174 : vector<32x128xf32> to vector<32x128xbf16>
    %cst_99 = arith.constant dense<0.000000e+00> : vector<32x256xf32>
    %176 = tpu.matmul %175, %78, %cst_99 {dimension_numbers = #tpu.dot_dimension_numbers<[1], [0], [0], [1], [0, 0, 1, 1], [], []>} : vector<32x128xbf16>, vector<128x256xbf16>, vector<32x256xf32> -> vector<32x256xf32>
    %177 = arith.truncf %176 : vector<32x256xf32> to vector<32x256xbf16>
    %c1_100 = arith.constant 1 : index
    %c0_101 = arith.constant 0 : index
    %c0_102 = arith.constant 0 : index
    %178 = vector.load %arg4[%c1_100, %c0_101, %c0_102] : memref<9x256x128xbf16, #tpu.memory_space<vmem>>, vector<1x256x128xbf16>
    %179 = vector.shape_cast %178 : vector<1x256x128xbf16> to vector<256x128xbf16>
    %cst_103 = arith.constant dense<0.000000e+00> : vector<32x128xf32>
    %180 = tpu.matmul %177, %179, %cst_103 {dimension_numbers = #tpu.dot_dimension_numbers<[1], [0], [0], [1], [0, 0, 1, 1], [], []>} : vector<32x256xbf16>, vector<256x128xbf16>, vector<32x128xf32> -> vector<32x128xf32>
    %181 = arith.addf %130, %180 : vector<32x128xf32>
    %182 = tpu.iota {dimensions = array<i32: 0>} : vector<32x128xi32>
    %183 = tpu.iota {dimensions = array<i32: 1>} : vector<32x128xi32>
    %c4_i32_104 = arith.constant 4 : i32
    %184 = vector.broadcast %c4_i32_104 : i32 to vector<32x128xi32>
    %185 = arith.shrsi %182, %184 : vector<32x128xi32>
    %c15_i32_105 = arith.constant 15 : i32
    %186 = vector.broadcast %c15_i32_105 : i32 to vector<32x128xi32>
    %187 = arith.andi %182, %186 : vector<32x128xi32>
    %c2_i32_106 = arith.constant 2 : i32
    %188 = vector.broadcast %c2_i32_106 : i32 to vector<32x128xi32>
    %189 = arith.shrsi %187, %188 : vector<32x128xi32>
    %c3_i32_107 = arith.constant 3 : i32
    %190 = vector.broadcast %c3_i32_107 : i32 to vector<32x128xi32>
    %191 = arith.andi %187, %190 : vector<32x128xi32>
    %c2_i32_108 = arith.constant 2 : i32
    %192 = vector.broadcast %c2_i32_108 : i32 to vector<32x128xi32>
    %193 = arith.muli %192, %189 : vector<32x128xi32>
    %c1_i32_109 = arith.constant 1 : i32
    %194 = vector.broadcast %c1_i32_109 : i32 to vector<32x128xi32>
    %195 = arith.subi %193, %194 : vector<32x128xi32>
    %c0_i32_110 = arith.constant 0 : i32
    %196 = vector.broadcast %c0_i32_110 : i32 to vector<32x128xi32>
    %197 = arith.addi %195, %196 : vector<32x128xi32>
    %c2_i32_111 = arith.constant 2 : i32
    %198 = vector.broadcast %c2_i32_111 : i32 to vector<32x128xi32>
    %199 = arith.muli %198, %191 : vector<32x128xi32>
    %c1_i32_112 = arith.constant 1 : i32
    %200 = vector.broadcast %c1_i32_112 : i32 to vector<32x128xi32>
    %201 = arith.subi %199, %200 : vector<32x128xi32>
    %c2_i32_113 = arith.constant 2 : i32
    %202 = vector.broadcast %c2_i32_113 : i32 to vector<32x128xi32>
    %203 = arith.addi %201, %202 : vector<32x128xi32>
    %c0_i32_114 = arith.constant 0 : i32
    %204 = vector.broadcast %c0_i32_114 : i32 to vector<32x128xi32>
    %205 = arith.cmpi sge, %197, %204 : vector<32x128xi32>
    %c8_i32_115 = arith.constant 8 : i32
    %206 = vector.broadcast %c8_i32_115 : i32 to vector<32x128xi32>
    %207 = arith.cmpi slt, %197, %206 : vector<32x128xi32>
    %208 = arith.andi %205, %207 : vector<32x128xi1>
    %c0_i32_116 = arith.constant 0 : i32
    %209 = vector.broadcast %c0_i32_116 : i32 to vector<32x128xi32>
    %210 = arith.cmpi sge, %203, %209 : vector<32x128xi32>
    %211 = arith.andi %208, %210 : vector<32x128xi1>
    %c8_i32_117 = arith.constant 8 : i32
    %212 = vector.broadcast %c8_i32_117 : i32 to vector<32x128xi32>
    %213 = arith.cmpi slt, %203, %212 : vector<32x128xi32>
    %214 = arith.andi %211, %213 : vector<32x128xi1>
    %c64_i32_118 = arith.constant 64 : i32
    %215 = vector.broadcast %c64_i32_118 : i32 to vector<32x128xi32>
    %216 = arith.muli %185, %215 : vector<32x128xi32>
    %c8_i32_119 = arith.constant 8 : i32
    %217 = vector.broadcast %c8_i32_119 : i32 to vector<32x128xi32>
    %218 = arith.muli %197, %217 : vector<32x128xi32>
    %219 = arith.addi %216, %218 : vector<32x128xi32>
    %220 = arith.addi %219, %203 : vector<32x128xi32>
    %221 = arith.cmpi eq, %183, %220 : vector<32x128xi32>
    %222 = arith.andi %214, %221 : vector<32x128xi1>
    %cst_120 = arith.constant 1.000000e+00 : f32
    %cst_121 = arith.constant 0.000000e+00 : f32
    %223 = vector.broadcast %cst_120 : f32 to vector<32x128xf32>
    %224 = vector.broadcast %cst_121 : f32 to vector<32x128xf32>
    %225 = arith.select %222, %223, %224 : vector<32x128xi1>, vector<32x128xf32>
    %226 = arith.truncf %225 : vector<32x128xf32> to vector<32x128xbf16>
    %cst_122 = arith.constant dense<0.000000e+00> : vector<32x256xf32>
    %227 = tpu.matmul %226, %78, %cst_122 {dimension_numbers = #tpu.dot_dimension_numbers<[1], [0], [0], [1], [0, 0, 1, 1], [], []>} : vector<32x128xbf16>, vector<128x256xbf16>, vector<32x256xf32> -> vector<32x256xf32>
    %228 = arith.truncf %227 : vector<32x256xf32> to vector<32x256xbf16>
    %c2_123 = arith.constant 2 : index
    %c0_124 = arith.constant 0 : index
    %c0_125 = arith.constant 0 : index
    %229 = vector.load %arg4[%c2_123, %c0_124, %c0_125] : memref<9x256x128xbf16, #tpu.memory_space<vmem>>, vector<1x256x128xbf16>
    %230 = vector.shape_cast %229 : vector<1x256x128xbf16> to vector<256x128xbf16>
    %cst_126 = arith.constant dense<0.000000e+00> : vector<32x128xf32>
    %231 = tpu.matmul %228, %230, %cst_126 {dimension_numbers = #tpu.dot_dimension_numbers<[1], [0], [0], [1], [0, 0, 1, 1], [], []>} : vector<32x256xbf16>, vector<256x128xbf16>, vector<32x128xf32> -> vector<32x128xf32>
    %232 = arith.addf %181, %231 : vector<32x128xf32>
    %233 = tpu.iota {dimensions = array<i32: 0>} : vector<32x128xi32>
    %234 = tpu.iota {dimensions = array<i32: 1>} : vector<32x128xi32>
    %c4_i32_127 = arith.constant 4 : i32
    %235 = vector.broadcast %c4_i32_127 : i32 to vector<32x128xi32>
    %236 = arith.shrsi %233, %235 : vector<32x128xi32>
    %c15_i32_128 = arith.constant 15 : i32
    %237 = vector.broadcast %c15_i32_128 : i32 to vector<32x128xi32>
    %238 = arith.andi %233, %237 : vector<32x128xi32>
    %c2_i32_129 = arith.constant 2 : i32
    %239 = vector.broadcast %c2_i32_129 : i32 to vector<32x128xi32>
    %240 = arith.shrsi %238, %239 : vector<32x128xi32>
    %c3_i32_130 = arith.constant 3 : i32
    %241 = vector.broadcast %c3_i32_130 : i32 to vector<32x128xi32>
    %242 = arith.andi %238, %241 : vector<32x128xi32>
    %c2_i32_131 = arith.constant 2 : i32
    %243 = vector.broadcast %c2_i32_131 : i32 to vector<32x128xi32>
    %244 = arith.muli %243, %240 : vector<32x128xi32>
    %c1_i32_132 = arith.constant 1 : i32
    %245 = vector.broadcast %c1_i32_132 : i32 to vector<32x128xi32>
    %246 = arith.subi %244, %245 : vector<32x128xi32>
    %c1_i32_133 = arith.constant 1 : i32
    %247 = vector.broadcast %c1_i32_133 : i32 to vector<32x128xi32>
    %248 = arith.addi %246, %247 : vector<32x128xi32>
    %c2_i32_134 = arith.constant 2 : i32
    %249 = vector.broadcast %c2_i32_134 : i32 to vector<32x128xi32>
    %250 = arith.muli %249, %242 : vector<32x128xi32>
    %c1_i32_135 = arith.constant 1 : i32
    %251 = vector.broadcast %c1_i32_135 : i32 to vector<32x128xi32>
    %252 = arith.subi %250, %251 : vector<32x128xi32>
    %c0_i32_136 = arith.constant 0 : i32
    %253 = vector.broadcast %c0_i32_136 : i32 to vector<32x128xi32>
    %254 = arith.addi %252, %253 : vector<32x128xi32>
    %c0_i32_137 = arith.constant 0 : i32
    %255 = vector.broadcast %c0_i32_137 : i32 to vector<32x128xi32>
    %256 = arith.cmpi sge, %248, %255 : vector<32x128xi32>
    %c8_i32_138 = arith.constant 8 : i32
    %257 = vector.broadcast %c8_i32_138 : i32 to vector<32x128xi32>
    %258 = arith.cmpi slt, %248, %257 : vector<32x128xi32>
    %259 = arith.andi %256, %258 : vector<32x128xi1>
    %c0_i32_139 = arith.constant 0 : i32
    %260 = vector.broadcast %c0_i32_139 : i32 to vector<32x128xi32>
    %261 = arith.cmpi sge, %254, %260 : vector<32x128xi32>
    %262 = arith.andi %259, %261 : vector<32x128xi1>
    %c8_i32_140 = arith.constant 8 : i32
    %263 = vector.broadcast %c8_i32_140 : i32 to vector<32x128xi32>
    %264 = arith.cmpi slt, %254, %263 : vector<32x128xi32>
    %265 = arith.andi %262, %264 : vector<32x128xi1>
    %c64_i32_141 = arith.constant 64 : i32
    %266 = vector.broadcast %c64_i32_141 : i32 to vector<32x128xi32>
    %267 = arith.muli %236, %266 : vector<32x128xi32>
    %c8_i32_142 = arith.constant 8 : i32
    %268 = vector.broadcast %c8_i32_142 : i32 to vector<32x128xi32>
    %269 = arith.muli %248, %268 : vector<32x128xi32>
    %270 = arith.addi %267, %269 : vector<32x128xi32>
    %271 = arith.addi %270, %254 : vector<32x128xi32>
    %272 = arith.cmpi eq, %234, %271 : vector<32x128xi32>
    %273 = arith.andi %265, %272 : vector<32x128xi1>
    %cst_143 = arith.constant 1.000000e+00 : f32
    %cst_144 = arith.constant 0.000000e+00 : f32
    %274 = vector.broadcast %cst_143 : f32 to vector<32x128xf32>
    %275 = vector.broadcast %cst_144 : f32 to vector<32x128xf32>
    %276 = arith.select %273, %274, %275 : vector<32x128xi1>, vector<32x128xf32>
    %277 = arith.truncf %276 : vector<32x128xf32> to vector<32x128xbf16>
    %cst_145 = arith.constant dense<0.000000e+00> : vector<32x256xf32>
    %278 = tpu.matmul %277, %78, %cst_145 {dimension_numbers = #tpu.dot_dimension_numbers<[1], [0], [0], [1], [0, 0, 1, 1], [], []>} : vector<32x128xbf16>, vector<128x256xbf16>, vector<32x256xf32> -> vector<32x256xf32>
    %279 = arith.truncf %278 : vector<32x256xf32> to vector<32x256xbf16>
    %c3_146 = arith.constant 3 : index
    %c0_147 = arith.constant 0 : index
    %c0_148 = arith.constant 0 : index
    %280 = vector.load %arg4[%c3_146, %c0_147, %c0_148] : memref<9x256x128xbf16, #tpu.memory_space<vmem>>, vector<1x256x128xbf16>
    %281 = vector.shape_cast %280 : vector<1x256x128xbf16> to vector<256x128xbf16>
    %cst_149 = arith.constant dense<0.000000e+00> : vector<32x128xf32>
    %282 = tpu.matmul %279, %281, %cst_149 {dimension_numbers = #tpu.dot_dimension_numbers<[1], [0], [0], [1], [0, 0, 1, 1], [], []>} : vector<32x256xbf16>, vector<256x128xbf16>, vector<32x128xf32> -> vector<32x128xf32>
    %283 = arith.addf %232, %282 : vector<32x128xf32>
    %284 = tpu.iota {dimensions = array<i32: 0>} : vector<32x128xi32>
    %285 = tpu.iota {dimensions = array<i32: 1>} : vector<32x128xi32>
    %c4_i32_150 = arith.constant 4 : i32
    %286 = vector.broadcast %c4_i32_150 : i32 to vector<32x128xi32>
    %287 = arith.shrsi %284, %286 : vector<32x128xi32>
    %c15_i32_151 = arith.constant 15 : i32
    %288 = vector.broadcast %c15_i32_151 : i32 to vector<32x128xi32>
    %289 = arith.andi %284, %288 : vector<32x128xi32>
    %c2_i32_152 = arith.constant 2 : i32
    %290 = vector.broadcast %c2_i32_152 : i32 to vector<32x128xi32>
    %291 = arith.shrsi %289, %290 : vector<32x128xi32>
    %c3_i32_153 = arith.constant 3 : i32
    %292 = vector.broadcast %c3_i32_153 : i32 to vector<32x128xi32>
    %293 = arith.andi %289, %292 : vector<32x128xi32>
    %c2_i32_154 = arith.constant 2 : i32
    %294 = vector.broadcast %c2_i32_154 : i32 to vector<32x128xi32>
    %295 = arith.muli %294, %291 : vector<32x128xi32>
    %c1_i32_155 = arith.constant 1 : i32
    %296 = vector.broadcast %c1_i32_155 : i32 to vector<32x128xi32>
    %297 = arith.subi %295, %296 : vector<32x128xi32>
    %c1_i32_156 = arith.constant 1 : i32
    %298 = vector.broadcast %c1_i32_156 : i32 to vector<32x128xi32>
    %299 = arith.addi %297, %298 : vector<32x128xi32>
    %c2_i32_157 = arith.constant 2 : i32
    %300 = vector.broadcast %c2_i32_157 : i32 to vector<32x128xi32>
    %301 = arith.muli %300, %293 : vector<32x128xi32>
    %c1_i32_158 = arith.constant 1 : i32
    %302 = vector.broadcast %c1_i32_158 : i32 to vector<32x128xi32>
    %303 = arith.subi %301, %302 : vector<32x128xi32>
    %c1_i32_159 = arith.constant 1 : i32
    %304 = vector.broadcast %c1_i32_159 : i32 to vector<32x128xi32>
    %305 = arith.addi %303, %304 : vector<32x128xi32>
    %c0_i32_160 = arith.constant 0 : i32
    %306 = vector.broadcast %c0_i32_160 : i32 to vector<32x128xi32>
    %307 = arith.cmpi sge, %299, %306 : vector<32x128xi32>
    %c8_i32_161 = arith.constant 8 : i32
    %308 = vector.broadcast %c8_i32_161 : i32 to vector<32x128xi32>
    %309 = arith.cmpi slt, %299, %308 : vector<32x128xi32>
    %310 = arith.andi %307, %309 : vector<32x128xi1>
    %c0_i32_162 = arith.constant 0 : i32
    %311 = vector.broadcast %c0_i32_162 : i32 to vector<32x128xi32>
    %312 = arith.cmpi sge, %305, %311 : vector<32x128xi32>
    %313 = arith.andi %310, %312 : vector<32x128xi1>
    %c8_i32_163 = arith.constant 8 : i32
    %314 = vector.broadcast %c8_i32_163 : i32 to vector<32x128xi32>
    %315 = arith.cmpi slt, %305, %314 : vector<32x128xi32>
    %316 = arith.andi %313, %315 : vector<32x128xi1>
    %c64_i32_164 = arith.constant 64 : i32
    %317 = vector.broadcast %c64_i32_164 : i32 to vector<32x128xi32>
    %318 = arith.muli %287, %317 : vector<32x128xi32>
    %c8_i32_165 = arith.constant 8 : i32
    %319 = vector.broadcast %c8_i32_165 : i32 to vector<32x128xi32>
    %320 = arith.muli %299, %319 : vector<32x128xi32>
    %321 = arith.addi %318, %320 : vector<32x128xi32>
    %322 = arith.addi %321, %305 : vector<32x128xi32>
    %323 = arith.cmpi eq, %285, %322 : vector<32x128xi32>
    %324 = arith.andi %316, %323 : vector<32x128xi1>
    %cst_166 = arith.constant 1.000000e+00 : f32
    %cst_167 = arith.constant 0.000000e+00 : f32
    %325 = vector.broadcast %cst_166 : f32 to vector<32x128xf32>
    %326 = vector.broadcast %cst_167 : f32 to vector<32x128xf32>
    %327 = arith.select %324, %325, %326 : vector<32x128xi1>, vector<32x128xf32>
    %328 = arith.truncf %327 : vector<32x128xf32> to vector<32x128xbf16>
    %cst_168 = arith.constant dense<0.000000e+00> : vector<32x256xf32>
    %329 = tpu.matmul %328, %78, %cst_168 {dimension_numbers = #tpu.dot_dimension_numbers<[1], [0], [0], [1], [0, 0, 1, 1], [], []>} : vector<32x128xbf16>, vector<128x256xbf16>, vector<32x256xf32> -> vector<32x256xf32>
    %330 = arith.truncf %329 : vector<32x256xf32> to vector<32x256xbf16>
    %c4_169 = arith.constant 4 : index
    %c0_170 = arith.constant 0 : index
    %c0_171 = arith.constant 0 : index
    %331 = vector.load %arg4[%c4_169, %c0_170, %c0_171] : memref<9x256x128xbf16, #tpu.memory_space<vmem>>, vector<1x256x128xbf16>
    %332 = vector.shape_cast %331 : vector<1x256x128xbf16> to vector<256x128xbf16>
    %cst_172 = arith.constant dense<0.000000e+00> : vector<32x128xf32>
    %333 = tpu.matmul %330, %332, %cst_172 {dimension_numbers = #tpu.dot_dimension_numbers<[1], [0], [0], [1], [0, 0, 1, 1], [], []>} : vector<32x256xbf16>, vector<256x128xbf16>, vector<32x128xf32> -> vector<32x128xf32>
    %334 = arith.addf %283, %333 : vector<32x128xf32>
    %335 = tpu.iota {dimensions = array<i32: 0>} : vector<32x128xi32>
    %336 = tpu.iota {dimensions = array<i32: 1>} : vector<32x128xi32>
    %c4_i32_173 = arith.constant 4 : i32
    %337 = vector.broadcast %c4_i32_173 : i32 to vector<32x128xi32>
    %338 = arith.shrsi %335, %337 : vector<32x128xi32>
    %c15_i32_174 = arith.constant 15 : i32
    %339 = vector.broadcast %c15_i32_174 : i32 to vector<32x128xi32>
    %340 = arith.andi %335, %339 : vector<32x128xi32>
    %c2_i32_175 = arith.constant 2 : i32
    %341 = vector.broadcast %c2_i32_175 : i32 to vector<32x128xi32>
    %342 = arith.shrsi %340, %341 : vector<32x128xi32>
    %c3_i32_176 = arith.constant 3 : i32
    %343 = vector.broadcast %c3_i32_176 : i32 to vector<32x128xi32>
    %344 = arith.andi %340, %343 : vector<32x128xi32>
    %c2_i32_177 = arith.constant 2 : i32
    %345 = vector.broadcast %c2_i32_177 : i32 to vector<32x128xi32>
    %346 = arith.muli %345, %342 : vector<32x128xi32>
    %c1_i32_178 = arith.constant 1 : i32
    %347 = vector.broadcast %c1_i32_178 : i32 to vector<32x128xi32>
    %348 = arith.subi %346, %347 : vector<32x128xi32>
    %c1_i32_179 = arith.constant 1 : i32
    %349 = vector.broadcast %c1_i32_179 : i32 to vector<32x128xi32>
    %350 = arith.addi %348, %349 : vector<32x128xi32>
    %c2_i32_180 = arith.constant 2 : i32
    %351 = vector.broadcast %c2_i32_180 : i32 to vector<32x128xi32>
    %352 = arith.muli %351, %344 : vector<32x128xi32>
    %c1_i32_181 = arith.constant 1 : i32
    %353 = vector.broadcast %c1_i32_181 : i32 to vector<32x128xi32>
    %354 = arith.subi %352, %353 : vector<32x128xi32>
    %c2_i32_182 = arith.constant 2 : i32
    %355 = vector.broadcast %c2_i32_182 : i32 to vector<32x128xi32>
    %356 = arith.addi %354, %355 : vector<32x128xi32>
    %c0_i32_183 = arith.constant 0 : i32
    %357 = vector.broadcast %c0_i32_183 : i32 to vector<32x128xi32>
    %358 = arith.cmpi sge, %350, %357 : vector<32x128xi32>
    %c8_i32_184 = arith.constant 8 : i32
    %359 = vector.broadcast %c8_i32_184 : i32 to vector<32x128xi32>
    %360 = arith.cmpi slt, %350, %359 : vector<32x128xi32>
    %361 = arith.andi %358, %360 : vector<32x128xi1>
    %c0_i32_185 = arith.constant 0 : i32
    %362 = vector.broadcast %c0_i32_185 : i32 to vector<32x128xi32>
    %363 = arith.cmpi sge, %356, %362 : vector<32x128xi32>
    %364 = arith.andi %361, %363 : vector<32x128xi1>
    %c8_i32_186 = arith.constant 8 : i32
    %365 = vector.broadcast %c8_i32_186 : i32 to vector<32x128xi32>
    %366 = arith.cmpi slt, %356, %365 : vector<32x128xi32>
    %367 = arith.andi %364, %366 : vector<32x128xi1>
    %c64_i32_187 = arith.constant 64 : i32
    %368 = vector.broadcast %c64_i32_187 : i32 to vector<32x128xi32>
    %369 = arith.muli %338, %368 : vector<32x128xi32>
    %c8_i32_188 = arith.constant 8 : i32
    %370 = vector.broadcast %c8_i32_188 : i32 to vector<32x128xi32>
    %371 = arith.muli %350, %370 : vector<32x128xi32>
    %372 = arith.addi %369, %371 : vector<32x128xi32>
    %373 = arith.addi %372, %356 : vector<32x128xi32>
    %374 = arith.cmpi eq, %336, %373 : vector<32x128xi32>
    %375 = arith.andi %367, %374 : vector<32x128xi1>
    %cst_189 = arith.constant 1.000000e+00 : f32
    %cst_190 = arith.constant 0.000000e+00 : f32
    %376 = vector.broadcast %cst_189 : f32 to vector<32x128xf32>
    %377 = vector.broadcast %cst_190 : f32 to vector<32x128xf32>
    %378 = arith.select %375, %376, %377 : vector<32x128xi1>, vector<32x128xf32>
    %379 = arith.truncf %378 : vector<32x128xf32> to vector<32x128xbf16>
    %cst_191 = arith.constant dense<0.000000e+00> : vector<32x256xf32>
    %380 = tpu.matmul %379, %78, %cst_191 {dimension_numbers = #tpu.dot_dimension_numbers<[1], [0], [0], [1], [0, 0, 1, 1], [], []>} : vector<32x128xbf16>, vector<128x256xbf16>, vector<32x256xf32> -> vector<32x256xf32>
    %381 = arith.truncf %380 : vector<32x256xf32> to vector<32x256xbf16>
    %c5_192 = arith.constant 5 : index
    %c0_193 = arith.constant 0 : index
    %c0_194 = arith.constant 0 : index
    %382 = vector.load %arg4[%c5_192, %c0_193, %c0_194] : memref<9x256x128xbf16, #tpu.memory_space<vmem>>, vector<1x256x128xbf16>
    %383 = vector.shape_cast %382 : vector<1x256x128xbf16> to vector<256x128xbf16>
    %cst_195 = arith.constant dense<0.000000e+00> : vector<32x128xf32>
    %384 = tpu.matmul %381, %383, %cst_195 {dimension_numbers = #tpu.dot_dimension_numbers<[1], [0], [0], [1], [0, 0, 1, 1], [], []>} : vector<32x256xbf16>, vector<256x128xbf16>, vector<32x128xf32> -> vector<32x128xf32>
    %385 = arith.addf %334, %384 : vector<32x128xf32>
    %386 = tpu.iota {dimensions = array<i32: 0>} : vector<32x128xi32>
    %387 = tpu.iota {dimensions = array<i32: 1>} : vector<32x128xi32>
    %c4_i32_196 = arith.constant 4 : i32
    %388 = vector.broadcast %c4_i32_196 : i32 to vector<32x128xi32>
    %389 = arith.shrsi %386, %388 : vector<32x128xi32>
    %c15_i32_197 = arith.constant 15 : i32
    %390 = vector.broadcast %c15_i32_197 : i32 to vector<32x128xi32>
    %391 = arith.andi %386, %390 : vector<32x128xi32>
    %c2_i32_198 = arith.constant 2 : i32
    %392 = vector.broadcast %c2_i32_198 : i32 to vector<32x128xi32>
    %393 = arith.shrsi %391, %392 : vector<32x128xi32>
    %c3_i32_199 = arith.constant 3 : i32
    %394 = vector.broadcast %c3_i32_199 : i32 to vector<32x128xi32>
    %395 = arith.andi %391, %394 : vector<32x128xi32>
    %c2_i32_200 = arith.constant 2 : i32
    %396 = vector.broadcast %c2_i32_200 : i32 to vector<32x128xi32>
    %397 = arith.muli %396, %393 : vector<32x128xi32>
    %c1_i32_201 = arith.constant 1 : i32
    %398 = vector.broadcast %c1_i32_201 : i32 to vector<32x128xi32>
    %399 = arith.subi %397, %398 : vector<32x128xi32>
    %c2_i32_202 = arith.constant 2 : i32
    %400 = vector.broadcast %c2_i32_202 : i32 to vector<32x128xi32>
    %401 = arith.addi %399, %400 : vector<32x128xi32>
    %c2_i32_203 = arith.constant 2 : i32
    %402 = vector.broadcast %c2_i32_203 : i32 to vector<32x128xi32>
    %403 = arith.muli %402, %395 : vector<32x128xi32>
    %c1_i32_204 = arith.constant 1 : i32
    %404 = vector.broadcast %c1_i32_204 : i32 to vector<32x128xi32>
    %405 = arith.subi %403, %404 : vector<32x128xi32>
    %c0_i32_205 = arith.constant 0 : i32
    %406 = vector.broadcast %c0_i32_205 : i32 to vector<32x128xi32>
    %407 = arith.addi %405, %406 : vector<32x128xi32>
    %c0_i32_206 = arith.constant 0 : i32
    %408 = vector.broadcast %c0_i32_206 : i32 to vector<32x128xi32>
    %409 = arith.cmpi sge, %401, %408 : vector<32x128xi32>
    %c8_i32_207 = arith.constant 8 : i32
    %410 = vector.broadcast %c8_i32_207 : i32 to vector<32x128xi32>
    %411 = arith.cmpi slt, %401, %410 : vector<32x128xi32>
    %412 = arith.andi %409, %411 : vector<32x128xi1>
    %c0_i32_208 = arith.constant 0 : i32
    %413 = vector.broadcast %c0_i32_208 : i32 to vector<32x128xi32>
    %414 = arith.cmpi sge, %407, %413 : vector<32x128xi32>
    %415 = arith.andi %412, %414 : vector<32x128xi1>
    %c8_i32_209 = arith.constant 8 : i32
    %416 = vector.broadcast %c8_i32_209 : i32 to vector<32x128xi32>
    %417 = arith.cmpi slt, %407, %416 : vector<32x128xi32>
    %418 = arith.andi %415, %417 : vector<32x128xi1>
    %c64_i32_210 = arith.constant 64 : i32
    %419 = vector.broadcast %c64_i32_210 : i32 to vector<32x128xi32>
    %420 = arith.muli %389, %419 : vector<32x128xi32>
    %c8_i32_211 = arith.constant 8 : i32
    %421 = vector.broadcast %c8_i32_211 : i32 to vector<32x128xi32>
    %422 = arith.muli %401, %421 : vector<32x128xi32>
    %423 = arith.addi %420, %422 : vector<32x128xi32>
    %424 = arith.addi %423, %407 : vector<32x128xi32>
    %425 = arith.cmpi eq, %387, %424 : vector<32x128xi32>
    %426 = arith.andi %418, %425 : vector<32x128xi1>
    %cst_212 = arith.constant 1.000000e+00 : f32
    %cst_213 = arith.constant 0.000000e+00 : f32
    %427 = vector.broadcast %cst_212 : f32 to vector<32x128xf32>
    %428 = vector.broadcast %cst_213 : f32 to vector<32x128xf32>
    %429 = arith.select %426, %427, %428 : vector<32x128xi1>, vector<32x128xf32>
    %430 = arith.truncf %429 : vector<32x128xf32> to vector<32x128xbf16>
    %cst_214 = arith.constant dense<0.000000e+00> : vector<32x256xf32>
    %431 = tpu.matmul %430, %78, %cst_214 {dimension_numbers = #tpu.dot_dimension_numbers<[1], [0], [0], [1], [0, 0, 1, 1], [], []>} : vector<32x128xbf16>, vector<128x256xbf16>, vector<32x256xf32> -> vector<32x256xf32>
    %432 = arith.truncf %431 : vector<32x256xf32> to vector<32x256xbf16>
    %c6_215 = arith.constant 6 : index
    %c0_216 = arith.constant 0 : index
    %c0_217 = arith.constant 0 : index
    %433 = vector.load %arg4[%c6_215, %c0_216, %c0_217] : memref<9x256x128xbf16, #tpu.memory_space<vmem>>, vector<1x256x128xbf16>
    %434 = vector.shape_cast %433 : vector<1x256x128xbf16> to vector<256x128xbf16>
    %cst_218 = arith.constant dense<0.000000e+00> : vector<32x128xf32>
    %435 = tpu.matmul %432, %434, %cst_218 {dimension_numbers = #tpu.dot_dimension_numbers<[1], [0], [0], [1], [0, 0, 1, 1], [], []>} : vector<32x256xbf16>, vector<256x128xbf16>, vector<32x128xf32> -> vector<32x128xf32>
    %436 = arith.addf %385, %435 : vector<32x128xf32>
    %437 = tpu.iota {dimensions = array<i32: 0>} : vector<32x128xi32>
    %438 = tpu.iota {dimensions = array<i32: 1>} : vector<32x128xi32>
    %c4_i32_219 = arith.constant 4 : i32
    %439 = vector.broadcast %c4_i32_219 : i32 to vector<32x128xi32>
    %440 = arith.shrsi %437, %439 : vector<32x128xi32>
    %c15_i32_220 = arith.constant 15 : i32
    %441 = vector.broadcast %c15_i32_220 : i32 to vector<32x128xi32>
    %442 = arith.andi %437, %441 : vector<32x128xi32>
    %c2_i32_221 = arith.constant 2 : i32
    %443 = vector.broadcast %c2_i32_221 : i32 to vector<32x128xi32>
    %444 = arith.shrsi %442, %443 : vector<32x128xi32>
    %c3_i32_222 = arith.constant 3 : i32
    %445 = vector.broadcast %c3_i32_222 : i32 to vector<32x128xi32>
    %446 = arith.andi %442, %445 : vector<32x128xi32>
    %c2_i32_223 = arith.constant 2 : i32
    %447 = vector.broadcast %c2_i32_223 : i32 to vector<32x128xi32>
    %448 = arith.muli %447, %444 : vector<32x128xi32>
    %c1_i32_224 = arith.constant 1 : i32
    %449 = vector.broadcast %c1_i32_224 : i32 to vector<32x128xi32>
    %450 = arith.subi %448, %449 : vector<32x128xi32>
    %c2_i32_225 = arith.constant 2 : i32
    %451 = vector.broadcast %c2_i32_225 : i32 to vector<32x128xi32>
    %452 = arith.addi %450, %451 : vector<32x128xi32>
    %c2_i32_226 = arith.constant 2 : i32
    %453 = vector.broadcast %c2_i32_226 : i32 to vector<32x128xi32>
    %454 = arith.muli %453, %446 : vector<32x128xi32>
    %c1_i32_227 = arith.constant 1 : i32
    %455 = vector.broadcast %c1_i32_227 : i32 to vector<32x128xi32>
    %456 = arith.subi %454, %455 : vector<32x128xi32>
    %c1_i32_228 = arith.constant 1 : i32
    %457 = vector.broadcast %c1_i32_228 : i32 to vector<32x128xi32>
    %458 = arith.addi %456, %457 : vector<32x128xi32>
    %c0_i32_229 = arith.constant 0 : i32
    %459 = vector.broadcast %c0_i32_229 : i32 to vector<32x128xi32>
    %460 = arith.cmpi sge, %452, %459 : vector<32x128xi32>
    %c8_i32_230 = arith.constant 8 : i32
    %461 = vector.broadcast %c8_i32_230 : i32 to vector<32x128xi32>
    %462 = arith.cmpi slt, %452, %461 : vector<32x128xi32>
    %463 = arith.andi %460, %462 : vector<32x128xi1>
    %c0_i32_231 = arith.constant 0 : i32
    %464 = vector.broadcast %c0_i32_231 : i32 to vector<32x128xi32>
    %465 = arith.cmpi sge, %458, %464 : vector<32x128xi32>
    %466 = arith.andi %463, %465 : vector<32x128xi1>
    %c8_i32_232 = arith.constant 8 : i32
    %467 = vector.broadcast %c8_i32_232 : i32 to vector<32x128xi32>
    %468 = arith.cmpi slt, %458, %467 : vector<32x128xi32>
    %469 = arith.andi %466, %468 : vector<32x128xi1>
    %c64_i32_233 = arith.constant 64 : i32
    %470 = vector.broadcast %c64_i32_233 : i32 to vector<32x128xi32>
    %471 = arith.muli %440, %470 : vector<32x128xi32>
    %c8_i32_234 = arith.constant 8 : i32
    %472 = vector.broadcast %c8_i32_234 : i32 to vector<32x128xi32>
    %473 = arith.muli %452, %472 : vector<32x128xi32>
    %474 = arith.addi %471, %473 : vector<32x128xi32>
    %475 = arith.addi %474, %458 : vector<32x128xi32>
    %476 = arith.cmpi eq, %438, %475 : vector<32x128xi32>
    %477 = arith.andi %469, %476 : vector<32x128xi1>
    %cst_235 = arith.constant 1.000000e+00 : f32
    %cst_236 = arith.constant 0.000000e+00 : f32
    %478 = vector.broadcast %cst_235 : f32 to vector<32x128xf32>
    %479 = vector.broadcast %cst_236 : f32 to vector<32x128xf32>
    %480 = arith.select %477, %478, %479 : vector<32x128xi1>, vector<32x128xf32>
    %481 = arith.truncf %480 : vector<32x128xf32> to vector<32x128xbf16>
    %cst_237 = arith.constant dense<0.000000e+00> : vector<32x256xf32>
    %482 = tpu.matmul %481, %78, %cst_237 {dimension_numbers = #tpu.dot_dimension_numbers<[1], [0], [0], [1], [0, 0, 1, 1], [], []>} : vector<32x128xbf16>, vector<128x256xbf16>, vector<32x256xf32> -> vector<32x256xf32>
    %483 = arith.truncf %482 : vector<32x256xf32> to vector<32x256xbf16>
    %c7_238 = arith.constant 7 : index
    %c0_239 = arith.constant 0 : index
    %c0_240 = arith.constant 0 : index
    %484 = vector.load %arg4[%c7_238, %c0_239, %c0_240] : memref<9x256x128xbf16, #tpu.memory_space<vmem>>, vector<1x256x128xbf16>
    %485 = vector.shape_cast %484 : vector<1x256x128xbf16> to vector<256x128xbf16>
    %cst_241 = arith.constant dense<0.000000e+00> : vector<32x128xf32>
    %486 = tpu.matmul %483, %485, %cst_241 {dimension_numbers = #tpu.dot_dimension_numbers<[1], [0], [0], [1], [0, 0, 1, 1], [], []>} : vector<32x256xbf16>, vector<256x128xbf16>, vector<32x128xf32> -> vector<32x128xf32>
    %487 = arith.addf %436, %486 : vector<32x128xf32>
    %488 = tpu.iota {dimensions = array<i32: 0>} : vector<32x128xi32>
    %489 = tpu.iota {dimensions = array<i32: 1>} : vector<32x128xi32>
    %c4_i32_242 = arith.constant 4 : i32
    %490 = vector.broadcast %c4_i32_242 : i32 to vector<32x128xi32>
    %491 = arith.shrsi %488, %490 : vector<32x128xi32>
    %c15_i32_243 = arith.constant 15 : i32
    %492 = vector.broadcast %c15_i32_243 : i32 to vector<32x128xi32>
    %493 = arith.andi %488, %492 : vector<32x128xi32>
    %c2_i32_244 = arith.constant 2 : i32
    %494 = vector.broadcast %c2_i32_244 : i32 to vector<32x128xi32>
    %495 = arith.shrsi %493, %494 : vector<32x128xi32>
    %c3_i32_245 = arith.constant 3 : i32
    %496 = vector.broadcast %c3_i32_245 : i32 to vector<32x128xi32>
    %497 = arith.andi %493, %496 : vector<32x128xi32>
    %c2_i32_246 = arith.constant 2 : i32
    %498 = vector.broadcast %c2_i32_246 : i32 to vector<32x128xi32>
    %499 = arith.muli %498, %495 : vector<32x128xi32>
    %c1_i32_247 = arith.constant 1 : i32
    %500 = vector.broadcast %c1_i32_247 : i32 to vector<32x128xi32>
    %501 = arith.subi %499, %500 : vector<32x128xi32>
    %c2_i32_248 = arith.constant 2 : i32
    %502 = vector.broadcast %c2_i32_248 : i32 to vector<32x128xi32>
    %503 = arith.addi %501, %502 : vector<32x128xi32>
    %c2_i32_249 = arith.constant 2 : i32
    %504 = vector.broadcast %c2_i32_249 : i32 to vector<32x128xi32>
    %505 = arith.muli %504, %497 : vector<32x128xi32>
    %c1_i32_250 = arith.constant 1 : i32
    %506 = vector.broadcast %c1_i32_250 : i32 to vector<32x128xi32>
    %507 = arith.subi %505, %506 : vector<32x128xi32>
    %c2_i32_251 = arith.constant 2 : i32
    %508 = vector.broadcast %c2_i32_251 : i32 to vector<32x128xi32>
    %509 = arith.addi %507, %508 : vector<32x128xi32>
    %c0_i32_252 = arith.constant 0 : i32
    %510 = vector.broadcast %c0_i32_252 : i32 to vector<32x128xi32>
    %511 = arith.cmpi sge, %503, %510 : vector<32x128xi32>
    %c8_i32_253 = arith.constant 8 : i32
    %512 = vector.broadcast %c8_i32_253 : i32 to vector<32x128xi32>
    %513 = arith.cmpi slt, %503, %512 : vector<32x128xi32>
    %514 = arith.andi %511, %513 : vector<32x128xi1>
    %c0_i32_254 = arith.constant 0 : i32
    %515 = vector.broadcast %c0_i32_254 : i32 to vector<32x128xi32>
    %516 = arith.cmpi sge, %509, %515 : vector<32x128xi32>
    %517 = arith.andi %514, %516 : vector<32x128xi1>
    %c8_i32_255 = arith.constant 8 : i32
    %518 = vector.broadcast %c8_i32_255 : i32 to vector<32x128xi32>
    %519 = arith.cmpi slt, %509, %518 : vector<32x128xi32>
    %520 = arith.andi %517, %519 : vector<32x128xi1>
    %c64_i32_256 = arith.constant 64 : i32
    %521 = vector.broadcast %c64_i32_256 : i32 to vector<32x128xi32>
    %522 = arith.muli %491, %521 : vector<32x128xi32>
    %c8_i32_257 = arith.constant 8 : i32
    %523 = vector.broadcast %c8_i32_257 : i32 to vector<32x128xi32>
    %524 = arith.muli %503, %523 : vector<32x128xi32>
    %525 = arith.addi %522, %524 : vector<32x128xi32>
    %526 = arith.addi %525, %509 : vector<32x128xi32>
    %527 = arith.cmpi eq, %489, %526 : vector<32x128xi32>
    %528 = arith.andi %520, %527 : vector<32x128xi1>
    %cst_258 = arith.constant 1.000000e+00 : f32
    %cst_259 = arith.constant 0.000000e+00 : f32
    %529 = vector.broadcast %cst_258 : f32 to vector<32x128xf32>
    %530 = vector.broadcast %cst_259 : f32 to vector<32x128xf32>
    %531 = arith.select %528, %529, %530 : vector<32x128xi1>, vector<32x128xf32>
    %532 = arith.truncf %531 : vector<32x128xf32> to vector<32x128xbf16>
    %cst_260 = arith.constant dense<0.000000e+00> : vector<32x256xf32>
    %533 = tpu.matmul %532, %78, %cst_260 {dimension_numbers = #tpu.dot_dimension_numbers<[1], [0], [0], [1], [0, 0, 1, 1], [], []>} : vector<32x128xbf16>, vector<128x256xbf16>, vector<32x256xf32> -> vector<32x256xf32>
    %534 = arith.truncf %533 : vector<32x256xf32> to vector<32x256xbf16>
    %c8_261 = arith.constant 8 : index
    %c0_262 = arith.constant 0 : index
    %c0_263 = arith.constant 0 : index
    %535 = vector.load %arg4[%c8_261, %c0_262, %c0_263] : memref<9x256x128xbf16, #tpu.memory_space<vmem>>, vector<1x256x128xbf16>
    %536 = vector.shape_cast %535 : vector<1x256x128xbf16> to vector<256x128xbf16>
    %cst_264 = arith.constant dense<0.000000e+00> : vector<32x128xf32>
    %537 = tpu.matmul %534, %536, %cst_264 {dimension_numbers = #tpu.dot_dimension_numbers<[1], [0], [0], [1], [0, 0, 1, 1], [], []>} : vector<32x256xbf16>, vector<256x128xbf16>, vector<32x128xf32> -> vector<32x128xf32>
    %538 = arith.addf %487, %537 : vector<32x128xf32>
    %c0_265 = arith.constant 0 : index
    %c0_266 = arith.constant 0 : index
    %539 = vector.load %arg5[%c0_265, %c0_266] : memref<1x128xf32, #tpu.memory_space<vmem>>, vector<1x128xf32>
    %540 = vector.broadcast %539 : vector<1x128xf32> to vector<32x128xf32>
    %541 = arith.addf %538, %540 : vector<32x128xf32>
    %cst_267 = arith.constant 0.000000e+00 : f32
    %542 = vector.broadcast %cst_267 : f32 to vector<32x128xf32>
    %543 = arith.maximumf %541, %542 : vector<32x128xf32>
    %544 = arith.truncf %543 : vector<32x128xf32> to vector<32x128xbf16>
    %cst_268 = arith.constant 0.000000e+00 : f32
    %545 = vector.broadcast %cst_268 : f32 to vector<8x128xf32>
    %546 = tpu.iota {dimensions = array<i32: 0>} : vector<8x32xi32>
    %547 = tpu.iota {dimensions = array<i32: 1>} : vector<8x32xi32>
    %c2_i32_269 = arith.constant 2 : i32
    %548 = vector.broadcast %c2_i32_269 : i32 to vector<8x32xi32>
    %549 = arith.shrsi %546, %548 : vector<8x32xi32>
    %c3_i32_270 = arith.constant 3 : i32
    %550 = vector.broadcast %c3_i32_270 : i32 to vector<8x32xi32>
    %551 = arith.andi %546, %550 : vector<8x32xi32>
    %c1_i32_271 = arith.constant 1 : i32
    %552 = vector.broadcast %c1_i32_271 : i32 to vector<8x32xi32>
    %553 = arith.shrsi %551, %552 : vector<8x32xi32>
    %c1_i32_272 = arith.constant 1 : i32
    %554 = vector.broadcast %c1_i32_272 : i32 to vector<8x32xi32>
    %555 = arith.andi %551, %554 : vector<8x32xi32>
    %c2_i32_273 = arith.constant 2 : i32
    %556 = vector.broadcast %c2_i32_273 : i32 to vector<8x32xi32>
    %557 = arith.muli %556, %553 : vector<8x32xi32>
    %c1_i32_274 = arith.constant 1 : i32
    %558 = vector.broadcast %c1_i32_274 : i32 to vector<8x32xi32>
    %559 = arith.subi %557, %558 : vector<8x32xi32>
    %c0_i32_275 = arith.constant 0 : i32
    %560 = vector.broadcast %c0_i32_275 : i32 to vector<8x32xi32>
    %561 = arith.addi %559, %560 : vector<8x32xi32>
    %c2_i32_276 = arith.constant 2 : i32
    %562 = vector.broadcast %c2_i32_276 : i32 to vector<8x32xi32>
    %563 = arith.muli %562, %555 : vector<8x32xi32>
    %c1_i32_277 = arith.constant 1 : i32
    %564 = vector.broadcast %c1_i32_277 : i32 to vector<8x32xi32>
    %565 = arith.subi %563, %564 : vector<8x32xi32>
    %c0_i32_278 = arith.constant 0 : i32
    %566 = vector.broadcast %c0_i32_278 : i32 to vector<8x32xi32>
    %567 = arith.addi %565, %566 : vector<8x32xi32>
    %c0_i32_279 = arith.constant 0 : i32
    %568 = vector.broadcast %c0_i32_279 : i32 to vector<8x32xi32>
    %569 = arith.cmpi sge, %561, %568 : vector<8x32xi32>
    %c4_i32_280 = arith.constant 4 : i32
    %570 = vector.broadcast %c4_i32_280 : i32 to vector<8x32xi32>
    %571 = arith.cmpi slt, %561, %570 : vector<8x32xi32>
    %572 = arith.andi %569, %571 : vector<8x32xi1>
    %c0_i32_281 = arith.constant 0 : i32
    %573 = vector.broadcast %c0_i32_281 : i32 to vector<8x32xi32>
    %574 = arith.cmpi sge, %567, %573 : vector<8x32xi32>
    %575 = arith.andi %572, %574 : vector<8x32xi1>
    %c4_i32_282 = arith.constant 4 : i32
    %576 = vector.broadcast %c4_i32_282 : i32 to vector<8x32xi32>
    %577 = arith.cmpi slt, %567, %576 : vector<8x32xi32>
    %578 = arith.andi %575, %577 : vector<8x32xi1>
    %c16_i32 = arith.constant 16 : i32
    %579 = vector.broadcast %c16_i32 : i32 to vector<8x32xi32>
    %580 = arith.muli %549, %579 : vector<8x32xi32>
    %c4_i32_283 = arith.constant 4 : i32
    %581 = vector.broadcast %c4_i32_283 : i32 to vector<8x32xi32>
    %582 = arith.muli %561, %581 : vector<8x32xi32>
    %583 = arith.addi %580, %582 : vector<8x32xi32>
    %584 = arith.addi %583, %567 : vector<8x32xi32>
    %585 = arith.cmpi eq, %547, %584 : vector<8x32xi32>
    %586 = arith.andi %578, %585 : vector<8x32xi1>
    %cst_284 = arith.constant 1.000000e+00 : f32
    %cst_285 = arith.constant 0.000000e+00 : f32
    %587 = vector.broadcast %cst_284 : f32 to vector<8x32xf32>
    %588 = vector.broadcast %cst_285 : f32 to vector<8x32xf32>
    %589 = arith.select %586, %587, %588 : vector<8x32xi1>, vector<8x32xf32>
    %590 = arith.truncf %589 : vector<8x32xf32> to vector<8x32xbf16>
    %cst_286 = arith.constant dense<0.000000e+00> : vector<8x128xf32>
    %591 = tpu.matmul %590, %544, %cst_286 {dimension_numbers = #tpu.dot_dimension_numbers<[1], [0], [0], [1], [0, 0, 1, 1], [], []>} : vector<8x32xbf16>, vector<32x128xbf16>, vector<8x128xf32> -> vector<8x128xf32>
    %592 = arith.truncf %591 : vector<8x128xf32> to vector<8x128xbf16>
    %c0_287 = arith.constant 0 : index
    %c0_288 = arith.constant 0 : index
    %c0_289 = arith.constant 0 : index
    %593 = vector.load %arg6[%c0_287, %c0_288, %c0_289] : memref<9x128x128xbf16, #tpu.memory_space<vmem>>, vector<1x128x128xbf16>
    %594 = vector.shape_cast %593 : vector<1x128x128xbf16> to vector<128x128xbf16>
    %cst_290 = arith.constant dense<0.000000e+00> : vector<8x128xf32>
    %595 = tpu.matmul %592, %594, %cst_290 {dimension_numbers = #tpu.dot_dimension_numbers<[1], [0], [0], [1], [0, 0, 1, 1], [], []>} : vector<8x128xbf16>, vector<128x128xbf16>, vector<8x128xf32> -> vector<8x128xf32>
    %596 = arith.addf %545, %595 : vector<8x128xf32>
    %597 = tpu.iota {dimensions = array<i32: 0>} : vector<8x32xi32>
    %598 = tpu.iota {dimensions = array<i32: 1>} : vector<8x32xi32>
    %c2_i32_291 = arith.constant 2 : i32
    %599 = vector.broadcast %c2_i32_291 : i32 to vector<8x32xi32>
    %600 = arith.shrsi %597, %599 : vector<8x32xi32>
    %c3_i32_292 = arith.constant 3 : i32
    %601 = vector.broadcast %c3_i32_292 : i32 to vector<8x32xi32>
    %602 = arith.andi %597, %601 : vector<8x32xi32>
    %c1_i32_293 = arith.constant 1 : i32
    %603 = vector.broadcast %c1_i32_293 : i32 to vector<8x32xi32>
    %604 = arith.shrsi %602, %603 : vector<8x32xi32>
    %c1_i32_294 = arith.constant 1 : i32
    %605 = vector.broadcast %c1_i32_294 : i32 to vector<8x32xi32>
    %606 = arith.andi %602, %605 : vector<8x32xi32>
    %c2_i32_295 = arith.constant 2 : i32
    %607 = vector.broadcast %c2_i32_295 : i32 to vector<8x32xi32>
    %608 = arith.muli %607, %604 : vector<8x32xi32>
    %c1_i32_296 = arith.constant 1 : i32
    %609 = vector.broadcast %c1_i32_296 : i32 to vector<8x32xi32>
    %610 = arith.subi %608, %609 : vector<8x32xi32>
    %c0_i32_297 = arith.constant 0 : i32
    %611 = vector.broadcast %c0_i32_297 : i32 to vector<8x32xi32>
    %612 = arith.addi %610, %611 : vector<8x32xi32>
    %c2_i32_298 = arith.constant 2 : i32
    %613 = vector.broadcast %c2_i32_298 : i32 to vector<8x32xi32>
    %614 = arith.muli %613, %606 : vector<8x32xi32>
    %c1_i32_299 = arith.constant 1 : i32
    %615 = vector.broadcast %c1_i32_299 : i32 to vector<8x32xi32>
    %616 = arith.subi %614, %615 : vector<8x32xi32>
    %c1_i32_300 = arith.constant 1 : i32
    %617 = vector.broadcast %c1_i32_300 : i32 to vector<8x32xi32>
    %618 = arith.addi %616, %617 : vector<8x32xi32>
    %c0_i32_301 = arith.constant 0 : i32
    %619 = vector.broadcast %c0_i32_301 : i32 to vector<8x32xi32>
    %620 = arith.cmpi sge, %612, %619 : vector<8x32xi32>
    %c4_i32_302 = arith.constant 4 : i32
    %621 = vector.broadcast %c4_i32_302 : i32 to vector<8x32xi32>
    %622 = arith.cmpi slt, %612, %621 : vector<8x32xi32>
    %623 = arith.andi %620, %622 : vector<8x32xi1>
    %c0_i32_303 = arith.constant 0 : i32
    %624 = vector.broadcast %c0_i32_303 : i32 to vector<8x32xi32>
    %625 = arith.cmpi sge, %618, %624 : vector<8x32xi32>
    %626 = arith.andi %623, %625 : vector<8x32xi1>
    %c4_i32_304 = arith.constant 4 : i32
    %627 = vector.broadcast %c4_i32_304 : i32 to vector<8x32xi32>
    %628 = arith.cmpi slt, %618, %627 : vector<8x32xi32>
    %629 = arith.andi %626, %628 : vector<8x32xi1>
    %c16_i32_305 = arith.constant 16 : i32
    %630 = vector.broadcast %c16_i32_305 : i32 to vector<8x32xi32>
    %631 = arith.muli %600, %630 : vector<8x32xi32>
    %c4_i32_306 = arith.constant 4 : i32
    %632 = vector.broadcast %c4_i32_306 : i32 to vector<8x32xi32>
    %633 = arith.muli %612, %632 : vector<8x32xi32>
    %634 = arith.addi %631, %633 : vector<8x32xi32>
    %635 = arith.addi %634, %618 : vector<8x32xi32>
    %636 = arith.cmpi eq, %598, %635 : vector<8x32xi32>
    %637 = arith.andi %629, %636 : vector<8x32xi1>
    %cst_307 = arith.constant 1.000000e+00 : f32
    %cst_308 = arith.constant 0.000000e+00 : f32
    %638 = vector.broadcast %cst_307 : f32 to vector<8x32xf32>
    %639 = vector.broadcast %cst_308 : f32 to vector<8x32xf32>
    %640 = arith.select %637, %638, %639 : vector<8x32xi1>, vector<8x32xf32>
    %641 = arith.truncf %640 : vector<8x32xf32> to vector<8x32xbf16>
    %cst_309 = arith.constant dense<0.000000e+00> : vector<8x128xf32>
    %642 = tpu.matmul %641, %544, %cst_309 {dimension_numbers = #tpu.dot_dimension_numbers<[1], [0], [0], [1], [0, 0, 1, 1], [], []>} : vector<8x32xbf16>, vector<32x128xbf16>, vector<8x128xf32> -> vector<8x128xf32>
    %643 = arith.truncf %642 : vector<8x128xf32> to vector<8x128xbf16>
    %c1_310 = arith.constant 1 : index
    %c0_311 = arith.constant 0 : index
    %c0_312 = arith.constant 0 : index
    %644 = vector.load %arg6[%c1_310, %c0_311, %c0_312] : memref<9x128x128xbf16, #tpu.memory_space<vmem>>, vector<1x128x128xbf16>
    %645 = vector.shape_cast %644 : vector<1x128x128xbf16> to vector<128x128xbf16>
    %cst_313 = arith.constant dense<0.000000e+00> : vector<8x128xf32>
    %646 = tpu.matmul %643, %645, %cst_313 {dimension_numbers = #tpu.dot_dimension_numbers<[1], [0], [0], [1], [0, 0, 1, 1], [], []>} : vector<8x128xbf16>, vector<128x128xbf16>, vector<8x128xf32> -> vector<8x128xf32>
    %647 = arith.addf %596, %646 : vector<8x128xf32>
    %648 = tpu.iota {dimensions = array<i32: 0>} : vector<8x32xi32>
    %649 = tpu.iota {dimensions = array<i32: 1>} : vector<8x32xi32>
    %c2_i32_314 = arith.constant 2 : i32
    %650 = vector.broadcast %c2_i32_314 : i32 to vector<8x32xi32>
    %651 = arith.shrsi %648, %650 : vector<8x32xi32>
    %c3_i32_315 = arith.constant 3 : i32
    %652 = vector.broadcast %c3_i32_315 : i32 to vector<8x32xi32>
    %653 = arith.andi %648, %652 : vector<8x32xi32>
    %c1_i32_316 = arith.constant 1 : i32
    %654 = vector.broadcast %c1_i32_316 : i32 to vector<8x32xi32>
    %655 = arith.shrsi %653, %654 : vector<8x32xi32>
    %c1_i32_317 = arith.constant 1 : i32
    %656 = vector.broadcast %c1_i32_317 : i32 to vector<8x32xi32>
    %657 = arith.andi %653, %656 : vector<8x32xi32>
    %c2_i32_318 = arith.constant 2 : i32
    %658 = vector.broadcast %c2_i32_318 : i32 to vector<8x32xi32>
    %659 = arith.muli %658, %655 : vector<8x32xi32>
    %c1_i32_319 = arith.constant 1 : i32
    %660 = vector.broadcast %c1_i32_319 : i32 to vector<8x32xi32>
    %661 = arith.subi %659, %660 : vector<8x32xi32>
    %c0_i32_320 = arith.constant 0 : i32
    %662 = vector.broadcast %c0_i32_320 : i32 to vector<8x32xi32>
    %663 = arith.addi %661, %662 : vector<8x32xi32>
    %c2_i32_321 = arith.constant 2 : i32
    %664 = vector.broadcast %c2_i32_321 : i32 to vector<8x32xi32>
    %665 = arith.muli %664, %657 : vector<8x32xi32>
    %c1_i32_322 = arith.constant 1 : i32
    %666 = vector.broadcast %c1_i32_322 : i32 to vector<8x32xi32>
    %667 = arith.subi %665, %666 : vector<8x32xi32>
    %c2_i32_323 = arith.constant 2 : i32
    %668 = vector.broadcast %c2_i32_323 : i32 to vector<8x32xi32>
    %669 = arith.addi %667, %668 : vector<8x32xi32>
    %c0_i32_324 = arith.constant 0 : i32
    %670 = vector.broadcast %c0_i32_324 : i32 to vector<8x32xi32>
    %671 = arith.cmpi sge, %663, %670 : vector<8x32xi32>
    %c4_i32_325 = arith.constant 4 : i32
    %672 = vector.broadcast %c4_i32_325 : i32 to vector<8x32xi32>
    %673 = arith.cmpi slt, %663, %672 : vector<8x32xi32>
    %674 = arith.andi %671, %673 : vector<8x32xi1>
    %c0_i32_326 = arith.constant 0 : i32
    %675 = vector.broadcast %c0_i32_326 : i32 to vector<8x32xi32>
    %676 = arith.cmpi sge, %669, %675 : vector<8x32xi32>
    %677 = arith.andi %674, %676 : vector<8x32xi1>
    %c4_i32_327 = arith.constant 4 : i32
    %678 = vector.broadcast %c4_i32_327 : i32 to vector<8x32xi32>
    %679 = arith.cmpi slt, %669, %678 : vector<8x32xi32>
    %680 = arith.andi %677, %679 : vector<8x32xi1>
    %c16_i32_328 = arith.constant 16 : i32
    %681 = vector.broadcast %c16_i32_328 : i32 to vector<8x32xi32>
    %682 = arith.muli %651, %681 : vector<8x32xi32>
    %c4_i32_329 = arith.constant 4 : i32
    %683 = vector.broadcast %c4_i32_329 : i32 to vector<8x32xi32>
    %684 = arith.muli %663, %683 : vector<8x32xi32>
    %685 = arith.addi %682, %684 : vector<8x32xi32>
    %686 = arith.addi %685, %669 : vector<8x32xi32>
    %687 = arith.cmpi eq, %649, %686 : vector<8x32xi32>
    %688 = arith.andi %680, %687 : vector<8x32xi1>
    %cst_330 = arith.constant 1.000000e+00 : f32
    %cst_331 = arith.constant 0.000000e+00 : f32
    %689 = vector.broadcast %cst_330 : f32 to vector<8x32xf32>
    %690 = vector.broadcast %cst_331 : f32 to vector<8x32xf32>
    %691 = arith.select %688, %689, %690 : vector<8x32xi1>, vector<8x32xf32>
    %692 = arith.truncf %691 : vector<8x32xf32> to vector<8x32xbf16>
    %cst_332 = arith.constant dense<0.000000e+00> : vector<8x128xf32>
    %693 = tpu.matmul %692, %544, %cst_332 {dimension_numbers = #tpu.dot_dimension_numbers<[1], [0], [0], [1], [0, 0, 1, 1], [], []>} : vector<8x32xbf16>, vector<32x128xbf16>, vector<8x128xf32> -> vector<8x128xf32>
    %694 = arith.truncf %693 : vector<8x128xf32> to vector<8x128xbf16>
    %c2_333 = arith.constant 2 : index
    %c0_334 = arith.constant 0 : index
    %c0_335 = arith.constant 0 : index
    %695 = vector.load %arg6[%c2_333, %c0_334, %c0_335] : memref<9x128x128xbf16, #tpu.memory_space<vmem>>, vector<1x128x128xbf16>
    %696 = vector.shape_cast %695 : vector<1x128x128xbf16> to vector<128x128xbf16>
    %cst_336 = arith.constant dense<0.000000e+00> : vector<8x128xf32>
    %697 = tpu.matmul %694, %696, %cst_336 {dimension_numbers = #tpu.dot_dimension_numbers<[1], [0], [0], [1], [0, 0, 1, 1], [], []>} : vector<8x128xbf16>, vector<128x128xbf16>, vector<8x128xf32> -> vector<8x128xf32>
    %698 = arith.addf %647, %697 : vector<8x128xf32>
    %699 = tpu.iota {dimensions = array<i32: 0>} : vector<8x32xi32>
    %700 = tpu.iota {dimensions = array<i32: 1>} : vector<8x32xi32>
    %c2_i32_337 = arith.constant 2 : i32
    %701 = vector.broadcast %c2_i32_337 : i32 to vector<8x32xi32>
    %702 = arith.shrsi %699, %701 : vector<8x32xi32>
    %c3_i32_338 = arith.constant 3 : i32
    %703 = vector.broadcast %c3_i32_338 : i32 to vector<8x32xi32>
    %704 = arith.andi %699, %703 : vector<8x32xi32>
    %c1_i32_339 = arith.constant 1 : i32
    %705 = vector.broadcast %c1_i32_339 : i32 to vector<8x32xi32>
    %706 = arith.shrsi %704, %705 : vector<8x32xi32>
    %c1_i32_340 = arith.constant 1 : i32
    %707 = vector.broadcast %c1_i32_340 : i32 to vector<8x32xi32>
    %708 = arith.andi %704, %707 : vector<8x32xi32>
    %c2_i32_341 = arith.constant 2 : i32
    %709 = vector.broadcast %c2_i32_341 : i32 to vector<8x32xi32>
    %710 = arith.muli %709, %706 : vector<8x32xi32>
    %c1_i32_342 = arith.constant 1 : i32
    %711 = vector.broadcast %c1_i32_342 : i32 to vector<8x32xi32>
    %712 = arith.subi %710, %711 : vector<8x32xi32>
    %c1_i32_343 = arith.constant 1 : i32
    %713 = vector.broadcast %c1_i32_343 : i32 to vector<8x32xi32>
    %714 = arith.addi %712, %713 : vector<8x32xi32>
    %c2_i32_344 = arith.constant 2 : i32
    %715 = vector.broadcast %c2_i32_344 : i32 to vector<8x32xi32>
    %716 = arith.muli %715, %708 : vector<8x32xi32>
    %c1_i32_345 = arith.constant 1 : i32
    %717 = vector.broadcast %c1_i32_345 : i32 to vector<8x32xi32>
    %718 = arith.subi %716, %717 : vector<8x32xi32>
    %c0_i32_346 = arith.constant 0 : i32
    %719 = vector.broadcast %c0_i32_346 : i32 to vector<8x32xi32>
    %720 = arith.addi %718, %719 : vector<8x32xi32>
    %c0_i32_347 = arith.constant 0 : i32
    %721 = vector.broadcast %c0_i32_347 : i32 to vector<8x32xi32>
    %722 = arith.cmpi sge, %714, %721 : vector<8x32xi32>
    %c4_i32_348 = arith.constant 4 : i32
    %723 = vector.broadcast %c4_i32_348 : i32 to vector<8x32xi32>
    %724 = arith.cmpi slt, %714, %723 : vector<8x32xi32>
    %725 = arith.andi %722, %724 : vector<8x32xi1>
    %c0_i32_349 = arith.constant 0 : i32
    %726 = vector.broadcast %c0_i32_349 : i32 to vector<8x32xi32>
    %727 = arith.cmpi sge, %720, %726 : vector<8x32xi32>
    %728 = arith.andi %725, %727 : vector<8x32xi1>
    %c4_i32_350 = arith.constant 4 : i32
    %729 = vector.broadcast %c4_i32_350 : i32 to vector<8x32xi32>
    %730 = arith.cmpi slt, %720, %729 : vector<8x32xi32>
    %731 = arith.andi %728, %730 : vector<8x32xi1>
    %c16_i32_351 = arith.constant 16 : i32
    %732 = vector.broadcast %c16_i32_351 : i32 to vector<8x32xi32>
    %733 = arith.muli %702, %732 : vector<8x32xi32>
    %c4_i32_352 = arith.constant 4 : i32
    %734 = vector.broadcast %c4_i32_352 : i32 to vector<8x32xi32>
    %735 = arith.muli %714, %734 : vector<8x32xi32>
    %736 = arith.addi %733, %735 : vector<8x32xi32>
    %737 = arith.addi %736, %720 : vector<8x32xi32>
    %738 = arith.cmpi eq, %700, %737 : vector<8x32xi32>
    %739 = arith.andi %731, %738 : vector<8x32xi1>
    %cst_353 = arith.constant 1.000000e+00 : f32
    %cst_354 = arith.constant 0.000000e+00 : f32
    %740 = vector.broadcast %cst_353 : f32 to vector<8x32xf32>
    %741 = vector.broadcast %cst_354 : f32 to vector<8x32xf32>
    %742 = arith.select %739, %740, %741 : vector<8x32xi1>, vector<8x32xf32>
    %743 = arith.truncf %742 : vector<8x32xf32> to vector<8x32xbf16>
    %cst_355 = arith.constant dense<0.000000e+00> : vector<8x128xf32>
    %744 = tpu.matmul %743, %544, %cst_355 {dimension_numbers = #tpu.dot_dimension_numbers<[1], [0], [0], [1], [0, 0, 1, 1], [], []>} : vector<8x32xbf16>, vector<32x128xbf16>, vector<8x128xf32> -> vector<8x128xf32>
    %745 = arith.truncf %744 : vector<8x128xf32> to vector<8x128xbf16>
    %c3_356 = arith.constant 3 : index
    %c0_357 = arith.constant 0 : index
    %c0_358 = arith.constant 0 : index
    %746 = vector.load %arg6[%c3_356, %c0_357, %c0_358] : memref<9x128x128xbf16, #tpu.memory_space<vmem>>, vector<1x128x128xbf16>
    %747 = vector.shape_cast %746 : vector<1x128x128xbf16> to vector<128x128xbf16>
    %cst_359 = arith.constant dense<0.000000e+00> : vector<8x128xf32>
    %748 = tpu.matmul %745, %747, %cst_359 {dimension_numbers = #tpu.dot_dimension_numbers<[1], [0], [0], [1], [0, 0, 1, 1], [], []>} : vector<8x128xbf16>, vector<128x128xbf16>, vector<8x128xf32> -> vector<8x128xf32>
    %749 = arith.addf %698, %748 : vector<8x128xf32>
    %750 = tpu.iota {dimensions = array<i32: 0>} : vector<8x32xi32>
    %751 = tpu.iota {dimensions = array<i32: 1>} : vector<8x32xi32>
    %c2_i32_360 = arith.constant 2 : i32
    %752 = vector.broadcast %c2_i32_360 : i32 to vector<8x32xi32>
    %753 = arith.shrsi %750, %752 : vector<8x32xi32>
    %c3_i32_361 = arith.constant 3 : i32
    %754 = vector.broadcast %c3_i32_361 : i32 to vector<8x32xi32>
    %755 = arith.andi %750, %754 : vector<8x32xi32>
    %c1_i32_362 = arith.constant 1 : i32
    %756 = vector.broadcast %c1_i32_362 : i32 to vector<8x32xi32>
    %757 = arith.shrsi %755, %756 : vector<8x32xi32>
    %c1_i32_363 = arith.constant 1 : i32
    %758 = vector.broadcast %c1_i32_363 : i32 to vector<8x32xi32>
    %759 = arith.andi %755, %758 : vector<8x32xi32>
    %c2_i32_364 = arith.constant 2 : i32
    %760 = vector.broadcast %c2_i32_364 : i32 to vector<8x32xi32>
    %761 = arith.muli %760, %757 : vector<8x32xi32>
    %c1_i32_365 = arith.constant 1 : i32
    %762 = vector.broadcast %c1_i32_365 : i32 to vector<8x32xi32>
    %763 = arith.subi %761, %762 : vector<8x32xi32>
    %c1_i32_366 = arith.constant 1 : i32
    %764 = vector.broadcast %c1_i32_366 : i32 to vector<8x32xi32>
    %765 = arith.addi %763, %764 : vector<8x32xi32>
    %c2_i32_367 = arith.constant 2 : i32
    %766 = vector.broadcast %c2_i32_367 : i32 to vector<8x32xi32>
    %767 = arith.muli %766, %759 : vector<8x32xi32>
    %c1_i32_368 = arith.constant 1 : i32
    %768 = vector.broadcast %c1_i32_368 : i32 to vector<8x32xi32>
    %769 = arith.subi %767, %768 : vector<8x32xi32>
    %c1_i32_369 = arith.constant 1 : i32
    %770 = vector.broadcast %c1_i32_369 : i32 to vector<8x32xi32>
    %771 = arith.addi %769, %770 : vector<8x32xi32>
    %c0_i32_370 = arith.constant 0 : i32
    %772 = vector.broadcast %c0_i32_370 : i32 to vector<8x32xi32>
    %773 = arith.cmpi sge, %765, %772 : vector<8x32xi32>
    %c4_i32_371 = arith.constant 4 : i32
    %774 = vector.broadcast %c4_i32_371 : i32 to vector<8x32xi32>
    %775 = arith.cmpi slt, %765, %774 : vector<8x32xi32>
    %776 = arith.andi %773, %775 : vector<8x32xi1>
    %c0_i32_372 = arith.constant 0 : i32
    %777 = vector.broadcast %c0_i32_372 : i32 to vector<8x32xi32>
    %778 = arith.cmpi sge, %771, %777 : vector<8x32xi32>
    %779 = arith.andi %776, %778 : vector<8x32xi1>
    %c4_i32_373 = arith.constant 4 : i32
    %780 = vector.broadcast %c4_i32_373 : i32 to vector<8x32xi32>
    %781 = arith.cmpi slt, %771, %780 : vector<8x32xi32>
    %782 = arith.andi %779, %781 : vector<8x32xi1>
    %c16_i32_374 = arith.constant 16 : i32
    %783 = vector.broadcast %c16_i32_374 : i32 to vector<8x32xi32>
    %784 = arith.muli %753, %783 : vector<8x32xi32>
    %c4_i32_375 = arith.constant 4 : i32
    %785 = vector.broadcast %c4_i32_375 : i32 to vector<8x32xi32>
    %786 = arith.muli %765, %785 : vector<8x32xi32>
    %787 = arith.addi %784, %786 : vector<8x32xi32>
    %788 = arith.addi %787, %771 : vector<8x32xi32>
    %789 = arith.cmpi eq, %751, %788 : vector<8x32xi32>
    %790 = arith.andi %782, %789 : vector<8x32xi1>
    %cst_376 = arith.constant 1.000000e+00 : f32
    %cst_377 = arith.constant 0.000000e+00 : f32
    %791 = vector.broadcast %cst_376 : f32 to vector<8x32xf32>
    %792 = vector.broadcast %cst_377 : f32 to vector<8x32xf32>
    %793 = arith.select %790, %791, %792 : vector<8x32xi1>, vector<8x32xf32>
    %794 = arith.truncf %793 : vector<8x32xf32> to vector<8x32xbf16>
    %cst_378 = arith.constant dense<0.000000e+00> : vector<8x128xf32>
    %795 = tpu.matmul %794, %544, %cst_378 {dimension_numbers = #tpu.dot_dimension_numbers<[1], [0], [0], [1], [0, 0, 1, 1], [], []>} : vector<8x32xbf16>, vector<32x128xbf16>, vector<8x128xf32> -> vector<8x128xf32>
    %796 = arith.truncf %795 : vector<8x128xf32> to vector<8x128xbf16>
    %c4_379 = arith.constant 4 : index
    %c0_380 = arith.constant 0 : index
    %c0_381 = arith.constant 0 : index
    %797 = vector.load %arg6[%c4_379, %c0_380, %c0_381] : memref<9x128x128xbf16, #tpu.memory_space<vmem>>, vector<1x128x128xbf16>
    %798 = vector.shape_cast %797 : vector<1x128x128xbf16> to vector<128x128xbf16>
    %cst_382 = arith.constant dense<0.000000e+00> : vector<8x128xf32>
    %799 = tpu.matmul %796, %798, %cst_382 {dimension_numbers = #tpu.dot_dimension_numbers<[1], [0], [0], [1], [0, 0, 1, 1], [], []>} : vector<8x128xbf16>, vector<128x128xbf16>, vector<8x128xf32> -> vector<8x128xf32>
    %800 = arith.addf %749, %799 : vector<8x128xf32>
    %801 = tpu.iota {dimensions = array<i32: 0>} : vector<8x32xi32>
    %802 = tpu.iota {dimensions = array<i32: 1>} : vector<8x32xi32>
    %c2_i32_383 = arith.constant 2 : i32
    %803 = vector.broadcast %c2_i32_383 : i32 to vector<8x32xi32>
    %804 = arith.shrsi %801, %803 : vector<8x32xi32>
    %c3_i32_384 = arith.constant 3 : i32
    %805 = vector.broadcast %c3_i32_384 : i32 to vector<8x32xi32>
    %806 = arith.andi %801, %805 : vector<8x32xi32>
    %c1_i32_385 = arith.constant 1 : i32
    %807 = vector.broadcast %c1_i32_385 : i32 to vector<8x32xi32>
    %808 = arith.shrsi %806, %807 : vector<8x32xi32>
    %c1_i32_386 = arith.constant 1 : i32
    %809 = vector.broadcast %c1_i32_386 : i32 to vector<8x32xi32>
    %810 = arith.andi %806, %809 : vector<8x32xi32>
    %c2_i32_387 = arith.constant 2 : i32
    %811 = vector.broadcast %c2_i32_387 : i32 to vector<8x32xi32>
    %812 = arith.muli %811, %808 : vector<8x32xi32>
    %c1_i32_388 = arith.constant 1 : i32
    %813 = vector.broadcast %c1_i32_388 : i32 to vector<8x32xi32>
    %814 = arith.subi %812, %813 : vector<8x32xi32>
    %c1_i32_389 = arith.constant 1 : i32
    %815 = vector.broadcast %c1_i32_389 : i32 to vector<8x32xi32>
    %816 = arith.addi %814, %815 : vector<8x32xi32>
    %c2_i32_390 = arith.constant 2 : i32
    %817 = vector.broadcast %c2_i32_390 : i32 to vector<8x32xi32>
    %818 = arith.muli %817, %810 : vector<8x32xi32>
    %c1_i32_391 = arith.constant 1 : i32
    %819 = vector.broadcast %c1_i32_391 : i32 to vector<8x32xi32>
    %820 = arith.subi %818, %819 : vector<8x32xi32>
    %c2_i32_392 = arith.constant 2 : i32
    %821 = vector.broadcast %c2_i32_392 : i32 to vector<8x32xi32>
    %822 = arith.addi %820, %821 : vector<8x32xi32>
    %c0_i32_393 = arith.constant 0 : i32
    %823 = vector.broadcast %c0_i32_393 : i32 to vector<8x32xi32>
    %824 = arith.cmpi sge, %816, %823 : vector<8x32xi32>
    %c4_i32_394 = arith.constant 4 : i32
    %825 = vector.broadcast %c4_i32_394 : i32 to vector<8x32xi32>
    %826 = arith.cmpi slt, %816, %825 : vector<8x32xi32>
    %827 = arith.andi %824, %826 : vector<8x32xi1>
    %c0_i32_395 = arith.constant 0 : i32
    %828 = vector.broadcast %c0_i32_395 : i32 to vector<8x32xi32>
    %829 = arith.cmpi sge, %822, %828 : vector<8x32xi32>
    %830 = arith.andi %827, %829 : vector<8x32xi1>
    %c4_i32_396 = arith.constant 4 : i32
    %831 = vector.broadcast %c4_i32_396 : i32 to vector<8x32xi32>
    %832 = arith.cmpi slt, %822, %831 : vector<8x32xi32>
    %833 = arith.andi %830, %832 : vector<8x32xi1>
    %c16_i32_397 = arith.constant 16 : i32
    %834 = vector.broadcast %c16_i32_397 : i32 to vector<8x32xi32>
    %835 = arith.muli %804, %834 : vector<8x32xi32>
    %c4_i32_398 = arith.constant 4 : i32
    %836 = vector.broadcast %c4_i32_398 : i32 to vector<8x32xi32>
    %837 = arith.muli %816, %836 : vector<8x32xi32>
    %838 = arith.addi %835, %837 : vector<8x32xi32>
    %839 = arith.addi %838, %822 : vector<8x32xi32>
    %840 = arith.cmpi eq, %802, %839 : vector<8x32xi32>
    %841 = arith.andi %833, %840 : vector<8x32xi1>
    %cst_399 = arith.constant 1.000000e+00 : f32
    %cst_400 = arith.constant 0.000000e+00 : f32
    %842 = vector.broadcast %cst_399 : f32 to vector<8x32xf32>
    %843 = vector.broadcast %cst_400 : f32 to vector<8x32xf32>
    %844 = arith.select %841, %842, %843 : vector<8x32xi1>, vector<8x32xf32>
    %845 = arith.truncf %844 : vector<8x32xf32> to vector<8x32xbf16>
    %cst_401 = arith.constant dense<0.000000e+00> : vector<8x128xf32>
    %846 = tpu.matmul %845, %544, %cst_401 {dimension_numbers = #tpu.dot_dimension_numbers<[1], [0], [0], [1], [0, 0, 1, 1], [], []>} : vector<8x32xbf16>, vector<32x128xbf16>, vector<8x128xf32> -> vector<8x128xf32>
    %847 = arith.truncf %846 : vector<8x128xf32> to vector<8x128xbf16>
    %c5_402 = arith.constant 5 : index
    %c0_403 = arith.constant 0 : index
    %c0_404 = arith.constant 0 : index
    %848 = vector.load %arg6[%c5_402, %c0_403, %c0_404] : memref<9x128x128xbf16, #tpu.memory_space<vmem>>, vector<1x128x128xbf16>
    %849 = vector.shape_cast %848 : vector<1x128x128xbf16> to vector<128x128xbf16>
    %cst_405 = arith.constant dense<0.000000e+00> : vector<8x128xf32>
    %850 = tpu.matmul %847, %849, %cst_405 {dimension_numbers = #tpu.dot_dimension_numbers<[1], [0], [0], [1], [0, 0, 1, 1], [], []>} : vector<8x128xbf16>, vector<128x128xbf16>, vector<8x128xf32> -> vector<8x128xf32>
    %851 = arith.addf %800, %850 : vector<8x128xf32>
    %852 = tpu.iota {dimensions = array<i32: 0>} : vector<8x32xi32>
    %853 = tpu.iota {dimensions = array<i32: 1>} : vector<8x32xi32>
    %c2_i32_406 = arith.constant 2 : i32
    %854 = vector.broadcast %c2_i32_406 : i32 to vector<8x32xi32>
    %855 = arith.shrsi %852, %854 : vector<8x32xi32>
    %c3_i32_407 = arith.constant 3 : i32
    %856 = vector.broadcast %c3_i32_407 : i32 to vector<8x32xi32>
    %857 = arith.andi %852, %856 : vector<8x32xi32>
    %c1_i32_408 = arith.constant 1 : i32
    %858 = vector.broadcast %c1_i32_408 : i32 to vector<8x32xi32>
    %859 = arith.shrsi %857, %858 : vector<8x32xi32>
    %c1_i32_409 = arith.constant 1 : i32
    %860 = vector.broadcast %c1_i32_409 : i32 to vector<8x32xi32>
    %861 = arith.andi %857, %860 : vector<8x32xi32>
    %c2_i32_410 = arith.constant 2 : i32
    %862 = vector.broadcast %c2_i32_410 : i32 to vector<8x32xi32>
    %863 = arith.muli %862, %859 : vector<8x32xi32>
    %c1_i32_411 = arith.constant 1 : i32
    %864 = vector.broadcast %c1_i32_411 : i32 to vector<8x32xi32>
    %865 = arith.subi %863, %864 : vector<8x32xi32>
    %c2_i32_412 = arith.constant 2 : i32
    %866 = vector.broadcast %c2_i32_412 : i32 to vector<8x32xi32>
    %867 = arith.addi %865, %866 : vector<8x32xi32>
    %c2_i32_413 = arith.constant 2 : i32
    %868 = vector.broadcast %c2_i32_413 : i32 to vector<8x32xi32>
    %869 = arith.muli %868, %861 : vector<8x32xi32>
    %c1_i32_414 = arith.constant 1 : i32
    %870 = vector.broadcast %c1_i32_414 : i32 to vector<8x32xi32>
    %871 = arith.subi %869, %870 : vector<8x32xi32>
    %c0_i32_415 = arith.constant 0 : i32
    %872 = vector.broadcast %c0_i32_415 : i32 to vector<8x32xi32>
    %873 = arith.addi %871, %872 : vector<8x32xi32>
    %c0_i32_416 = arith.constant 0 : i32
    %874 = vector.broadcast %c0_i32_416 : i32 to vector<8x32xi32>
    %875 = arith.cmpi sge, %867, %874 : vector<8x32xi32>
    %c4_i32_417 = arith.constant 4 : i32
    %876 = vector.broadcast %c4_i32_417 : i32 to vector<8x32xi32>
    %877 = arith.cmpi slt, %867, %876 : vector<8x32xi32>
    %878 = arith.andi %875, %877 : vector<8x32xi1>
    %c0_i32_418 = arith.constant 0 : i32
    %879 = vector.broadcast %c0_i32_418 : i32 to vector<8x32xi32>
    %880 = arith.cmpi sge, %873, %879 : vector<8x32xi32>
    %881 = arith.andi %878, %880 : vector<8x32xi1>
    %c4_i32_419 = arith.constant 4 : i32
    %882 = vector.broadcast %c4_i32_419 : i32 to vector<8x32xi32>
    %883 = arith.cmpi slt, %873, %882 : vector<8x32xi32>
    %884 = arith.andi %881, %883 : vector<8x32xi1>
    %c16_i32_420 = arith.constant 16 : i32
    %885 = vector.broadcast %c16_i32_420 : i32 to vector<8x32xi32>
    %886 = arith.muli %855, %885 : vector<8x32xi32>
    %c4_i32_421 = arith.constant 4 : i32
    %887 = vector.broadcast %c4_i32_421 : i32 to vector<8x32xi32>
    %888 = arith.muli %867, %887 : vector<8x32xi32>
    %889 = arith.addi %886, %888 : vector<8x32xi32>
    %890 = arith.addi %889, %873 : vector<8x32xi32>
    %891 = arith.cmpi eq, %853, %890 : vector<8x32xi32>
    %892 = arith.andi %884, %891 : vector<8x32xi1>
    %cst_422 = arith.constant 1.000000e+00 : f32
    %cst_423 = arith.constant 0.000000e+00 : f32
    %893 = vector.broadcast %cst_422 : f32 to vector<8x32xf32>
    %894 = vector.broadcast %cst_423 : f32 to vector<8x32xf32>
    %895 = arith.select %892, %893, %894 : vector<8x32xi1>, vector<8x32xf32>
    %896 = arith.truncf %895 : vector<8x32xf32> to vector<8x32xbf16>
    %cst_424 = arith.constant dense<0.000000e+00> : vector<8x128xf32>
    %897 = tpu.matmul %896, %544, %cst_424 {dimension_numbers = #tpu.dot_dimension_numbers<[1], [0], [0], [1], [0, 0, 1, 1], [], []>} : vector<8x32xbf16>, vector<32x128xbf16>, vector<8x128xf32> -> vector<8x128xf32>
    %898 = arith.truncf %897 : vector<8x128xf32> to vector<8x128xbf16>
    %c6_425 = arith.constant 6 : index
    %c0_426 = arith.constant 0 : index
    %c0_427 = arith.constant 0 : index
    %899 = vector.load %arg6[%c6_425, %c0_426, %c0_427] : memref<9x128x128xbf16, #tpu.memory_space<vmem>>, vector<1x128x128xbf16>
    %900 = vector.shape_cast %899 : vector<1x128x128xbf16> to vector<128x128xbf16>
    %cst_428 = arith.constant dense<0.000000e+00> : vector<8x128xf32>
    %901 = tpu.matmul %898, %900, %cst_428 {dimension_numbers = #tpu.dot_dimension_numbers<[1], [0], [0], [1], [0, 0, 1, 1], [], []>} : vector<8x128xbf16>, vector<128x128xbf16>, vector<8x128xf32> -> vector<8x128xf32>
    %902 = arith.addf %851, %901 : vector<8x128xf32>
    %903 = tpu.iota {dimensions = array<i32: 0>} : vector<8x32xi32>
    %904 = tpu.iota {dimensions = array<i32: 1>} : vector<8x32xi32>
    %c2_i32_429 = arith.constant 2 : i32
    %905 = vector.broadcast %c2_i32_429 : i32 to vector<8x32xi32>
    %906 = arith.shrsi %903, %905 : vector<8x32xi32>
    %c3_i32_430 = arith.constant 3 : i32
    %907 = vector.broadcast %c3_i32_430 : i32 to vector<8x32xi32>
    %908 = arith.andi %903, %907 : vector<8x32xi32>
    %c1_i32_431 = arith.constant 1 : i32
    %909 = vector.broadcast %c1_i32_431 : i32 to vector<8x32xi32>
    %910 = arith.shrsi %908, %909 : vector<8x32xi32>
    %c1_i32_432 = arith.constant 1 : i32
    %911 = vector.broadcast %c1_i32_432 : i32 to vector<8x32xi32>
    %912 = arith.andi %908, %911 : vector<8x32xi32>
    %c2_i32_433 = arith.constant 2 : i32
    %913 = vector.broadcast %c2_i32_433 : i32 to vector<8x32xi32>
    %914 = arith.muli %913, %910 : vector<8x32xi32>
    %c1_i32_434 = arith.constant 1 : i32
    %915 = vector.broadcast %c1_i32_434 : i32 to vector<8x32xi32>
    %916 = arith.subi %914, %915 : vector<8x32xi32>
    %c2_i32_435 = arith.constant 2 : i32
    %917 = vector.broadcast %c2_i32_435 : i32 to vector<8x32xi32>
    %918 = arith.addi %916, %917 : vector<8x32xi32>
    %c2_i32_436 = arith.constant 2 : i32
    %919 = vector.broadcast %c2_i32_436 : i32 to vector<8x32xi32>
    %920 = arith.muli %919, %912 : vector<8x32xi32>
    %c1_i32_437 = arith.constant 1 : i32
    %921 = vector.broadcast %c1_i32_437 : i32 to vector<8x32xi32>
    %922 = arith.subi %920, %921 : vector<8x32xi32>
    %c1_i32_438 = arith.constant 1 : i32
    %923 = vector.broadcast %c1_i32_438 : i32 to vector<8x32xi32>
    %924 = arith.addi %922, %923 : vector<8x32xi32>
    %c0_i32_439 = arith.constant 0 : i32
    %925 = vector.broadcast %c0_i32_439 : i32 to vector<8x32xi32>
    %926 = arith.cmpi sge, %918, %925 : vector<8x32xi32>
    %c4_i32_440 = arith.constant 4 : i32
    %927 = vector.broadcast %c4_i32_440 : i32 to vector<8x32xi32>
    %928 = arith.cmpi slt, %918, %927 : vector<8x32xi32>
    %929 = arith.andi %926, %928 : vector<8x32xi1>
    %c0_i32_441 = arith.constant 0 : i32
    %930 = vector.broadcast %c0_i32_441 : i32 to vector<8x32xi32>
    %931 = arith.cmpi sge, %924, %930 : vector<8x32xi32>
    %932 = arith.andi %929, %931 : vector<8x32xi1>
    %c4_i32_442 = arith.constant 4 : i32
    %933 = vector.broadcast %c4_i32_442 : i32 to vector<8x32xi32>
    %934 = arith.cmpi slt, %924, %933 : vector<8x32xi32>
    %935 = arith.andi %932, %934 : vector<8x32xi1>
    %c16_i32_443 = arith.constant 16 : i32
    %936 = vector.broadcast %c16_i32_443 : i32 to vector<8x32xi32>
    %937 = arith.muli %906, %936 : vector<8x32xi32>
    %c4_i32_444 = arith.constant 4 : i32
    %938 = vector.broadcast %c4_i32_444 : i32 to vector<8x32xi32>
    %939 = arith.muli %918, %938 : vector<8x32xi32>
    %940 = arith.addi %937, %939 : vector<8x32xi32>
    %941 = arith.addi %940, %924 : vector<8x32xi32>
    %942 = arith.cmpi eq, %904, %941 : vector<8x32xi32>
    %943 = arith.andi %935, %942 : vector<8x32xi1>
    %cst_445 = arith.constant 1.000000e+00 : f32
    %cst_446 = arith.constant 0.000000e+00 : f32
    %944 = vector.broadcast %cst_445 : f32 to vector<8x32xf32>
    %945 = vector.broadcast %cst_446 : f32 to vector<8x32xf32>
    %946 = arith.select %943, %944, %945 : vector<8x32xi1>, vector<8x32xf32>
    %947 = arith.truncf %946 : vector<8x32xf32> to vector<8x32xbf16>
    %cst_447 = arith.constant dense<0.000000e+00> : vector<8x128xf32>
    %948 = tpu.matmul %947, %544, %cst_447 {dimension_numbers = #tpu.dot_dimension_numbers<[1], [0], [0], [1], [0, 0, 1, 1], [], []>} : vector<8x32xbf16>, vector<32x128xbf16>, vector<8x128xf32> -> vector<8x128xf32>
    %949 = arith.truncf %948 : vector<8x128xf32> to vector<8x128xbf16>
    %c7_448 = arith.constant 7 : index
    %c0_449 = arith.constant 0 : index
    %c0_450 = arith.constant 0 : index
    %950 = vector.load %arg6[%c7_448, %c0_449, %c0_450] : memref<9x128x128xbf16, #tpu.memory_space<vmem>>, vector<1x128x128xbf16>
    %951 = vector.shape_cast %950 : vector<1x128x128xbf16> to vector<128x128xbf16>
    %cst_451 = arith.constant dense<0.000000e+00> : vector<8x128xf32>
    %952 = tpu.matmul %949, %951, %cst_451 {dimension_numbers = #tpu.dot_dimension_numbers<[1], [0], [0], [1], [0, 0, 1, 1], [], []>} : vector<8x128xbf16>, vector<128x128xbf16>, vector<8x128xf32> -> vector<8x128xf32>
    %953 = arith.addf %902, %952 : vector<8x128xf32>
    %954 = tpu.iota {dimensions = array<i32: 0>} : vector<8x32xi32>
    %955 = tpu.iota {dimensions = array<i32: 1>} : vector<8x32xi32>
    %c2_i32_452 = arith.constant 2 : i32
    %956 = vector.broadcast %c2_i32_452 : i32 to vector<8x32xi32>
    %957 = arith.shrsi %954, %956 : vector<8x32xi32>
    %c3_i32_453 = arith.constant 3 : i32
    %958 = vector.broadcast %c3_i32_453 : i32 to vector<8x32xi32>
    %959 = arith.andi %954, %958 : vector<8x32xi32>
    %c1_i32_454 = arith.constant 1 : i32
    %960 = vector.broadcast %c1_i32_454 : i32 to vector<8x32xi32>
    %961 = arith.shrsi %959, %960 : vector<8x32xi32>
    %c1_i32_455 = arith.constant 1 : i32
    %962 = vector.broadcast %c1_i32_455 : i32 to vector<8x32xi32>
    %963 = arith.andi %959, %962 : vector<8x32xi32>
    %c2_i32_456 = arith.constant 2 : i32
    %964 = vector.broadcast %c2_i32_456 : i32 to vector<8x32xi32>
    %965 = arith.muli %964, %961 : vector<8x32xi32>
    %c1_i32_457 = arith.constant 1 : i32
    %966 = vector.broadcast %c1_i32_457 : i32 to vector<8x32xi32>
    %967 = arith.subi %965, %966 : vector<8x32xi32>
    %c2_i32_458 = arith.constant 2 : i32
    %968 = vector.broadcast %c2_i32_458 : i32 to vector<8x32xi32>
    %969 = arith.addi %967, %968 : vector<8x32xi32>
    %c2_i32_459 = arith.constant 2 : i32
    %970 = vector.broadcast %c2_i32_459 : i32 to vector<8x32xi32>
    %971 = arith.muli %970, %963 : vector<8x32xi32>
    %c1_i32_460 = arith.constant 1 : i32
    %972 = vector.broadcast %c1_i32_460 : i32 to vector<8x32xi32>
    %973 = arith.subi %971, %972 : vector<8x32xi32>
    %c2_i32_461 = arith.constant 2 : i32
    %974 = vector.broadcast %c2_i32_461 : i32 to vector<8x32xi32>
    %975 = arith.addi %973, %974 : vector<8x32xi32>
    %c0_i32_462 = arith.constant 0 : i32
    %976 = vector.broadcast %c0_i32_462 : i32 to vector<8x32xi32>
    %977 = arith.cmpi sge, %969, %976 : vector<8x32xi32>
    %c4_i32_463 = arith.constant 4 : i32
    %978 = vector.broadcast %c4_i32_463 : i32 to vector<8x32xi32>
    %979 = arith.cmpi slt, %969, %978 : vector<8x32xi32>
    %980 = arith.andi %977, %979 : vector<8x32xi1>
    %c0_i32_464 = arith.constant 0 : i32
    %981 = vector.broadcast %c0_i32_464 : i32 to vector<8x32xi32>
    %982 = arith.cmpi sge, %975, %981 : vector<8x32xi32>
    %983 = arith.andi %980, %982 : vector<8x32xi1>
    %c4_i32_465 = arith.constant 4 : i32
    %984 = vector.broadcast %c4_i32_465 : i32 to vector<8x32xi32>
    %985 = arith.cmpi slt, %975, %984 : vector<8x32xi32>
    %986 = arith.andi %983, %985 : vector<8x32xi1>
    %c16_i32_466 = arith.constant 16 : i32
    %987 = vector.broadcast %c16_i32_466 : i32 to vector<8x32xi32>
    %988 = arith.muli %957, %987 : vector<8x32xi32>
    %c4_i32_467 = arith.constant 4 : i32
    %989 = vector.broadcast %c4_i32_467 : i32 to vector<8x32xi32>
    %990 = arith.muli %969, %989 : vector<8x32xi32>
    %991 = arith.addi %988, %990 : vector<8x32xi32>
    %992 = arith.addi %991, %975 : vector<8x32xi32>
    %993 = arith.cmpi eq, %955, %992 : vector<8x32xi32>
    %994 = arith.andi %986, %993 : vector<8x32xi1>
    %cst_468 = arith.constant 1.000000e+00 : f32
    %cst_469 = arith.constant 0.000000e+00 : f32
    %995 = vector.broadcast %cst_468 : f32 to vector<8x32xf32>
    %996 = vector.broadcast %cst_469 : f32 to vector<8x32xf32>
    %997 = arith.select %994, %995, %996 : vector<8x32xi1>, vector<8x32xf32>
    %998 = arith.truncf %997 : vector<8x32xf32> to vector<8x32xbf16>
    %cst_470 = arith.constant dense<0.000000e+00> : vector<8x128xf32>
    %999 = tpu.matmul %998, %544, %cst_470 {dimension_numbers = #tpu.dot_dimension_numbers<[1], [0], [0], [1], [0, 0, 1, 1], [], []>} : vector<8x32xbf16>, vector<32x128xbf16>, vector<8x128xf32> -> vector<8x128xf32>
    %1000 = arith.truncf %999 : vector<8x128xf32> to vector<8x128xbf16>
    %c8_471 = arith.constant 8 : index
    %c0_472 = arith.constant 0 : index
    %c0_473 = arith.constant 0 : index
    %1001 = vector.load %arg6[%c8_471, %c0_472, %c0_473] : memref<9x128x128xbf16, #tpu.memory_space<vmem>>, vector<1x128x128xbf16>
    %1002 = vector.shape_cast %1001 : vector<1x128x128xbf16> to vector<128x128xbf16>
    %cst_474 = arith.constant dense<0.000000e+00> : vector<8x128xf32>
    %1003 = tpu.matmul %1000, %1002, %cst_474 {dimension_numbers = #tpu.dot_dimension_numbers<[1], [0], [0], [1], [0, 0, 1, 1], [], []>} : vector<8x128xbf16>, vector<128x128xbf16>, vector<8x128xf32> -> vector<8x128xf32>
    %1004 = arith.addf %953, %1003 : vector<8x128xf32>
    %c0_475 = arith.constant 0 : index
    %c0_476 = arith.constant 0 : index
    %1005 = vector.load %arg7[%c0_475, %c0_476] : memref<1x128xf32, #tpu.memory_space<vmem>>, vector<1x128xf32>
    %1006 = vector.broadcast %1005 : vector<1x128xf32> to vector<8x128xf32>
    %1007 = arith.addf %1004, %1006 : vector<8x128xf32>
    %cst_477 = arith.constant 0.000000e+00 : f32
    %1008 = vector.broadcast %cst_477 : f32 to vector<8x128xf32>
    %1009 = arith.maximumf %1007, %1008 : vector<8x128xf32>
    %1010 = tpu.iota {dimensions = array<i32: 0>} : vector<2x8xi32>
    %1011 = tpu.iota {dimensions = array<i32: 1>} : vector<2x8xi32>
    %c2_i32_478 = arith.constant 2 : i32
    %1012 = vector.broadcast %c2_i32_478 : i32 to vector<2x8xi32>
    %1013 = arith.shrsi %1011, %1012 : vector<2x8xi32>
    %1014 = arith.cmpi eq, %1013, %1010 : vector<2x8xi32>
    %cst_479 = arith.constant 2.500000e-01 : f32
    %cst_480 = arith.constant 0.000000e+00 : f32
    %1015 = vector.broadcast %cst_479 : f32 to vector<2x8xf32>
    %1016 = vector.broadcast %cst_480 : f32 to vector<2x8xf32>
    %1017 = arith.select %1014, %1015, %1016 : vector<2x8xi1>, vector<2x8xf32>
    %cst_481 = arith.constant dense<0.000000e+00> : vector<2x128xf32>
    %1018 = tpu.matmul %1017, %1009, %cst_481 {dimension_numbers = #tpu.dot_dimension_numbers<[1], [0], [0], [1], [0, 0, 1, 1], [], []>} : vector<2x8xf32>, vector<8x128xf32>, vector<2x128xf32> -> vector<2x128xf32>
    %c0_482 = arith.constant 0 : index
    %c0_483 = arith.constant 0 : index
    %1019 = vector.load %arg11[%c0_482, %c0_483] : memref<2x128xf32, #tpu.memory_space<vmem>>, vector<2x128xf32>
    tpu.vector_store %arg11[%c0_482, %c0_483], %1018 {strides = array<i32>} : memref<2x128xf32, #tpu.memory_space<vmem>>, vector<2x128xf32>,
    %c0_484 = arith.constant 0 : index
    %c0_485 = arith.constant 0 : index
    %1020 = vector.load %arg8[%c0_484, %c0_485] : memref<128x2xf32, #tpu.memory_space<vmem>>, vector<128x2xf32>
    %cst_486 = arith.constant dense<0.000000e+00> : vector<2x2xf32>
    %1021 = tpu.matmul %1018, %1020, %cst_486 {dimension_numbers = #tpu.dot_dimension_numbers<[1], [0], [0], [1], [0, 0, 1, 1], [], []>} : vector<2x128xf32>, vector<128x2xf32>, vector<2x2xf32> -> vector<2x2xf32>
    %c0_487 = arith.constant 0 : index
    %c0_488 = arith.constant 0 : index
    %1022 = vector.load %arg9[%c0_487, %c0_488] : memref<1x2xf32, #tpu.memory_space<vmem>>, vector<1x2xf32>
    %1023 = vector.broadcast %1022 : vector<1x2xf32> to vector<2x2xf32>
    %1024 = arith.addf %1021, %1023 : vector<2x2xf32>
    %c0_489 = arith.constant 0 : index
    %c0_490 = arith.constant 0 : index
    %1025 = vector.load %arg10[%c0_489, %c0_490] : memref<2x2xf32, #tpu.memory_space<vmem>>, vector<2x2xf32>
    tpu.vector_store %arg10[%c0_489, %c0_490], %1024 {strides = array<i32>} : memref<2x2xf32, #tpu.memory_space<vmem>>, vector<2x2xf32>,
    return
  }
  func.func @transform_0(%arg0: i32) -> (i32, i32, i32, i32) {
    %c0_i32 = arith.constant 0 : i32
    %c0_i32_0 = arith.constant 0 : i32
    %c0_i32_1 = arith.constant 0 : i32
    %c0_i32_2 = arith.constant 0 : i32
    %c0_i32_3 = arith.constant 0 : i32
    return %c0_i32, %c0_i32_0, %c0_i32_1, %c0_i32_2 : i32, i32, i32, i32
  }
  func.func @transform_1(%arg0: i32) -> (i32, i32, i32) {
    %c0_i32 = arith.constant 0 : i32
    %c0_i32_0 = arith.constant 0 : i32
    %c0_i32_1 = arith.constant 0 : i32
    %c0_i32_2 = arith.constant 0 : i32
    return %c0_i32, %c0_i32_0, %c0_i32_1 : i32, i32, i32
  }
  func.func @transform_2(%arg0: i32) -> (i32, i32) {
    %c0_i32 = arith.constant 0 : i32
    %c0_i32_0 = arith.constant 0 : i32
    %c0_i32_1 = arith.constant 0 : i32
    return %c0_i32, %c0_i32_0 : i32, i32
  }
  func.func @transform_3(%arg0: i32) -> (i32, i32, i32) {
    %c0_i32 = arith.constant 0 : i32
    %c0_i32_0 = arith.constant 0 : i32
    %c0_i32_1 = arith.constant 0 : i32
    %c0_i32_2 = arith.constant 0 : i32
    return %c0_i32, %c0_i32_0, %c0_i32_1 : i32, i32, i32
  }
  func.func @transform_4(%arg0: i32) -> (i32, i32) {
    %c0_i32 = arith.constant 0 : i32
    %c0_i32_0 = arith.constant 0 : i32
    %c0_i32_1 = arith.constant 0 : i32
    return %c0_i32, %c0_i32_0 : i32, i32
  }
  func.func @transform_5(%arg0: i32) -> (i32, i32, i32) {
    %c0_i32 = arith.constant 0 : i32
    %c0_i32_0 = arith.constant 0 : i32
    %c0_i32_1 = arith.constant 0 : i32
    %c0_i32_2 = arith.constant 0 : i32
    return %c0_i32, %c0_i32_0, %c0_i32_1 : i32, i32, i32
  }
  func.func @transform_6(%arg0: i32) -> (i32, i32) {
    %c0_i32 = arith.constant 0 : i32
    %c0_i32_0 = arith.constant 0 : i32
    %c0_i32_1 = arith.constant 0 : i32
    return %c0_i32, %c0_i32_0 : i32, i32
  }
  func.func @transform_7(%arg0: i32) -> (i32, i32) {
    %c0_i32 = arith.constant 0 : i32
    %c0_i32_0 = arith.constant 0 : i32
    %c0_i32_1 = arith.constant 0 : i32
    return %c0_i32, %c0_i32_0 : i32, i32
  }
  func.func @transform_8(%arg0: i32) -> (i32, i32) {
    %c0_i32 = arith.constant 0 : i32
    %c0_i32_0 = arith.constant 0 : i32
    %c0_i32_1 = arith.constant 0 : i32
    return %c0_i32, %c0_i32_0 : i32, i32
  }
  func.func @transform_9(%arg0: i32) -> (i32, i32) {
    %c0_i32 = arith.constant 0 : i32
    %c0_i32_0 = arith.constant 0 : i32
    %c0_i32_1 = arith.constant 0 : i32
    return %c0_i32, %c0_i32_0 : i32, i32
  }
  func.func @transform_10(%arg0: i32) -> (i32, i32) {
    %c0_i32 = arith.constant 0 : i32
    %c0_i32_0 = arith.constant 0 : i32
    %c0_i32_1 = arith.constant 0 : i32
    return %c0_i32, %c0_i32_0 : i32, i32
  }
}

</mosaic_0001>

<llo_original>
// kernel: netD_forward.1
$region0: #{netD_forward.1}
  #allocation0 [shape = 'u32[]', space=smem, size = 0x4, offset = 0x4, fixed_abs, tag = 'smem constant byte address 0x4 - core index']
  #allocation1 [shape = 'u32[144,128]{1,0:T(1,128)}', space=vmem, size = 0x12000, scoped, tag = 'internal scratch']
  %s0 = inlined_call_operand.vmem [shape: bf16[12,9,8,512], index: 0, kind: input, shape index: {}]
  %s1 = inlined_call_operand.vmem [shape: bf16[9,512,256], index: 1, kind: input, shape index: {}]
  %s2 = inlined_call_operand.vmem [shape: f32[1,256], index: 2, kind: input, shape index: {}]
  %s3 = inlined_call_operand.vmem [shape: bf16[9,256,128], index: 3, kind: input, shape index: {}]
  %s4 = inlined_call_operand.vmem [shape: f32[1,128], index: 4, kind: input, shape index: {}]
  %s5 = inlined_call_operand.vmem [shape: bf16[9,128,128], index: 5, kind: input, shape index: {}]
  %s6 = inlined_call_operand.vmem [shape: f32[1,128], index: 6, kind: input, shape index: {}]
  %s7 = inlined_call_operand.vmem [shape: f32[128,2], index: 7, kind: input, shape index: {}]
  %s8 = inlined_call_operand.vmem [shape: f32[1,2], index: 8, kind: input, shape index: {}]
  %s9 = inlined_call_operand.hbm [shape: f32[2,2], index: 9, kind: output, shape index: {0}]
  %s10 = inlined_call_operand.hbm [shape: f32[2,128], index: 10, kind: output, shape index: {1}]
  %11 = xla_tuple %s9, %s10
  %s12 = sld [smem:[#allocation0]]
  $region54: #{netD_forward.1} parent=0
    _
  %s14 = ssub.s32 1, %s12
  %s15 = scalar_select 0, %s14, %s12
  $region1: #{netD_forward.1} parent=0
    #allocation2 [shape = 'u8[1024]{0}', space=vmem, size = 0x400, scoped, tag = 'output window, operand 0, single buffered']
    #allocation3 [shape = 's32[1]{0}', space=sflag, size = 0x4, scoped, tag = 'scoped memory for netD_forward.1']
    #allocation4 [shape = 'u8[1024]{0}', space=vmem, size = 0x400, scoped, tag = 'output window, operand 1, single buffered']
    #allocation5 [shape = 's32[1]{0}', space=sflag, size = 0x4, scoped, tag = 'scoped memory for netD_forward.1']
    %16 = vsyncpa [#allocation3], 0
    %17 = vsyncpa [#allocation5], 0
    // Predicated region
    $region2: #{netD_forward.1} parent=1 // pred_check
      _
    $region3: #{netD_forward.1} parent=1 // pred_check_branch
      %19 = sbr.rel (0) target = $region5
    $region4: #{netD_forward.1} parent=1 // pred_region
      _
    $region5: #{netD_forward.1} parent=1 // pred_fallthru
      _
    // Predicated region
    $region6: #{netD_forward.1} parent=1 // pred_check
      _
    $region7: #{netD_forward.1} parent=1 // pred_check_branch
      %21 = sbr.rel (0) target = $region9
    $region8: #{netD_forward.1} parent=1 // pred_region
      _
    $region9: #{netD_forward.1} parent=1 // pred_fallthru
      _
    // Predicated region
    $region10: #{netD_forward.1} parent=1 // pred_check
      _
    $region11: #{netD_forward.1} parent=1 // pred_check_branch
      %23 = sbr.rel (0) target = $region13
    $region12: #{netD_forward.1} parent=1 // pred_region
      _
    $region13: #{netD_forward.1} parent=1 // pred_fallthru
      _
    // Predicated region
    $region14: #{netD_forward.1} parent=1 // pred_check
      _
    $region15: #{netD_forward.1} parent=1 // pred_check_branch
      %25 = sbr.rel (0) target = $region17
    $region16: #{netD_forward.1} parent=1 // pred_region
      _
    $region17: #{netD_forward.1} parent=1 // pred_fallthru
      _
    // Predicated region
    $region18: #{netD_forward.1} parent=1 // pred_check
      _
    $region19: #{netD_forward.1} parent=1 // pred_check_branch
      %27 = sbr.rel (0) target = $region21
    $region20: #{netD_forward.1} parent=1 // pred_region
      _
    $region21: #{netD_forward.1} parent=1 // pred_fallthru
      _
    // Predicated region
    $region22: #{netD_forward.1} parent=1 // pred_check
      _
    $region23: #{netD_forward.1} parent=1 // pred_check_branch
      %29 = sbr.rel (0) target = $region25
    $region24: #{netD_forward.1} parent=1 // pred_region
      _
    $region25: #{netD_forward.1} parent=1 // pred_fallthru
      _
    // Predicated region
    $region26: #{netD_forward.1} parent=1 // pred_check
      _
    $region27: #{netD_forward.1} parent=1 // pred_check_branch
      %31 = sbr.rel (0) target = $region29
    $region28: #{netD_forward.1} parent=1 // pred_region
      _
    $region29: #{netD_forward.1} parent=1 // pred_fallthru
      _
    // Predicated region
    $region30: #{netD_forward.1} parent=1 // pred_check
      _
    $region31: #{netD_forward.1} parent=1 // pred_check_branch
      %33 = sbr.rel (0) target = $region33
    $region32: #{netD_forward.1} parent=1 // pred_region
      _
    $region33: #{netD_forward.1} parent=1 // pred_fallthru
      _
    // Predicated region
    $region34: #{netD_forward.1} parent=1 // pred_check
      _
    $region35: #{netD_forward.1} parent=1 // pred_check_branch
      %35 = sbr.rel (0) target = $region37
    $region36: #{netD_forward.1} parent=1 // pred_region
      _
    $region37: #{netD_forward.1} parent=1 // pred_fallthru
      _
    %v37 = vld [vmem:[%s0] sm:$0xff]
    %v38 = vld [vmem:[%s0 + $0x8] sm:$0xff]
    %v39 = vld [vmem:[%s0 + $0x10] sm:$0xff]
    %v40 = vld [vmem:[%s0 + $0x18] sm:$0xff]
    %v41 = vld [vmem:[%s0 + $0x20] sm:$0xff]
    %v42 = vld [vmem:[%s0 + $0x28] sm:$0xff]
    %v43 = vld [vmem:[%s0 + $0x30] sm:$0xff]
    %v44 = vld [vmem:[%s0 + $0x38] sm:$0xff]
    %v45 = vld [vmem:[%s0 + $0x40] sm:$0xff]
    %v46 = vld [vmem:[%s0 + $0x48] sm:$0xff]
    %v47 = vld [vmem:[%s0 + $0x50] sm:$0xff]
    %v48 = vld [vmem:[%s0 + $0x58] sm:$0xff]
    %v49 = vld [vmem:[%s0 + $0x60] sm:$0xff]
    %v50 = vld [vmem:[%s0 + $0x68] sm:$0xff]
    %v51 = vld [vmem:[%s0 + $0x70] sm:$0xff]
    %v52 = vld [vmem:[%s0 + $0x78] sm:$0xff]
    %v53 = vld [vmem:[%s0 + $0x90] sm:$0xff]
    %v54 = vld [vmem:[%s0 + $0x98] sm:$0xff]
    %v55 = vld [vmem:[%s0 + $0xa0] sm:$0xff]
    %v56 = vld [vmem:[%s0 + $0xa8] sm:$0xff]
    %v57 = vld [vmem:[%s0 + $0xb0] sm:$0xff]
    %v58 = vld [vmem:[%s0 + $0xb8] sm:$0xff]
    %v59 = vld [vmem:[%s0 + $0xc0] sm:$0xff]
    %v60 = vld [vmem:[%s0 + $0xc8] sm:$0xff]
    %v61 = vld [vmem:[%s0 + $0xd0] sm:$0xff]
    %v62 = vld [vmem:[%s0 + $0xd8] sm:$0xff]
    %v63 = vld [vmem:[%s0 + $0xe0] sm:$0xff]
    %v64 = vld [vmem:[%s0 + $0xe8] sm:$0xff]
    %v65 = vld [vmem:[%s0 + $0xf0] sm:$0xff]
    %v66 = vld [vmem:[%s0 + $0xf8] sm:$0xff]
    %v67 = vld [vmem:[%s0 + $0x100] sm:$0xff]
    %v68 = vld [vmem:[%s0 + $0x108] sm:$0xff]
    %v69 = vunpack.c.l.bf16 %v37
    %v70 = vunpack.c.h.bf16 %v37
    %v71 = vunpack.c.l.bf16 %v38
    %v72 = vunpack.c.h.bf16 %v38
    %v73 = vunpack.c.l.bf16 %v39
    %v74 = vunpack.c.h.bf16 %v39
    %v75 = vunpack.c.l.bf16 %v40
    %v76 = vunpack.c.h.bf16 %v40
    %v77 = vunpack.c.l.bf16 %v41
    %v78 = vunpack.c.h.bf16 %v41
    %v79 = vunpack.c.l.bf16 %v42
    %v80 = vunpack.c.h.bf16 %v42
    %v81 = vunpack.c.l.bf16 %v43
    %v82 = vunpack.c.h.bf16 %v43
    %v83 = vunpack.c.l.bf16 %v44
    %v84 = vunpack.c.h.bf16 %v44
    %v85 = vunpack.c.l.bf16 %v45
    %v86 = vunpack.c.h.bf16 %v45
    %v87 = vunpack.c.l.bf16 %v46
    %v88 = vunpack.c.h.bf16 %v46
    %v89 = vunpack.c.l.bf16 %v47
    %v90 = vunpack.c.h.bf16 %v47
    %v91 = vunpack.c.l.bf16 %v48
    %v92 = vunpack.c.h.bf16 %v48
    %v93 = vunpack.c.l.bf16 %v49
    %v94 = vunpack.c.h.bf16 %v49
    %v95 = vunpack.c.l.bf16 %v50
    %v96 = vunpack.c.h.bf16 %v50
    %v97 = vunpack.c.l.bf16 %v51
    %v98 = vunpack.c.h.bf16 %v51
    %v99 = vunpack.c.l.bf16 %v52
    %v100 = vunpack.c.h.bf16 %v52
    %v101 = vunpack.c.l.bf16 %v53
    %v102 = vunpack.c.h.bf16 %v53
    %v103 = vunpack.c.l.bf16 %v54
    %v104 = vunpack.c.h.bf16 %v54
    %v105 = vunpack.c.l.bf16 %v55
    %v106 = vunpack.c.h.bf16 %v55
    %v107 = vunpack.c.l.bf16 %v56
    %v108 = vunpack.c.h.bf16 %v56
    %v109 = vunpack.c.l.bf16 %v57
    %v110 = vunpack.c.h.bf16 %v57
    %v111 = vunpack.c.l.bf16 %v58
    %v112 = vunpack.c.h.bf16 %v58
    %v113 = vunpack.c.l.bf16 %v59
    %v114 = vunpack.c.h.bf16 %v59
    %v115 = vunpack.c.l.bf16 %v60
    %v116 = vunpack.c.h.bf16 %v60
    %v117 = vunpack.c.l.bf16 %v61
    %v118 = vunpack.c.h.bf16 %v61
    %v119 = vunpack.c.l.bf16 %v62
    %v120 = vunpack.c.h.bf16 %v62
    %v121 = vunpack.c.l.bf16 %v63
    %v122 = vunpack.c.h.bf16 %v63
    %v123 = vunpack.c.l.bf16 %v64
    %v124 = vunpack.c.h.bf16 %v64
    %v125 = vunpack.c.l.bf16 %v65
    %v126 = vunpack.c.h.bf16 %v65
    %v127 = vunpack.c.l.bf16 %v66
    %v128 = vunpack.c.h.bf16 %v66
    %v129 = vunpack.c.l.bf16 %v67
    %v130 = vunpack.c.h.bf16 %v67
    %v131 = vunpack.c.l.bf16 %v68
    %v132 = vunpack.c.h.bf16 %v68
    %v133 = vpack.c.bf16 %v73, %v69
    %v134 = vpack.c.bf16 %v74, %v70
    %v135 = vpack.c.bf16 %v75, %v71
    %v136 = vpack.c.bf16 %v76, %v72
    %v137 = vpack.c.bf16 %v81, %v77
    %v138 = vpack.c.bf16 %v82, %v78
    %v139 = vpack.c.bf16 %v83, %v79
    %v140 = vpack.c.bf16 %v84, %v80
    %v141 = vpack.c.bf16 %v89, %v85
    %v142 = vpack.c.bf16 %v90, %v86
    %v143 = vpack.c.bf16 %v91, %v87
    %v144 = vpack.c.bf16 %v92, %v88
    %v145 = vpack.c.bf16 %v97, %v93
    %v146 = vpack.c.bf16 %v98, %v94
    %v147 = vpack.c.bf16 %v99, %v95
    %v148 = vpack.c.bf16 %v100, %v96
    %v149 = vpack.c.bf16 %v105, %v101
    %v150 = vpack.c.bf16 %v106, %v102
    %v151 = vpack.c.bf16 %v107, %v103
    %v152 = vpack.c.bf16 %v108, %v104
    %v153 = vpack.c.bf16 %v113, %v109
    %v154 = vpack.c.bf16 %v114, %v110
    %v155 = vpack.c.bf16 %v115, %v111
    %v156 = vpack.c.bf16 %v116, %v112
    %v157 = vpack.c.bf16 %v121, %v117
    %v158 = vpack.c.bf16 %v122, %v118
    %v159 = vpack.c.bf16 %v123, %v119
    %v160 = vpack.c.bf16 %v124, %v120
    %v161 = vpack.c.bf16 %v129, %v125
    %v162 = vpack.c.bf16 %v130, %v126
    %v163 = vpack.c.bf16 %v131, %v127
    %v164 = vpack.c.bf16 %v132, %v128
    %v165 = vld [vmem:[%s1] sm:$0xff]
    %v166 = vld [vmem:[%s1 + $0x8] sm:$0xff]
    %v167 = vld [vmem:[%s1 + $0x10] sm:$0xff]
    %v168 = vld [vmem:[%s1 + $0x18] sm:$0xff]
    %v169 = vld [vmem:[%s1 + $0x20] sm:$0xff]
    %v170 = vld [vmem:[%s1 + $0x28] sm:$0xff]
    %v171 = vld [vmem:[%s1 + $0x30] sm:$0xff]
    %v172 = vld [vmem:[%s1 + $0x38] sm:$0xff]
    %v173 = vld [vmem:[%s1 + $0x40] sm:$0xff]
    %v174 = vld [vmem:[%s1 + $0x48] sm:$0xff]
    %v175 = vld [vmem:[%s1 + $0x50] sm:$0xff]
    %v176 = vld [vmem:[%s1 + $0x58] sm:$0xff]
    %v177 = vld [vmem:[%s1 + $0x60] sm:$0xff]
    %v178 = vld [vmem:[%s1 + $0x68] sm:$0xff]
    %v179 = vld [vmem:[%s1 + $0x70] sm:$0xff]
    %v180 = vld [vmem:[%s1 + $0x78] sm:$0xff]
    %v181 = vld [vmem:[%s1 + $0x80] sm:$0xff]
    %v182 = vld [vmem:[%s1 + $0x88] sm:$0xff]
    %v183 = vld [vmem:[%s1 + $0x90] sm:$0xff]
    %v184 = vld [vmem:[%s1 + $0x98] sm:$0xff]
    %v185 = vld [vmem:[%s1 + $0xa0] sm:$0xff]
    %v186 = vld [vmem:[%s1 + $0xa8] sm:$0xff]
    %v187 = vld [vmem:[%s1 + $0xb0] sm:$0xff]
    %v188 = vld [vmem:[%s1 + $0xb8] sm:$0xff]
    %v189 = vld [vmem:[%s1 + $0xc0] sm:$0xff]
    %v190 = vld [vmem:[%s1 + $0xc8] sm:$0xff]
    %v191 = vld [vmem:[%s1 + $0xd0] sm:$0xff]
    %v192 = vld [vmem:[%s1 + $0xd8] sm:$0xff]
    %v193 = vld [vmem:[%s1 + $0xe0] sm:$0xff]
    %v194 = vld [vmem:[%s1 + $0xe8] sm:$0xff]
    %v195 = vld [vmem:[%s1 + $0xf0] sm:$0xff]
    %v196 = vld [vmem:[%s1 + $0xf8] sm:$0xff]
    %v197 = vld [vmem:[%s1 + $0x100] sm:$0xff]
    %v198 = vld [vmem:[%s1 + $0x108] sm:$0xff]
    %v199 = vld [vmem:[%s1 + $0x110] sm:$0xff]
    %v200 = vld [vmem:[%s1 + $0x118] sm:$0xff]
    %v201 = vld [vmem:[%s1 + $0x120] sm:$0xff]
    %v202 = vld [vmem:[%s1 + $0x128] sm:$0xff]
    %v203 = vld [vmem:[%s1 + $0x130] sm:$0xff]
    %v204 = vld [vmem:[%s1 + $0x138] sm:$0xff]
    %v205 = vld [vmem:[%s1 + $0x140] sm:$0xff]
    %v206 = vld [vmem:[%s1 + $0x148] sm:$0xff]
    %v207 = vld [vmem:[%s1 + $0x150] sm:$0xff]
    %v208 = vld [vmem:[%s1 + $0x158] sm:$0xff]
    %v209 = vld [vmem:[%s1 + $0x160] sm:$0xff]
    %v210 = vld [vmem:[%s1 + $0x168] sm:$0xff]
    %v211 = vld [vmem:[%s1 + $0x170] sm:$0xff]
    %v212 = vld [vmem:[%s1 + $0x178] sm:$0xff]
    %v213 = vld [vmem:[%s1 + $0x180] sm:$0xff]
    %v214 = vld [vmem:[%s1 + $0x188] sm:$0xff]
    %v215 = vld [vmem:[%s1 + $0x190] sm:$0xff]
    %v216 = vld [vmem:[%s1 + $0x198] sm:$0xff]
    %v217 = vld [vmem:[%s1 + $0x1a0] sm:$0xff]
    %v218 = vld [vmem:[%s1 + $0x1a8] sm:$0xff]
    %v219 = vld [vmem:[%s1 + $0x1b0] sm:$0xff]
    %v220 = vld [vmem:[%s1 + $0x1b8] sm:$0xff]
    %v221 = vld [vmem:[%s1 + $0x1c0] sm:$0xff]
    %v222 = vld [vmem:[%s1 + $0x1c8] sm:$0xff]
    %v223 = vld [vmem:[%s1 + $0x1d0] sm:$0xff]
    %v224 = vld [vmem:[%s1 + $0x1d8] sm:$0xff]
    %v225 = vld [vmem:[%s1 + $0x1e0] sm:$0xff]
    %v226 = vld [vmem:[%s1 + $0x1e8] sm:$0xff]
    %v227 = vld [vmem:[%s1 + $0x1f0] sm:$0xff]
    %v228 = vld [vmem:[%s1 + $0x1f8] sm:$0xff]
    %s229 = scalar_lea.vmem %s0, 576
    %v230 = vld [vmem:[%s229] sm:$0xff]
    %v231 = vld [vmem:[%s229 + $0x8] sm:$0xff]
    %v232 = vld [vmem:[%s229 + $0x10] sm:$0xff]
    %v233 = vld [vmem:[%s229 + $0x18] sm:$0xff]
    %v234 = vld [vmem:[%s229 + $0x20] sm:$0xff]
    %v235 = vld [vmem:[%s229 + $0x28] sm:$0xff]
    %v236 = vld [vmem:[%s229 + $0x30] sm:$0xff]
    %v237 = vld [vmem:[%s229 + $0x38] sm:$0xff]
    %v238 = vld [vmem:[%s229 + $0x40] sm:$0xff]
    %v239 = vld [vmem:[%s229 + $0x48] sm:$0xff]
    %v240 = vld [vmem:[%s229 + $0x50] sm:$0xff]
    %v241 = vld [vmem:[%s229 + $0x58] sm:$0xff]
    %v242 = vld [vmem:[%s229 + $0x60] sm:$0xff]
    %v243 = vld [vmem:[%s229 + $0x68] sm:$0xff]
    %v244 = vld [vmem:[%s229 + $0x70] sm:$0xff]
    %v245 = vld [vmem:[%s229 + $0x78] sm:$0xff]
    %v246 = vld [vmem:[%s229 + $0x90] sm:$0xff]
    %v247 = vld [vmem:[%s229 + $0x98] sm:$0xff]
    %v248 = vld [vmem:[%s229 + $0xa0] sm:$0xff]
    %v249 = vld [vmem:[%s229 + $0xa8] sm:$0xff]
    %v250 = vld [vmem:[%s229 + $0xb0] sm:$0xff]
    %v251 = vld [vmem:[%s229 + $0xb8] sm:$0xff]
    %v252 = vld [vmem:[%s229 + $0xc0] sm:$0xff]
    %v253 = vld [vmem:[%s229 + $0xc8] sm:$0xff]
    %v254 = vld [vmem:[%s229 + $0xd0] sm:$0xff]
    %v255 = vld [vmem:[%s229 + $0xd8] sm:$0xff]
    %v256 = vld [vmem:[%s229 + $0xe0] sm:$0xff]
    %v257 = vld [vmem:[%s229 + $0xe8] sm:$0xff]
    %v258 = vld [vmem:[%s229 + $0xf0] sm:$0xff]
    %v259 = vld [vmem:[%s229 + $0xf8] sm:$0xff]
    %v260 = vld [vmem:[%s229 + $0x100] sm:$0xff]
    %v261 = vld [vmem:[%s229 + $0x108] sm:$0xff]
    %v262 = vunpack.c.l.bf16 %v230
    %v263 = vunpack.c.h.bf16 %v230
    %v264 = vunpack.c.l.bf16 %v231
    %v265 = vunpack.c.h.bf16 %v231
    %v266 = vunpack.c.l.bf16 %v232
    %v267 = vunpack.c.h.bf16 %v232
    %v268 = vunpack.c.l.bf16 %v233
    %v269 = vunpack.c.h.bf16 %v233
    %v270 = vunpack.c.l.bf16 %v234
    %v271 = vunpack.c.h.bf16 %v234
    %v272 = vunpack.c.l.bf16 %v235
    %v273 = vunpack.c.h.bf16 %v235
    %v274 = vunpack.c.l.bf16 %v236
    %v275 = vunpack.c.h.bf16 %v236
    %v276 = vunpack.c.l.bf16 %v237
    %v277 = vunpack.c.h.bf16 %v237
    %v278 = vunpack.c.l.bf16 %v238
    %v279 = vunpack.c.h.bf16 %v238
    %v280 = vunpack.c.l.bf16 %v239
    %v281 = vunpack.c.h.bf16 %v239
    %v282 = vunpack.c.l.bf16 %v240
    %v283 = vunpack.c.h.bf16 %v240
    %v284 = vunpack.c.l.bf16 %v241
    %v285 = vunpack.c.h.bf16 %v241
    %v286 = vunpack.c.l.bf16 %v242
    %v287 = vunpack.c.h.bf16 %v242
    %v288 = vunpack.c.l.bf16 %v243
    %v289 = vunpack.c.h.bf16 %v243
    %v290 = vunpack.c.l.bf16 %v244
    %v291 = vunpack.c.h.bf16 %v244
    %v292 = vunpack.c.l.bf16 %v245
    %v293 = vunpack.c.h.bf16 %v245
    %v294 = vunpack.c.l.bf16 %v246
    %v295 = vunpack.c.h.bf16 %v246
    %v296 = vunpack.c.l.bf16 %v247
    %v297 = vunpack.c.h.bf16 %v247
    %v298 = vunpack.c.l.bf16 %v248
    %v299 = vunpack.c.h.bf16 %v248
    %v300 = vunpack.c.l.bf16 %v249
    %v301 = vunpack.c.h.bf16 %v249
    %v302 = vunpack.c.l.bf16 %v250
    %v303 = vunpack.c.h.bf16 %v250
    %v304 = vunpack.c.l.bf16 %v251
    %v305 = vunpack.c.h.bf16 %v251
    %v306 = vunpack.c.l.bf16 %v252
    %v307 = vunpack.c.h.bf16 %v252
    %v308 = vunpack.c.l.bf16 %v253
    %v309 = vunpack.c.h.bf16 %v253
    %v310 = vunpack.c.l.bf16 %v254
    %v311 = vunpack.c.h.bf16 %v254
    %v312 = vunpack.c.l.bf16 %v255
    %v313 = vunpack.c.h.bf16 %v255
    %v314 = vunpack.c.l.bf16 %v256
    %v315 = vunpack.c.h.bf16 %v256
    %v316 = vunpack.c.l.bf16 %v257
    %v317 = vunpack.c.h.bf16 %v257
    %v318 = vunpack.c.l.bf16 %v258
    %v319 = vunpack.c.h.bf16 %v258
    %v320 = vunpack.c.l.bf16 %v259
    %v321 = vunpack.c.h.bf16 %v259
    %v322 = vunpack.c.l.bf16 %v260
    %v323 = vunpack.c.h.bf16 %v260
    %v324 = vunpack.c.l.bf16 %v261
    %v325 = vunpack.c.h.bf16 %v261
    %v326 = vpack.c.bf16 %v266, %v262
    %v327 = vpack.c.bf16 %v267, %v263
    %v328 = vpack.c.bf16 %v268, %v264
    %v329 = vpack.c.bf16 %v269, %v265
    %v330 = vpack.c.bf16 %v274, %v270
    %v331 = vpack.c.bf16 %v275, %v271
    %v332 = vpack.c.bf16 %v276, %v272
    %v333 = vpack.c.bf16 %v277, %v273
    %v334 = vpack.c.bf16 %v282, %v278
    %v335 = vpack.c.bf16 %v283, %v279
    %v336 = vpack.c.bf16 %v284, %v280
    %v337 = vpack.c.bf16 %v285, %v281
    %v338 = vpack.c.bf16 %v290, %v286
    %v339 = vpack.c.bf16 %v291, %v287
    %v340 = vpack.c.bf16 %v292, %v288
    %v341 = vpack.c.bf16 %v293, %v289
    %v342 = vpack.c.bf16 %v298, %v294
    %v343 = vpack.c.bf16 %v299, %v295
    %v344 = vpack.c.bf16 %v300, %v296
    %v345 = vpack.c.bf16 %v301, %v297
    %v346 = vpack.c.bf16 %v306, %v302
    %v347 = vpack.c.bf16 %v307, %v303
    %v348 = vpack.c.bf16 %v308, %v304
    %v349 = vpack.c.bf16 %v309, %v305
    %v350 = vpack.c.bf16 %v314, %v310
    %v351 = vpack.c.bf16 %v315, %v311
    %v352 = vpack.c.bf16 %v316, %v312
    %v353 = vpack.c.bf16 %v317, %v313
    %v354 = vpack.c.bf16 %v322, %v318
    %v355 = vpack.c.bf16 %v323, %v319
    %v356 = vpack.c.bf16 %v324, %v320
    %v357 = vpack.c.bf16 %v325, %v321
    %s358 = scalar_lea.vmem %s1, 512
    %v359 = vld [vmem:[%s358] sm:$0xff]
    %v360 = vld [vmem:[%s358 + $0x8] sm:$0xff]
    %v361 = vld [vmem:[%s358 + $0x10] sm:$0xff]
    %v362 = vld [vmem:[%s358 + $0x18] sm:$0xff]
    %v363 = vld [vmem:[%s358 + $0x20] sm:$0xff]
    %v364 = vld [vmem:[%s358 + $0x28] sm:$0xff]
    %v365 = vld [vmem:[%s358 + $0x30] sm:$0xff]
    %v366 = vld [vmem:[%s358 + $0x38] sm:$0xff]
    %v367 = vld [vmem:[%s358 + $0x40] sm:$0xff]
    %v368 = vld [vmem:[%s358 + $0x48] sm:$0xff]
    %v369 = vld [vmem:[%s358 + $0x50] sm:$0xff]
    %v370 = vld [vmem:[%s358 + $0x58] sm:$0xff]
    %v371 = vld [vmem:[%s358 + $0x60] sm:$0xff]
    %v372 = vld [vmem:[%s358 + $0x68] sm:$0xff]
    %v373 = vld [vmem:[%s358 + $0x70] sm:$0xff]
    %v374 = vld [vmem:[%s358 + $0x78] sm:$0xff]
    %v375 = vld [vmem:[%s358 + $0x80] sm:$0xff]
    %v376 = vld [vmem:[%s358 + $0x88] sm:$0xff]
    %v377 = vld [vmem:[%s358 + $0x90] sm:$0xff]
    %v378 = vld [vmem:[%s358 + $0x98] sm:$0xff]
    %v379 = vld [vmem:[%s358 + $0xa0] sm:$0xff]
    %v380 = vld [vmem:[%s358 + $0xa8] sm:$0xff]
    %v381 = vld [vmem:[%s358 + $0xb0] sm:$0xff]
    %v382 = vld [vmem:[%s358 + $0xb8] sm:$0xff]
    %v383 = vld [vmem:[%s358 + $0xc0] sm:$0xff]
    %v384 = vld [vmem:[%s358 + $0xc8] sm:$0xff]
    %v385 = vld [vmem:[%s358 + $0xd0] sm:$0xff]
    %v386 = vld [vmem:[%s358 + $0xd8] sm:$0xff]
    %v387 = vld [vmem:[%s358 + $0xe0] sm:$0xff]
    %v388 = vld [vmem:[%s358 + $0xe8] sm:$0xff]
    %v389 = vld [vmem:[%s358 + $0xf0] sm:$0xff]
    %v390 = vld [vmem:[%s358 + $0xf8] sm:$0xff]
    %v391 = vld [vmem:[%s358 + $0x100] sm:$0xff]
    %v392 = vld [vmem:[%s358 + $0x108] sm:$0xff]
    %v393 = vld [vmem:[%s358 + $0x110] sm:$0xff]
    %v394 = vld [vmem:[%s358 + $0x118] sm:$0xff]
    %v395 = vld [vmem:[%s358 + $0x120] sm:$0xff]
    %v396 = vld [vmem:[%s358 + $0x128] sm:$0xff]
    %v397 = vld [vmem:[%s358 + $0x130] sm:$0xff]
    %v398 = vld [vmem:[%s358 + $0x138] sm:$0xff]
    %v399 = vld [vmem:[%s358 + $0x140] sm:$0xff]
    %v400 = vld [vmem:[%s358 + $0x148] sm:$0xff]
    %v401 = vld [vmem:[%s358 + $0x150] sm:$0xff]
    %v402 = vld [vmem:[%s358 + $0x158] sm:$0xff]
    %v403 = vld [vmem:[%s358 + $0x160] sm:$0xff]
    %v404 = vld [vmem:[%s358 + $0x168] sm:$0xff]
    %v405 = vld [vmem:[%s358 + $0x170] sm:$0xff]
    %v406 = vld [vmem:[%s358 + $0x178] sm:$0xff]
    %v407 = vld [vmem:[%s358 + $0x180] sm:$0xff]
    %v408 = vld [vmem:[%s358 + $0x188] sm:$0xff]
    %v409 = vld [vmem:[%s358 + $0x190] sm:$0xff]
    %v410 = vld [vmem:[%s358 + $0x198] sm:$0xff]
    %v411 = vld [vmem:[%s358 + $0x1a0] sm:$0xff]
    %v412 = vld [vmem:[%s358 + $0x1a8] sm:$0xff]
    %v413 = vld [vmem:[%s358 + $0x1b0] sm:$0xff]
    %v414 = vld [vmem:[%s358 + $0x1b8] sm:$0xff]
    %v415 = vld [vmem:[%s358 + $0x1c0] sm:$0xff]
    %v416 = vld [vmem:[%s358 + $0x1c8] sm:$0xff]
    %v417 = vld [vmem:[%s358 + $0x1d0] sm:$0xff]
    %v418 = vld [vmem:[%s358 + $0x1d8] sm:$0xff]
    %v419 = vld [vmem:[%s358 + $0x1e0] sm:$0xff]
    %v420 = vld [vmem:[%s358 + $0x1e8] sm:$0xff]
    %v421 = vld [vmem:[%s358 + $0x1f0] sm:$0xff]
    %v422 = vld [vmem:[%s358 + $0x1f8] sm:$0xff]
    %v487 = vunpack.c.l.b16 %v359
    %v488 = vunpack.c.h.b16 %v359
    %v489 = vunpack.c.l.b16 %v360
    %v490 = vunpack.c.h.b16 %v360
    %v491 = vunpack.c.l.b16 %v361
    %v492 = vunpack.c.h.b16 %v361
    %v493 = vunpack.c.l.b16 %v362
    %v494 = vunpack.c.h.b16 %v362
    %v495 = vunpack.c.l.b16 %v363
    %v496 = vunpack.c.h.b16 %v363
    %v497 = vunpack.c.l.b16 %v364
    %v498 = vunpack.c.h.b16 %v364
    %v499 = vunpack.c.l.b16 %v365
    %v500 = vunpack.c.h.b16 %v365
    %v501 = vunpack.c.l.b16 %v366
    %v502 = vunpack.c.h.b16 %v366
    %v503 = vunpack.c.l.b16 %v367
    %v504 = vunpack.c.h.b16 %v367
    %v505 = vunpack.c.l.b16 %v368
    %v506 = vunpack.c.h.b16 %v368
    %v507 = vunpack.c.l.b16 %v369
    %v508 = vunpack.c.h.b16 %v369
    %v509 = vunpack.c.l.b16 %v370
    %v510 = vunpack.c.h.b16 %v370
    %v511 = vunpack.c.l.b16 %v371
    %v512 = vunpack.c.h.b16 %v371
    %v513 = vunpack.c.l.b16 %v372
    %v514 = vunpack.c.h.b16 %v372
    %v515 = vunpack.c.l.b16 %v373
    %v516 = vunpack.c.h.b16 %v373
    %v517 = vunpack.c.l.b16 %v374
    %v518 = vunpack.c.h.b16 %v374
    %v519 = vunpack.c.l.b16 %v375
    %v520 = vunpack.c.h.b16 %v375
    %v521 = vunpack.c.l.b16 %v376
    %v522 = vunpack.c.h.b16 %v376
    %v523 = vunpack.c.l.b16 %v377
    %v524 = vunpack.c.h.b16 %v377
    %v525 = vunpack.c.l.b16 %v378
    %v526 = vunpack.c.h.b16 %v378
    %v527 = vunpack.c.l.b16 %v379
    %v528 = vunpack.c.h.b16 %v379
    %v529 = vunpack.c.l.b16 %v380
    %v530 = vunpack.c.h.b16 %v380
    %v531 = vunpack.c.l.b16 %v381
    %v532 = vunpack.c.h.b16 %v381
    %v533 = vunpack.c.l.b16 %v382
    %v534 = vunpack.c.h.b16 %v382
    %v535 = vunpack.c.l.b16 %v383
    %v536 = vunpack.c.h.b16 %v383
    %v537 = vunpack.c.l.b16 %v384
    %v538 = vunpack.c.h.b16 %v384
    %v539 = vunpack.c.l.b16 %v385
    %v540 = vunpack.c.h.b16 %v385
    %v541 = vunpack.c.l.b16 %v386
    %v542 = vunpack.c.h.b16 %v386
    %v543 = vunpack.c.l.b16 %v387
    %v544 = vunpack.c.h.b16 %v387
    %v545 = vunpack.c.l.b16 %v388
    %v546 = vunpack.c.h.b16 %v388
    %v547 = vunpack.c.l.b16 %v389
    %v548 = vunpack.c.h.b16 %v389
    %v549 = vunpack.c.l.b16 %v390
    %v550 = vunpack.c.h.b16 %v390
    %v551 = vunpack.c.l.b16 %v391
    %v552 = vunpack.c.h.b16 %v391
    %v553 = vunpack.c.l.b16 %v392
    %v554 = vunpack.c.h.b16 %v392
    %v555 = vunpack.c.l.b16 %v393
    %v556 = vunpack.c.h.b16 %v393
    %v557 = vunpack.c.l.b16 %v394
    %v558 = vunpack.c.h.b16 %v394
    %v559 = vunpack.c.l.b16 %v395
    %v560 = vunpack.c.h.b16 %v395
    %v561 = vunpack.c.l.b16 %v396
    %v562 = vunpack.c.h.b16 %v396
    %v563 = vunpack.c.l.b16 %v397
    %v564 = vunpack.c.h.b16 %v397
    %v565 = vunpack.c.l.b16 %v398
    %v566 = vunpack.c.h.b16 %v398
    %v567 = vunpack.c.l.b16 %v399
    %v568 = vunpack.c.h.b16 %v399
    %v569 = vunpack.c.l.b16 %v400
    %v570 = vunpack.c.h.b16 %v400
    %v571 = vunpack.c.l.b16 %v401
    %v572 = vunpack.c.h.b16 %v401
    %v573 = vunpack.c.l.b16 %v402
    %v574 = vunpack.c.h.b16 %v402
    %v575 = vunpack.c.l.b16 %v403
    %v576 = vunpack.c.h.b16 %v403
    %v577 = vunpack.c.l.b16 %v404
    %v578 = vunpack.c.h.b16 %v404
    %v579 = vunpack.c.l.b16 %v405
    %v580 = vunpack.c.h.b16 %v405
    %v581 = vunpack.c.l.b16 %v406
    %v582 = vunpack.c.h.b16 %v406
    %v583 = vunpack.c.l.b16 %v407
    %v584 = vunpack.c.h.b16 %v407
    %v585 = vunpack.c.l.b16 %v408
    %v586 = vunpack.c.h.b16 %v408
    %v587 = vunpack.c.l.b16 %v409
    %v588 = vunpack.c.h.b16 %v409
    %v589 = vunpack.c.l.b16 %v410
    %v590 = vunpack.c.h.b16 %v410
    %v591 = vunpack.c.l.b16 %v411
    %v592 = vunpack.c.h.b16 %v411
    %v593 = vunpack.c.l.b16 %v412
    %v594 = vunpack.c.h.b16 %v412
    %v595 = vunpack.c.l.b16 %v413
    %v596 = vunpack.c.h.b16 %v413
    %v597 = vunpack.c.l.b16 %v414
    %v598 = vunpack.c.h.b16 %v414
    %v599 = vunpack.c.l.b16 %v415
    %v600 = vunpack.c.h.b16 %v415
    %v601 = vunpack.c.l.b16 %v416
    %v602 = vunpack.c.h.b16 %v416
    %v603 = vunpack.c.l.b16 %v417
    %v604 = vunpack.c.h.b16 %v417
    %v605 = vunpack.c.l.b16 %v418
    %v606 = vunpack.c.h.b16 %v418
    %v607 = vunpack.c.l.b16 %v419
    %v608 = vunpack.c.h.b16 %v419
    %v609 = vunpack.c.l.b16 %v420
    %v610 = vunpack.c.h.b16 %v420
    %v611 = vunpack.c.l.b16 %v421
    %v612 = vunpack.c.h.b16 %v421
    %v613 = vunpack.c.l.b16 %v422
    %v614 = vunpack.c.h.b16 %v422
    %v615 = vpack.c.b16 %v489, %v487
    %v616 = vpack.c.b16 %v490, %v488
    %v617 = vpack.c.b16 %v493, %v491
    %v618 = vpack.c.b16 %v494, %v492
    %v619 = vpack.c.b16 %v497, %v495
    %v620 = vpack.c.b16 %v498, %v496
    %v621 = vpack.c.b16 %v501, %v499
    %v622 = vpack.c.b16 %v502, %v500
    %v623 = vpack.c.b16 %v505, %v503
    %v624 = vpack.c.b16 %v506, %v504
    %v625 = vpack.c.b16 %v509, %v507
    %v626 = vpack.c.b16 %v510, %v508
    %v627 = vpack.c.b16 %v513, %v511
    %v628 = vpack.c.b16 %v514, %v512
    %v629 = vpack.c.b16 %v517, %v515
    %v630 = vpack.c.b16 %v518, %v516
    %v631 = vpack.c.b16 %v521, %v519
    %v632 = vpack.c.b16 %v522, %v520
    %v633 = vpack.c.b16 %v525, %v523
    %v634 = vpack.c.b16 %v526, %v524
    %v635 = vpack.c.b16 %v529, %v527
    %v636 = vpack.c.b16 %v530, %v528
    %v637 = vpack.c.b16 %v533, %v531
    %v638 = vpack.c.b16 %v534, %v532
    %v639 = vpack.c.b16 %v537, %v535
    %v640 = vpack.c.b16 %v538, %v536
    %v641 = vpack.c.b16 %v541, %v539
    %v642 = vpack.c.b16 %v542, %v540
    %v643 = vpack.c.b16 %v545, %v543
    %v644 = vpack.c.b16 %v546, %v544
    %v645 = vpack.c.b16 %v549, %v547
    %v646 = vpack.c.b16 %v550, %v548
    %v647 = vpack.c.b16 %v553, %v551
    %v648 = vpack.c.b16 %v554, %v552
    %v649 = vpack.c.b16 %v557, %v555
    %v650 = vpack.c.b16 %v558, %v556
    %v651 = vpack.c.b16 %v561, %v559
    %v652 = vpack.c.b16 %v562, %v560
    %v653 = vpack.c.b16 %v565, %v563
    %v654 = vpack.c.b16 %v566, %v564
    %v655 = vpack.c.b16 %v569, %v567
    %v656 = vpack.c.b16 %v570, %v568
    %v657 = vpack.c.b16 %v573, %v571
    %v658 = vpack.c.b16 %v574, %v572
    %v659 = vpack.c.b16 %v577, %v575
    %v660 = vpack.c.b16 %v578, %v576
    %v661 = vpack.c.b16 %v581, %v579
    %v662 = vpack.c.b16 %v582, %v580
    %v663 = vpack.c.b16 %v585, %v583
    %v664 = vpack.c.b16 %v586, %v584
    %v665 = vpack.c.b16 %v589, %v587
    %v666 = vpack.c.b16 %v590, %v588
    %v667 = vpack.c.b16 %v593, %v591
    %v668 = vpack.c.b16 %v594, %v592
    %v669 = vpack.c.b16 %v597, %v595
    %v670 = vpack.c.b16 %v598, %v596
    %v671 = vpack.c.b16 %v601, %v599
    %v672 = vpack.c.b16 %v602, %v600
    %v673 = vpack.c.b16 %v605, %v603
    %v674 = vpack.c.b16 %v606, %v604
    %v675 = vpack.c.b16 %v609, %v607
    %v676 = vpack.c.b16 %v610, %v608
    %v677 = vpack.c.b16 %v613, %v611
    %v678 = vpack.c.b16 %v614, %v612
    %743 = vmatprep.subr.bf16.mxu0 %v616
    %744 = vmatpush1.bf16.msra.mxu0 %v615
    %745 = vmatprep.subr.bf16.mxu0 %v618
    %746 = vmatpush1.bf16.msra.mxu0 %v617
    %747 = vmatprep.subr.bf16.mxu0 %v620
    %748 = vmatpush1.bf16.msra.mxu0 %v619
    %749 = vmatprep.subr.bf16.mxu0 %v622
    %750 = vmatpush1.bf16.msra.mxu0 %v621
    %751 = vmatprep.subr.bf16.mxu0 %v624
    %752 = vmatpush1.bf16.msra.mxu0 %v623
    %753 = vmatprep.subr.bf16.mxu0 %v626
    %754 = vmatpush1.bf16.msra.mxu0 %v625
    %755 = vmatprep.subr.bf16.mxu0 %v628
    %756 = vmatpush1.bf16.msra.mxu0 %v627
    %757 = vmatprep.subr.bf16.mxu0 %v630
    %758 = vmatpush1.bf16.msra.mxu0 %v629
    %759 = vmatprep.subr.bf16.mxu0 %v632
    %760 = vmatpush1.bf16.msra.mxu0 %v631
    %761 = vmatprep.subr.bf16.mxu0 %v634
    %762 = vmatpush1.bf16.msra.mxu0 %v633
    %763 = vmatprep.subr.bf16.mxu0 %v636
    %764 = vmatpush1.bf16.msra.mxu0 %v635
    %765 = vmatprep.subr.bf16.mxu0 %v638
    %766 = vmatpush1.bf16.msra.mxu0 %v637
    %767 = vmatprep.subr.bf16.mxu0 %v640
    %768 = vmatpush1.bf16.msra.mxu0 %v639
    %769 = vmatprep.subr.bf16.mxu0 %v642
    %770 = vmatpush1.bf16.msra.mxu0 %v641
    %771 = vmatprep.subr.bf16.mxu0 %v644
    %772 = vmatpush1.bf16.msra.mxu0 %v643
    %773 = vmatprep.subr.bf16.mxu0 %v646
    %774 = vmatpush1.bf16.msra.mxu0 %v645
    %775 = vmatprep.mubr.bf16.mxu0 %v327
    %776 = vmatmul.mubr.bf16.gmra.mrb[0].mxu0 %v326
    %v777 = vpop.f32.mrb[0].mxu0
    %v778 = vadd.f32 0.0, %v777
    %v779 = vpop.f32.mrb[0].mxu0
    %v780 = vadd.f32 0.0, %v779
    %v781 = vpop.f32.mrb[0].mxu0
    %v782 = vadd.f32 0.0, %v781
    %v783 = vpop.f32.mrb[0].mxu0
    %v784 = vadd.f32 0.0, %v783
    %785 = vmatprep.mubr.bf16.mxu0 %v331
    %786 = vmatmul.mubr.bf16.gmra.mrb[0].mxu0 %v330
    %v787 = vpop.f32.mrb[0].mxu0
    %v788 = vadd.f32 0.0, %v787
    %v789 = vpop.f32.mrb[0].mxu0
    %v790 = vadd.f32 0.0, %v789
    %v791 = vpop.f32.mrb[0].mxu0
    %v792 = vadd.f32 0.0, %v791
    %v793 = vpop.f32.mrb[0].mxu0
    %v794 = vadd.f32 0.0, %v793
    %795 = vmatprep.mubr.bf16.mxu0 %v335
    %796 = vmatmul.mubr.bf16.gmra.mrb[0].mxu0 %v334
    %v797 = vpop.f32.mrb[0].mxu0
    %v798 = vadd.f32 0.0, %v797
    %v799 = vpop.f32.mrb[0].mxu0
    %v800 = vadd.f32 0.0, %v799
    %v801 = vpop.f32.mrb[0].mxu0
    %v802 = vadd.f32 0.0, %v801
    %v803 = vpop.f32.mrb[0].mxu0
    %v804 = vadd.f32 0.0, %v803
    %805 = vmatprep.mubr.bf16.mxu0 %v339
    %806 = vmatmul.mubr.bf16.gmra.mrb[0].mxu0 %v338
    %v807 = vpop.f32.mrb[0].mxu0
    %v808 = vadd.f32 0.0, %v807
    %v809 = vpop.f32.mrb[0].mxu0
    %v810 = vadd.f32 0.0, %v809
    %v811 = vpop.f32.mrb[0].mxu0
    %v812 = vadd.f32 0.0, %v811
    %v813 = vpop.f32.mrb[0].mxu0
    %v814 = vadd.f32 0.0, %v813
    %815 = vmatprep.mubr.bf16.mxu0 %v343
    %816 = vmatmul.mubr.bf16.gmra.mrb[0].mxu0 %v342
    %v817 = vpop.f32.mrb[0].mxu0
    %v818 = vadd.f32 0.0, %v817
    %v819 = vpop.f32.mrb[0].mxu0
    %v820 = vadd.f32 0.0, %v819
    %v821 = vpop.f32.mrb[0].mxu0
    %v822 = vadd.f32 0.0, %v821
    %v823 = vpop.f32.mrb[0].mxu0
    %v824 = vadd.f32 0.0, %v823
    %825 = vmatprep.mubr.bf16.mxu0 %v347
    %826 = vmatmul.mubr.bf16.gmra.mrb[0].mxu0 %v346
    %v827 = vpop.f32.mrb[0].mxu0
    %v828 = vadd.f32 0.0, %v827
    %v829 = vpop.f32.mrb[0].mxu0
    %v830 = vadd.f32 0.0, %v829
    %v831 = vpop.f32.mrb[0].mxu0
    %v832 = vadd.f32 0.0, %v831
    %v833 = vpop.f32.mrb[0].mxu0
    %v834 = vadd.f32 0.0, %v833
    %835 = vmatprep.mubr.bf16.mxu0 %v351
    %836 = vmatmul.mubr.bf16.gmra.mrb[0].mxu0 %v350
    %v837 = vpop.f32.mrb[0].mxu0
    %v838 = vadd.f32 0.0, %v837
    %v839 = vpop.f32.mrb[0].mxu0
    %v840 = vadd.f32 0.0, %v839
    %v841 = vpop.f32.mrb[0].mxu0
    %v842 = vadd.f32 0.0, %v841
    %v843 = vpop.f32.mrb[0].mxu0
    %v844 = vadd.f32 0.0, %v843
    %845 = vmatprep.mubr.bf16.mxu0 %v355
    %846 = vmatmul.mubr.bf16.gmra.mrb[0].mxu0 %v354
    %v847 = vpop.f32.mrb[0].mxu0
    %v848 = vadd.f32 0.0, %v847
    %v849 = vpop.f32.mrb[0].mxu0
    %v850 = vadd.f32 0.0, %v849
    %v851 = vpop.f32.mrb[0].mxu0
    %v852 = vadd.f32 0.0, %v851
    %v853 = vpop.f32.mrb[0].mxu0
    %v854 = vadd.f32 0.0, %v853
    %855 = vdwg.mxu0
    %856 = vmatprep.subr.bf16.mxu0 %v648
    %857 = vmatpush1.bf16.msra.mxu0 %v647
    %858 = vmatprep.subr.bf16.mxu0 %v650
    %859 = vmatpush1.bf16.msra.mxu0 %v649
    %860 = vmatprep.subr.bf16.mxu0 %v652
    %861 = vmatpush1.bf16.msra.mxu0 %v651
    %862 = vmatprep.subr.bf16.mxu0 %v654
    %863 = vmatpush1.bf16.msra.mxu0 %v653
    %864 = vmatprep.subr.bf16.mxu0 %v656
    %865 = vmatpush1.bf16.msra.mxu0 %v655
    %866 = vmatprep.subr.bf16.mxu0 %v658
    %867 = vmatpush1.bf16.msra.mxu0 %v657
    %868 = vmatprep.subr.bf16.mxu0 %v660
    %869 = vmatpush1.bf16.msra.mxu0 %v659
    %870 = vmatprep.subr.bf16.mxu0 %v662
    %871 = vmatpush1.bf16.msra.mxu0 %v661
    %872 = vmatprep.subr.bf16.mxu0 %v664
    %873 = vmatpush1.bf16.msra.mxu0 %v663
    %874 = vmatprep.subr.bf16.mxu0 %v666
    %875 = vmatpush1.bf16.msra.mxu0 %v665
    %876 = vmatprep.subr.bf16.mxu0 %v668
    %877 = vmatpush1.bf16.msra.mxu0 %v667
    %878 = vmatprep.subr.bf16.mxu0 %v670
    %879 = vmatpush1.bf16.msra.mxu0 %v669
    %880 = vmatprep.subr.bf16.mxu0 %v672
    %881 = vmatpush1.bf16.msra.mxu0 %v671
    %882 = vmatprep.subr.bf16.mxu0 %v674
    %883 = vmatpush1.bf16.msra.mxu0 %v673
    %884 = vmatprep.subr.bf16.mxu0 %v676
    %885 = vmatpush1.bf16.msra.mxu0 %v675
    %886 = vmatprep.subr.bf16.mxu0 %v678
    %887 = vmatpush1.bf16.msra.mxu0 %v677
    %888 = vmatprep.mubr.bf16.mxu0 %v329
    %889 = vmatmul.mubr.bf16.gmra.mrb[0].mxu0 %v328
    %v890 = vpop.f32.mrb[0].mxu0
    %v891 = vadd.f32 %v778, %v890
    %v892 = vpop.f32.mrb[0].mxu0
    %v893 = vadd.f32 %v780, %v892
    %v894 = vpop.f32.mrb[0].mxu0
    %v895 = vadd.f32 %v782, %v894
    %v896 = vpop.f32.mrb[0].mxu0
    %v897 = vadd.f32 %v784, %v896
    %898 = vmatprep.mubr.bf16.mxu0 %v333
    %899 = vmatmul.mubr.bf16.gmra.mrb[0].mxu0 %v332
    %v900 = vpop.f32.mrb[0].mxu0
    %v901 = vadd.f32 %v788, %v900
    %v902 = vpop.f32.mrb[0].mxu0
    %v903 = vadd.f32 %v790, %v902
    %v904 = vpop.f32.mrb[0].mxu0
    %v905 = vadd.f32 %v792, %v904
    %v906 = vpop.f32.mrb[0].mxu0
    %v907 = vadd.f32 %v794, %v906
    %908 = vmatprep.mubr.bf16.mxu0 %v337
    %909 = vmatmul.mubr.bf16.gmra.mrb[0].mxu0 %v336
    %v910 = vpop.f32.mrb[0].mxu0
    %v911 = vadd.f32 %v798, %v910
    %v912 = vpop.f32.mrb[0].mxu0
    %v913 = vadd.f32 %v800, %v912
    %v914 = vpop.f32.mrb[0].mxu0
    %v915 = vadd.f32 %v802, %v914
    %v916 = vpop.f32.mrb[0].mxu0
    %v917 = vadd.f32 %v804, %v916
    %918 = vmatprep.mubr.bf16.mxu0 %v341
    %919 = vmatmul.mubr.bf16.gmra.mrb[0].mxu0 %v340
    %v920 = vpop.f32.mrb[0].mxu0
    %v921 = vadd.f32 %v808, %v920
    %v922 = vpop.f32.mrb[0].mxu0
    %v923 = vadd.f32 %v810, %v922
    %v924 = vpop.f32.mrb[0].mxu0
    %v925 = vadd.f32 %v812, %v924
    %v926 = vpop.f32.mrb[0].mxu0
    %v927 = vadd.f32 %v814, %v926
    %928 = vmatprep.mubr.bf16.mxu0 %v345
    %929 = vmatmul.mubr.bf16.gmra.mrb[0].mxu0 %v344
    %v930 = vpop.f32.mrb[0].mxu0
    %v931 = vadd.f32 %v818, %v930
    %v932 = vpop.f32.mrb[0].mxu0
    %v933 = vadd.f32 %v820, %v932
    %v934 = vpop.f32.mrb[0].mxu0
    %v935 = vadd.f32 %v822, %v934
    %v936 = vpop.f32.mrb[0].mxu0
    %v937 = vadd.f32 %v824, %v936
    %938 = vmatprep.mubr.bf16.mxu0 %v349
    %939 = vmatmul.mubr.bf16.gmra.mrb[0].mxu0 %v348
    %v940 = vpop.f32.mrb[0].mxu0
    %v941 = vadd.f32 %v828, %v940
    %v942 = vpop.f32.mrb[0].mxu0
    %v943 = vadd.f32 %v830, %v942
    %v944 = vpop.f32.mrb[0].mxu0
    %v945 = vadd.f32 %v832, %v944
    %v946 = vpop.f32.mrb[0].mxu0
    %v947 = vadd.f32 %v834, %v946
    %948 = vmatprep.mubr.bf16.mxu0 %v353
    %949 = vmatmul.mubr.bf16.gmra.mrb[0].mxu0 %v352
    %v950 = vpop.f32.mrb[0].mxu0
    %v951 = vadd.f32 %v838, %v950
    %v952 = vpop.f32.mrb[0].mxu0
    %v953 = vadd.f32 %v840, %v952
    %v954 = vpop.f32.mrb[0].mxu0
    %v955 = vadd.f32 %v842, %v954
    %v956 = vpop.f32.mrb[0].mxu0
    %v957 = vadd.f32 %v844, %v956
    %958 = vmatprep.mubr.bf16.mxu0 %v357
    %959 = vmatmul.mubr.bf16.gmra.mrb[0].mxu0 %v356
    %v960 = vpop.f32.mrb[0].mxu0
    %v961 = vadd.f32 %v848, %v960
    %v962 = vpop.f32.mrb[0].mxu0
    %v963 = vadd.f32 %v850, %v962
    %v964 = vpop.f32.mrb[0].mxu0
    %v965 = vadd.f32 %v852, %v964
    %v966 = vpop.f32.mrb[0].mxu0
    %v967 = vadd.f32 %v854, %v966
    %968 = vdwg.mxu0
    %v1033 = vunpack.c.l.b16 %v165
    %v1034 = vunpack.c.h.b16 %v165
    %v1035 = vunpack.c.l.b16 %v166
    %v1036 = vunpack.c.h.b16 %v166
    %v1037 = vunpack.c.l.b16 %v167
    %v1038 = vunpack.c.h.b16 %v167
    %v1039 = vunpack.c.l.b16 %v168
    %v1040 = vunpack.c.h.b16 %v168
    %v1041 = vunpack.c.l.b16 %v169
    %v1042 = vunpack.c.h.b16 %v169
    %v1043 = vunpack.c.l.b16 %v170
    %v1044 = vunpack.c.h.b16 %v170
    %v1045 = vunpack.c.l.b16 %v171
    %v1046 = vunpack.c.h.b16 %v171
    %v1047 = vunpack.c.l.b16 %v172
    %v1048 = vunpack.c.h.b16 %v172
    %v1049 = vunpack.c.l.b16 %v173
    %v1050 = vunpack.c.h.b16 %v173
    %v1051 = vunpack.c.l.b16 %v174
    %v1052 = vunpack.c.h.b16 %v174
    %v1053 = vunpack.c.l.b16 %v175
    %v1054 = vunpack.c.h.b16 %v175
    %v1055 = vunpack.c.l.b16 %v176
    %v1056 = vunpack.c.h.b16 %v176
    %v1057 = vunpack.c.l.b16 %v177
    %v1058 = vunpack.c.h.b16 %v177
    %v1059 = vunpack.c.l.b16 %v178
    %v1060 = vunpack.c.h.b16 %v178
    %v1061 = vunpack.c.l.b16 %v179
    %v1062 = vunpack.c.h.b16 %v179
    %v1063 = vunpack.c.l.b16 %v180
    %v1064 = vunpack.c.h.b16 %v180
    %v1065 = vunpack.c.l.b16 %v181
    %v1066 = vunpack.c.h.b16 %v181
    %v1067 = vunpack.c.l.b16 %v182
    %v1068 = vunpack.c.h.b16 %v182
    %v1069 = vunpack.c.l.b16 %v183
    %v1070 = vunpack.c.h.b16 %v183
    %v1071 = vunpack.c.l.b16 %v184
    %v1072 = vunpack.c.h.b16 %v184
    %v1073 = vunpack.c.l.b16 %v185
    %v1074 = vunpack.c.h.b16 %v185
    %v1075 = vunpack.c.l.b16 %v186
    %v1076 = vunpack.c.h.b16 %v186
    %v1077 = vunpack.c.l.b16 %v187
    %v1078 = vunpack.c.h.b16 %v187
    %v1079 = vunpack.c.l.b16 %v188
    %v1080 = vunpack.c.h.b16 %v188
    %v1081 = vunpack.c.l.b16 %v189
    %v1082 = vunpack.c.h.b16 %v189
    %v1083 = vunpack.c.l.b16 %v190
    %v1084 = vunpack.c.h.b16 %v190
    %v1085 = vunpack.c.l.b16 %v191
    %v1086 = vunpack.c.h.b16 %v191
    %v1087 = vunpack.c.l.b16 %v192
    %v1088 = vunpack.c.h.b16 %v192
    %v1089 = vunpack.c.l.b16 %v193
    %v1090 = vunpack.c.h.b16 %v193
    %v1091 = vunpack.c.l.b16 %v194
    %v1092 = vunpack.c.h.b16 %v194
    %v1093 = vunpack.c.l.b16 %v195
    %v1094 = vunpack.c.h.b16 %v195
    %v1095 = vunpack.c.l.b16 %v196
    %v1096 = vunpack.c.h.b16 %v196
    %v1097 = vunpack.c.l.b16 %v197
    %v1098 = vunpack.c.h.b16 %v197
    %v1099 = vunpack.c.l.b16 %v198
    %v1100 = vunpack.c.h.b16 %v198
    %v1101 = vunpack.c.l.b16 %v199
    %v1102 = vunpack.c.h.b16 %v199
    %v1103 = vunpack.c.l.b16 %v200
    %v1104 = vunpack.c.h.b16 %v200
    %v1105 = vunpack.c.l.b16 %v201
    %v1106 = vunpack.c.h.b16 %v201
    %v1107 = vunpack.c.l.b16 %v202
    %v1108 = vunpack.c.h.b16 %v202
    %v1109 = vunpack.c.l.b16 %v203
    %v1110 = vunpack.c.h.b16 %v203
    %v1111 = vunpack.c.l.b16 %v204
    %v1112 = vunpack.c.h.b16 %v204
    %v1113 = vunpack.c.l.b16 %v205
    %v1114 = vunpack.c.h.b16 %v205
    %v1115 = vunpack.c.l.b16 %v206
    %v1116 = vunpack.c.h.b16 %v206
    %v1117 = vunpack.c.l.b16 %v207
    %v1118 = vunpack.c.h.b16 %v207
    %v1119 = vunpack.c.l.b16 %v208
    %v1120 = vunpack.c.h.b16 %v208
    %v1121 = vunpack.c.l.b16 %v209
    %v1122 = vunpack.c.h.b16 %v209
    %v1123 = vunpack.c.l.b16 %v210
    %v1124 = vunpack.c.h.b16 %v210
    %v1125 = vunpack.c.l.b16 %v211
    %v1126 = vunpack.c.h.b16 %v211
    %v1127 = vunpack.c.l.b16 %v212
    %v1128 = vunpack.c.h.b16 %v212
    %v1129 = vunpack.c.l.b16 %v213
    %v1130 = vunpack.c.h.b16 %v213
    %v1131 = vunpack.c.l.b16 %v214
    %v1132 = vunpack.c.h.b16 %v214
    %v1133 = vunpack.c.l.b16 %v215
    %v1134 = vunpack.c.h.b16 %v215
    %v1135 = vunpack.c.l.b16 %v216
    %v1136 = vunpack.c.h.b16 %v216
    %v1137 = vunpack.c.l.b16 %v217
    %v1138 = vunpack.c.h.b16 %v217
    %v1139 = vunpack.c.l.b16 %v218
    %v1140 = vunpack.c.h.b16 %v218
    %v1141 = vunpack.c.l.b16 %v219
    %v1142 = vunpack.c.h.b16 %v219
    %v1143 = vunpack.c.l.b16 %v220
    %v1144 = vunpack.c.h.b16 %v220
    %v1145 = vunpack.c.l.b16 %v221
    %v1146 = vunpack.c.h.b16 %v221
    %v1147 = vunpack.c.l.b16 %v222
    %v1148 = vunpack.c.h.b16 %v222
    %v1149 = vunpack.c.l.b16 %v223
    %v1150 = vunpack.c.h.b16 %v223
    %v1151 = vunpack.c.l.b16 %v224
    %v1152 = vunpack.c.h.b16 %v224
    %v1153 = vunpack.c.l.b16 %v225
    %v1154 = vunpack.c.h.b16 %v225
    %v1155 = vunpack.c.l.b16 %v226
    %v1156 = vunpack.c.h.b16 %v226
    %v1157 = vunpack.c.l.b16 %v227
    %v1158 = vunpack.c.h.b16 %v227
    %v1159 = vunpack.c.l.b16 %v228
    %v1160 = vunpack.c.h.b16 %v228
    %v1161 = vpack.c.b16 %v1035, %v1033
    %v1162 = vpack.c.b16 %v1036, %v1034
    %v1163 = vpack.c.b16 %v1039, %v1037
    %v1164 = vpack.c.b16 %v1040, %v1038
    %v1165 = vpack.c.b16 %v1043, %v1041
    %v1166 = vpack.c.b16 %v1044, %v1042
    %v1167 = vpack.c.b16 %v1047, %v1045
    %v1168 = vpack.c.b16 %v1048, %v1046
    %v1169 = vpack.c.b16 %v1051, %v1049
    %v1170 = vpack.c.b16 %v1052, %v1050
    %v1171 = vpack.c.b16 %v1055, %v1053
    %v1172 = vpack.c.b16 %v1056, %v1054
    %v1173 = vpack.c.b16 %v1059, %v1057
    %v1174 = vpack.c.b16 %v1060, %v1058
    %v1175 = vpack.c.b16 %v1063, %v1061
    %v1176 = vpack.c.b16 %v1064, %v1062
    %v1177 = vpack.c.b16 %v1067, %v1065
    %v1178 = vpack.c.b16 %v1068, %v1066
    %v1179 = vpack.c.b16 %v1071, %v1069
    %v1180 = vpack.c.b16 %v1072, %v1070
    %v1181 = vpack.c.b16 %v1075, %v1073
    %v1182 = vpack.c.b16 %v1076, %v1074
    %v1183 = vpack.c.b16 %v1079, %v1077
    %v1184 = vpack.c.b16 %v1080, %v1078
    %v1185 = vpack.c.b16 %v1083, %v1081
    %v1186 = vpack.c.b16 %v1084, %v1082
    %v1187 = vpack.c.b16 %v1087, %v1085
    %v1188 = vpack.c.b16 %v1088, %v1086
    %v1189 = vpack.c.b16 %v1091, %v1089
    %v1190 = vpack.c.b16 %v1092, %v1090
    %v1191 = vpack.c.b16 %v1095, %v1093
    %v1192 = vpack.c.b16 %v1096, %v1094
    %v1193 = vpack.c.b16 %v1099, %v1097
    %v1194 = vpack.c.b16 %v1100, %v1098
    %v1195 = vpack.c.b16 %v1103, %v1101
    %v1196 = vpack.c.b16 %v1104, %v1102
    %v1197 = vpack.c.b16 %v1107, %v1105
    %v1198 = vpack.c.b16 %v1108, %v1106
    %v1199 = vpack.c.b16 %v1111, %v1109
    %v1200 = vpack.c.b16 %v1112, %v1110
    %v1201 = vpack.c.b16 %v1115, %v1113
    %v1202 = vpack.c.b16 %v1116, %v1114
    %v1203 = vpack.c.b16 %v1119, %v1117
    %v1204 = vpack.c.b16 %v1120, %v1118
    %v1205 = vpack.c.b16 %v1123, %v1121
    %v1206 = vpack.c.b16 %v1124, %v1122
    %v1207 = vpack.c.b16 %v1127, %v1125
    %v1208 = vpack.c.b16 %v1128, %v1126
    %v1209 = vpack.c.b16 %v1131, %v1129
    %v1210 = vpack.c.b16 %v1132, %v1130
    %v1211 = vpack.c.b16 %v1135, %v1133
    %v1212 = vpack.c.b16 %v1136, %v1134
    %v1213 = vpack.c.b16 %v1139, %v1137
    %v1214 = vpack.c.b16 %v1140, %v1138
    %v1215 = vpack.c.b16 %v1143, %v1141
    %v1216 = vpack.c.b16 %v1144, %v1142
    %v1217 = vpack.c.b16 %v1147, %v1145
    %v1218 = vpack.c.b16 %v1148, %v1146
    %v1219 = vpack.c.b16 %v1151, %v1149
    %v1220 = vpack.c.b16 %v1152, %v1150
    %v1221 = vpack.c.b16 %v1155, %v1153
    %v1222 = vpack.c.b16 %v1156, %v1154
    %v1223 = vpack.c.b16 %v1159, %v1157
    %v1224 = vpack.c.b16 %v1160, %v1158
    %1289 = vmatprep.subr.bf16.mxu0 %v1162
    %1290 = vmatpush1.bf16.msra.mxu0 %v1161
    %1291 = vmatprep.subr.bf16.mxu0 %v1164
    %1292 = vmatpush1.bf16.msra.mxu0 %v1163
    %1293 = vmatprep.subr.bf16.mxu0 %v1166
    %1294 = vmatpush1.bf16.msra.mxu0 %v1165
    %1295 = vmatprep.subr.bf16.mxu0 %v1168
    %1296 = vmatpush1.bf16.msra.mxu0 %v1167
    %1297 = vmatprep.subr.bf16.mxu0 %v1170
    %1298 = vmatpush1.bf16.msra.mxu0 %v1169
    %1299 = vmatprep.subr.bf16.mxu0 %v1172
    %1300 = vmatpush1.bf16.msra.mxu0 %v1171
    %1301 = vmatprep.subr.bf16.mxu0 %v1174
    %1302 = vmatpush1.bf16.msra.mxu0 %v1173
    %1303 = vmatprep.subr.bf16.mxu0 %v1176
    %1304 = vmatpush1.bf16.msra.mxu0 %v1175
    %1305 = vmatprep.subr.bf16.mxu0 %v1178
    %1306 = vmatpush1.bf16.msra.mxu0 %v1177
    %1307 = vmatprep.subr.bf16.mxu0 %v1180
    %1308 = vmatpush1.bf16.msra.mxu0 %v1179
    %1309 = vmatprep.subr.bf16.mxu0 %v1182
    %1310 = vmatpush1.bf16.msra.mxu0 %v1181
    %1311 = vmatprep.subr.bf16.mxu0 %v1184
    %1312 = vmatpush1.bf16.msra.mxu0 %v1183
    %1313 = vmatprep.subr.bf16.mxu0 %v1186
    %1314 = vmatpush1.bf16.msra.mxu0 %v1185
    %1315 = vmatprep.subr.bf16.mxu0 %v1188
    %1316 = vmatpush1.bf16.msra.mxu0 %v1187
    %1317 = vmatprep.subr.bf16.mxu0 %v1190
    %1318 = vmatpush1.bf16.msra.mxu0 %v1189
    %1319 = vmatprep.subr.bf16.mxu0 %v1192
    %1320 = vmatpush1.bf16.msra.mxu0 %v1191
    %1321 = vmatprep.mubr.bf16.mxu0 %v134
    %1322 = vmatmul.mubr.bf16.gmra.mrb[0].mxu0 %v133
    %v1323 = vpop.f32.mrb[0].mxu0
    %v1324 = vadd.f32 %v891, %v1323
    %v1325 = vpop.f32.mrb[0].mxu0
    %v1326 = vadd.f32 %v893, %v1325
    %v1327 = vpop.f32.mrb[0].mxu0
    %v1328 = vadd.f32 %v895, %v1327
    %v1329 = vpop.f32.mrb[0].mxu0
    %v1330 = vadd.f32 %v897, %v1329
    %1331 = vmatprep.mubr.bf16.mxu0 %v138
    %1332 = vmatmul.mubr.bf16.gmra.mrb[0].mxu0 %v137
    %v1333 = vpop.f32.mrb[0].mxu0
    %v1334 = vadd.f32 %v901, %v1333
    %v1335 = vpop.f32.mrb[0].mxu0
    %v1336 = vadd.f32 %v903, %v1335
    %v1337 = vpop.f32.mrb[0].mxu0
    %v1338 = vadd.f32 %v905, %v1337
    %v1339 = vpop.f32.mrb[0].mxu0
    %v1340 = vadd.f32 %v907, %v1339
    %1341 = vmatprep.mubr.bf16.mxu0 %v142
    %1342 = vmatmul.mubr.bf16.gmra.mrb[0].mxu0 %v141
    %v1343 = vpop.f32.mrb[0].mxu0
    %v1344 = vadd.f32 %v911, %v1343
    %v1345 = vpop.f32.mrb[0].mxu0
    %v1346 = vadd.f32 %v913, %v1345
    %v1347 = vpop.f32.mrb[0].mxu0
    %v1348 = vadd.f32 %v915, %v1347
    %v1349 = vpop.f32.mrb[0].mxu0
    %v1350 = vadd.f32 %v917, %v1349
    %1351 = vmatprep.mubr.bf16.mxu0 %v146
    %1352 = vmatmul.mubr.bf16.gmra.mrb[0].mxu0 %v145
    %v1353 = vpop.f32.mrb[0].mxu0
    %v1354 = vadd.f32 %v921, %v1353
    %v1355 = vpop.f32.mrb[0].mxu0
    %v1356 = vadd.f32 %v923, %v1355
    %v1357 = vpop.f32.mrb[0].mxu0
    %v1358 = vadd.f32 %v925, %v1357
    %v1359 = vpop.f32.mrb[0].mxu0
    %v1360 = vadd.f32 %v927, %v1359
    %1361 = vmatprep.mubr.bf16.mxu0 %v150
    %1362 = vmatmul.mubr.bf16.gmra.mrb[0].mxu0 %v149
    %v1363 = vpop.f32.mrb[0].mxu0
    %v1364 = vadd.f32 %v931, %v1363
    %v1365 = vpop.f32.mrb[0].mxu0
    %v1366 = vadd.f32 %v933, %v1365
    %v1367 = vpop.f32.mrb[0].mxu0
    %v1368 = vadd.f32 %v935, %v1367
    %v1369 = vpop.f32.mrb[0].mxu0
    %v1370 = vadd.f32 %v937, %v1369
    %1371 = vmatprep.mubr.bf16.mxu0 %v154
    %1372 = vmatmul.mubr.bf16.gmra.mrb[0].mxu0 %v153
    %v1373 = vpop.f32.mrb[0].mxu0
    %v1374 = vadd.f32 %v941, %v1373
    %v1375 = vpop.f32.mrb[0].mxu0
    %v1376 = vadd.f32 %v943, %v1375
    %v1377 = vpop.f32.mrb[0].mxu0
    %v1378 = vadd.f32 %v945, %v1377
    %v1379 = vpop.f32.mrb[0].mxu0
    %v1380 = vadd.f32 %v947, %v1379
    %1381 = vmatprep.mubr.bf16.mxu0 %v158
    %1382 = vmatmul.mubr.bf16.gmra.mrb[0].mxu0 %v157
    %v1383 = vpop.f32.mrb[0].mxu0
    %v1384 = vadd.f32 %v951, %v1383
    %v1385 = vpop.f32.mrb[0].mxu0
    %v1386 = vadd.f32 %v953, %v1385
    %v1387 = vpop.f32.mrb[0].mxu0
    %v1388 = vadd.f32 %v955, %v1387
    %v1389 = vpop.f32.mrb[0].mxu0
    %v1390 = vadd.f32 %v957, %v1389
    %1391 = vmatprep.mubr.bf16.mxu0 %v162
    %1392 = vmatmul.mubr.bf16.gmra.mrb[0].mxu0 %v161
    %v1393 = vpop.f32.mrb[0].mxu0
    %v1394 = vadd.f32 %v961, %v1393
    %v1395 = vpop.f32.mrb[0].mxu0
    %v1396 = vadd.f32 %v963, %v1395
    %v1397 = vpop.f32.mrb[0].mxu0
    %v1398 = vadd.f32 %v965, %v1397
    %v1399 = vpop.f32.mrb[0].mxu0
    %v1400 = vadd.f32 %v967, %v1399
    %1401 = vdwg.mxu0
    %1402 = vmatprep.subr.bf16.mxu0 %v1194
    %1403 = vmatpush1.bf16.msra.mxu0 %v1193
    %1404 = vmatprep.subr.bf16.mxu0 %v1196
    %1405 = vmatpush1.bf16.msra.mxu0 %v1195
    %1406 = vmatprep.subr.bf16.mxu0 %v1198
    %1407 = vmatpush1.bf16.msra.mxu0 %v1197
    %1408 = vmatprep.subr.bf16.mxu0 %v1200
    %1409 = vmatpush1.bf16.msra.mxu0 %v1199
    %1410 = vmatprep.subr.bf16.mxu0 %v1202
    %1411 = vmatpush1.bf16.msra.mxu0 %v1201
    %1412 = vmatprep.subr.bf16.mxu0 %v1204
    %1413 = vmatpush1.bf16.msra.mxu0 %v1203
    %1414 = vmatprep.subr.bf16.mxu0 %v1206
    %1415 = vmatpush1.bf16.msra.mxu0 %v1205
    %1416 = vmatprep.subr.bf16.mxu0 %v1208
    %1417 = vmatpush1.bf16.msra.mxu0 %v1207
    %1418 = vmatprep.subr.bf16.mxu0 %v1210
    %1419 = vmatpush1.bf16.msra.mxu0 %v1209
    %1420 = vmatprep.subr.bf16.mxu0 %v1212
    %1421 = vmatpush1.bf16.msra.mxu0 %v1211
    %1422 = vmatprep.subr.bf16.mxu0 %v1214
    %1423 = vmatpush1.bf16.msra.mxu0 %v1213
    %1424 = vmatprep.subr.bf16.mxu0 %v1216
    %1425 = vmatpush1.bf16.msra.mxu0 %v1215
    %1426 = vmatprep.subr.bf16.mxu0 %v1218
    %1427 = vmatpush1.bf16.msra.mxu0 %v1217
    %1428 = vmatprep.subr.bf16.mxu0 %v1220
    %1429 = vmatpush1.bf16.msra.mxu0 %v1219
    %1430 = vmatprep.subr.bf16.mxu0 %v1222
    %1431 = vmatpush1.bf16.msra.mxu0 %v1221
    %1432 = vmatprep.subr.bf16.mxu0 %v1224
    %1433 = vmatpush1.bf16.msra.mxu0 %v1223
    %1434 = vmatprep.mubr.bf16.mxu0 %v136
    %1435 = vmatmul.mubr.bf16.gmra.mrb[0].mxu0 %v135
    %v1436 = vpop.f32.mrb[0].mxu0
    %v1437 = vadd.f32 %v1324, %v1436
    %v1438 = vpop.f32.mrb[0].mxu0
    %v1439 = vadd.f32 %v1326, %v1438
    %v1440 = vpop.f32.mrb[0].mxu0
    %v1441 = vadd.f32 %v1328, %v1440
    %v1442 = vpop.f32.mrb[0].mxu0
    %v1443 = vadd.f32 %v1330, %v1442
    %1444 = vmatprep.mubr.bf16.mxu0 %v140
    %1445 = vmatmul.mubr.bf16.gmra.mrb[0].mxu0 %v139
    %v1446 = vpop.f32.mrb[0].mxu0
    %v1447 = vadd.f32 %v1334, %v1446
    %v1448 = vpop.f32.mrb[0].mxu0
    %v1449 = vadd.f32 %v1336, %v1448
    %v1450 = vpop.f32.mrb[0].mxu0
    %v1451 = vadd.f32 %v1338, %v1450
    %v1452 = vpop.f32.mrb[0].mxu0
    %v1453 = vadd.f32 %v1340, %v1452
    %1454 = vmatprep.mubr.bf16.mxu0 %v144
    %1455 = vmatmul.mubr.bf16.gmra.mrb[0].mxu0 %v143
    %v1456 = vpop.f32.mrb[0].mxu0
    %v1457 = vadd.f32 %v1344, %v1456
    %v1458 = vpop.f32.mrb[0].mxu0
    %v1459 = vadd.f32 %v1346, %v1458
    %v1460 = vpop.f32.mrb[0].mxu0
    %v1461 = vadd.f32 %v1348, %v1460
    %v1462 = vpop.f32.mrb[0].mxu0
    %v1463 = vadd.f32 %v1350, %v1462
    %1464 = vmatprep.mubr.bf16.mxu0 %v148
    %1465 = vmatmul.mubr.bf16.gmra.mrb[0].mxu0 %v147
    %v1466 = vpop.f32.mrb[0].mxu0
    %v1467 = vadd.f32 %v1354, %v1466
    %v1468 = vpop.f32.mrb[0].mxu0
    %v1469 = vadd.f32 %v1356, %v1468
    %v1470 = vpop.f32.mrb[0].mxu0
    %v1471 = vadd.f32 %v1358, %v1470
    %v1472 = vpop.f32.mrb[0].mxu0
    %v1473 = vadd.f32 %v1360, %v1472
    %1474 = vmatprep.mubr.bf16.mxu0 %v152
    %1475 = vmatmul.mubr.bf16.gmra.mrb[0].mxu0 %v151
    %v1476 = vpop.f32.mrb[0].mxu0
    %v1477 = vadd.f32 %v1364, %v1476
    %v1478 = vpop.f32.mrb[0].mxu0
    %v1479 = vadd.f32 %v1366, %v1478
    %v1480 = vpop.f32.mrb[0].mxu0
    %v1481 = vadd.f32 %v1368, %v1480
    %v1482 = vpop.f32.mrb[0].mxu0
    %v1483 = vadd.f32 %v1370, %v1482
    %1484 = vmatprep.mubr.bf16.mxu0 %v156
    %1485 = vmatmul.mubr.bf16.gmra.mrb[0].mxu0 %v155
    %v1486 = vpop.f32.mrb[0].mxu0
    %v1487 = vadd.f32 %v1374, %v1486
    %v1488 = vpop.f32.mrb[0].mxu0
    %v1489 = vadd.f32 %v1376, %v1488
    %v1490 = vpop.f32.mrb[0].mxu0
    %v1491 = vadd.f32 %v1378, %v1490
    %v1492 = vpop.f32.mrb[0].mxu0
    %v1493 = vadd.f32 %v1380, %v1492
    %1494 = vmatprep.mubr.bf16.mxu0 %v160
    %1495 = vmatmul.mubr.bf16.gmra.mrb[0].mxu0 %v159
    %v1496 = vpop.f32.mrb[0].mxu0
    %v1497 = vadd.f32 %v1384, %v1496
    %v1498 = vpop.f32.mrb[0].mxu0
    %v1499 = vadd.f32 %v1386, %v1498
    %v1500 = vpop.f32.mrb[0].mxu0
    %v1501 = vadd.f32 %v1388, %v1500
    %v1502 = vpop.f32.mrb[0].mxu0
    %v1503 = vadd.f32 %v1390, %v1502
    %1504 = vmatprep.mubr.bf16.mxu0 %v164
    %1505 = vmatmul.mubr.bf16.gmra.mrb[0].mxu0 %v163
    %v1506 = vpop.f32.mrb[0].mxu0
    %v1507 = vadd.f32 %v1394, %v1506
    %v1508 = vpop.f32.mrb[0].mxu0
    %v1509 = vadd.f32 %v1396, %v1508
    %v1510 = vpop.f32.mrb[0].mxu0
    %v1511 = vadd.f32 %v1398, %v1510
    %v1512 = vpop.f32.mrb[0].mxu0
    %v1513 = vadd.f32 %v1400, %v1512
    %1514 = vdwg.mxu0
    %s1515 = scalar_lea.vmem %s0, 1152
    %v1516 = vld [vmem:[%s1515] sm:$0xff]
    %v1517 = vld [vmem:[%s1515 + $0x8] sm:$0xff]
    %v1518 = vld [vmem:[%s1515 + $0x10] sm:$0xff]
    %v1519 = vld [vmem:[%s1515 + $0x18] sm:$0xff]
    %v1520 = vld [vmem:[%s1515 + $0x20] sm:$0xff]
    %v1521 = vld [vmem:[%s1515 + $0x28] sm:$0xff]
    %v1522 = vld [vmem:[%s1515 + $0x30] sm:$0xff]
    %v1523 = vld [vmem:[%s1515 + $0x38] sm:$0xff]
    %v1524 = vld [vmem:[%s1515 + $0x40] sm:$0xff]
    %v1525 = vld [vmem:[%s1515 + $0x48] sm:$0xff]
    %v1526 = vld [vmem:[%s1515 + $0x50] sm:$0xff]
    %v1527 = vld [vmem:[%s1515 + $0x58] sm:$0xff]
    %v1528 = vld [vmem:[%s1515 + $0x60] sm:$0xff]
    %v1529 = vld [vmem:[%s1515 + $0x68] sm:$0xff]
    %v1530 = vld [vmem:[%s1515 + $0x70] sm:$0xff]
    %v1531 = vld [vmem:[%s1515 + $0x78] sm:$0xff]
    %v1532 = vld [vmem:[%s1515 + $0x90] sm:$0xff]
    %v1533 = vld [vmem:[%s1515 + $0x98] sm:$0xff]
    %v1534 = vld [vmem:[%s1515 + $0xa0] sm:$0xff]
    %v1535 = vld [vmem:[%s1515 + $0xa8] sm:$0xff]
    %v1536 = vld [vmem:[%s1515 + $0xb0] sm:$0xff]
    %v1537 = vld [vmem:[%s1515 + $0xb8] sm:$0xff]
    %v1538 = vld [vmem:[%s1515 + $0xc0] sm:$0xff]
    %v1539 = vld [vmem:[%s1515 + $0xc8] sm:$0xff]
    %v1540 = vld [vmem:[%s1515 + $0xd0] sm:$0xff]
    %v1541 = vld [vmem:[%s1515 + $0xd8] sm:$0xff]
    %v1542 = vld [vmem:[%s1515 + $0xe0] sm:$0xff]
    %v1543 = vld [vmem:[%s1515 + $0xe8] sm:$0xff]
    %v1544 = vld [vmem:[%s1515 + $0xf0] sm:$0xff]
    %v1545 = vld [vmem:[%s1515 + $0xf8] sm:$0xff]
    %v1546 = vld [vmem:[%s1515 + $0x100] sm:$0xff]
    %v1547 = vld [vmem:[%s1515 + $0x108] sm:$0xff]
    %v1548 = vunpack.c.l.bf16 %v1516
    %v1549 = vunpack.c.h.bf16 %v1516
    %v1550 = vunpack.c.l.bf16 %v1517
    %v1551 = vunpack.c.h.bf16 %v1517
    %v1552 = vunpack.c.l.bf16 %v1518
    %v1553 = vunpack.c.h.bf16 %v1518
    %v1554 = vunpack.c.l.bf16 %v1519
    %v1555 = vunpack.c.h.bf16 %v1519
    %v1556 = vunpack.c.l.bf16 %v1520
    %v1557 = vunpack.c.h.bf16 %v1520
    %v1558 = vunpack.c.l.bf16 %v1521
    %v1559 = vunpack.c.h.bf16 %v1521
    %v1560 = vunpack.c.l.bf16 %v1522
    %v1561 = vunpack.c.h.bf16 %v1522
    %v1562 = vunpack.c.l.bf16 %v1523
    %v1563 = vunpack.c.h.bf16 %v1523
    %v1564 = vunpack.c.l.bf16 %v1524
    %v1565 = vunpack.c.h.bf16 %v1524
    %v1566 = vunpack.c.l.bf16 %v1525
    %v1567 = vunpack.c.h.bf16 %v1525
    %v1568 = vunpack.c.l.bf16 %v1526
    %v1569 = vunpack.c.h.bf16 %v1526
    %v1570 = vunpack.c.l.bf16 %v1527
    %v1571 = vunpack.c.h.bf16 %v1527
    %v1572 = vunpack.c.l.bf16 %v1528
    %v1573 = vunpack.c.h.bf16 %v1528
    %v1574 = vunpack.c.l.bf16 %v1529
    %v1575 = vunpack.c.h.bf16 %v1529
    %v1576 = vunpack.c.l.bf16 %v1530
    %v1577 = vunpack.c.h.bf16 %v1530
    %v1578 = vunpack.c.l.bf16 %v1531
    %v1579 = vunpack.c.h.bf16 %v1531
    %v1580 = vunpack.c.l.bf16 %v1532
    %v1581 = vunpack.c.h.bf16 %v1532
    %v1582 = vunpack.c.l.bf16 %v1533
    %v1583 = vunpack.c.h.bf16 %v1533
    %v1584 = vunpack.c.l.bf16 %v1534
    %v1585 = vunpack.c.h.bf16 %v1534
    %v1586 = vunpack.c.l.bf16 %v1535
    %v1587 = vunpack.c.h.bf16 %v1535
    %v1588 = vunpack.c.l.bf16 %v1536
    %v1589 = vunpack.c.h.bf16 %v1536
    %v1590 = vunpack.c.l.bf16 %v1537
    %v1591 = vunpack.c.h.bf16 %v1537
    %v1592 = vunpack.c.l.bf16 %v1538
    %v1593 = vunpack.c.h.bf16 %v1538
    %v1594 = vunpack.c.l.bf16 %v1539
    %v1595 = vunpack.c.h.bf16 %v1539
    %v1596 = vunpack.c.l.bf16 %v1540
    %v1597 = vunpack.c.h.bf16 %v1540
    %v1598 = vunpack.c.l.bf16 %v1541
    %v1599 = vunpack.c.h.bf16 %v1541
    %v1600 = vunpack.c.l.bf16 %v1542
    %v1601 = vunpack.c.h.bf16 %v1542
    %v1602 = vunpack.c.l.bf16 %v1543
    %v1603 = vunpack.c.h.bf16 %v1543
    %v1604 = vunpack.c.l.bf16 %v1544
    %v1605 = vunpack.c.h.bf16 %v1544
    %v1606 = vunpack.c.l.bf16 %v1545
    %v1607 = vunpack.c.h.bf16 %v1545
    %v1608 = vunpack.c.l.bf16 %v1546
    %v1609 = vunpack.c.h.bf16 %v1546
    %v1610 = vunpack.c.l.bf16 %v1547
    %v1611 = vunpack.c.h.bf16 %v1547
    %v1612 = vpack.c.bf16 %v1552, %v1548
    %v1613 = vpack.c.bf16 %v1553, %v1549
    %v1614 = vpack.c.bf16 %v1554, %v1550
    %v1615 = vpack.c.bf16 %v1555, %v1551
    %v1616 = vpack.c.bf16 %v1560, %v1556
    %v1617 = vpack.c.bf16 %v1561, %v1557
    %v1618 = vpack.c.bf16 %v1562, %v1558
    %v1619 = vpack.c.bf16 %v1563, %v1559
    %v1620 = vpack.c.bf16 %v1568, %v1564
    %v1621 = vpack.c.bf16 %v1569, %v1565
    %v1622 = vpack.c.bf16 %v1570, %v1566
    %v1623 = vpack.c.bf16 %v1571, %v1567
    %v1624 = vpack.c.bf16 %v1576, %v1572
    %v1625 = vpack.c.bf16 %v1577, %v1573
    %v1626 = vpack.c.bf16 %v1578, %v1574
    %v1627 = vpack.c.bf16 %v1579, %v1575
    %v1628 = vpack.c.bf16 %v1584, %v1580
    %v1629 = vpack.c.bf16 %v1585, %v1581
    %v1630 = vpack.c.bf16 %v1586, %v1582
    %v1631 = vpack.c.bf16 %v1587, %v1583
    %v1632 = vpack.c.bf16 %v1592, %v1588
    %v1633 = vpack.c.bf16 %v1593, %v1589
    %v1634 = vpack.c.bf16 %v1594, %v1590
    %v1635 = vpack.c.bf16 %v1595, %v1591
    %v1636 = vpack.c.bf16 %v1600, %v1596
    %v1637 = vpack.c.bf16 %v1601, %v1597
    %v1638 = vpack.c.bf16 %v1602, %v1598
    %v1639 = vpack.c.bf16 %v1603, %v1599
    %v1640 = vpack.c.bf16 %v1608, %v1604
    %v1641 = vpack.c.bf16 %v1609, %v1605
    %v1642 = vpack.c.bf16 %v1610, %v1606
    %v1643 = vpack.c.bf16 %v1611, %v1607
    %s1644 = scalar_lea.vmem %s1, 1024
    %v1645 = vld [vmem:[%s1644] sm:$0xff]
    %v1646 = vld [vmem:[%s1644 + $0x8] sm:$0xff]
    %v1647 = vld [vmem:[%s1644 + $0x10] sm:$0xff]
    %v1648 = vld [vmem:[%s1644 + $0x18] sm:$0xff]
    %v1649 = vld [vmem:[%s1644 + $0x20] sm:$0xff]
    %v1650 = vld [vmem:[%s1644 + $0x28] sm:$0xff]
    %v1651 = vld [vmem:[%s1644 + $0x30] sm:$0xff]
    %v1652 = vld [vmem:[%s1644 + $0x38] sm:$0xff]
    %v1653 = vld [vmem:[%s1644 + $0x40] sm:$0xff]
    %v1654 = vld [vmem:[%s1644 + $0x48] sm:$0xff]
    %v1655 = vld [vmem:[%s1644 + $0x50] sm:$0xff]
    %v1656 = vld [vmem:[%s1644 + $0x58] sm:$0xff]
    %v1657 = vld [vmem:[%s1644 + $0x60] sm:$0xff]
    %v1658 = vld [vmem:[%s1644 + $0x68] sm:$0xff]
    %v1659 = vld [vmem:[%s1644 + $0x70] sm:$0xff]
    %v1660 = vld [vmem:[%s1644 + $0x78] sm:$0xff]
    %v1661 = vld [vmem:[%s1644 + $0x80] sm:$0xff]
    %v1662 = vld [vmem:[%s1644 + $0x88] sm:$0xff]
    %v1663 = vld [vmem:[%s1644 + $0x90] sm:$0xff]
    %v1664 = vld [vmem:[%s1644 + $0x98] sm:$0xff]
    %v1665 = vld [vmem:[%s1644 + $0xa0] sm:$0xff]
    %v1666 = vld [vmem:[%s1644 + $0xa8] sm:$0xff]
    %v1667 = vld [vmem:[%s1644 + $0xb0] sm:$0xff]
    %v1668 = vld [vmem:[%s1644 + $0xb8] sm:$0xff]
    %v1669 = vld [vmem:[%s1644 + $0xc0] sm:$0xff]
    %v1670 = vld [vmem:[%s1644 + $0xc8] sm:$0xff]
    %v1671 = vld [vmem:[%s1644 + $0xd0] sm:$0xff]
    %v1672 = vld [vmem:[%s1644 + $0xd8] sm:$0xff]
    %v1673 = vld [vmem:[%s1644 + $0xe0] sm:$0xff]
    %v1674 = vld [vmem:[%s1644 + $0xe8] sm:$0xff]
    %v1675 = vld [vmem:[%s1644 + $0xf0] sm:$0xff]
    %v1676 = vld [vmem:[%s1644 + $0xf8] sm:$0xff]
    %v1677 = vld [vmem:[%s1644 + $0x100] sm:$0xff]
    %v1678 = vld [vmem:[%s1644 + $0x108] sm:$0xff]
    %v1679 = vld [vmem:[%s1644 + $0x110] sm:$0xff]
    %v1680 = vld [vmem:[%s1644 + $0x118] sm:$0xff]
    %v1681 = vld [vmem:[%s1644 + $0x120] sm:$0xff]
    %v1682 = vld [vmem:[%s1644 + $0x128] sm:$0xff]
    %v1683 = vld [vmem:[%s1644 + $0x130] sm:$0xff]
    %v1684 = vld [vmem:[%s1644 + $0x138] sm:$0xff]
    %v1685 = vld [vmem:[%s1644 + $0x140] sm:$0xff]
    %v1686 = vld [vmem:[%s1644 + $0x148] sm:$0xff]
    %v1687 = vld [vmem:[%s1644 + $0x150] sm:$0xff]
    %v1688 = vld [vmem:[%s1644 + $0x158] sm:$0xff]
    %v1689 = vld [vmem:[%s1644 + $0x160] sm:$0xff]
    %v1690 = vld [vmem:[%s1644 + $0x168] sm:$0xff]
    %v1691 = vld [vmem:[%s1644 + $0x170] sm:$0xff]
    %v1692 = vld [vmem:[%s1644 + $0x178] sm:$0xff]
    %v1693 = vld [vmem:[%s1644 + $0x180] sm:$0xff]
    %v1694 = vld [vmem:[%s1644 + $0x188] sm:$0xff]
    %v1695 = vld [vmem:[%s1644 + $0x190] sm:$0xff]
    %v1696 = vld [vmem:[%s1644 + $0x198] sm:$0xff]
    %v1697 = vld [vmem:[%s1644 + $0x1a0] sm:$0xff]
    %v1698 = vld [vmem:[%s1644 + $0x1a8] sm:$0xff]
    %v1699 = vld [vmem:[%s1644 + $0x1b0] sm:$0xff]
    %v1700 = vld [vmem:[%s1644 + $0x1b8] sm:$0xff]
    %v1701 = vld [vmem:[%s1644 + $0x1c0] sm:$0xff]
    %v1702 = vld [vmem:[%s1644 + $0x1c8] sm:$0xff]
    %v1703 = vld [vmem:[%s1644 + $0x1d0] sm:$0xff]
    %v1704 = vld [vmem:[%s1644 + $0x1d8] sm:$0xff]
    %v1705 = vld [vmem:[%s1644 + $0x1e0] sm:$0xff]
    %v1706 = vld [vmem:[%s1644 + $0x1e8] sm:$0xff]
    %v1707 = vld [vmem:[%s1644 + $0x1f0] sm:$0xff]
    %v1708 = vld [vmem:[%s1644 + $0x1f8] sm:$0xff]
    %v1773 = vunpack.c.l.b16 %v1645
    %v1774 = vunpack.c.h.b16 %v1645
    %v1775 = vunpack.c.l.b16 %v1646
    %v1776 = vunpack.c.h.b16 %v1646
    %v1777 = vunpack.c.l.b16 %v1647
    %v1778 = vunpack.c.h.b16 %v1647
    %v1779 = vunpack.c.l.b16 %v1648
    %v1780 = vunpack.c.h.b16 %v1648
    %v1781 = vunpack.c.l.b16 %v1649
    %v1782 = vunpack.c.h.b16 %v1649
    %v1783 = vunpack.c.l.b16 %v1650
    %v1784 = vunpack.c.h.b16 %v1650
    %v1785 = vunpack.c.l.b16 %v1651
    %v1786 = vunpack.c.h.b16 %v1651
    %v1787 = vunpack.c.l.b16 %v1652
    %v1788 = vunpack.c.h.b16 %v1652
    %v1789 = vunpack.c.l.b16 %v1653
    %v1790 = vunpack.c.h.b16 %v1653
    %v1791 = vunpack.c.l.b16 %v1654
    %v1792 = vunpack.c.h.b16 %v1654
    %v1793 = vunpack.c.l.b16 %v1655
    %v1794 = vunpack.c.h.b16 %v1655
    %v1795 = vunpack.c.l.b16 %v1656
    %v1796 = vunpack.c.h.b16 %v1656
    %v1797 = vunpack.c.l.b16 %v1657
    %v1798 = vunpack.c.h.b16 %v1657
    %v1799 = vunpack.c.l.b16 %v1658
    %v1800 = vunpack.c.h.b16 %v1658
    %v1801 = vunpack.c.l.b16 %v1659
    %v1802 = vunpack.c.h.b16 %v1659
    %v1803 = vunpack.c.l.b16 %v1660
    %v1804 = vunpack.c.h.b16 %v1660
    %v1805 = vunpack.c.l.b16 %v1661
    %v1806 = vunpack.c.h.b16 %v1661
    %v1807 = vunpack.c.l.b16 %v1662
    %v1808 = vunpack.c.h.b16 %v1662
    %v1809 = vunpack.c.l.b16 %v1663
    %v1810 = vunpack.c.h.b16 %v1663
    %v1811 = vunpack.c.l.b16 %v1664
    %v1812 = vunpack.c.h.b16 %v1664
    %v1813 = vunpack.c.l.b16 %v1665
    %v1814 = vunpack.c.h.b16 %v1665
    %v1815 = vunpack.c.l.b16 %v1666
    %v1816 = vunpack.c.h.b16 %v1666
    %v1817 = vunpack.c.l.b16 %v1667
    %v1818 = vunpack.c.h.b16 %v1667
    %v1819 = vunpack.c.l.b16 %v1668
    %v1820 = vunpack.c.h.b16 %v1668
    %v1821 = vunpack.c.l.b16 %v1669
    %v1822 = vunpack.c.h.b16 %v1669
    %v1823 = vunpack.c.l.b16 %v1670
    %v1824 = vunpack.c.h.b16 %v1670
    %v1825 = vunpack.c.l.b16 %v1671
    %v1826 = vunpack.c.h.b16 %v1671
    %v1827 = vunpack.c.l.b16 %v1672
    %v1828 = vunpack.c.h.b16 %v1672
    %v1829 = vunpack.c.l.b16 %v1673
    %v1830 = vunpack.c.h.b16 %v1673
    %v1831 = vunpack.c.l.b16 %v1674
    %v1832 = vunpack.c.h.b16 %v1674
    %v1833 = vunpack.c.l.b16 %v1675
    %v1834 = vunpack.c.h.b16 %v1675
    %v1835 = vunpack.c.l.b16 %v1676
    %v1836 = vunpack.c.h.b16 %v1676
    %v1837 = vunpack.c.l.b16 %v1677
    %v1838 = vunpack.c.h.b16 %v1677
    %v1839 = vunpack.c.l.b16 %v1678
    %v1840 = vunpack.c.h.b16 %v1678
    %v1841 = vunpack.c.l.b16 %v1679
    %v1842 = vunpack.c.h.b16 %v1679
    %v1843 = vunpack.c.l.b16 %v1680
    %v1844 = vunpack.c.h.b16 %v1680
    %v1845 = vunpack.c.l.b16 %v1681
    %v1846 = vunpack.c.h.b16 %v1681
    %v1847 = vunpack.c.l.b16 %v1682
    %v1848 = vunpack.c.h.b16 %v1682
    %v1849 = vunpack.c.l.b16 %v1683
    %v1850 = vunpack.c.h.b16 %v1683
    %v1851 = vunpack.c.l.b16 %v1684
    %v1852 = vunpack.c.h.b16 %v1684
    %v1853 = vunpack.c.l.b16 %v1685
    %v1854 = vunpack.c.h.b16 %v1685
    %v1855 = vunpack.c.l.b16 %v1686
    %v1856 = vunpack.c.h.b16 %v1686
    %v1857 = vunpack.c.l.b16 %v1687
    %v1858 = vunpack.c.h.b16 %v1687
    %v1859 = vunpack.c.l.b16 %v1688
    %v1860 = vunpack.c.h.b16 %v1688
    %v1861 = vunpack.c.l.b16 %v1689
    %v1862 = vunpack.c.h.b16 %v1689
    %v1863 = vunpack.c.l.b16 %v1690
    %v1864 = vunpack.c.h.b16 %v1690
    %v1865 = vunpack.c.l.b16 %v1691
    %v1866 = vunpack.c.h.b16 %v1691
    %v1867 = vunpack.c.l.b16 %v1692
    %v1868 = vunpack.c.h.b16 %v1692
    %v1869 = vunpack.c.l.b16 %v1693
    %v1870 = vunpack.c.h.b16 %v1693
    %v1871 = vunpack.c.l.b16 %v1694
    %v1872 = vunpack.c.h.b16 %v1694
    %v1873 = vunpack.c.l.b16 %v1695
    %v1874 = vunpack.c.h.b16 %v1695
    %v1875 = vunpack.c.l.b16 %v1696
    %v1876 = vunpack.c.h.b16 %v1696
    %v1877 = vunpack.c.l.b16 %v1697
    %v1878 = vunpack.c.h.b16 %v1697
    %v1879 = vunpack.c.l.b16 %v1698
    %v1880 = vunpack.c.h.b16 %v1698
    %v1881 = vunpack.c.l.b16 %v1699
    %v1882 = vunpack.c.h.b16 %v1699
    %v1883 = vunpack.c.l.b16 %v1700
    %v1884 = vunpack.c.h.b16 %v1700
    %v1885 = vunpack.c.l.b16 %v1701
    %v1886 = vunpack.c.h.b16 %v1701
    %v1887 = vunpack.c.l.b16 %v1702
    %v1888 = vunpack.c.h.b16 %v1702
    %v1889 = vunpack.c.l.b16 %v1703
    %v1890 = vunpack.c.h.b16 %v1703
    %v1891 = vunpack.c.l.b16 %v1704
    %v1892 = vunpack.c.h.b16 %v1704
    %v1893 = vunpack.c.l.b16 %v1705
    %v1894 = vunpack.c.h.b16 %v1705
    %v1895 = vunpack.c.l.b16 %v1706
    %v1896 = vunpack.c.h.b16 %v1706
    %v1897 = vunpack.c.l.b16 %v1707
    %v1898 = vunpack.c.h.b16 %v1707
    %v1899 = vunpack.c.l.b16 %v1708
    %v1900 = vunpack.c.h.b16 %v1708
    %v1901 = vpack.c.b16 %v1775, %v1773
    %v1902 = vpack.c.b16 %v1776, %v1774
    %v1903 = vpack.c.b16 %v1779, %v1777
    %v1904 = vpack.c.b16 %v1780, %v1778
    %v1905 = vpack.c.b16 %v1783, %v1781
    %v1906 = vpack.c.b16 %v1784, %v1782
    %v1907 = vpack.c.b16 %v1787, %v1785
    %v1908 = vpack.c.b16 %v1788, %v1786
    %v1909 = vpack.c.b16 %v1791, %v1789
    %v1910 = vpack.c.b16 %v1792, %v1790
    %v1911 = vpack.c.b16 %v1795, %v1793
    %v1912 = vpack.c.b16 %v1796, %v1794
    %v1913 = vpack.c.b16 %v1799, %v1797
    %v1914 = vpack.c.b16 %v1800, %v1798
    %v1915 = vpack.c.b16 %v1803, %v1801
    %v1916 = vpack.c.b16 %v1804, %v1802
    %v1917 = vpack.c.b16 %v1807, %v1805
    %v1918 = vpack.c.b16 %v1808, %v1806
    %v1919 = vpack.c.b16 %v1811, %v1809
    %v1920 = vpack.c.b16 %v1812, %v1810
    %v1921 = vpack.c.b16 %v1815, %v1813
    %v1922 = vpack.c.b16 %v1816, %v1814
    %v1923 = vpack.c.b16 %v1819, %v1817
    %v1924 = vpack.c.b16 %v1820, %v1818
    %v1925 = vpack.c.b16 %v1823, %v1821
    %v1926 = vpack.c.b16 %v1824, %v1822
    %v1927 = vpack.c.b16 %v1827, %v1825
    %v1928 = vpack.c.b16 %v1828, %v1826
    %v1929 = vpack.c.b16 %v1831, %v1829
    %v1930 = vpack.c.b16 %v1832, %v1830
    %v1931 = vpack.c.b16 %v1835, %v1833
    %v1932 = vpack.c.b16 %v1836, %v1834
    %v1933 = vpack.c.b16 %v1839, %v1837
    %v1934 = vpack.c.b16 %v1840, %v1838
    %v1935 = vpack.c.b16 %v1843, %v1841
    %v1936 = vpack.c.b16 %v1844, %v1842
    %v1937 = vpack.c.b16 %v1847, %v1845
    %v1938 = vpack.c.b16 %v1848, %v1846
    %v1939 = vpack.c.b16 %v1851, %v1849
    %v1940 = vpack.c.b16 %v1852, %v1850
    %v1941 = vpack.c.b16 %v1855, %v1853
    %v1942 = vpack.c.b16 %v1856, %v1854
    %v1943 = vpack.c.b16 %v1859, %v1857
    %v1944 = vpack.c.b16 %v1860, %v1858
    %v1945 = vpack.c.b16 %v1863, %v1861
    %v1946 = vpack.c.b16 %v1864, %v1862
    %v1947 = vpack.c.b16 %v1867, %v1865
    %v1948 = vpack.c.b16 %v1868, %v1866
    %v1949 = vpack.c.b16 %v1871, %v1869
    %v1950 = vpack.c.b16 %v1872, %v1870
    %v1951 = vpack.c.b16 %v1875, %v1873
    %v1952 = vpack.c.b16 %v1876, %v1874
    %v1953 = vpack.c.b16 %v1879, %v1877
    %v1954 = vpack.c.b16 %v1880, %v1878
    %v1955 = vpack.c.b16 %v1883, %v1881
    %v1956 = vpack.c.b16 %v1884, %v1882
    %v1957 = vpack.c.b16 %v1887, %v1885
    %v1958 = vpack.c.b16 %v1888, %v1886
    %v1959 = vpack.c.b16 %v1891, %v1889
    %v1960 = vpack.c.b16 %v1892, %v1890
    %v1961 = vpack.c.b16 %v1895, %v1893
    %v1962 = vpack.c.b16 %v1896, %v1894
    %v1963 = vpack.c.b16 %v1899, %v1897
    %v1964 = vpack.c.b16 %v1900, %v1898
    %2029 = vmatprep.subr.bf16.mxu0 %v1902
    %2030 = vmatpush1.bf16.msra.mxu0 %v1901
    %2031 = vmatprep.subr.bf16.mxu0 %v1904
    %2032 = vmatpush1.bf16.msra.mxu0 %v1903
    %2033 = vmatprep.subr.bf16.mxu0 %v1906
    %2034 = vmatpush1.bf16.msra.mxu0 %v1905
    %2035 = vmatprep.subr.bf16.mxu0 %v1908
    %2036 = vmatpush1.bf16.msra.mxu0 %v1907
    %2037 = vmatprep.subr.bf16.mxu0 %v1910
    %2038 = vmatpush1.bf16.msra.mxu0 %v1909
    %2039 = vmatprep.subr.bf16.mxu0 %v1912
    %2040 = vmatpush1.bf16.msra.mxu0 %v1911
    %2041 = vmatprep.subr.bf16.mxu0 %v1914
    %2042 = vmatpush1.bf16.msra.mxu0 %v1913
    %2043 = vmatprep.subr.bf16.mxu0 %v1916
    %2044 = vmatpush1.bf16.msra.mxu0 %v1915
    %2045 = vmatprep.subr.bf16.mxu0 %v1918
    %2046 = vmatpush1.bf16.msra.mxu0 %v1917
    %2047 = vmatprep.subr.bf16.mxu0 %v1920
    %2048 = vmatpush1.bf16.msra.mxu0 %v1919
    %2049 = vmatprep.subr.bf16.mxu0 %v1922
    %2050 = vmatpush1.bf16.msra.mxu0 %v1921
    %2051 = vmatprep.subr.bf16.mxu0 %v1924
    %2052 = vmatpush1.bf16.msra.mxu0 %v1923
    %2053 = vmatprep.subr.bf16.mxu0 %v1926
    %2054 = vmatpush1.bf16.msra.mxu0 %v1925
    %2055 = vmatprep.subr.bf16.mxu0 %v1928
    %2056 = vmatpush1.bf16.msra.mxu0 %v1927
    %2057 = vmatprep.subr.bf16.mxu0 %v1930
    %2058 = vmatpush1.bf16.msra.mxu0 %v1929
    %2059 = vmatprep.subr.bf16.mxu0 %v1932
    %2060 = vmatpush1.bf16.msra.mxu0 %v1931
    %2061 = vmatprep.mubr.bf16.mxu0 %v1613
    %2062 = vmatmul.mubr.bf16.gmra.mrb[0].mxu0 %v1612
    %v2063 = vpop.f32.mrb[0].mxu0
    %v2064 = vadd.f32 0.0, %v2063
    %v2065 = vpop.f32.mrb[0].mxu0
    %v2066 = vadd.f32 0.0, %v2065
    %v2067 = vpop.f32.mrb[0].mxu0
    %v2068 = vadd.f32 0.0, %v2067
    %v2069 = vpop.f32.mrb[0].mxu0
    %v2070 = vadd.f32 0.0, %v2069
    %2071 = vmatprep.mubr.bf16.mxu0 %v1617
    %2072 = vmatmul.mubr.bf16.gmra.mrb[0].mxu0 %v1616
    %v2073 = vpop.f32.mrb[0].mxu0
    %v2074 = vadd.f32 0.0, %v2073
    %v2075 = vpop.f32.mrb[0].mxu0
    %v2076 = vadd.f32 0.0, %v2075
    %v2077 = vpop.f32.mrb[0].mxu0
    %v2078 = vadd.f32 0.0, %v2077
    %v2079 = vpop.f32.mrb[0].mxu0
    %v2080 = vadd.f32 0.0, %v2079
    %2081 = vmatprep.mubr.bf16.mxu0 %v1621
    %2082 = vmatmul.mubr.bf16.gmra.mrb[0].mxu0 %v1620
    %v2083 = vpop.f32.mrb[0].mxu0
    %v2084 = vadd.f32 0.0, %v2083
    %v2085 = vpop.f32.mrb[0].mxu0
    %v2086 = vadd.f32 0.0, %v2085
    %v2087 = vpop.f32.mrb[0].mxu0
    %v2088 = vadd.f32 0.0, %v2087
    %v2089 = vpop.f32.mrb[0].mxu0
    %v2090 = vadd.f32 0.0, %v2089
    %2091 = vmatprep.mubr.bf16.mxu0 %v1625
    %2092 = vmatmul.mubr.bf16.gmra.mrb[0].mxu0 %v1624
    %v2093 = vpop.f32.mrb[0].mxu0
    %v2094 = vadd.f32 0.0, %v2093
    %v2095 = vpop.f32.mrb[0].mxu0
    %v2096 = vadd.f32 0.0, %v2095
    %v2097 = vpop.f32.mrb[0].mxu0
    %v2098 = vadd.f32 0.0, %v2097
    %v2099 = vpop.f32.mrb[0].mxu0
    %v2100 = vadd.f32 0.0, %v2099
    %2101 = vmatprep.mubr.bf16.mxu0 %v1629
    %2102 = vmatmul.mubr.bf16.gmra.mrb[0].mxu0 %v1628
    %v2103 = vpop.f32.mrb[0].mxu0
    %v2104 = vadd.f32 0.0, %v2103
    %v2105 = vpop.f32.mrb[0].mxu0
    %v2106 = vadd.f32 0.0, %v2105
    %v2107 = vpop.f32.mrb[0].mxu0
    %v2108 = vadd.f32 0.0, %v2107
    %v2109 = vpop.f32.mrb[0].mxu0
    %v2110 = vadd.f32 0.0, %v2109
    %2111 = vmatprep.mubr.bf16.mxu0 %v1633
    %2112 = vmatmul.mubr.bf16.gmra.mrb[0].mxu0 %v1632
    %v2113 = vpop.f32.mrb[0].mxu0
    %v2114 = vadd.f32 0.0, %v2113
    %v2115 = vpop.f32.mrb[0].mxu0
    %v2116 = vadd.f32 0.0, %v2115
    %v2117 = vpop.f32.mrb[0].mxu0
    %v2118 = vadd.f32 0.0, %v2117
    %v2119 = vpop.f32.mrb[0].mxu0
    %v2120 = vadd.f32 0.0, %v2119
    %2121 = vmatprep.mubr.bf16.mxu0 %v1637
    %2122 = vmatmul.mubr.bf16.gmra.mrb[0].mxu0 %v1636
    %v2123 = vpop.f32.mrb[0].mxu0
    %v2124 = vadd.f32 0.0, %v2123
    %v2125 = vpop.f32.mrb[0].mxu0
    %v2126 = vadd.f32 0.0, %v2125
    %v2127 = vpop.f32.mrb[0].mxu0
    %v2128 = vadd.f32 0.0, %v2127
    %v2129 = vpop.f32.mrb[0].mxu0
    %v2130 = vadd.f32 0.0, %v2129
    %2131 = vmatprep.mubr.bf16.mxu0 %v1641
    %2132 = vmatmul.mubr.bf16.gmra.mrb[0].mxu0 %v1640
    %v2133 = vpop.f32.mrb[0].mxu0
    %v2134 = vadd.f32 0.0, %v2133
    %v2135 = vpop.f32.mrb[0].mxu0
    %v2136 = vadd.f32 0.0, %v2135
    %v2137 = vpop.f32.mrb[0].mxu0
    %v2138 = vadd.f32 0.0, %v2137
    %v2139 = vpop.f32.mrb[0].mxu0
    %v2140 = vadd.f32 0.0, %v2139
    %2141 = vdwg.mxu0
    %2142 = vmatprep.subr.bf16.mxu0 %v1934
    %2143 = vmatpush1.bf16.msra.mxu0 %v1933
    %2144 = vmatprep.subr.bf16.mxu0 %v1936
    %2145 = vmatpush1.bf16.msra.mxu0 %v1935
    %2146 = vmatprep.subr.bf16.mxu0 %v1938
    %2147 = vmatpush1.bf16.msra.mxu0 %v1937
    %2148 = vmatprep.subr.bf16.mxu0 %v1940
    %2149 = vmatpush1.bf16.msra.mxu0 %v1939
    %2150 = vmatprep.subr.bf16.mxu0 %v1942
    %2151 = vmatpush1.bf16.msra.mxu0 %v1941
    %2152 = vmatprep.subr.bf16.mxu0 %v1944
    %2153 = vmatpush1.bf16.msra.mxu0 %v1943
    %2154 = vmatprep.subr.bf16.mxu0 %v1946
    %2155 = vmatpush1.bf16.msra.mxu0 %v1945
    %2156 = vmatprep.subr.bf16.mxu0 %v1948
    %2157 = vmatpush1.bf16.msra.mxu0 %v1947
    %2158 = vmatprep.subr.bf16.mxu0 %v1950
    %2159 = vmatpush1.bf16.msra.mxu0 %v1949
    %2160 = vmatprep.subr.bf16.mxu0 %v1952
    %2161 = vmatpush1.bf16.msra.mxu0 %v1951
    %2162 = vmatprep.subr.bf16.mxu0 %v1954
    %2163 = vmatpush1.bf16.msra.mxu0 %v1953
    %2164 = vmatprep.subr.bf16.mxu0 %v1956
    %2165 = vmatpush1.bf16.msra.mxu0 %v1955
    %2166 = vmatprep.subr.bf16.mxu0 %v1958
    %2167 = vmatpush1.bf16.msra.mxu0 %v1957
    %2168 = vmatprep.subr.bf16.mxu0 %v1960
    %2169 = vmatpush1.bf16.msra.mxu0 %v1959
    %2170 = vmatprep.subr.bf16.mxu0 %v1962
    %2171 = vmatpush1.bf16.msra.mxu0 %v1961
    %2172 = vmatprep.subr.bf16.mxu0 %v1964
    %2173 = vmatpush1.bf16.msra.mxu0 %v1963
    %2174 = vmatprep.mubr.bf16.mxu0 %v1615
    %2175 = vmatmul.mubr.bf16.gmra.mrb[0].mxu0 %v1614
    %v2176 = vpop.f32.mrb[0].mxu0
    %v2177 = vadd.f32 %v2064, %v2176
    %v2178 = vpop.f32.mrb[0].mxu0
    %v2179 = vadd.f32 %v2066, %v2178
    %v2180 = vpop.f32.mrb[0].mxu0
    %v2181 = vadd.f32 %v2068, %v2180
    %v2182 = vpop.f32.mrb[0].mxu0
    %v2183 = vadd.f32 %v2070, %v2182
    %2184 = vmatprep.mubr.bf16.mxu0 %v1619
    %2185 = vmatmul.mubr.bf16.gmra.mrb[0].mxu0 %v1618
    %v2186 = vpop.f32.mrb[0].mxu0
    %v2187 = vadd.f32 %v2074, %v2186
    %v2188 = vpop.f32.mrb[0].mxu0
    %v2189 = vadd.f32 %v2076, %v2188
    %v2190 = vpop.f32.mrb[0].mxu0
    %v2191 = vadd.f32 %v2078, %v2190
    %v2192 = vpop.f32.mrb[0].mxu0
    %v2193 = vadd.f32 %v2080, %v2192
    %2194 = vmatprep.mubr.bf16.mxu0 %v1623
    %2195 = vmatmul.mubr.bf16.gmra.mrb[0].mxu0 %v1622
    %v2196 = vpop.f32.mrb[0].mxu0
    %v2197 = vadd.f32 %v2084, %v2196
    %v2198 = vpop.f32.mrb[0].mxu0
    %v2199 = vadd.f32 %v2086, %v2198
    %v2200 = vpop.f32.mrb[0].mxu0
    %v2201 = vadd.f32 %v2088, %v2200
    %v2202 = vpop.f32.mrb[0].mxu0
    %v2203 = vadd.f32 %v2090, %v2202
    %2204 = vmatprep.mubr.bf16.mxu0 %v1627
    %2205 = vmatmul.mubr.bf16.gmra.mrb[0].mxu0 %v1626
    %v2206 = vpop.f32.mrb[0].mxu0
    %v2207 = vadd.f32 %v2094, %v2206
    %v2208 = vpop.f32.mrb[0].mxu0
    %v2209 = vadd.f32 %v2096, %v2208
    %v2210 = vpop.f32.mrb[0].mxu0
    %v2211 = vadd.f32 %v2098, %v2210
    %v2212 = vpop.f32.mrb[0].mxu0
    %v2213 = vadd.f32 %v2100, %v2212
    %2214 = vmatprep.mubr.bf16.mxu0 %v1631
    %2215 = vmatmul.mubr.bf16.gmra.mrb[0].mxu0 %v1630
    %v2216 = vpop.f32.mrb[0].mxu0
    %v2217 = vadd.f32 %v2104, %v2216
    %v2218 = vpop.f32.mrb[0].mxu0
    %v2219 = vadd.f32 %v2106, %v2218
    %v2220 = vpop.f32.mrb[0].mxu0
    %v2221 = vadd.f32 %v2108, %v2220
    %v2222 = vpop.f32.mrb[0].mxu0
    %v2223 = vadd.f32 %v2110, %v2222
    %2224 = vmatprep.mubr.bf16.mxu0 %v1635
    %2225 = vmatmul.mubr.bf16.gmra.mrb[0].mxu0 %v1634
    %v2226 = vpop.f32.mrb[0].mxu0
    %v2227 = vadd.f32 %v2114, %v2226
    %v2228 = vpop.f32.mrb[0].mxu0
    %v2229 = vadd.f32 %v2116, %v2228
    %v2230 = vpop.f32.mrb[0].mxu0
    %v2231 = vadd.f32 %v2118, %v2230
    %v2232 = vpop.f32.mrb[0].mxu0
    %v2233 = vadd.f32 %v2120, %v2232
    %2234 = vmatprep.mubr.bf16.mxu0 %v1639
    %2235 = vmatmul.mubr.bf16.gmra.mrb[0].mxu0 %v1638
    %v2236 = vpop.f32.mrb[0].mxu0
    %v2237 = vadd.f32 %v2124, %v2236
    %v2238 = vpop.f32.mrb[0].mxu0
    %v2239 = vadd.f32 %v2126, %v2238
    %v2240 = vpop.f32.mrb[0].mxu0
    %v2241 = vadd.f32 %v2128, %v2240
    %v2242 = vpop.f32.mrb[0].mxu0
    %v2243 = vadd.f32 %v2130, %v2242
    %2244 = vmatprep.mubr.bf16.mxu0 %v1643
    %2245 = vmatmul.mubr.bf16.gmra.mrb[0].mxu0 %v1642
    %v2246 = vpop.f32.mrb[0].mxu0
    %v2247 = vadd.f32 %v2134, %v2246
    %v2248 = vpop.f32.mrb[0].mxu0
    %v2249 = vadd.f32 %v2136, %v2248
    %v2250 = vpop.f32.mrb[0].mxu0
    %v2251 = vadd.f32 %v2138, %v2250
    %v2252 = vpop.f32.mrb[0].mxu0
    %v2253 = vadd.f32 %v2140, %v2252
    %2254 = vdwg.mxu0
    %v2255 = vadd.f32 %v1437, %v2177
    %v2256 = vadd.f32 %v1439, %v2179
    %v2257 = vadd.f32 %v1441, %v2181
    %v2258 = vadd.f32 %v1443, %v2183
    %v2259 = vadd.f32 %v1447, %v2187
    %v2260 = vadd.f32 %v1449, %v2189
    %v2261 = vadd.f32 %v1451, %v2191
    %v2262 = vadd.f32 %v1453, %v2193
    %v2263 = vadd.f32 %v1457, %v2197
    %v2264 = vadd.f32 %v1459, %v2199
    %v2265 = vadd.f32 %v1461, %v2201
    %v2266 = vadd.f32 %v1463, %v2203
    %v2267 = vadd.f32 %v1467, %v2207
    %v2268 = vadd.f32 %v1469, %v2209
    %v2269 = vadd.f32 %v1471, %v2211
    %v2270 = vadd.f32 %v1473, %v2213
    %v2271 = vadd.f32 %v1477, %v2217
    %v2272 = vadd.f32 %v1479, %v2219
    %v2273 = vadd.f32 %v1481, %v2221
    %v2274 = vadd.f32 %v1483, %v2223
    %v2275 = vadd.f32 %v1487, %v2227
    %v2276 = vadd.f32 %v1489, %v2229
    %v2277 = vadd.f32 %v1491, %v2231
    %v2278 = vadd.f32 %v1493, %v2233
    %v2279 = vadd.f32 %v1497, %v2237
    %v2280 = vadd.f32 %v1499, %v2239
    %v2281 = vadd.f32 %v1501, %v2241
    %v2282 = vadd.f32 %v1503, %v2243
    %v2283 = vadd.f32 %v1507, %v2247
    %v2284 = vadd.f32 %v1509, %v2249
    %v2285 = vadd.f32 %v1511, %v2251
    %v2286 = vadd.f32 %v1513, %v2253
    %s2287 = scalar_lea.vmem %s0, 288
    %v2288 = vld [vmem:[%s2287] sm:$0xff]
    %v2289 = vld [vmem:[%s2287 + $0x8] sm:$0xff]
    %v2290 = vld [vmem:[%s2287 + $0x10] sm:$0xff]
    %v2291 = vld [vmem:[%s2287 + $0x18] sm:$0xff]
    %v2292 = vld [vmem:[%s2287 + $0x20] sm:$0xff]
    %v2293 = vld [vmem:[%s2287 + $0x28] sm:$0xff]
    %v2294 = vld [vmem:[%s2287 + $0x30] sm:$0xff]
    %v2295 = vld [vmem:[%s2287 + $0x38] sm:$0xff]
    %v2296 = vld [vmem:[%s2287 + $0x40] sm:$0xff]
    %v2297 = vld [vmem:[%s2287 + $0x48] sm:$0xff]
    %v2298 = vld [vmem:[%s2287 + $0x50] sm:$0xff]
    %v2299 = vld [vmem:[%s2287 + $0x58] sm:$0xff]
    %v2300 = vld [vmem:[%s2287 + $0x60] sm:$0xff]
    %v2301 = vld [vmem:[%s2287 + $0x68] sm:$0xff]
    %v2302 = vld [vmem:[%s2287 + $0x70] sm:$0xff]
    %v2303 = vld [vmem:[%s2287 + $0x78] sm:$0xff]
    %v2304 = vld [vmem:[%s2287 + $0x90] sm:$0xff]
    %v2305 = vld [vmem:[%s2287 + $0x98] sm:$0xff]
    %v2306 = vld [vmem:[%s2287 + $0xa0] sm:$0xff]
    %v2307 = vld [vmem:[%s2287 + $0xa8] sm:$0xff]
    %v2308 = vld [vmem:[%s2287 + $0xb0] sm:$0xff]
    %v2309 = vld [vmem:[%s2287 + $0xb8] sm:$0xff]
    %v2310 = vld [vmem:[%s2287 + $0xc0] sm:$0xff]
    %v2311 = vld [vmem:[%s2287 + $0xc8] sm:$0xff]
    %v2312 = vld [vmem:[%s2287 + $0xd0] sm:$0xff]
    %v2313 = vld [vmem:[%s2287 + $0xd8] sm:$0xff]
    %v2314 = vld [vmem:[%s2287 + $0xe0] sm:$0xff]
    %v2315 = vld [vmem:[%s2287 + $0xe8] sm:$0xff]
    %v2316 = vld [vmem:[%s2287 + $0xf0] sm:$0xff]
    %v2317 = vld [vmem:[%s2287 + $0xf8] sm:$0xff]
    %v2318 = vld [vmem:[%s2287 + $0x100] sm:$0xff]
    %v2319 = vld [vmem:[%s2287 + $0x108] sm:$0xff]
    %v2320 = vunpack.c.l.bf16 %v2288
    %v2321 = vunpack.c.h.bf16 %v2288
    %v2322 = vunpack.c.l.bf16 %v2289
    %v2323 = vunpack.c.h.bf16 %v2289
    %v2324 = vunpack.c.l.bf16 %v2290
    %v2325 = vunpack.c.h.bf16 %v2290
    %v2326 = vunpack.c.l.bf16 %v2291
    %v2327 = vunpack.c.h.bf16 %v2291
    %v2328 = vunpack.c.l.bf16 %v2292
    %v2329 = vunpack.c.h.bf16 %v2292
    %v2330 = vunpack.c.l.bf16 %v2293
    %v2331 = vunpack.c.h.bf16 %v2293
    %v2332 = vunpack.c.l.bf16 %v2294
    %v2333 = vunpack.c.h.bf16 %v2294
    %v2334 = vunpack.c.l.bf16 %v2295
    %v2335 = vunpack.c.h.bf16 %v2295
    %v2336 = vunpack.c.l.bf16 %v2296
    %v2337 = vunpack.c.h.bf16 %v2296
    %v2338 = vunpack.c.l.bf16 %v2297
    %v2339 = vunpack.c.h.bf16 %v2297
    %v2340 = vunpack.c.l.bf16 %v2298
    %v2341 = vunpack.c.h.bf16 %v2298
    %v2342 = vunpack.c.l.bf16 %v2299
    %v2343 = vunpack.c.h.bf16 %v2299
    %v2344 = vunpack.c.l.bf16 %v2300
    %v2345 = vunpack.c.h.bf16 %v2300
    %v2346 = vunpack.c.l.bf16 %v2301
    %v2347 = vunpack.c.h.bf16 %v2301
    %v2348 = vunpack.c.l.bf16 %v2302
    %v2349 = vunpack.c.h.bf16 %v2302
    %v2350 = vunpack.c.l.bf16 %v2303
    %v2351 = vunpack.c.h.bf16 %v2303
    %v2352 = vunpack.c.l.bf16 %v2304
    %v2353 = vunpack.c.h.bf16 %v2304
    %v2354 = vunpack.c.l.bf16 %v2305
    %v2355 = vunpack.c.h.bf16 %v2305
    %v2356 = vunpack.c.l.bf16 %v2306
    %v2357 = vunpack.c.h.bf16 %v2306
    %v2358 = vunpack.c.l.bf16 %v2307
    %v2359 = vunpack.c.h.bf16 %v2307
    %v2360 = vunpack.c.l.bf16 %v2308
    %v2361 = vunpack.c.h.bf16 %v2308
    %v2362 = vunpack.c.l.bf16 %v2309
    %v2363 = vunpack.c.h.bf16 %v2309
    %v2364 = vunpack.c.l.bf16 %v2310
    %v2365 = vunpack.c.h.bf16 %v2310
    %v2366 = vunpack.c.l.bf16 %v2311
    %v2367 = vunpack.c.h.bf16 %v2311
    %v2368 = vunpack.c.l.bf16 %v2312
    %v2369 = vunpack.c.h.bf16 %v2312
    %v2370 = vunpack.c.l.bf16 %v2313
    %v2371 = vunpack.c.h.bf16 %v2313
    %v2372 = vunpack.c.l.bf16 %v2314
    %v2373 = vunpack.c.h.bf16 %v2314
    %v2374 = vunpack.c.l.bf16 %v2315
    %v2375 = vunpack.c.h.bf16 %v2315
    %v2376 = vunpack.c.l.bf16 %v2316
    %v2377 = vunpack.c.h.bf16 %v2316
    %v2378 = vunpack.c.l.bf16 %v2317
    %v2379 = vunpack.c.h.bf16 %v2317
    %v2380 = vunpack.c.l.bf16 %v2318
    %v2381 = vunpack.c.h.bf16 %v2318
    %v2382 = vunpack.c.l.bf16 %v2319
    %v2383 = vunpack.c.h.bf16 %v2319
    %v2384 = vpack.c.bf16 %v2324, %v2320
    %v2385 = vpack.c.bf16 %v2325, %v2321
    %v2386 = vpack.c.bf16 %v2326, %v2322
    %v2387 = vpack.c.bf16 %v2327, %v2323
    %v2388 = vpack.c.bf16 %v2332, %v2328
    %v2389 = vpack.c.bf16 %v2333, %v2329
    %v2390 = vpack.c.bf16 %v2334, %v2330
    %v2391 = vpack.c.bf16 %v2335, %v2331
    %v2392 = vpack.c.bf16 %v2340, %v2336
    %v2393 = vpack.c.bf16 %v2341, %v2337
    %v2394 = vpack.c.bf16 %v2342, %v2338
    %v2395 = vpack.c.bf16 %v2343, %v2339
    %v2396 = vpack.c.bf16 %v2348, %v2344
    %v2397 = vpack.c.bf16 %v2349, %v2345
    %v2398 = vpack.c.bf16 %v2350, %v2346
    %v2399 = vpack.c.bf16 %v2351, %v2347
    %v2400 = vpack.c.bf16 %v2356, %v2352
    %v2401 = vpack.c.bf16 %v2357, %v2353
    %v2402 = vpack.c.bf16 %v2358, %v2354
    %v2403 = vpack.c.bf16 %v2359, %v2355
    %v2404 = vpack.c.bf16 %v2364, %v2360
    %v2405 = vpack.c.bf16 %v2365, %v2361
    %v2406 = vpack.c.bf16 %v2366, %v2362
    %v2407 = vpack.c.bf16 %v2367, %v2363
    %v2408 = vpack.c.bf16 %v2372, %v2368
    %v2409 = vpack.c.bf16 %v2373, %v2369
    %v2410 = vpack.c.bf16 %v2374, %v2370
    %v2411 = vpack.c.bf16 %v2375, %v2371
    %v2412 = vpack.c.bf16 %v2380, %v2376
    %v2413 = vpack.c.bf16 %v2381, %v2377
    %v2414 = vpack.c.bf16 %v2382, %v2378
    %v2415 = vpack.c.bf16 %v2383, %v2379
    %s2416 = scalar_lea.vmem %s1, 1536
    %v2417 = vld [vmem:[%s2416] sm:$0xff]
    %v2418 = vld [vmem:[%s2416 + $0x8] sm:$0xff]
    %v2419 = vld [vmem:[%s2416 + $0x10] sm:$0xff]
    %v2420 = vld [vmem:[%s2416 + $0x18] sm:$0xff]
    %v2421 = vld [vmem:[%s2416 + $0x20] sm:$0xff]
    %v2422 = vld [vmem:[%s2416 + $0x28] sm:$0xff]
    %v2423 = vld [vmem:[%s2416 + $0x30] sm:$0xff]
    %v2424 = vld [vmem:[%s2416 + $0x38] sm:$0xff]
    %v2425 = vld [vmem:[%s2416 + $0x40] sm:$0xff]
    %v2426 = vld [vmem:[%s2416 + $0x48] sm:$0xff]
    %v2427 = vld [vmem:[%s2416 + $0x50] sm:$0xff]
    %v2428 = vld [vmem:[%s2416 + $0x58] sm:$0xff]
    %v2429 = vld [vmem:[%s2416 + $0x60] sm:$0xff]
    %v2430 = vld [vmem:[%s2416 + $0x68] sm:$0xff]
    %v2431 = vld [vmem:[%s2416 + $0x70] sm:$0xff]
    %v2432 = vld [vmem:[%s2416 + $0x78] sm:$0xff]
    %v2433 = vld [vmem:[%s2416 + $0x80] sm:$0xff]
    %v2434 = vld [vmem:[%s2416 + $0x88] sm:$0xff]
    %v2435 = vld [vmem:[%s2416 + $0x90] sm:$0xff]
    %v2436 = vld [vmem:[%s2416 + $0x98] sm:$0xff]
    %v2437 = vld [vmem:[%s2416 + $0xa0] sm:$0xff]
    %v2438 = vld [vmem:[%s2416 + $0xa8] sm:$0xff]
    %v2439 = vld [vmem:[%s2416 + $0xb0] sm:$0xff]
    %v2440 = vld [vmem:[%s2416 + $0xb8] sm:$0xff]
    %v2441 = vld [vmem:[%s2416 + $0xc0] sm:$0xff]
    %v2442 = vld [vmem:[%s2416 + $0xc8] sm:$0xff]
    %v2443 = vld [vmem:[%s2416 + $0xd0] sm:$0xff]
    %v2444 = vld [vmem:[%s2416 + $0xd8] sm:$0xff]
    %v2445 = vld [vmem:[%s2416 + $0xe0] sm:$0xff]
    %v2446 = vld [vmem:[%s2416 + $0xe8] sm:$0xff]
    %v2447 = vld [vmem:[%s2416 + $0xf0] sm:$0xff]
    %v2448 = vld [vmem:[%s2416 + $0xf8] sm:$0xff]
    %v2449 = vld [vmem:[%s2416 + $0x100] sm:$0xff]
    %v2450 = vld [vmem:[%s2416 + $0x108] sm:$0xff]
    %v2451 = vld [vmem:[%s2416 + $0x110] sm:$0xff]
    %v2452 = vld [vmem:[%s2416 + $0x118] sm:$0xff]
    %v2453 = vld [vmem:[%s2416 + $0x120] sm:$0xff]
    %v2454 = vld [vmem:[%s2416 + $0x128] sm:$0xff]
    %v2455 = vld [vmem:[%s2416 + $0x130] sm:$0xff]
    %v2456 = vld [vmem:[%s2416 + $0x138] sm:$0xff]
    %v2457 = vld [vmem:[%s2416 + $0x140] sm:$0xff]
    %v2458 = vld [vmem:[%s2416 + $0x148] sm:$0xff]
    %v2459 = vld [vmem:[%s2416 + $0x150] sm:$0xff]
    %v2460 = vld [vmem:[%s2416 + $0x158] sm:$0xff]
    %v2461 = vld [vmem:[%s2416 + $0x160] sm:$0xff]
    %v2462 = vld [vmem:[%s2416 + $0x168] sm:$0xff]
    %v2463 = vld [vmem:[%s2416 + $0x170] sm:$0xff]
    %v2464 = vld [vmem:[%s2416 + $0x178] sm:$0xff]
    %v2465 = vld [vmem:[%s2416 + $0x180] sm:$0xff]
    %v2466 = vld [vmem:[%s2416 + $0x188] sm:$0xff]
    %v2467 = vld [vmem:[%s2416 + $0x190] sm:$0xff]
    %v2468 = vld [vmem:[%s2416 + $0x198] sm:$0xff]
    %v2469 = vld [vmem:[%s2416 + $0x1a0] sm:$0xff]
    %v2470 = vld [vmem:[%s2416 + $0x1a8] sm:$0xff]
    %v2471 = vld [vmem:[%s2416 + $0x1b0] sm:$0xff]
    %v2472 = vld [vmem:[%s2416 + $0x1b8] sm:$0xff]
    %v2473 = vld [vmem:[%s2416 + $0x1c0] sm:$0xff]
    %v2474 = vld [vmem:[%s2416 + $0x1c8] sm:$0xff]
    %v2475 = vld [vmem:[%s2416 + $0x1d0] sm:$0xff]
    %v2476 = vld [vmem:[%s2416 + $0x1d8] sm:$0xff]
    %v2477 = vld [vmem:[%s2416 + $0x1e0] sm:$0xff]
    %v2478 = vld [vmem:[%s2416 + $0x1e8] sm:$0xff]
    %v2479 = vld [vmem:[%s2416 + $0x1f0] sm:$0xff]
    %v2480 = vld [vmem:[%s2416 + $0x1f8] sm:$0xff]
    %v2545 = vunpack.c.l.b16 %v2417
    %v2546 = vunpack.c.h.b16 %v2417
    %v2547 = vunpack.c.l.b16 %v2418
    %v2548 = vunpack.c.h.b16 %v2418
    %v2549 = vunpack.c.l.b16 %v2419
    %v2550 = vunpack.c.h.b16 %v2419
    %v2551 = vunpack.c.l.b16 %v2420
    %v2552 = vunpack.c.h.b16 %v2420
    %v2553 = vunpack.c.l.b16 %v2421
    %v2554 = vunpack.c.h.b16 %v2421
    %v2555 = vunpack.c.l.b16 %v2422
    %v2556 = vunpack.c.h.b16 %v2422
    %v2557 = vunpack.c.l.b16 %v2423
    %v2558 = vunpack.c.h.b16 %v2423
    %v2559 = vunpack.c.l.b16 %v2424
    %v2560 = vunpack.c.h.b16 %v2424
    %v2561 = vunpack.c.l.b16 %v2425
    %v2562 = vunpack.c.h.b16 %v2425
    %v2563 = vunpack.c.l.b16 %v2426
    %v2564 = vunpack.c.h.b16 %v2426
    %v2565 = vunpack.c.l.b16 %v2427
    %v2566 = vunpack.c.h.b16 %v2427
    %v2567 = vunpack.c.l.b16 %v2428
    %v2568 = vunpack.c.h.b16 %v2428
    %v2569 = vunpack.c.l.b16 %v2429
    %v2570 = vunpack.c.h.b16 %v2429
    %v2571 = vunpack.c.l.b16 %v2430
    %v2572 = vunpack.c.h.b16 %v2430
    %v2573 = vunpack.c.l.b16 %v2431
    %v2574 = vunpack.c.h.b16 %v2431
    %v2575 = vunpack.c.l.b16 %v2432
    %v2576 = vunpack.c.h.b16 %v2432
    %v2577 = vunpack.c.l.b16 %v2433
    %v2578 = vunpack.c.h.b16 %v2433
    %v2579 = vunpack.c.l.b16 %v2434
    %v2580 = vunpack.c.h.b16 %v2434
    %v2581 = vunpack.c.l.b16 %v2435
    %v2582 = vunpack.c.h.b16 %v2435
    %v2583 = vunpack.c.l.b16 %v2436
    %v2584 = vunpack.c.h.b16 %v2436
    %v2585 = vunpack.c.l.b16 %v2437
    %v2586 = vunpack.c.h.b16 %v2437
    %v2587 = vunpack.c.l.b16 %v2438
    %v2588 = vunpack.c.h.b16 %v2438
    %v2589 = vunpack.c.l.b16 %v2439
    %v2590 = vunpack.c.h.b16 %v2439
    %v2591 = vunpack.c.l.b16 %v2440
    %v2592 = vunpack.c.h.b16 %v2440
    %v2593 = vunpack.c.l.b16 %v2441
    %v2594 = vunpack.c.h.b16 %v2441
    %v2595 = vunpack.c.l.b16 %v2442
    %v2596 = vunpack.c.h.b16 %v2442
    %v2597 = vunpack.c.l.b16 %v2443
    %v2598 = vunpack.c.h.b16 %v2443
    %v2599 = vunpack.c.l.b16 %v2444
    %v2600 = vunpack.c.h.b16 %v2444
    %v2601 = vunpack.c.l.b16 %v2445
    %v2602 = vunpack.c.h.b16 %v2445
    %v2603 = vunpack.c.l.b16 %v2446
    %v2604 = vunpack.c.h.b16 %v2446
    %v2605 = vunpack.c.l.b16 %v2447
    %v2606 = vunpack.c.h.b16 %v2447
    %v2607 = vunpack.c.l.b16 %v2448
    %v2608 = vunpack.c.h.b16 %v2448
    %v2609 = vunpack.c.l.b16 %v2449
    %v2610 = vunpack.c.h.b16 %v2449
    %v2611 = vunpack.c.l.b16 %v2450
    %v2612 = vunpack.c.h.b16 %v2450
    %v2613 = vunpack.c.l.b16 %v2451
    %v2614 = vunpack.c.h.b16 %v2451
    %v2615 = vunpack.c.l.b16 %v2452
    %v2616 = vunpack.c.h.b16 %v2452
    %v2617 = vunpack.c.l.b16 %v2453
    %v2618 = vunpack.c.h.b16 %v2453
    %v2619 = vunpack.c.l.b16 %v2454
    %v2620 = vunpack.c.h.b16 %v2454
    %v2621 = vunpack.c.l.b16 %v2455
    %v2622 = vunpack.c.h.b16 %v2455
    %v2623 = vunpack.c.l.b16 %v2456
    %v2624 = vunpack.c.h.b16 %v2456
    %v2625 = vunpack.c.l.b16 %v2457
    %v2626 = vunpack.c.h.b16 %v2457
    %v2627 = vunpack.c.l.b16 %v2458
    %v2628 = vunpack.c.h.b16 %v2458
    %v2629 = vunpack.c.l.b16 %v2459
    %v2630 = vunpack.c.h.b16 %v2459
    %v2631 = vunpack.c.l.b16 %v2460
    %v2632 = vunpack.c.h.b16 %v2460
    %v2633 = vunpack.c.l.b16 %v2461
    %v2634 = vunpack.c.h.b16 %v2461
    %v2635 = vunpack.c.l.b16 %v2462
    %v2636 = vunpack.c.h.b16 %v2462
    %v2637 = vunpack.c.l.b16 %v2463
    %v2638 = vunpack.c.h.b16 %v2463
    %v2639 = vunpack.c.l.b16 %v2464
    %v2640 = vunpack.c.h.b16 %v2464
    %v2641 = vunpack.c.l.b16 %v2465
    %v2642 = vunpack.c.h.b16 %v2465
    %v2643 = vunpack.c.l.b16 %v2466
    %v2644 = vunpack.c.h.b16 %v2466
    %v2645 = vunpack.c.l.b16 %v2467
    %v2646 = vunpack.c.h.b16 %v2467
    %v2647 = vunpack.c.l.b16 %v2468
    %v2648 = vunpack.c.h.b16 %v2468
    %v2649 = vunpack.c.l.b16 %v2469
    %v2650 = vunpack.c.h.b16 %v2469
    %v2651 = vunpack.c.l.b16 %v2470
    %v2652 = vunpack.c.h.b16 %v2470
    %v2653 = vunpack.c.l.b16 %v2471
    %v2654 = vunpack.c.h.b16 %v2471
    %v2655 = vunpack.c.l.b16 %v2472
    %v2656 = vunpack.c.h.b16 %v2472
    %v2657 = vunpack.c.l.b16 %v2473
    %v2658 = vunpack.c.h.b16 %v2473
    %v2659 = vunpack.c.l.b16 %v2474
    %v2660 = vunpack.c.h.b16 %v2474
    %v2661 = vunpack.c.l.b16 %v2475
    %v2662 = vunpack.c.h.b16 %v2475
    %v2663 = vunpack.c.l.b16 %v2476
    %v2664 = vunpack.c.h.b16 %v2476
    %v2665 = vunpack.c.l.b16 %v2477
    %v2666 = vunpack.c.h.b16 %v2477
    %v2667 = vunpack.c.l.b16 %v2478
    %v2668 = vunpack.c.h.b16 %v2478
    %v2669 = vunpack.c.l.b16 %v2479
    %v2670 = vunpack.c.h.b16 %v2479
    %v2671 = vunpack.c.l.b16 %v2480
    %v2672 = vunpack.c.h.b16 %v2480
    %v2673 = vpack.c.b16 %v2547, %v2545
    %v2674 = vpack.c.b16 %v2548, %v2546
    %v2675 = vpack.c.b16 %v2551, %v2549
    %v2676 = vpack.c.b16 %v2552, %v2550
    %v2677 = vpack.c.b16 %v2555, %v2553
    %v2678 = vpack.c.b16 %v2556, %v2554
    %v2679 = vpack.c.b16 %v2559, %v2557
    %v2680 = vpack.c.b16 %v2560, %v2558
    %v2681 = vpack.c.b16 %v2563, %v2561
    %v2682 = vpack.c.b16 %v2564, %v2562
    %v2683 = vpack.c.b16 %v2567, %v2565
    %v2684 = vpack.c.b16 %v2568, %v2566
    %v2685 = vpack.c.b16 %v2571, %v2569
    %v2686 = vpack.c.b16 %v2572, %v2570
    %v2687 = vpack.c.b16 %v2575, %v2573
    %v2688 = vpack.c.b16 %v2576, %v2574
    %v2689 = vpack.c.b16 %v2579, %v2577
    %v2690 = vpack.c.b16 %v2580, %v2578
    %v2691 = vpack.c.b16 %v2583, %v2581
    %v2692 = vpack.c.b16 %v2584, %v2582
    %v2693 = vpack.c.b16 %v2587, %v2585
    %v2694 = vpack.c.b16 %v2588, %v2586
    %v2695 = vpack.c.b16 %v2591, %v2589
    %v2696 = vpack.c.b16 %v2592, %v2590
    %v2697 = vpack.c.b16 %v2595, %v2593
    %v2698 = vpack.c.b16 %v2596, %v2594
    %v2699 = vpack.c.b16 %v2599, %v2597
    %v2700 = vpack.c.b16 %v2600, %v2598
    %v2701 = vpack.c.b16 %v2603, %v2601
    %v2702 = vpack.c.b16 %v2604, %v2602
    %v2703 = vpack.c.b16 %v2607, %v2605
    %v2704 = vpack.c.b16 %v2608, %v2606
    %v2705 = vpack.c.b16 %v2611, %v2609
    %v2706 = vpack.c.b16 %v2612, %v2610
    %v2707 = vpack.c.b16 %v2615, %v2613
    %v2708 = vpack.c.b16 %v2616, %v2614
    %v2709 = vpack.c.b16 %v2619, %v2617
    %v2710 = vpack.c.b16 %v2620, %v2618
    %v2711 = vpack.c.b16 %v2623, %v2621
    %v2712 = vpack.c.b16 %v2624, %v2622
    %v2713 = vpack.c.b16 %v2627, %v2625
    %v2714 = vpack.c.b16 %v2628, %v2626
    %v2715 = vpack.c.b16 %v2631, %v2629
    %v2716 = vpack.c.b16 %v2632, %v2630
    %v2717 = vpack.c.b16 %v2635, %v2633
    %v2718 = vpack.c.b16 %v2636, %v2634
    %v2719 = vpack.c.b16 %v2639, %v2637
    %v2720 = vpack.c.b16 %v2640, %v2638
    %v2721 = vpack.c.b16 %v2643, %v2641
    %v2722 = vpack.c.b16 %v2644, %v2642
    %v2723 = vpack.c.b16 %v2647, %v2645
    %v2724 = vpack.c.b16 %v2648, %v2646
    %v2725 = vpack.c.b16 %v2651, %v2649
    %v2726 = vpack.c.b16 %v2652, %v2650
    %v2727 = vpack.c.b16 %v2655, %v2653
    %v2728 = vpack.c.b16 %v2656, %v2654
    %v2729 = vpack.c.b16 %v2659, %v2657
    %v2730 = vpack.c.b16 %v2660, %v2658
    %v2731 = vpack.c.b16 %v2663, %v2661
    %v2732 = vpack.c.b16 %v2664, %v2662
    %v2733 = vpack.c.b16 %v2667, %v2665
    %v2734 = vpack.c.b16 %v2668, %v2666
    %v2735 = vpack.c.b16 %v2671, %v2669
    %v2736 = vpack.c.b16 %v2672, %v2670
    %2801 = vmatprep.subr.bf16.mxu0 %v2674
    %2802 = vmatpush1.bf16.msra.mxu0 %v2673
    %2803 = vmatprep.subr.bf16.mxu0 %v2676
    %2804 = vmatpush1.bf16.msra.mxu0 %v2675
    %2805 = vmatprep.subr.bf16.mxu0 %v2678
    %2806 = vmatpush1.bf16.msra.mxu0 %v2677
    %2807 = vmatprep.subr.bf16.mxu0 %v2680
    %2808 = vmatpush1.bf16.msra.mxu0 %v2679
    %2809 = vmatprep.subr.bf16.mxu0 %v2682
    %2810 = vmatpush1.bf16.msra.mxu0 %v2681
    %2811 = vmatprep.subr.bf16.mxu0 %v2684
    %2812 = vmatpush1.bf16.msra.mxu0 %v2683
    %2813 = vmatprep.subr.bf16.mxu0 %v2686
    %2814 = vmatpush1.bf16.msra.mxu0 %v2685
    %2815 = vmatprep.subr.bf16.mxu0 %v2688
    %2816 = vmatpush1.bf16.msra.mxu0 %v2687
    %2817 = vmatprep.subr.bf16.mxu0 %v2690
    %2818 = vmatpush1.bf16.msra.mxu0 %v2689
    %2819 = vmatprep.subr.bf16.mxu0 %v2692
    %2820 = vmatpush1.bf16.msra.mxu0 %v2691
    %2821 = vmatprep.subr.bf16.mxu0 %v2694
    %2822 = vmatpush1.bf16.msra.mxu0 %v2693
    %2823 = vmatprep.subr.bf16.mxu0 %v2696
    %2824 = vmatpush1.bf16.msra.mxu0 %v2695
    %2825 = vmatprep.subr.bf16.mxu0 %v2698
    %2826 = vmatpush1.bf16.msra.mxu0 %v2697
    %2827 = vmatprep.subr.bf16.mxu0 %v2700
    %2828 = vmatpush1.bf16.msra.mxu0 %v2699
    %2829 = vmatprep.subr.bf16.mxu0 %v2702
    %2830 = vmatpush1.bf16.msra.mxu0 %v2701
    %2831 = vmatprep.subr.bf16.mxu0 %v2704
    %2832 = vmatpush1.bf16.msra.mxu0 %v2703
    %2833 = vmatprep.mubr.bf16.mxu0 %v2385
    %2834 = vmatmul.mubr.bf16.gmra.mrb[0].mxu0 %v2384
    %v2835 = vpop.f32.mrb[0].mxu0
    %v2836 = vadd.f32 0.0, %v2835
    %v2837 = vpop.f32.mrb[0].mxu0
    %v2838 = vadd.f32 0.0, %v2837
    %v2839 = vpop.f32.mrb[0].mxu0
    %v2840 = vadd.f32 0.0, %v2839
    %v2841 = vpop.f32.mrb[0].mxu0
    %v2842 = vadd.f32 0.0, %v2841
    %2843 = vmatprep.mubr.bf16.mxu0 %v2389
    %2844 = vmatmul.mubr.bf16.gmra.mrb[0].mxu0 %v2388
    %v2845 = vpop.f32.mrb[0].mxu0
    %v2846 = vadd.f32 0.0, %v2845
    %v2847 = vpop.f32.mrb[0].mxu0
    %v2848 = vadd.f32 0.0, %v2847
    %v2849 = vpop.f32.mrb[0].mxu0
    %v2850 = vadd.f32 0.0, %v2849
    %v2851 = vpop.f32.mrb[0].mxu0
    %v2852 = vadd.f32 0.0, %v2851
    %2853 = vmatprep.mubr.bf16.mxu0 %v2393
    %2854 = vmatmul.mubr.bf16.gmra.mrb[0].mxu0 %v2392
    %v2855 = vpop.f32.mrb[0].mxu0
    %v2856 = vadd.f32 0.0, %v2855
    %v2857 = vpop.f32.mrb[0].mxu0
    %v2858 = vadd.f32 0.0, %v2857
    %v2859 = vpop.f32.mrb[0].mxu0
    %v2860 = vadd.f32 0.0, %v2859
    %v2861 = vpop.f32.mrb[0].mxu0
    %v2862 = vadd.f32 0.0, %v2861
    %2863 = vmatprep.mubr.bf16.mxu0 %v2397
    %2864 = vmatmul.mubr.bf16.gmra.mrb[0].mxu0 %v2396
    %v2865 = vpop.f32.mrb[0].mxu0
    %v2866 = vadd.f32 0.0, %v2865
    %v2867 = vpop.f32.mrb[0].mxu0
    %v2868 = vadd.f32 0.0, %v2867
    %v2869 = vpop.f32.mrb[0].mxu0
    %v2870 = vadd.f32 0.0, %v2869
    %v2871 = vpop.f32.mrb[0].mxu0
    %v2872 = vadd.f32 0.0, %v2871
    %2873 = vmatprep.mubr.bf16.mxu0 %v2401
    %2874 = vmatmul.mubr.bf16.gmra.mrb[0].mxu0 %v2400
    %v2875 = vpop.f32.mrb[0].mxu0
    %v2876 = vadd.f32 0.0, %v2875
    %v2877 = vpop.f32.mrb[0].mxu0
    %v2878 = vadd.f32 0.0, %v2877
    %v2879 = vpop.f32.mrb[0].mxu0
    %v2880 = vadd.f32 0.0, %v2879
    %v2881 = vpop.f32.mrb[0].mxu0
    %v2882 = vadd.f32 0.0, %v2881
    %2883 = vmatprep.mubr.bf16.mxu0 %v2405
    %2884 = vmatmul.mubr.bf16.gmra.mrb[0].mxu0 %v2404
    %v2885 = vpop.f32.mrb[0].mxu0
    %v2886 = vadd.f32 0.0, %v2885
    %v2887 = vpop.f32.mrb[0].mxu0
    %v2888 = vadd.f32 0.0, %v2887
    %v2889 = vpop.f32.mrb[0].mxu0
    %v2890 = vadd.f32 0.0, %v2889
    %v2891 = vpop.f32.mrb[0].mxu0
    %v2892 = vadd.f32 0.0, %v2891
    %2893 = vmatprep.mubr.bf16.mxu0 %v2409
    %2894 = vmatmul.mubr.bf16.gmra.mrb[0].mxu0 %v2408
    %v2895 = vpop.f32.mrb[0].mxu0
    %v2896 = vadd.f32 0.0, %v2895
    %v2897 = vpop.f32.mrb[0].mxu0
    %v2898 = vadd.f32 0.0, %v2897
    %v2899 = vpop.f32.mrb[0].mxu0
    %v2900 = vadd.f32 0.0, %v2899
    %v2901 = vpop.f32.mrb[0].mxu0
    %v2902 = vadd.f32 0.0, %v2901
    %2903 = vmatprep.mubr.bf16.mxu0 %v2413
    %2904 = vmatmul.mubr.bf16.gmra.mrb[0].mxu0 %v2412
    %v2905 = vpop.f32.mrb[0].mxu0
    %v2906 = vadd.f32 0.0, %v2905
    %v2907 = vpop.f32.mrb[0].mxu0
    %v2908 = vadd.f32 0.0, %v2907
    %v2909 = vpop.f32.mrb[0].mxu0
    %v2910 = vadd.f32 0.0, %v2909
    %v2911 = vpop.f32.mrb[0].mxu0
    %v2912 = vadd.f32 0.0, %v2911
    %2913 = vdwg.mxu0
    %2914 = vmatprep.subr.bf16.mxu0 %v2706
    %2915 = vmatpush1.bf16.msra.mxu0 %v2705
    %2916 = vmatprep.subr.bf16.mxu0 %v2708
    %2917 = vmatpush1.bf16.msra.mxu0 %v2707
    %2918 = vmatprep.subr.bf16.mxu0 %v2710
    %2919 = vmatpush1.bf16.msra.mxu0 %v2709
    %2920 = vmatprep.subr.bf16.mxu0 %v2712
    %2921 = vmatpush1.bf16.msra.mxu0 %v2711
    %2922 = vmatprep.subr.bf16.mxu0 %v2714
    %2923 = vmatpush1.bf16.msra.mxu0 %v2713
    %2924 = vmatprep.subr.bf16.mxu0 %v2716
    %2925 = vmatpush1.bf16.msra.mxu0 %v2715
    %2926 = vmatprep.subr.bf16.mxu0 %v2718
    %2927 = vmatpush1.bf16.msra.mxu0 %v2717
    %2928 = vmatprep.subr.bf16.mxu0 %v2720
    %2929 = vmatpush1.bf16.msra.mxu0 %v2719
    %2930 = vmatprep.subr.bf16.mxu0 %v2722
    %2931 = vmatpush1.bf16.msra.mxu0 %v2721
    %2932 = vmatprep.subr.bf16.mxu0 %v2724
    %2933 = vmatpush1.bf16.msra.mxu0 %v2723
    %2934 = vmatprep.subr.bf16.mxu0 %v2726
    %2935 = vmatpush1.bf16.msra.mxu0 %v2725
    %2936 = vmatprep.subr.bf16.mxu0 %v2728
    %2937 = vmatpush1.bf16.msra.mxu0 %v2727
    %2938 = vmatprep.subr.bf16.mxu0 %v2730
    %2939 = vmatpush1.bf16.msra.mxu0 %v2729
    %2940 = vmatprep.subr.bf16.mxu0 %v2732
    %2941 = vmatpush1.bf16.msra.mxu0 %v2731
    %2942 = vmatprep.subr.bf16.mxu0 %v2734
    %2943 = vmatpush1.bf16.msra.mxu0 %v2733
    %2944 = vmatprep.subr.bf16.mxu0 %v2736
    %2945 = vmatpush1.bf16.msra.mxu0 %v2735
    %2946 = vmatprep.mubr.bf16.mxu0 %v2387
    %2947 = vmatmul.mubr.bf16.gmra.mrb[0].mxu0 %v2386
    %v2948 = vpop.f32.mrb[0].mxu0
    %v2949 = vadd.f32 %v2836, %v2948
    %v2950 = vpop.f32.mrb[0].mxu0
    %v2951 = vadd.f32 %v2838, %v2950
    %v2952 = vpop.f32.mrb[0].mxu0
    %v2953 = vadd.f32 %v2840, %v2952
    %v2954 = vpop.f32.mrb[0].mxu0
    %v2955 = vadd.f32 %v2842, %v2954
    %2956 = vmatprep.mubr.bf16.mxu0 %v2391
    %2957 = vmatmul.mubr.bf16.gmra.mrb[0].mxu0 %v2390
    %v2958 = vpop.f32.mrb[0].mxu0
    %v2959 = vadd.f32 %v2846, %v2958
    %v2960 = vpop.f32.mrb[0].mxu0
    %v2961 = vadd.f32 %v2848, %v2960
    %v2962 = vpop.f32.mrb[0].mxu0
    %v2963 = vadd.f32 %v2850, %v2962
    %v2964 = vpop.f32.mrb[0].mxu0
    %v2965 = vadd.f32 %v2852, %v2964
    %2966 = vmatprep.mubr.bf16.mxu0 %v2395
    %2967 = vmatmul.mubr.bf16.gmra.mrb[0].mxu0 %v2394
    %v2968 = vpop.f32.mrb[0].mxu0
    %v2969 = vadd.f32 %v2856, %v2968
    %v2970 = vpop.f32.mrb[0].mxu0
    %v2971 = vadd.f32 %v2858, %v2970
    %v2972 = vpop.f32.mrb[0].mxu0
    %v2973 = vadd.f32 %v2860, %v2972
    %v2974 = vpop.f32.mrb[0].mxu0
    %v2975 = vadd.f32 %v2862, %v2974
    %2976 = vmatprep.mubr.bf16.mxu0 %v2399
    %2977 = vmatmul.mubr.bf16.gmra.mrb[0].mxu0 %v2398
    %v2978 = vpop.f32.mrb[0].mxu0
    %v2979 = vadd.f32 %v2866, %v2978
    %v2980 = vpop.f32.mrb[0].mxu0
    %v2981 = vadd.f32 %v2868, %v2980
    %v2982 = vpop.f32.mrb[0].mxu0
    %v2983 = vadd.f32 %v2870, %v2982
    %v2984 = vpop.f32.mrb[0].mxu0
    %v2985 = vadd.f32 %v2872, %v2984
    %2986 = vmatprep.mubr.bf16.mxu0 %v2403
    %2987 = vmatmul.mubr.bf16.gmra.mrb[0].mxu0 %v2402
    %v2988 = vpop.f32.mrb[0].mxu0
    %v2989 = vadd.f32 %v2876, %v2988
    %v2990 = vpop.f32.mrb[0].mxu0
    %v2991 = vadd.f32 %v2878, %v2990
    %v2992 = vpop.f32.mrb[0].mxu0
    %v2993 = vadd.f32 %v2880, %v2992
    %v2994 = vpop.f32.mrb[0].mxu0
    %v2995 = vadd.f32 %v2882, %v2994
    %2996 = vmatprep.mubr.bf16.mxu0 %v2407
    %2997 = vmatmul.mubr.bf16.gmra.mrb[0].mxu0 %v2406
    %v2998 = vpop.f32.mrb[0].mxu0
    %v2999 = vadd.f32 %v2886, %v2998
    %v3000 = vpop.f32.mrb[0].mxu0
    %v3001 = vadd.f32 %v2888, %v3000
    %v3002 = vpop.f32.mrb[0].mxu0
    %v3003 = vadd.f32 %v2890, %v3002
    %v3004 = vpop.f32.mrb[0].mxu0
    %v3005 = vadd.f32 %v2892, %v3004
    %3006 = vmatprep.mubr.bf16.mxu0 %v2411
    %3007 = vmatmul.mubr.bf16.gmra.mrb[0].mxu0 %v2410
    %v3008 = vpop.f32.mrb[0].mxu0
    %v3009 = vadd.f32 %v2896, %v3008
    %v3010 = vpop.f32.mrb[0].mxu0
    %v3011 = vadd.f32 %v2898, %v3010
    %v3012 = vpop.f32.mrb[0].mxu0
    %v3013 = vadd.f32 %v2900, %v3012
    %v3014 = vpop.f32.mrb[0].mxu0
    %v3015 = vadd.f32 %v2902, %v3014
    %3016 = vmatprep.mubr.bf16.mxu0 %v2415
    %3017 = vmatmul.mubr.bf16.gmra.mrb[0].mxu0 %v2414
    %v3018 = vpop.f32.mrb[0].mxu0
    %v3019 = vadd.f32 %v2906, %v3018
    %v3020 = vpop.f32.mrb[0].mxu0
    %v3021 = vadd.f32 %v2908, %v3020
    %v3022 = vpop.f32.mrb[0].mxu0
    %v3023 = vadd.f32 %v2910, %v3022
    %v3024 = vpop.f32.mrb[0].mxu0
    %v3025 = vadd.f32 %v2912, %v3024
    %3026 = vdwg.mxu0
    %v3027 = vadd.f32 %v2255, %v2949
    %v3028 = vadd.f32 %v2256, %v2951
    %v3029 = vadd.f32 %v2257, %v2953
    %v3030 = vadd.f32 %v2258, %v2955
    %v3031 = vadd.f32 %v2259, %v2959
    %v3032 = vadd.f32 %v2260, %v2961
    %v3033 = vadd.f32 %v2261, %v2963
    %v3034 = vadd.f32 %v2262, %v2965
    %v3035 = vadd.f32 %v2263, %v2969
    %v3036 = vadd.f32 %v2264, %v2971
    %v3037 = vadd.f32 %v2265, %v2973
    %v3038 = vadd.f32 %v2266, %v2975
    %v3039 = vadd.f32 %v2267, %v2979
    %v3040 = vadd.f32 %v2268, %v2981
    %v3041 = vadd.f32 %v2269, %v2983
    %v3042 = vadd.f32 %v2270, %v2985
    %v3043 = vadd.f32 %v2271, %v2989
    %v3044 = vadd.f32 %v2272, %v2991
    %v3045 = vadd.f32 %v2273, %v2993
    %v3046 = vadd.f32 %v2274, %v2995
    %v3047 = vadd.f32 %v2275, %v2999
    %v3048 = vadd.f32 %v2276, %v3001
    %v3049 = vadd.f32 %v2277, %v3003
    %v3050 = vadd.f32 %v2278, %v3005
    %v3051 = vadd.f32 %v2279, %v3009
    %v3052 = vadd.f32 %v2280, %v3011
    %v3053 = vadd.f32 %v2281, %v3013
    %v3054 = vadd.f32 %v2282, %v3015
    %v3055 = vadd.f32 %v2283, %v3019
    %v3056 = vadd.f32 %v2284, %v3021
    %v3057 = vadd.f32 %v2285, %v3023
    %v3058 = vadd.f32 %v2286, %v3025
    %s3059 = scalar_lea.vmem %s0, 864
    %v3060 = vld [vmem:[%s3059] sm:$0xff]
    %v3061 = vld [vmem:[%s3059 + $0x8] sm:$0xff]
    %v3062 = vld [vmem:[%s3059 + $0x10] sm:$0xff]
    %v3063 = vld [vmem:[%s3059 + $0x18] sm:$0xff]
    %v3064 = vld [vmem:[%s3059 + $0x20] sm:$0xff]
    %v3065 = vld [vmem:[%s3059 + $0x28] sm:$0xff]
    %v3066 = vld [vmem:[%s3059 + $0x30] sm:$0xff]
    %v3067 = vld [vmem:[%s3059 + $0x38] sm:$0xff]
    %v3068 = vld [vmem:[%s3059 + $0x40] sm:$0xff]
    %v3069 = vld [vmem:[%s3059 + $0x48] sm:$0xff]
    %v3070 = vld [vmem:[%s3059 + $0x50] sm:$0xff]
    %v3071 = vld [vmem:[%s3059 + $0x58] sm:$0xff]
    %v3072 = vld [vmem:[%s3059 + $0x60] sm:$0xff]
    %v3073 = vld [vmem:[%s3059 + $0x68] sm:$0xff]
    %v3074 = vld [vmem:[%s3059 + $0x70] sm:$0xff]
    %v3075 = vld [vmem:[%s3059 + $0x78] sm:$0xff]
    %v3076 = vld [vmem:[%s3059 + $0x90] sm:$0xff]
    %v3077 = vld [vmem:[%s3059 + $0x98] sm:$0xff]
    %v3078 = vld [vmem:[%s3059 + $0xa0] sm:$0xff]
    %v3079 = vld [vmem:[%s3059 + $0xa8] sm:$0xff]
    %v3080 = vld [vmem:[%s3059 + $0xb0] sm:$0xff]
    %v3081 = vld [vmem:[%s3059 + $0xb8] sm:$0xff]
    %v3082 = vld [vmem:[%s3059 + $0xc0] sm:$0xff]
    %v3083 = vld [vmem:[%s3059 + $0xc8] sm:$0xff]
    %v3084 = vld [vmem:[%s3059 + $0xd0] sm:$0xff]
    %v3085 = vld [vmem:[%s3059 + $0xd8] sm:$0xff]
    %v3086 = vld [vmem:[%s3059 + $0xe0] sm:$0xff]
    %v3087 = vld [vmem:[%s3059 + $0xe8] sm:$0xff]
    %v3088 = vld [vmem:[%s3059 + $0xf0] sm:$0xff]
    %v3089 = vld [vmem:[%s3059 + $0xf8] sm:$0xff]
    %v3090 = vld [vmem:[%s3059 + $0x100] sm:$0xff]
    %v3091 = vld [vmem:[%s3059 + $0x108] sm:$0xff]
    %v3092 = vunpack.c.l.bf16 %v3060
    %v3093 = vunpack.c.h.bf16 %v3060
    %v3094 = vunpack.c.l.bf16 %v3061
    %v3095 = vunpack.c.h.bf16 %v3061
    %v3096 = vunpack.c.l.bf16 %v3062
    %v3097 = vunpack.c.h.bf16 %v3062
    %v3098 = vunpack.c.l.bf16 %v3063
    %v3099 = vunpack.c.h.bf16 %v3063
    %v3100 = vunpack.c.l.bf16 %v3064
    %v3101 = vunpack.c.h.bf16 %v3064
    %v3102 = vunpack.c.l.bf16 %v3065
    %v3103 = vunpack.c.h.bf16 %v3065
    %v3104 = vunpack.c.l.bf16 %v3066
    %v3105 = vunpack.c.h.bf16 %v3066
    %v3106 = vunpack.c.l.bf16 %v3067
    %v3107 = vunpack.c.h.bf16 %v3067
    %v3108 = vunpack.c.l.bf16 %v3068
    %v3109 = vunpack.c.h.bf16 %v3068
    %v3110 = vunpack.c.l.bf16 %v3069
    %v3111 = vunpack.c.h.bf16 %v3069
    %v3112 = vunpack.c.l.bf16 %v3070
    %v3113 = vunpack.c.h.bf16 %v3070
    %v3114 = vunpack.c.l.bf16 %v3071
    %v3115 = vunpack.c.h.bf16 %v3071
    %v3116 = vunpack.c.l.bf16 %v3072
    %v3117 = vunpack.c.h.bf16 %v3072
    %v3118 = vunpack.c.l.bf16 %v3073
    %v3119 = vunpack.c.h.bf16 %v3073
    %v3120 = vunpack.c.l.bf16 %v3074
    %v3121 = vunpack.c.h.bf16 %v3074
    %v3122 = vunpack.c.l.bf16 %v3075
    %v3123 = vunpack.c.h.bf16 %v3075
    %v3124 = vunpack.c.l.bf16 %v3076
    %v3125 = vunpack.c.h.bf16 %v3076
    %v3126 = vunpack.c.l.bf16 %v3077
    %v3127 = vunpack.c.h.bf16 %v3077
    %v3128 = vunpack.c.l.bf16 %v3078
    %v3129 = vunpack.c.h.bf16 %v3078
    %v3130 = vunpack.c.l.bf16 %v3079
    %v3131 = vunpack.c.h.bf16 %v3079
    %v3132 = vunpack.c.l.bf16 %v3080
    %v3133 = vunpack.c.h.bf16 %v3080
    %v3134 = vunpack.c.l.bf16 %v3081
    %v3135 = vunpack.c.h.bf16 %v3081
    %v3136 = vunpack.c.l.bf16 %v3082
    %v3137 = vunpack.c.h.bf16 %v3082
    %v3138 = vunpack.c.l.bf16 %v3083
    %v3139 = vunpack.c.h.bf16 %v3083
    %v3140 = vunpack.c.l.bf16 %v3084
    %v3141 = vunpack.c.h.bf16 %v3084
    %v3142 = vunpack.c.l.bf16 %v3085
    %v3143 = vunpack.c.h.bf16 %v3085
    %v3144 = vunpack.c.l.bf16 %v3086
    %v3145 = vunpack.c.h.bf16 %v3086
    %v3146 = vunpack.c.l.bf16 %v3087
    %v3147 = vunpack.c.h.bf16 %v3087
    %v3148 = vunpack.c.l.bf16 %v3088
    %v3149 = vunpack.c.h.bf16 %v3088
    %v3150 = vunpack.c.l.bf16 %v3089
    %v3151 = vunpack.c.h.bf16 %v3089
    %v3152 = vunpack.c.l.bf16 %v3090
    %v3153 = vunpack.c.h.bf16 %v3090
    %v3154 = vunpack.c.l.bf16 %v3091
    %v3155 = vunpack.c.h.bf16 %v3091
    %v3156 = vpack.c.bf16 %v3096, %v3092
    %v3157 = vpack.c.bf16 %v3097, %v3093
    %v3158 = vpack.c.bf16 %v3098, %v3094
    %v3159 = vpack.c.bf16 %v3099, %v3095
    %v3160 = vpack.c.bf16 %v3104, %v3100
    %v3161 = vpack.c.bf16 %v3105, %v3101
    %v3162 = vpack.c.bf16 %v3106, %v3102
    %v3163 = vpack.c.bf16 %v3107, %v3103
    %v3164 = vpack.c.bf16 %v3112, %v3108
    %v3165 = vpack.c.bf16 %v3113, %v3109
    %v3166 = vpack.c.bf16 %v3114, %v3110
    %v3167 = vpack.c.bf16 %v3115, %v3111
    %v3168 = vpack.c.bf16 %v3120, %v3116
    %v3169 = vpack.c.bf16 %v3121, %v3117
    %v3170 = vpack.c.bf16 %v3122, %v3118
    %v3171 = vpack.c.bf16 %v3123, %v3119
    %v3172 = vpack.c.bf16 %v3128, %v3124
    %v3173 = vpack.c.bf16 %v3129, %v3125
    %v3174 = vpack.c.bf16 %v3130, %v3126
    %v3175 = vpack.c.bf16 %v3131, %v3127
    %v3176 = vpack.c.bf16 %v3136, %v3132
    %v3177 = vpack.c.bf16 %v3137, %v3133
    %v3178 = vpack.c.bf16 %v3138, %v3134
    %v3179 = vpack.c.bf16 %v3139, %v3135
    %v3180 = vpack.c.bf16 %v3144, %v3140
    %v3181 = vpack.c.bf16 %v3145, %v3141
    %v3182 = vpack.c.bf16 %v3146, %v3142
    %v3183 = vpack.c.bf16 %v3147, %v3143
    %v3184 = vpack.c.bf16 %v3152, %v3148
    %v3185 = vpack.c.bf16 %v3153, %v3149
    %v3186 = vpack.c.bf16 %v3154, %v3150
    %v3187 = vpack.c.bf16 %v3155, %v3151
    %s3188 = scalar_lea.vmem %s1, 2048
    %v3189 = vld [vmem:[%s3188] sm:$0xff]
    %v3190 = vld [vmem:[%s3188 + $0x8] sm:$0xff]
    %v3191 = vld [vmem:[%s3188 + $0x10] sm:$0xff]
    %v3192 = vld [vmem:[%s3188 + $0x18] sm:$0xff]
    %v3193 = vld [vmem:[%s3188 + $0x20] sm:$0xff]
    %v3194 = vld [vmem:[%s3188 + $0x28] sm:$0xff]
    %v3195 = vld [vmem:[%s3188 + $0x30] sm:$0xff]
    %v3196 = vld [vmem:[%s3188 + $0x38] sm:$0xff]
    %v3197 = vld [vmem:[%s3188 + $0x40] sm:$0xff]
    %v3198 = vld [vmem:[%s3188 + $0x48] sm:$0xff]
    %v3199 = vld [vmem:[%s3188 + $0x50] sm:$0xff]
    %v3200 = vld [vmem:[%s3188 + $0x58] sm:$0xff]
    %v3201 = vld [vmem:[%s3188 + $0x60] sm:$0xff]
    %v3202 = vld [vmem:[%s3188 + $0x68] sm:$0xff]
    %v3203 = vld [vmem:[%s3188 + $0x70] sm:$0xff]
    %v3204 = vld [vmem:[%s3188 + $0x78] sm:$0xff]
    %v3205 = vld [vmem:[%s3188 + $0x80] sm:$0xff]
    %v3206 = vld [vmem:[%s3188 + $0x88] sm:$0xff]
    %v3207 = vld [vmem:[%s3188 + $0x90] sm:$0xff]
    %v3208 = vld [vmem:[%s3188 + $0x98] sm:$0xff]
    %v3209 = vld [vmem:[%s3188 + $0xa0] sm:$0xff]
    %v3210 = vld [vmem:[%s3188 + $0xa8] sm:$0xff]
    %v3211 = vld [vmem:[%s3188 + $0xb0] sm:$0xff]
    %v3212 = vld [vmem:[%s3188 + $0xb8] sm:$0xff]
    %v3213 = vld [vmem:[%s3188 + $0xc0] sm:$0xff]
    %v3214 = vld [vmem:[%s3188 + $0xc8] sm:$0xff]
    %v3215 = vld [vmem:[%s3188 + $0xd0] sm:$0xff]
    %v3216 = vld [vmem:[%s3188 + $0xd8] sm:$0xff]
    %v3217 = vld [vmem:[%s3188 + $0xe0] sm:$0xff]
    %v3218 = vld [vmem:[%s3188 + $0xe8] sm:$0xff]
    %v3219 = vld [vmem:[%s3188 + $0xf0] sm:$0xff]
    %v3220 = vld [vmem:[%s3188 + $0xf8] sm:$0xff]
    %v3221 = vld [vmem:[%s3188 + $0x100] sm:$0xff]
    %v3222 = vld [vmem:[%s3188 + $0x108] sm:$0xff]
    %v3223 = vld [vmem:[%s3188 + $0x110] sm:$0xff]
    %v3224 = vld [vmem:[%s3188 + $0x118] sm:$0xff]
    %v3225 = vld [vmem:[%s3188 + $0x120] sm:$0xff]
    %v3226 = vld [vmem:[%s3188 + $0x128] sm:$0xff]
    %v3227 = vld [vmem:[%s3188 + $0x130] sm:$0xff]
    %v3228 = vld [vmem:[%s3188 + $0x138] sm:$0xff]
    %v3229 = vld [vmem:[%s3188 + $0x140] sm:$0xff]
    %v3230 = vld [vmem:[%s3188 + $0x148] sm:$0xff]
    %v3231 = vld [vmem:[%s3188 + $0x150] sm:$0xff]
    %v3232 = vld [vmem:[%s3188 + $0x158] sm:$0xff]
    %v3233 = vld [vmem:[%s3188 + $0x160] sm:$0xff]
    %v3234 = vld [vmem:[%s3188 + $0x168] sm:$0xff]
    %v3235 = vld [vmem:[%s3188 + $0x170] sm:$0xff]
    %v3236 = vld [vmem:[%s3188 + $0x178] sm:$0xff]
    %v3237 = vld [vmem:[%s3188 + $0x180] sm:$0xff]
    %v3238 = vld [vmem:[%s3188 + $0x188] sm:$0xff]
    %v3239 = vld [vmem:[%s3188 + $0x190] sm:$0xff]
    %v3240 = vld [vmem:[%s3188 + $0x198] sm:$0xff]
    %v3241 = vld [vmem:[%s3188 + $0x1a0] sm:$0xff]
    %v3242 = vld [vmem:[%s3188 + $0x1a8] sm:$0xff]
    %v3243 = vld [vmem:[%s3188 + $0x1b0] sm:$0xff]
    %v3244 = vld [vmem:[%s3188 + $0x1b8] sm:$0xff]
    %v3245 = vld [vmem:[%s3188 + $0x1c0] sm:$0xff]
    %v3246 = vld [vmem:[%s3188 + $0x1c8] sm:$0xff]
    %v3247 = vld [vmem:[%s3188 + $0x1d0] sm:$0xff]
    %v3248 = vld [vmem:[%s3188 + $0x1d8] sm:$0xff]
    %v3249 = vld [vmem:[%s3188 + $0x1e0] sm:$0xff]
    %v3250 = vld [vmem:[%s3188 + $0x1e8] sm:$0xff]
    %v3251 = vld [vmem:[%s3188 + $0x1f0] sm:$0xff]
    %v3252 = vld [vmem:[%s3188 + $0x1f8] sm:$0xff]
    %v3317 = vunpack.c.l.b16 %v3189
    %v3318 = vunpack.c.h.b16 %v3189
    %v3319 = vunpack.c.l.b16 %v3190
    %v3320 = vunpack.c.h.b16 %v3190
    %v3321 = vunpack.c.l.b16 %v3191
    %v3322 = vunpack.c.h.b16 %v3191
    %v3323 = vunpack.c.l.b16 %v3192
    %v3324 = vunpack.c.h.b16 %v3192
    %v3325 = vunpack.c.l.b16 %v3193
    %v3326 = vunpack.c.h.b16 %v3193
    %v3327 = vunpack.c.l.b16 %v3194
    %v3328 = vunpack.c.h.b16 %v3194
    %v3329 = vunpack.c.l.b16 %v3195
    %v3330 = vunpack.c.h.b16 %v3195
    %v3331 = vunpack.c.l.b16 %v3196
    %v3332 = vunpack.c.h.b16 %v3196
    %v3333 = vunpack.c.l.b16 %v3197
    %v3334 = vunpack.c.h.b16 %v3197
    %v3335 = vunpack.c.l.b16 %v3198
    %v3336 = vunpack.c.h.b16 %v3198
    %v3337 = vunpack.c.l.b16 %v3199
    %v3338 = vunpack.c.h.b16 %v3199
    %v3339 = vunpack.c.l.b16 %v3200
    %v3340 = vunpack.c.h.b16 %v3200
    %v3341 = vunpack.c.l.b16 %v3201
    %v3342 = vunpack.c.h.b16 %v3201
    %v3343 = vunpack.c.l.b16 %v3202
    %v3344 = vunpack.c.h.b16 %v3202
    %v3345 = vunpack.c.l.b16 %v3203
    %v3346 = vunpack.c.h.b16 %v3203
    %v3347 = vunpack.c.l.b16 %v3204
    %v3348 = vunpack.c.h.b16 %v3204
    %v3349 = vunpack.c.l.b16 %v3205
    %v3350 = vunpack.c.h.b16 %v3205
    %v3351 = vunpack.c.l.b16 %v3206
    %v3352 = vunpack.c.h.b16 %v3206
    %v3353 = vunpack.c.l.b16 %v3207
    %v3354 = vunpack.c.h.b16 %v3207
    %v3355 = vunpack.c.l.b16 %v3208
    %v3356 = vunpack.c.h.b16 %v3208
    %v3357 = vunpack.c.l.b16 %v3209
    %v3358 = vunpack.c.h.b16 %v3209
    %v3359 = vunpack.c.l.b16 %v3210
    %v3360 = vunpack.c.h.b16 %v3210
    %v3361 = vunpack.c.l.b16 %v3211
    %v3362 = vunpack.c.h.b16 %v3211
    %v3363 = vunpack.c.l.b16 %v3212
    %v3364 = vunpack.c.h.b16 %v3212
    %v3365 = vunpack.c.l.b16 %v3213
    %v3366 = vunpack.c.h.b16 %v3213
    %v3367 = vunpack.c.l.b16 %v3214
    %v3368 = vunpack.c.h.b16 %v3214
    %v3369 = vunpack.c.l.b16 %v3215
    %v3370 = vunpack.c.h.b16 %v3215
    %v3371 = vunpack.c.l.b16 %v3216
    %v3372 = vunpack.c.h.b16 %v3216
    %v3373 = vunpack.c.l.b16 %v3217
    %v3374 = vunpack.c.h.b16 %v3217
    %v3375 = vunpack.c.l.b16 %v3218
    %v3376 = vunpack.c.h.b16 %v3218
    %v3377 = vunpack.c.l.b16 %v3219
    %v3378 = vunpack.c.h.b16 %v3219
    %v3379 = vunpack.c.l.b16 %v3220
    %v3380 = vunpack.c.h.b16 %v3220
    %v3381 = vunpack.c.l.b16 %v3221
    %v3382 = vunpack.c.h.b16 %v3221
    %v3383 = vunpack.c.l.b16 %v3222
    %v3384 = vunpack.c.h.b16 %v3222
    %v3385 = vunpack.c.l.b16 %v3223
    %v3386 = vunpack.c.h.b16 %v3223
    %v3387 = vunpack.c.l.b16 %v3224
    %v3388 = vunpack.c.h.b16 %v3224
    %v3389 = vunpack.c.l.b16 %v3225
    %v3390 = vunpack.c.h.b16 %v3225
    %v3391 = vunpack.c.l.b16 %v3226
    %v3392 = vunpack.c.h.b16 %v3226
    %v3393 = vunpack.c.l.b16 %v3227
    %v3394 = vunpack.c.h.b16 %v3227
    %v3395 = vunpack.c.l.b16 %v3228
    %v3396 = vunpack.c.h.b16 %v3228
    %v3397 = vunpack.c.l.b16 %v3229
    %v3398 = vunpack.c.h.b16 %v3229
    %v3399 = vunpack.c.l.b16 %v3230
    %v3400 = vunpack.c.h.b16 %v3230
    %v3401 = vunpack.c.l.b16 %v3231
    %v3402 = vunpack.c.h.b16 %v3231
    %v3403 = vunpack.c.l.b16 %v3232
    %v3404 = vunpack.c.h.b16 %v3232
    %v3405 = vunpack.c.l.b16 %v3233
    %v3406 = vunpack.c.h.b16 %v3233
    %v3407 = vunpack.c.l.b16 %v3234
    %v3408 = vunpack.c.h.b16 %v3234
    %v3409 = vunpack.c.l.b16 %v3235
    %v3410 = vunpack.c.h.b16 %v3235
    %v3411 = vunpack.c.l.b16 %v3236
    %v3412 = vunpack.c.h.b16 %v3236
    %v3413 = vunpack.c.l.b16 %v3237
    %v3414 = vunpack.c.h.b16 %v3237
    %v3415 = vunpack.c.l.b16 %v3238
    %v3416 = vunpack.c.h.b16 %v3238
    %v3417 = vunpack.c.l.b16 %v3239
    %v3418 = vunpack.c.h.b16 %v3239
    %v3419 = vunpack.c.l.b16 %v3240
    %v3420 = vunpack.c.h.b16 %v3240
    %v3421 = vunpack.c.l.b16 %v3241
    %v3422 = vunpack.c.h.b16 %v3241
    %v3423 = vunpack.c.l.b16 %v3242
    %v3424 = vunpack.c.h.b16 %v3242
    %v3425 = vunpack.c.l.b16 %v3243
    %v3426 = vunpack.c.h.b16 %v3243
    %v3427 = vunpack.c.l.b16 %v3244
    %v3428 = vunpack.c.h.b16 %v3244
    %v3429 = vunpack.c.l.b16 %v3245
    %v3430 = vunpack.c.h.b16 %v3245
    %v3431 = vunpack.c.l.b16 %v3246
    %v3432 = vunpack.c.h.b16 %v3246
    %v3433 = vunpack.c.l.b16 %v3247
    %v3434 = vunpack.c.h.b16 %v3247
    %v3435 = vunpack.c.l.b16 %v3248
    %v3436 = vunpack.c.h.b16 %v3248
    %v3437 = vunpack.c.l.b16 %v3249
    %v3438 = vunpack.c.h.b16 %v3249
    %v3439 = vunpack.c.l.b16 %v3250
    %v3440 = vunpack.c.h.b16 %v3250
    %v3441 = vunpack.c.l.b16 %v3251
    %v3442 = vunpack.c.h.b16 %v3251
    %v3443 = vunpack.c.l.b16 %v3252
    %v3444 = vunpack.c.h.b16 %v3252
    %v3445 = vpack.c.b16 %v3319, %v3317
    %v3446 = vpack.c.b16 %v3320, %v3318
    %v3447 = vpack.c.b16 %v3323, %v3321
    %v3448 = vpack.c.b16 %v3324, %v3322
    %v3449 = vpack.c.b16 %v3327, %v3325
    %v3450 = vpack.c.b16 %v3328, %v3326
    %v3451 = vpack.c.b16 %v3331, %v3329
    %v3452 = vpack.c.b16 %v3332, %v3330
    %v3453 = vpack.c.b16 %v3335, %v3333
    %v3454 = vpack.c.b16 %v3336, %v3334
    %v3455 = vpack.c.b16 %v3339, %v3337
    %v3456 = vpack.c.b16 %v3340, %v3338
    %v3457 = vpack.c.b16 %v3343, %v3341
    %v3458 = vpack.c.b16 %v3344, %v3342
    %v3459 = vpack.c.b16 %v3347, %v3345
    %v3460 = vpack.c.b16 %v3348, %v3346
    %v3461 = vpack.c.b16 %v3351, %v3349
    %v3462 = vpack.c.b16 %v3352, %v3350
    %v3463 = vpack.c.b16 %v3355, %v3353
    %v3464 = vpack.c.b16 %v3356, %v3354
    %v3465 = vpack.c.b16 %v3359, %v3357
    %v3466 = vpack.c.b16 %v3360, %v3358
    %v3467 = vpack.c.b16 %v3363, %v3361
    %v3468 = vpack.c.b16 %v3364, %v3362
    %v3469 = vpack.c.b16 %v3367, %v3365
    %v3470 = vpack.c.b16 %v3368, %v3366
    %v3471 = vpack.c.b16 %v3371, %v3369
    %v3472 = vpack.c.b16 %v3372, %v3370
    %v3473 = vpack.c.b16 %v3375, %v3373
    %v3474 = vpack.c.b16 %v3376, %v3374
    %v3475 = vpack.c.b16 %v3379, %v3377
    %v3476 = vpack.c.b16 %v3380, %v3378
    %v3477 = vpack.c.b16 %v3383, %v3381
    %v3478 = vpack.c.b16 %v3384, %v3382
    %v3479 = vpack.c.b16 %v3387, %v3385
    %v3480 = vpack.c.b16 %v3388, %v3386
    %v3481 = vpack.c.b16 %v3391, %v3389
    %v3482 = vpack.c.b16 %v3392, %v3390
    %v3483 = vpack.c.b16 %v3395, %v3393
    %v3484 = vpack.c.b16 %v3396, %v3394
    %v3485 = vpack.c.b16 %v3399, %v3397
    %v3486 = vpack.c.b16 %v3400, %v3398
    %v3487 = vpack.c.b16 %v3403, %v3401
    %v3488 = vpack.c.b16 %v3404, %v3402
    %v3489 = vpack.c.b16 %v3407, %v3405
    %v3490 = vpack.c.b16 %v3408, %v3406
    %v3491 = vpack.c.b16 %v3411, %v3409
    %v3492 = vpack.c.b16 %v3412, %v3410
    %v3493 = vpack.c.b16 %v3415, %v3413
    %v3494 = vpack.c.b16 %v3416, %v3414
    %v3495 = vpack.c.b16 %v3419, %v3417
    %v3496 = vpack.c.b16 %v3420, %v3418
    %v3497 = vpack.c.b16 %v3423, %v3421
    %v3498 = vpack.c.b16 %v3424, %v3422
    %v3499 = vpack.c.b16 %v3427, %v3425
    %v3500 = vpack.c.b16 %v3428, %v3426
    %v3501 = vpack.c.b16 %v3431, %v3429
    %v3502 = vpack.c.b16 %v3432, %v3430
    %v3503 = vpack.c.b16 %v3435, %v3433
    %v3504 = vpack.c.b16 %v3436, %v3434
    %v3505 = vpack.c.b16 %v3439, %v3437
    %v3506 = vpack.c.b16 %v3440, %v3438
    %v3507 = vpack.c.b16 %v3443, %v3441
    %v3508 = vpack.c.b16 %v3444, %v3442
    %3573 = vmatprep.subr.bf16.mxu0 %v3446
    %3574 = vmatpush1.bf16.msra.mxu0 %v3445
    %3575 = vmatprep.subr.bf16.mxu0 %v3448
    %3576 = vmatpush1.bf16.msra.mxu0 %v3447
    %3577 = vmatprep.subr.bf16.mxu0 %v3450
    %3578 = vmatpush1.bf16.msra.mxu0 %v3449
    %3579 = vmatprep.subr.bf16.mxu0 %v3452
    %3580 = vmatpush1.bf16.msra.mxu0 %v3451
    %3581 = vmatprep.subr.bf16.mxu0 %v3454
    %3582 = vmatpush1.bf16.msra.mxu0 %v3453
    %3583 = vmatprep.subr.bf16.mxu0 %v3456
    %3584 = vmatpush1.bf16.msra.mxu0 %v3455
    %3585 = vmatprep.subr.bf16.mxu0 %v3458
    %3586 = vmatpush1.bf16.msra.mxu0 %v3457
    %3587 = vmatprep.subr.bf16.mxu0 %v3460
    %3588 = vmatpush1.bf16.msra.mxu0 %v3459
    %3589 = vmatprep.subr.bf16.mxu0 %v3462
    %3590 = vmatpush1.bf16.msra.mxu0 %v3461
    %3591 = vmatprep.subr.bf16.mxu0 %v3464
    %3592 = vmatpush1.bf16.msra.mxu0 %v3463
    %3593 = vmatprep.subr.bf16.mxu0 %v3466
    %3594 = vmatpush1.bf16.msra.mxu0 %v3465
    %3595 = vmatprep.subr.bf16.mxu0 %v3468
    %3596 = vmatpush1.bf16.msra.mxu0 %v3467
    %3597 = vmatprep.subr.bf16.mxu0 %v3470
    %3598 = vmatpush1.bf16.msra.mxu0 %v3469
    %3599 = vmatprep.subr.bf16.mxu0 %v3472
    %3600 = vmatpush1.bf16.msra.mxu0 %v3471
    %3601 = vmatprep.subr.bf16.mxu0 %v3474
    %3602 = vmatpush1.bf16.msra.mxu0 %v3473
    %3603 = vmatprep.subr.bf16.mxu0 %v3476
    %3604 = vmatpush1.bf16.msra.mxu0 %v3475
    %3605 = vmatprep.mubr.bf16.mxu0 %v3157
    %3606 = vmatmul.mubr.bf16.gmra.mrb[0].mxu0 %v3156
    %v3607 = vpop.f32.mrb[0].mxu0
    %v3608 = vadd.f32 0.0, %v3607
    %v3609 = vpop.f32.mrb[0].mxu0
    %v3610 = vadd.f32 0.0, %v3609
    %v3611 = vpop.f32.mrb[0].mxu0
    %v3612 = vadd.f32 0.0, %v3611
    %v3613 = vpop.f32.mrb[0].mxu0
    %v3614 = vadd.f32 0.0, %v3613
    %3615 = vmatprep.mubr.bf16.mxu0 %v3161
    %3616 = vmatmul.mubr.bf16.gmra.mrb[0].mxu0 %v3160
    %v3617 = vpop.f32.mrb[0].mxu0
    %v3618 = vadd.f32 0.0, %v3617
    %v3619 = vpop.f32.mrb[0].mxu0
    %v3620 = vadd.f32 0.0, %v3619
    %v3621 = vpop.f32.mrb[0].mxu0
    %v3622 = vadd.f32 0.0, %v3621
    %v3623 = vpop.f32.mrb[0].mxu0
    %v3624 = vadd.f32 0.0, %v3623
    %3625 = vmatprep.mubr.bf16.mxu0 %v3165
    %3626 = vmatmul.mubr.bf16.gmra.mrb[0].mxu0 %v3164
    %v3627 = vpop.f32.mrb[0].mxu0
    %v3628 = vadd.f32 0.0, %v3627
    %v3629 = vpop.f32.mrb[0].mxu0
    %v3630 = vadd.f32 0.0, %v3629
    %v3631 = vpop.f32.mrb[0].mxu0
    %v3632 = vadd.f32 0.0, %v3631
    %v3633 = vpop.f32.mrb[0].mxu0
    %v3634 = vadd.f32 0.0, %v3633
    %3635 = vmatprep.mubr.bf16.mxu0 %v3169
    %3636 = vmatmul.mubr.bf16.gmra.mrb[0].mxu0 %v3168
    %v3637 = vpop.f32.mrb[0].mxu0
    %v3638 = vadd.f32 0.0, %v3637
    %v3639 = vpop.f32.mrb[0].mxu0
    %v3640 = vadd.f32 0.0, %v3639
    %v3641 = vpop.f32.mrb[0].mxu0
    %v3642 = vadd.f32 0.0, %v3641
    %v3643 = vpop.f32.mrb[0].mxu0
    %v3644 = vadd.f32 0.0, %v3643
    %3645 = vmatprep.mubr.bf16.mxu0 %v3173
    %3646 = vmatmul.mubr.bf16.gmra.mrb[0].mxu0 %v3172
    %v3647 = vpop.f32.mrb[0].mxu0
    %v3648 = vadd.f32 0.0, %v3647
    %v3649 = vpop.f32.mrb[0].mxu0
    %v3650 = vadd.f32 0.0, %v3649
    %v3651 = vpop.f32.mrb[0].mxu0
    %v3652 = vadd.f32 0.0, %v3651
    %v3653 = vpop.f32.mrb[0].mxu0
    %v3654 = vadd.f32 0.0, %v3653
    %3655 = vmatprep.mubr.bf16.mxu0 %v3177
    %3656 = vmatmul.mubr.bf16.gmra.mrb[0].mxu0 %v3176
    %v3657 = vpop.f32.mrb[0].mxu0
    %v3658 = vadd.f32 0.0, %v3657
    %v3659 = vpop.f32.mrb[0].mxu0
    %v3660 = vadd.f32 0.0, %v3659
    %v3661 = vpop.f32.mrb[0].mxu0
    %v3662 = vadd.f32 0.0, %v3661
    %v3663 = vpop.f32.mrb[0].mxu0
    %v3664 = vadd.f32 0.0, %v3663
    %3665 = vmatprep.mubr.bf16.mxu0 %v3181
    %3666 = vmatmul.mubr.bf16.gmra.mrb[0].mxu0 %v3180
    %v3667 = vpop.f32.mrb[0].mxu0
    %v3668 = vadd.f32 0.0, %v3667
    %v3669 = vpop.f32.mrb[0].mxu0
    %v3670 = vadd.f32 0.0, %v3669
    %v3671 = vpop.f32.mrb[0].mxu0
    %v3672 = vadd.f32 0.0, %v3671
    %v3673 = vpop.f32.mrb[0].mxu0
    %v3674 = vadd.f32 0.0, %v3673
    %3675 = vmatprep.mubr.bf16.mxu0 %v3185
    %3676 = vmatmul.mubr.bf16.gmra.mrb[0].mxu0 %v3184
    %v3677 = vpop.f32.mrb[0].mxu0
    %v3678 = vadd.f32 0.0, %v3677
    %v3679 = vpop.f32.mrb[0].mxu0
    %v3680 = vadd.f32 0.0, %v3679
    %v3681 = vpop.f32.mrb[0].mxu0
    %v3682 = vadd.f32 0.0, %v3681
    %v3683 = vpop.f32.mrb[0].mxu0
    %v3684 = vadd.f32 0.0, %v3683
    %3685 = vdwg.mxu0
    %3686 = vmatprep.subr.bf16.mxu0 %v3478
    %3687 = vmatpush1.bf16.msra.mxu0 %v3477
    %3688 = vmatprep.subr.bf16.mxu0 %v3480
    %3689 = vmatpush1.bf16.msra.mxu0 %v3479
    %3690 = vmatprep.subr.bf16.mxu0 %v3482
    %3691 = vmatpush1.bf16.msra.mxu0 %v3481
    %3692 = vmatprep.subr.bf16.mxu0 %v3484
    %3693 = vmatpush1.bf16.msra.mxu0 %v3483
    %3694 = vmatprep.subr.bf16.mxu0 %v3486
    %3695 = vmatpush1.bf16.msra.mxu0 %v3485
    %3696 = vmatprep.subr.bf16.mxu0 %v3488
    %3697 = vmatpush1.bf16.msra.mxu0 %v3487
    %3698 = vmatprep.subr.bf16.mxu0 %v3490
    %3699 = vmatpush1.bf16.msra.mxu0 %v3489
    %3700 = vmatprep.subr.bf16.mxu0 %v3492
    %3701 = vmatpush1.bf16.msra.mxu0 %v3491
    %3702 = vmatprep.subr.bf16.mxu0 %v3494
    %3703 = vmatpush1.bf16.msra.mxu0 %v3493
    %3704 = vmatprep.subr.bf16.mxu0 %v3496
    %3705 = vmatpush1.bf16.msra.mxu0 %v3495
    %3706 = vmatprep.subr.bf16.mxu0 %v3498
    %3707 = vmatpush1.bf16.msra.mxu0 %v3497
    %3708 = vmatprep.subr.bf16.mxu0 %v3500
    %3709 = vmatpush1.bf16.msra.mxu0 %v3499
    %3710 = vmatprep.subr.bf16.mxu0 %v3502
    %3711 = vmatpush1.bf16.msra.mxu0 %v3501
    %3712 = vmatprep.subr.bf16.mxu0 %v3504
    %3713 = vmatpush1.bf16.msra.mxu0 %v3503
    %3714 = vmatprep.subr.bf16.mxu0 %v3506
    %3715 = vmatpush1.bf16.msra.mxu0 %v3505
    %3716 = vmatprep.subr.bf16.mxu0 %v3508
    %3717 = vmatpush1.bf16.msra.mxu0 %v3507
    %3718 = vmatprep.mubr.bf16.mxu0 %v3159
    %3719 = vmatmul.mubr.bf16.gmra.mrb[0].mxu0 %v3158
    %v3720 = vpop.f32.mrb[0].mxu0
    %v3721 = vadd.f32 %v3608, %v3720
    %v3722 = vpop.f32.mrb[0].mxu0
    %v3723 = vadd.f32 %v3610, %v3722
    %v3724 = vpop.f32.mrb[0].mxu0
    %v3725 = vadd.f32 %v3612, %v3724
    %v3726 = vpop.f32.mrb[0].mxu0
    %v3727 = vadd.f32 %v3614, %v3726
    %3728 = vmatprep.mubr.bf16.mxu0 %v3163
    %3729 = vmatmul.mubr.bf16.gmra.mrb[0].mxu0 %v3162
    %v3730 = vpop.f32.mrb[0].mxu0
    %v3731 = vadd.f32 %v3618, %v3730
    %v3732 = vpop.f32.mrb[0].mxu0
    %v3733 = vadd.f32 %v3620, %v3732
    %v3734 = vpop.f32.mrb[0].mxu0
    %v3735 = vadd.f32 %v3622, %v3734
    %v3736 = vpop.f32.mrb[0].mxu0
    %v3737 = vadd.f32 %v3624, %v3736
    %3738 = vmatprep.mubr.bf16.mxu0 %v3167
    %3739 = vmatmul.mubr.bf16.gmra.mrb[0].mxu0 %v3166
    %v3740 = vpop.f32.mrb[0].mxu0
    %v3741 = vadd.f32 %v3628, %v3740
    %v3742 = vpop.f32.mrb[0].mxu0
    %v3743 = vadd.f32 %v3630, %v3742
    %v3744 = vpop.f32.mrb[0].mxu0
    %v3745 = vadd.f32 %v3632, %v3744
    %v3746 = vpop.f32.mrb[0].mxu0
    %v3747 = vadd.f32 %v3634, %v3746
    %3748 = vmatprep.mubr.bf16.mxu0 %v3171
    %3749 = vmatmul.mubr.bf16.gmra.mrb[0].mxu0 %v3170
    %v3750 = vpop.f32.mrb[0].mxu0
    %v3751 = vadd.f32 %v3638, %v3750
    %v3752 = vpop.f32.mrb[0].mxu0
    %v3753 = vadd.f32 %v3640, %v3752
    %v3754 = vpop.f32.mrb[0].mxu0
    %v3755 = vadd.f32 %v3642, %v3754
    %v3756 = vpop.f32.mrb[0].mxu0
    %v3757 = vadd.f32 %v3644, %v3756
    %3758 = vmatprep.mubr.bf16.mxu0 %v3175
    %3759 = vmatmul.mubr.bf16.gmra.mrb[0].mxu0 %v3174
    %v3760 = vpop.f32.mrb[0].mxu0
    %v3761 = vadd.f32 %v3648, %v3760
    %v3762 = vpop.f32.mrb[0].mxu0
    %v3763 = vadd.f32 %v3650, %v3762
    %v3764 = vpop.f32.mrb[0].mxu0
    %v3765 = vadd.f32 %v3652, %v3764
    %v3766 = vpop.f32.mrb[0].mxu0
    %v3767 = vadd.f32 %v3654, %v3766
    %3768 = vmatprep.mubr.bf16.mxu0 %v3179
    %3769 = vmatmul.mubr.bf16.gmra.mrb[0].mxu0 %v3178
    %v3770 = vpop.f32.mrb[0].mxu0
    %v3771 = vadd.f32 %v3658, %v3770
    %v3772 = vpop.f32.mrb[0].mxu0
    %v3773 = vadd.f32 %v3660, %v3772
    %v3774 = vpop.f32.mrb[0].mxu0
    %v3775 = vadd.f32 %v3662, %v3774
    %v3776 = vpop.f32.mrb[0].mxu0
    %v3777 = vadd.f32 %v3664, %v3776
    %3778 = vmatprep.mubr.bf16.mxu0 %v3183
    %3779 = vmatmul.mubr.bf16.gmra.mrb[0].mxu0 %v3182
    %v3780 = vpop.f32.mrb[0].mxu0
    %v3781 = vadd.f32 %v3668, %v3780
    %v3782 = vpop.f32.mrb[0].mxu0
    %v3783 = vadd.f32 %v3670, %v3782
    %v3784 = vpop.f32.mrb[0].mxu0
    %v3785 = vadd.f32 %v3672, %v3784
    %v3786 = vpop.f32.mrb[0].mxu0
    %v3787 = vadd.f32 %v3674, %v3786
    %3788 = vmatprep.mubr.bf16.mxu0 %v3187
    %3789 = vmatmul.mubr.bf16.gmra.mrb[0].mxu0 %v3186
    %v3790 = vpop.f32.mrb[0].mxu0
    %v3791 = vadd.f32 %v3678, %v3790
    %v3792 = vpop.f32.mrb[0].mxu0
    %v3793 = vadd.f32 %v3680, %v3792
    %v3794 = vpop.f32.mrb[0].mxu0
    %v3795 = vadd.f32 %v3682, %v3794
    %v3796 = vpop.f32.mrb[0].mxu0
    %v3797 = vadd.f32 %v3684, %v3796
    %3798 = vdwg.mxu0
    %v3799 = vadd.f32 %v3027, %v3721
    %v3800 = vadd.f32 %v3028, %v3723
    %v3801 = vadd.f32 %v3029, %v3725
    %v3802 = vadd.f32 %v3030, %v3727
    %v3803 = vadd.f32 %v3031, %v3731
    %v3804 = vadd.f32 %v3032, %v3733
    %v3805 = vadd.f32 %v3033, %v3735
    %v3806 = vadd.f32 %v3034, %v3737
    %v3807 = vadd.f32 %v3035, %v3741
    %v3808 = vadd.f32 %v3036, %v3743
    %v3809 = vadd.f32 %v3037, %v3745
    %v3810 = vadd.f32 %v3038, %v3747
    %v3811 = vadd.f32 %v3039, %v3751
    %v3812 = vadd.f32 %v3040, %v3753
    %v3813 = vadd.f32 %v3041, %v3755
    %v3814 = vadd.f32 %v3042, %v3757
    %v3815 = vadd.f32 %v3043, %v3761
    %v3816 = vadd.f32 %v3044, %v3763
    %v3817 = vadd.f32 %v3045, %v3765
    %v3818 = vadd.f32 %v3046, %v3767
    %v3819 = vadd.f32 %v3047, %v3771
    %v3820 = vadd.f32 %v3048, %v3773
    %v3821 = vadd.f32 %v3049, %v3775
    %v3822 = vadd.f32 %v3050, %v3777
    %v3823 = vadd.f32 %v3051, %v3781
    %v3824 = vadd.f32 %v3052, %v3783
    %v3825 = vadd.f32 %v3053, %v3785
    %v3826 = vadd.f32 %v3054, %v3787
    %v3827 = vadd.f32 %v3055, %v3791
    %v3828 = vadd.f32 %v3056, %v3793
    %v3829 = vadd.f32 %v3057, %v3795
    %v3830 = vadd.f32 %v3058, %v3797
    %s3831 = scalar_lea.vmem %s0, 1440
    %v3832 = vld [vmem:[%s3831] sm:$0xff]
    %v3833 = vld [vmem:[%s3831 + $0x8] sm:$0xff]
    %v3834 = vld [vmem:[%s3831 + $0x10] sm:$0xff]
    %v3835 = vld [vmem:[%s3831 + $0x18] sm:$0xff]
    %v3836 = vld [vmem:[%s3831 + $0x20] sm:$0xff]
    %v3837 = vld [vmem:[%s3831 + $0x28] sm:$0xff]
    %v3838 = vld [vmem:[%s3831 + $0x30] sm:$0xff]
    %v3839 = vld [vmem:[%s3831 + $0x38] sm:$0xff]
    %v3840 = vld [vmem:[%s3831 + $0x40] sm:$0xff]
    %v3841 = vld [vmem:[%s3831 + $0x48] sm:$0xff]
    %v3842 = vld [vmem:[%s3831 + $0x50] sm:$0xff]
    %v3843 = vld [vmem:[%s3831 + $0x58] sm:$0xff]
    %v3844 = vld [vmem:[%s3831 + $0x60] sm:$0xff]
    %v3845 = vld [vmem:[%s3831 + $0x68] sm:$0xff]
    %v3846 = vld [vmem:[%s3831 + $0x70] sm:$0xff]
    %v3847 = vld [vmem:[%s3831 + $0x78] sm:$0xff]
    %v3848 = vld [vmem:[%s3831 + $0x90] sm:$0xff]
    %v3849 = vld [vmem:[%s3831 + $0x98] sm:$0xff]
    %v3850 = vld [vmem:[%s3831 + $0xa0] sm:$0xff]
    %v3851 = vld [vmem:[%s3831 + $0xa8] sm:$0xff]
    %v3852 = vld [vmem:[%s3831 + $0xb0] sm:$0xff]
    %v3853 = vld [vmem:[%s3831 + $0xb8] sm:$0xff]
    %v3854 = vld [vmem:[%s3831 + $0xc0] sm:$0xff]
    %v3855 = vld [vmem:[%s3831 + $0xc8] sm:$0xff]
    %v3856 = vld [vmem:[%s3831 + $0xd0] sm:$0xff]
    %v3857 = vld [vmem:[%s3831 + $0xd8] sm:$0xff]
    %v3858 = vld [vmem:[%s3831 + $0xe0] sm:$0xff]
    %v3859 = vld [vmem:[%s3831 + $0xe8] sm:$0xff]
    %v3860 = vld [vmem:[%s3831 + $0xf0] sm:$0xff]
    %v3861 = vld [vmem:[%s3831 + $0xf8] sm:$0xff]
    %v3862 = vld [vmem:[%s3831 + $0x100] sm:$0xff]
    %v3863 = vld [vmem:[%s3831 + $0x108] sm:$0xff]
    %v3864 = vunpack.c.l.bf16 %v3832
    %v3865 = vunpack.c.h.bf16 %v3832
    %v3866 = vunpack.c.l.bf16 %v3833
    %v3867 = vunpack.c.h.bf16 %v3833
    %v3868 = vunpack.c.l.bf16 %v3834
    %v3869 = vunpack.c.h.bf16 %v3834
    %v3870 = vunpack.c.l.bf16 %v3835
    %v3871 = vunpack.c.h.bf16 %v3835
    %v3872 = vunpack.c.l.bf16 %v3836
    %v3873 = vunpack.c.h.bf16 %v3836
    %v3874 = vunpack.c.l.bf16 %v3837
    %v3875 = vunpack.c.h.bf16 %v3837
    %v3876 = vunpack.c.l.bf16 %v3838
    %v3877 = vunpack.c.h.bf16 %v3838
    %v3878 = vunpack.c.l.bf16 %v3839
    %v3879 = vunpack.c.h.bf16 %v3839
    %v3880 = vunpack.c.l.bf16 %v3840
    %v3881 = vunpack.c.h.bf16 %v3840
    %v3882 = vunpack.c.l.bf16 %v3841
    %v3883 = vunpack.c.h.bf16 %v3841
    %v3884 = vunpack.c.l.bf16 %v3842
    %v3885 = vunpack.c.h.bf16 %v3842
    %v3886 = vunpack.c.l.bf16 %v3843
    %v3887 = vunpack.c.h.bf16 %v3843
    %v3888 = vunpack.c.l.bf16 %v3844
    %v3889 = vunpack.c.h.bf16 %v3844
    %v3890 = vunpack.c.l.bf16 %v3845
    %v3891 = vunpack.c.h.bf16 %v3845
    %v3892 = vunpack.c.l.bf16 %v3846
    %v3893 = vunpack.c.h.bf16 %v3846
    %v3894 = vunpack.c.l.bf16 %v3847
    %v3895 = vunpack.c.h.bf16 %v3847
    %v3896 = vunpack.c.l.bf16 %v3848
    %v3897 = vunpack.c.h.bf16 %v3848
    %v3898 = vunpack.c.l.bf16 %v3849
    %v3899 = vunpack.c.h.bf16 %v3849
    %v3900 = vunpack.c.l.bf16 %v3850
    %v3901 = vunpack.c.h.bf16 %v3850
    %v3902 = vunpack.c.l.bf16 %v3851
    %v3903 = vunpack.c.h.bf16 %v3851
    %v3904 = vunpack.c.l.bf16 %v3852
    %v3905 = vunpack.c.h.bf16 %v3852
    %v3906 = vunpack.c.l.bf16 %v3853
    %v3907 = vunpack.c.h.bf16 %v3853
    %v3908 = vunpack.c.l.bf16 %v3854
    %v3909 = vunpack.c.h.bf16 %v3854
    %v3910 = vunpack.c.l.bf16 %v3855
    %v3911 = vunpack.c.h.bf16 %v3855
    %v3912 = vunpack.c.l.bf16 %v3856
    %v3913 = vunpack.c.h.bf16 %v3856
    %v3914 = vunpack.c.l.bf16 %v3857
    %v3915 = vunpack.c.h.bf16 %v3857
    %v3916 = vunpack.c.l.bf16 %v3858
    %v3917 = vunpack.c.h.bf16 %v3858
    %v3918 = vunpack.c.l.bf16 %v3859
    %v3919 = vunpack.c.h.bf16 %v3859
    %v3920 = vunpack.c.l.bf16 %v3860
    %v3921 = vunpack.c.h.bf16 %v3860
    %v3922 = vunpack.c.l.bf16 %v3861
    %v3923 = vunpack.c.h.bf16 %v3861
    %v3924 = vunpack.c.l.bf16 %v3862
    %v3925 = vunpack.c.h.bf16 %v3862
    %v3926 = vunpack.c.l.bf16 %v3863
    %v3927 = vunpack.c.h.bf16 %v3863
    %v3928 = vpack.c.bf16 %v3868, %v3864
    %v3929 = vpack.c.bf16 %v3869, %v3865
    %v3930 = vpack.c.bf16 %v3870, %v3866
    %v3931 = vpack.c.bf16 %v3871, %v3867
    %v3932 = vpack.c.bf16 %v3876, %v3872
    %v3933 = vpack.c.bf16 %v3877, %v3873
    %v3934 = vpack.c.bf16 %v3878, %v3874
    %v3935 = vpack.c.bf16 %v3879, %v3875
    %v3936 = vpack.c.bf16 %v3884, %v3880
    %v3937 = vpack.c.bf16 %v3885, %v3881
    %v3938 = vpack.c.bf16 %v3886, %v3882
    %v3939 = vpack.c.bf16 %v3887, %v3883
    %v3940 = vpack.c.bf16 %v3892, %v3888
    %v3941 = vpack.c.bf16 %v3893, %v3889
    %v3942 = vpack.c.bf16 %v3894, %v3890
    %v3943 = vpack.c.bf16 %v3895, %v3891
    %v3944 = vpack.c.bf16 %v3900, %v3896
    %v3945 = vpack.c.bf16 %v3901, %v3897
    %v3946 = vpack.c.bf16 %v3902, %v3898
    %v3947 = vpack.c.bf16 %v3903, %v3899
    %v3948 = vpack.c.bf16 %v3908, %v3904
    %v3949 = vpack.c.bf16 %v3909, %v3905
    %v3950 = vpack.c.bf16 %v3910, %v3906
    %v3951 = vpack.c.bf16 %v3911, %v3907
    %v3952 = vpack.c.bf16 %v3916, %v3912
    %v3953 = vpack.c.bf16 %v3917, %v3913
    %v3954 = vpack.c.bf16 %v3918, %v3914
    %v3955 = vpack.c.bf16 %v3919, %v3915
    %v3956 = vpack.c.bf16 %v3924, %v3920
    %v3957 = vpack.c.bf16 %v3925, %v3921
    %v3958 = vpack.c.bf16 %v3926, %v3922
    %v3959 = vpack.c.bf16 %v3927, %v3923
    %s3960 = scalar_lea.vmem %s1, 2560
    %v3961 = vld [vmem:[%s3960] sm:$0xff]
    %v3962 = vld [vmem:[%s3960 + $0x8] sm:$0xff]
    %v3963 = vld [vmem:[%s3960 + $0x10] sm:$0xff]
    %v3964 = vld [vmem:[%s3960 + $0x18] sm:$0xff]
    %v3965 = vld [vmem:[%s3960 + $0x20] sm:$0xff]
    %v3966 = vld [vmem:[%s3960 + $0x28] sm:$0xff]
    %v3967 = vld [vmem:[%s3960 + $0x30] sm:$0xff]
    %v3968 = vld [vmem:[%s3960 + $0x38] sm:$0xff]
    %v3969 = vld [vmem:[%s3960 + $0x40] sm:$0xff]
    %v3970 = vld [vmem:[%s3960 + $0x48] sm:$0xff]
    %v3971 = vld [vmem:[%s3960 + $0x50] sm:$0xff]
    %v3972 = vld [vmem:[%s3960 + $0x58] sm:$0xff]
    %v3973 = vld [vmem:[%s3960 + $0x60] sm:$0xff]
    %v3974 = vld [vmem:[%s3960 + $0x68] sm:$0xff]
    %v3975 = vld [vmem:[%s3960 + $0x70] sm:$0xff]
    %v3976 = vld [vmem:[%s3960 + $0x78] sm:$0xff]
    %v3977 = vld [vmem:[%s3960 + $0x80] sm:$0xff]
    %v3978 = vld [vmem:[%s3960 + $0x88] sm:$0xff]
    %v3979 = vld [vmem:[%s3960 + $0x90] sm:$0xff]
    %v3980 = vld [vmem:[%s3960 + $0x98] sm:$0xff]
    %v3981 = vld [vmem:[%s3960 + $0xa0] sm:$0xff]
    %v3982 = vld [vmem:[%s3960 + $0xa8] sm:$0xff]
    %v3983 = vld [vmem:[%s3960 + $0xb0] sm:$0xff]
    %v3984 = vld [vmem:[%s3960 + $0xb8] sm:$0xff]
    %v3985 = vld [vmem:[%s3960 + $0xc0] sm:$0xff]
    %v3986 = vld [vmem:[%s3960 + $0xc8] sm:$0xff]
    %v3987 = vld [vmem:[%s3960 + $0xd0] sm:$0xff]
    %v3988 = vld [vmem:[%s3960 + $0xd8] sm:$0xff]
    %v3989 = vld [vmem:[%s3960 + $0xe0] sm:$0xff]
    %v3990 = vld [vmem:[%s3960 + $0xe8] sm:$0xff]
    %v3991 = vld [vmem:[%s3960 + $0xf0] sm:$0xff]
    %v3992 = vld [vmem:[%s3960 + $0xf8] sm:$0xff]
    %v3993 = vld [vmem:[%s3960 + $0x100] sm:$0xff]
    %v3994 = vld [vmem:[%s3960 + $0x108] sm:$0xff]
    %v3995 = vld [vmem:[%s3960 + $0x110] sm:$0xff]
    %v3996 = vld [vmem:[%s3960 + $0x118] sm:$0xff]
    %v3997 = vld [vmem:[%s3960 + $0x120] sm:$0xff]
    %v3998 = vld [vmem:[%s3960 + $0x128] sm:$0xff]
    %v3999 = vld [vmem:[%s3960 + $0x130] sm:$0xff]
    %v4000 = vld [vmem:[%s3960 + $0x138] sm:$0xff]
    %v4001 = vld [vmem:[%s3960 + $0x140] sm:$0xff]
    %v4002 = vld [vmem:[%s3960 + $0x148] sm:$0xff]
    %v4003 = vld [vmem:[%s3960 + $0x150] sm:$0xff]
    %v4004 = vld [vmem:[%s3960 + $0x158] sm:$0xff]
    %v4005 = vld [vmem:[%s3960 + $0x160] sm:$0xff]
    %v4006 = vld [vmem:[%s3960 + $0x168] sm:$0xff]
    %v4007 = vld [vmem:[%s3960 + $0x170] sm:$0xff]
    %v4008 = vld [vmem:[%s3960 + $0x178] sm:$0xff]
    %v4009 = vld [vmem:[%s3960 + $0x180] sm:$0xff]
    %v4010 = vld [vmem:[%s3960 + $0x188] sm:$0xff]
    %v4011 = vld [vmem:[%s3960 + $0x190] sm:$0xff]
    %v4012 = vld [vmem:[%s3960 + $0x198] sm:$0xff]
    %v4013 = vld [vmem:[%s3960 + $0x1a0] sm:$0xff]
    %v4014 = vld [vmem:[%s3960 + $0x1a8] sm:$0xff]
    %v4015 = vld [vmem:[%s3960 + $0x1b0] sm:$0xff]
    %v4016 = vld [vmem:[%s3960 + $0x1b8] sm:$0xff]
    %v4017 = vld [vmem:[%s3960 + $0x1c0] sm:$0xff]
    %v4018 = vld [vmem:[%s3960 + $0x1c8] sm:$0xff]
    %v4019 = vld [vmem:[%s3960 + $0x1d0] sm:$0xff]
    %v4020 = vld [vmem:[%s3960 + $0x1d8] sm:$0xff]
    %v4021 = vld [vmem:[%s3960 + $0x1e0] sm:$0xff]
    %v4022 = vld [vmem:[%s3960 + $0x1e8] sm:$0xff]
    %v4023 = vld [vmem:[%s3960 + $0x1f0] sm:$0xff]
    %v4024 = vld [vmem:[%s3960 + $0x1f8] sm:$0xff]
    %v4089 = vunpack.c.l.b16 %v3961
    %v4090 = vunpack.c.h.b16 %v3961
    %v4091 = vunpack.c.l.b16 %v3962
    %v4092 = vunpack.c.h.b16 %v3962
    %v4093 = vunpack.c.l.b16 %v3963
    %v4094 = vunpack.c.h.b16 %v3963
    %v4095 = vunpack.c.l.b16 %v3964
    %v4096 = vunpack.c.h.b16 %v3964
    %v4097 = vunpack.c.l.b16 %v3965
    %v4098 = vunpack.c.h.b16 %v3965
    %v4099 = vunpack.c.l.b16 %v3966
    %v4100 = vunpack.c.h.b16 %v3966
    %v4101 = vunpack.c.l.b16 %v3967
    %v4102 = vunpack.c.h.b16 %v3967
    %v4103 = vunpack.c.l.b16 %v3968
    %v4104 = vunpack.c.h.b16 %v3968
    %v4105 = vunpack.c.l.b16 %v3969
    %v4106 = vunpack.c.h.b16 %v3969
    %v4107 = vunpack.c.l.b16 %v3970
    %v4108 = vunpack.c.h.b16 %v3970
    %v4109 = vunpack.c.l.b16 %v3971
    %v4110 = vunpack.c.h.b16 %v3971
    %v4111 = vunpack.c.l.b16 %v3972
    %v4112 = vunpack.c.h.b16 %v3972
    %v4113 = vunpack.c.l.b16 %v3973
    %v4114 = vunpack.c.h.b16 %v3973
    %v4115 = vunpack.c.l.b16 %v3974
    %v4116 = vunpack.c.h.b16 %v3974
    %v4117 = vunpack.c.l.b16 %v3975
    %v4118 = vunpack.c.h.b16 %v3975
    %v4119 = vunpack.c.l.b16 %v3976
    %v4120 = vunpack.c.h.b16 %v3976
    %v4121 = vunpack.c.l.b16 %v3977
    %v4122 = vunpack.c.h.b16 %v3977
    %v4123 = vunpack.c.l.b16 %v3978
    %v4124 = vunpack.c.h.b16 %v3978
    %v4125 = vunpack.c.l.b16 %v3979
    %v4126 = vunpack.c.h.b16 %v3979
    %v4127 = vunpack.c.l.b16 %v3980
    %v4128 = vunpack.c.h.b16 %v3980
    %v4129 = vunpack.c.l.b16 %v3981
    %v4130 = vunpack.c.h.b16 %v3981
    %v4131 = vunpack.c.l.b16 %v3982
    %v4132 = vunpack.c.h.b16 %v3982
    %v4133 = vunpack.c.l.b16 %v3983
    %v4134 = vunpack.c.h.b16 %v3983
    %v4135 = vunpack.c.l.b16 %v3984
    %v4136 = vunpack.c.h.b16 %v3984
    %v4137 = vunpack.c.l.b16 %v3985
    %v4138 = vunpack.c.h.b16 %v3985
    %v4139 = vunpack.c.l.b16 %v3986
    %v4140 = vunpack.c.h.b16 %v3986
    %v4141 = vunpack.c.l.b16 %v3987
    %v4142 = vunpack.c.h.b16 %v3987
    %v4143 = vunpack.c.l.b16 %v3988
    %v4144 = vunpack.c.h.b16 %v3988
    %v4145 = vunpack.c.l.b16 %v3989
    %v4146 = vunpack.c.h.b16 %v3989
    %v4147 = vunpack.c.l.b16 %v3990
    %v4148 = vunpack.c.h.b16 %v3990
    %v4149 = vunpack.c.l.b16 %v3991
    %v4150 = vunpack.c.h.b16 %v3991
    %v4151 = vunpack.c.l.b16 %v3992
    %v4152 = vunpack.c.h.b16 %v3992
    %v4153 = vunpack.c.l.b16 %v3993
    %v4154 = vunpack.c.h.b16 %v3993
    %v4155 = vunpack.c.l.b16 %v3994
    %v4156 = vunpack.c.h.b16 %v3994
    %v4157 = vunpack.c.l.b16 %v3995
    %v4158 = vunpack.c.h.b16 %v3995
    %v4159 = vunpack.c.l.b16 %v3996
    %v4160 = vunpack.c.h.b16 %v3996
    %v4161 = vunpack.c.l.b16 %v3997
    %v4162 = vunpack.c.h.b16 %v3997
    %v4163 = vunpack.c.l.b16 %v3998
    %v4164 = vunpack.c.h.b16 %v3998
    %v4165 = vunpack.c.l.b16 %v3999
    %v4166 = vunpack.c.h.b16 %v3999
    %v4167 = vunpack.c.l.b16 %v4000
    %v4168 = vunpack.c.h.b16 %v4000
    %v4169 = vunpack.c.l.b16 %v4001
    %v4170 = vunpack.c.h.b16 %v4001
    %v4171 = vunpack.c.l.b16 %v4002
    %v4172 = vunpack.c.h.b16 %v4002
    %v4173 = vunpack.c.l.b16 %v4003
    %v4174 = vunpack.c.h.b16 %v4003
    %v4175 = vunpack.c.l.b16 %v4004
    %v4176 = vunpack.c.h.b16 %v4004
    %v4177 = vunpack.c.l.b16 %v4005
    %v4178 = vunpack.c.h.b16 %v4005
    %v4179 = vunpack.c.l.b16 %v4006
    %v4180 = vunpack.c.h.b16 %v4006
    %v4181 = vunpack.c.l.b16 %v4007
    %v4182 = vunpack.c.h.b16 %v4007
    %v4183 = vunpack.c.l.b16 %v4008
    %v4184 = vunpack.c.h.b16 %v4008
    %v4185 = vunpack.c.l.b16 %v4009
    %v4186 = vunpack.c.h.b16 %v4009
    %v4187 = vunpack.c.l.b16 %v4010
    %v4188 = vunpack.c.h.b16 %v4010
    %v4189 = vunpack.c.l.b16 %v4011
    %v4190 = vunpack.c.h.b16 %v4011
    %v4191 = vunpack.c.l.b16 %v4012
    %v4192 = vunpack.c.h.b16 %v4012
    %v4193 = vunpack.c.l.b16 %v4013
    %v4194 = vunpack.c.h.b16 %v4013
    %v4195 = vunpack.c.l.b16 %v4014
    %v4196 = vunpack.c.h.b16 %v4014
    %v4197 = vunpack.c.l.b16 %v4015
    %v4198 = vunpack.c.h.b16 %v4015
    %v4199 = vunpack.c.l.b16 %v4016
    %v4200 = vunpack.c.h.b16 %v4016
    %v4201 = vunpack.c.l.b16 %v4017
    %v4202 = vunpack.c.h.b16 %v4017
    %v4203 = vunpack.c.l.b16 %v4018
    %v4204 = vunpack.c.h.b16 %v4018
    %v4205 = vunpack.c.l.b16 %v4019
    %v4206 = vunpack.c.h.b16 %v4019
    %v4207 = vunpack.c.l.b16 %v4020
    %v4208 = vunpack.c.h.b16 %v4020
    %v4209 = vunpack.c.l.b16 %v4021
    %v4210 = vunpack.c.h.b16 %v4021
    %v4211 = vunpack.c.l.b16 %v4022
    %v4212 = vunpack.c.h.b16 %v4022
    %v4213 = vunpack.c.l.b16 %v4023
    %v4214 = vunpack.c.h.b16 %v4023
    %v4215 = vunpack.c.l.b16 %v4024
    %v4216 = vunpack.c.h.b16 %v4024
    %v4217 = vpack.c.b16 %v4091, %v4089
    %v4218 = vpack.c.b16 %v4092, %v4090
    %v4219 = vpack.c.b16 %v4095, %v4093
    %v4220 = vpack.c.b16 %v4096, %v4094
    %v4221 = vpack.c.b16 %v4099, %v4097
    %v4222 = vpack.c.b16 %v4100, %v4098
    %v4223 = vpack.c.b16 %v4103, %v4101
    %v4224 = vpack.c.b16 %v4104, %v4102
    %v4225 = vpack.c.b16 %v4107, %v4105
    %v4226 = vpack.c.b16 %v4108, %v4106
    %v4227 = vpack.c.b16 %v4111, %v4109
    %v4228 = vpack.c.b16 %v4112, %v4110
    %v4229 = vpack.c.b16 %v4115, %v4113
    %v4230 = vpack.c.b16 %v4116, %v4114
    %v4231 = vpack.c.b16 %v4119, %v4117
    %v4232 = vpack.c.b16 %v4120, %v4118
    %v4233 = vpack.c.b16 %v4123, %v4121
    %v4234 = vpack.c.b16 %v4124, %v4122
    %v4235 = vpack.c.b16 %v4127, %v4125
    %v4236 = vpack.c.b16 %v4128, %v4126
    %v4237 = vpack.c.b16 %v4131, %v4129
    %v4238 = vpack.c.b16 %v4132, %v4130
    %v4239 = vpack.c.b16 %v4135, %v4133
    %v4240 = vpack.c.b16 %v4136, %v4134
    %v4241 = vpack.c.b16 %v4139, %v4137
    %v4242 = vpack.c.b16 %v4140, %v4138
    %v4243 = vpack.c.b16 %v4143, %v4141
    %v4244 = vpack.c.b16 %v4144, %v4142
    %v4245 = vpack.c.b16 %v4147, %v4145
    %v4246 = vpack.c.b16 %v4148, %v4146
    %v4247 = vpack.c.b16 %v4151, %v4149
    %v4248 = vpack.c.b16 %v4152, %v4150
    %v4249 = vpack.c.b16 %v4155, %v4153
    %v4250 = vpack.c.b16 %v4156, %v4154
    %v4251 = vpack.c.b16 %v4159, %v4157
    %v4252 = vpack.c.b16 %v4160, %v4158
    %v4253 = vpack.c.b16 %v4163, %v4161
    %v4254 = vpack.c.b16 %v4164, %v4162
    %v4255 = vpack.c.b16 %v4167, %v4165
    %v4256 = vpack.c.b16 %v4168, %v4166
    %v4257 = vpack.c.b16 %v4171, %v4169
    %v4258 = vpack.c.b16 %v4172, %v4170
    %v4259 = vpack.c.b16 %v4175, %v4173
    %v4260 = vpack.c.b16 %v4176, %v4174
    %v4261 = vpack.c.b16 %v4179, %v4177
    %v4262 = vpack.c.b16 %v4180, %v4178
    %v4263 = vpack.c.b16 %v4183, %v4181
    %v4264 = vpack.c.b16 %v4184, %v4182
    %v4265 = vpack.c.b16 %v4187, %v4185
    %v4266 = vpack.c.b16 %v4188, %v4186
    %v4267 = vpack.c.b16 %v4191, %v4189
    %v4268 = vpack.c.b16 %v4192, %v4190
    %v4269 = vpack.c.b16 %v4195, %v4193
    %v4270 = vpack.c.b16 %v4196, %v4194
    %v4271 = vpack.c.b16 %v4199, %v4197
    %v4272 = vpack.c.b16 %v4200, %v4198
    %v4273 = vpack.c.b16 %v4203, %v4201
    %v4274 = vpack.c.b16 %v4204, %v4202
    %v4275 = vpack.c.b16 %v4207, %v4205
    %v4276 = vpack.c.b16 %v4208, %v4206
    %v4277 = vpack.c.b16 %v4211, %v4209
    %v4278 = vpack.c.b16 %v4212, %v4210
    %v4279 = vpack.c.b16 %v4215, %v4213
    %v4280 = vpack.c.b16 %v4216, %v4214
    %4345 = vmatprep.subr.bf16.mxu0 %v4218
    %4346 = vmatpush1.bf16.msra.mxu0 %v4217
    %4347 = vmatprep.subr.bf16.mxu0 %v4220
    %4348 = vmatpush1.bf16.msra.mxu0 %v4219
    %4349 = vmatprep.subr.bf16.mxu0 %v4222
    %4350 = vmatpush1.bf16.msra.mxu0 %v4221
    %4351 = vmatprep.subr.bf16.mxu0 %v4224
    %4352 = vmatpush1.bf16.msra.mxu0 %v4223
    %4353 = vmatprep.subr.bf16.mxu0 %v4226
    %4354 = vmatpush1.bf16.msra.mxu0 %v4225
    %4355 = vmatprep.subr.bf16.mxu0 %v4228
    %4356 = vmatpush1.bf16.msra.mxu0 %v4227
    %4357 = vmatprep.subr.bf16.mxu0 %v4230
    %4358 = vmatpush1.bf16.msra.mxu0 %v4229
    %4359 = vmatprep.subr.bf16.mxu0 %v4232
    %4360 = vmatpush1.bf16.msra.mxu0 %v4231
    %4361 = vmatprep.subr.bf16.mxu0 %v4234
    %4362 = vmatpush1.bf16.msra.mxu0 %v4233
    %4363 = vmatprep.subr.bf16.mxu0 %v4236
    %4364 = vmatpush1.bf16.msra.mxu0 %v4235
    %4365 = vmatprep.subr.bf16.mxu0 %v4238
    %4366 = vmatpush1.bf16.msra.mxu0 %v4237
    %4367 = vmatprep.subr.bf16.mxu0 %v4240
    %4368 = vmatpush1.bf16.msra.mxu0 %v4239
    %4369 = vmatprep.subr.bf16.mxu0 %v4242
    %4370 = vmatpush1.bf16.msra.mxu0 %v4241
    %4371 = vmatprep.subr.bf16.mxu0 %v4244
    %4372 = vmatpush1.bf16.msra.mxu0 %v4243
    %4373 = vmatprep.subr.bf16.mxu0 %v4246
    %4374 = vmatpush1.bf16.msra.mxu0 %v4245
    %4375 = vmatprep.subr.bf16.mxu0 %v4248
    %4376 = vmatpush1.bf16.msra.mxu0 %v4247
    %4377 = vmatprep.mubr.bf16.mxu0 %v3929
    %4378 = vmatmul.mubr.bf16.gmra.mrb[0].mxu0 %v3928
    %v4379 = vpop.f32.mrb[0].mxu0
    %v4380 = vadd.f32 0.0, %v4379
    %v4381 = vpop.f32.mrb[0].mxu0
    %v4382 = vadd.f32 0.0, %v4381
    %v4383 = vpop.f32.mrb[0].mxu0
    %v4384 = vadd.f32 0.0, %v4383
    %v4385 = vpop.f32.mrb[0].mxu0
    %v4386 = vadd.f32 0.0, %v4385
    %4387 = vmatprep.mubr.bf16.mxu0 %v3933
    %4388 = vmatmul.mubr.bf16.gmra.mrb[0].mxu0 %v3932
    %v4389 = vpop.f32.mrb[0].mxu0
    %v4390 = vadd.f32 0.0, %v4389
    %v4391 = vpop.f32.mrb[0].mxu0
    %v4392 = vadd.f32 0.0, %v4391
    %v4393 = vpop.f32.mrb[0].mxu0
    %v4394 = vadd.f32 0.0, %v4393
    %v4395 = vpop.f32.mrb[0].mxu0
    %v4396 = vadd.f32 0.0, %v4395
    %4397 = vmatprep.mubr.bf16.mxu0 %v3937
    %4398 = vmatmul.mubr.bf16.gmra.mrb[0].mxu0 %v3936
    %v4399 = vpop.f32.mrb[0].mxu0
    %v4400 = vadd.f32 0.0, %v4399
    %v4401 = vpop.f32.mrb[0].mxu0
    %v4402 = vadd.f32 0.0, %v4401
    %v4403 = vpop.f32.mrb[0].mxu0
    %v4404 = vadd.f32 0.0, %v4403
    %v4405 = vpop.f32.mrb[0].mxu0
    %v4406 = vadd.f32 0.0, %v4405
    %4407 = vmatprep.mubr.bf16.mxu0 %v3941
    %4408 = vmatmul.mubr.bf16.gmra.mrb[0].mxu0 %v3940
    %v4409 = vpop.f32.mrb[0].mxu0
    %v4410 = vadd.f32 0.0, %v4409
    %v4411 = vpop.f32.mrb[0].mxu0
    %v4412 = vadd.f32 0.0, %v4411
    %v4413 = vpop.f32.mrb[0].mxu0
    %v4414 = vadd.f32 0.0, %v4413
    %v4415 = vpop.f32.mrb[0].mxu0
    %v4416 = vadd.f32 0.0, %v4415
    %4417 = vmatprep.mubr.bf16.mxu0 %v3945
    %4418 = vmatmul.mubr.bf16.gmra.mrb[0].mxu0 %v3944
    %v4419 = vpop.f32.mrb[0].mxu0
    %v4420 = vadd.f32 0.0, %v4419
    %v4421 = vpop.f32.mrb[0].mxu0
    %v4422 = vadd.f32 0.0, %v4421
    %v4423 = vpop.f32.mrb[0].mxu0
    %v4424 = vadd.f32 0.0, %v4423
    %v4425 = vpop.f32.mrb[0].mxu0
    %v4426 = vadd.f32 0.0, %v4425
    %4427 = vmatprep.mubr.bf16.mxu0 %v3949
    %4428 = vmatmul.mubr.bf16.gmra.mrb[0].mxu0 %v3948
    %v4429 = vpop.f32.mrb[0].mxu0
    %v4430 = vadd.f32 0.0, %v4429
    %v4431 = vpop.f32.mrb[0].mxu0
    %v4432 = vadd.f32 0.0, %v4431
    %v4433 = vpop.f32.mrb[0].mxu0
    %v4434 = vadd.f32 0.0, %v4433
    %v4435 = vpop.f32.mrb[0].mxu0
    %v4436 = vadd.f32 0.0, %v4435
    %4437 = vmatprep.mubr.bf16.mxu0 %v3953
    %4438 = vmatmul.mubr.bf16.gmra.mrb[0].mxu0 %v3952
    %v4439 = vpop.f32.mrb[0].mxu0
    %v4440 = vadd.f32 0.0, %v4439
    %v4441 = vpop.f32.mrb[0].mxu0
    %v4442 = vadd.f32 0.0, %v4441
    %v4443 = vpop.f32.mrb[0].mxu0
    %v4444 = vadd.f32 0.0, %v4443
    %v4445 = vpop.f32.mrb[0].mxu0
    %v4446 = vadd.f32 0.0, %v4445
    %4447 = vmatprep.mubr.bf16.mxu0 %v3957
    %4448 = vmatmul.mubr.bf16.gmra.mrb[0].mxu0 %v3956
    %v4449 = vpop.f32.mrb[0].mxu0
    %v4450 = vadd.f32 0.0, %v4449
    %v4451 = vpop.f32.mrb[0].mxu0
    %v4452 = vadd.f32 0.0, %v4451
    %v4453 = vpop.f32.mrb[0].mxu0
    %v4454 = vadd.f32 0.0, %v4453
    %v4455 = vpop.f32.mrb[0].mxu0
    %v4456 = vadd.f32 0.0, %v4455
    %4457 = vdwg.mxu0
    %4458 = vmatprep.subr.bf16.mxu0 %v4250
    %4459 = vmatpush1.bf16.msra.mxu0 %v4249
    %4460 = vmatprep.subr.bf16.mxu0 %v4252
    %4461 = vmatpush1.bf16.msra.mxu0 %v4251
    %4462 = vmatprep.subr.bf16.mxu0 %v4254
    %4463 = vmatpush1.bf16.msra.mxu0 %v4253
    %4464 = vmatprep.subr.bf16.mxu0 %v4256
    %4465 = vmatpush1.bf16.msra.mxu0 %v4255
    %4466 = vmatprep.subr.bf16.mxu0 %v4258
    %4467 = vmatpush1.bf16.msra.mxu0 %v4257
    %4468 = vmatprep.subr.bf16.mxu0 %v4260
    %4469 = vmatpush1.bf16.msra.mxu0 %v4259
    %4470 = vmatprep.subr.bf16.mxu0 %v4262
    %4471 = vmatpush1.bf16.msra.mxu0 %v4261
    %4472 = vmatprep.subr.bf16.mxu0 %v4264
    %4473 = vmatpush1.bf16.msra.mxu0 %v4263
    %4474 = vmatprep.subr.bf16.mxu0 %v4266
    %4475 = vmatpush1.bf16.msra.mxu0 %v4265
    %4476 = vmatprep.subr.bf16.mxu0 %v4268
    %4477 = vmatpush1.bf16.msra.mxu0 %v4267
    %4478 = vmatprep.subr.bf16.mxu0 %v4270
    %4479 = vmatpush1.bf16.msra.mxu0 %v4269
    %4480 = vmatprep.subr.bf16.mxu0 %v4272
    %4481 = vmatpush1.bf16.msra.mxu0 %v4271
    %4482 = vmatprep.subr.bf16.mxu0 %v4274
    %4483 = vmatpush1.bf16.msra.mxu0 %v4273
    %4484 = vmatprep.subr.bf16.mxu0 %v4276
    %4485 = vmatpush1.bf16.msra.mxu0 %v4275
    %4486 = vmatprep.subr.bf16.mxu0 %v4278
    %4487 = vmatpush1.bf16.msra.mxu0 %v4277
    %4488 = vmatprep.subr.bf16.mxu0 %v4280
    %4489 = vmatpush1.bf16.msra.mxu0 %v4279
    %4490 = vmatprep.mubr.bf16.mxu0 %v3931
    %4491 = vmatmul.mubr.bf16.gmra.mrb[0].mxu0 %v3930
    %v4492 = vpop.f32.mrb[0].mxu0
    %v4493 = vadd.f32 %v4380, %v4492
    %v4494 = vpop.f32.mrb[0].mxu0
    %v4495 = vadd.f32 %v4382, %v4494
    %v4496 = vpop.f32.mrb[0].mxu0
    %v4497 = vadd.f32 %v4384, %v4496
    %v4498 = vpop.f32.mrb[0].mxu0
    %v4499 = vadd.f32 %v4386, %v4498
    %4500 = vmatprep.mubr.bf16.mxu0 %v3935
    %4501 = vmatmul.mubr.bf16.gmra.mrb[0].mxu0 %v3934
    %v4502 = vpop.f32.mrb[0].mxu0
    %v4503 = vadd.f32 %v4390, %v4502
    %v4504 = vpop.f32.mrb[0].mxu0
    %v4505 = vadd.f32 %v4392, %v4504
    %v4506 = vpop.f32.mrb[0].mxu0
    %v4507 = vadd.f32 %v4394, %v4506
    %v4508 = vpop.f32.mrb[0].mxu0
    %v4509 = vadd.f32 %v4396, %v4508
    %4510 = vmatprep.mubr.bf16.mxu0 %v3939
    %4511 = vmatmul.mubr.bf16.gmra.mrb[0].mxu0 %v3938
    %v4512 = vpop.f32.mrb[0].mxu0
    %v4513 = vadd.f32 %v4400, %v4512
    %v4514 = vpop.f32.mrb[0].mxu0
    %v4515 = vadd.f32 %v4402, %v4514
    %v4516 = vpop.f32.mrb[0].mxu0
    %v4517 = vadd.f32 %v4404, %v4516
    %v4518 = vpop.f32.mrb[0].mxu0
    %v4519 = vadd.f32 %v4406, %v4518
    %4520 = vmatprep.mubr.bf16.mxu0 %v3943
    %4521 = vmatmul.mubr.bf16.gmra.mrb[0].mxu0 %v3942
    %v4522 = vpop.f32.mrb[0].mxu0
    %v4523 = vadd.f32 %v4410, %v4522
    %v4524 = vpop.f32.mrb[0].mxu0
    %v4525 = vadd.f32 %v4412, %v4524
    %v4526 = vpop.f32.mrb[0].mxu0
    %v4527 = vadd.f32 %v4414, %v4526
    %v4528 = vpop.f32.mrb[0].mxu0
    %v4529 = vadd.f32 %v4416, %v4528
    %4530 = vmatprep.mubr.bf16.mxu0 %v3947
    %4531 = vmatmul.mubr.bf16.gmra.mrb[0].mxu0 %v3946
    %v4532 = vpop.f32.mrb[0].mxu0
    %v4533 = vadd.f32 %v4420, %v4532
    %v4534 = vpop.f32.mrb[0].mxu0
    %v4535 = vadd.f32 %v4422, %v4534
    %v4536 = vpop.f32.mrb[0].mxu0
    %v4537 = vadd.f32 %v4424, %v4536
    %v4538 = vpop.f32.mrb[0].mxu0
    %v4539 = vadd.f32 %v4426, %v4538
    %4540 = vmatprep.mubr.bf16.mxu0 %v3951
    %4541 = vmatmul.mubr.bf16.gmra.mrb[0].mxu0 %v3950
    %v4542 = vpop.f32.mrb[0].mxu0
    %v4543 = vadd.f32 %v4430, %v4542
    %v4544 = vpop.f32.mrb[0].mxu0
    %v4545 = vadd.f32 %v4432, %v4544
    %v4546 = vpop.f32.mrb[0].mxu0
    %v4547 = vadd.f32 %v4434, %v4546
    %v4548 = vpop.f32.mrb[0].mxu0
    %v4549 = vadd.f32 %v4436, %v4548
    %4550 = vmatprep.mubr.bf16.mxu0 %v3955
    %4551 = vmatmul.mubr.bf16.gmra.mrb[0].mxu0 %v3954
    %v4552 = vpop.f32.mrb[0].mxu0
    %v4553 = vadd.f32 %v4440, %v4552
    %v4554 = vpop.f32.mrb[0].mxu0
    %v4555 = vadd.f32 %v4442, %v4554
    %v4556 = vpop.f32.mrb[0].mxu0
    %v4557 = vadd.f32 %v4444, %v4556
    %v4558 = vpop.f32.mrb[0].mxu0
    %v4559 = vadd.f32 %v4446, %v4558
    %4560 = vmatprep.mubr.bf16.mxu0 %v3959
    %4561 = vmatmul.mubr.bf16.gmra.mrb[0].mxu0 %v3958
    %v4562 = vpop.f32.mrb[0].mxu0
    %v4563 = vadd.f32 %v4450, %v4562
    %v4564 = vpop.f32.mrb[0].mxu0
    %v4565 = vadd.f32 %v4452, %v4564
    %v4566 = vpop.f32.mrb[0].mxu0
    %v4567 = vadd.f32 %v4454, %v4566
    %v4568 = vpop.f32.mrb[0].mxu0
    %v4569 = vadd.f32 %v4456, %v4568
    %4570 = vdwg.mxu0
    %v4571 = vadd.f32 %v3799, %v4493
    %v4572 = vadd.f32 %v3800, %v4495
    %v4573 = vadd.f32 %v3801, %v4497
    %v4574 = vadd.f32 %v3802, %v4499
    %v4575 = vadd.f32 %v3803, %v4503
    %v4576 = vadd.f32 %v3804, %v4505
    %v4577 = vadd.f32 %v3805, %v4507
    %v4578 = vadd.f32 %v3806, %v4509
    %v4579 = vadd.f32 %v3807, %v4513
    %v4580 = vadd.f32 %v3808, %v4515
    %v4581 = vadd.f32 %v3809, %v4517
    %v4582 = vadd.f32 %v3810, %v4519
    %v4583 = vadd.f32 %v3811, %v4523
    %v4584 = vadd.f32 %v3812, %v4525
    %v4585 = vadd.f32 %v3813, %v4527
    %v4586 = vadd.f32 %v3814, %v4529
    %v4587 = vadd.f32 %v3815, %v4533
    %v4588 = vadd.f32 %v3816, %v4535
    %v4589 = vadd.f32 %v3817, %v4537
    %v4590 = vadd.f32 %v3818, %v4539
    %v4591 = vadd.f32 %v3819, %v4543
    %v4592 = vadd.f32 %v3820, %v4545
    %v4593 = vadd.f32 %v3821, %v4547
    %v4594 = vadd.f32 %v3822, %v4549
    %v4595 = vadd.f32 %v3823, %v4553
    %v4596 = vadd.f32 %v3824, %v4555
    %v4597 = vadd.f32 %v3825, %v4557
    %v4598 = vadd.f32 %v3826, %v4559
    %v4599 = vadd.f32 %v3827, %v4563
    %v4600 = vadd.f32 %v3828, %v4565
    %v4601 = vadd.f32 %v3829, %v4567
    %v4602 = vadd.f32 %v3830, %v4569
    %s4603 = scalar_lea.vmem %s0, 16
    %v4604 = vld [vmem:[%s4603] sm:$0xff]
    %v4605 = vld [vmem:[%s4603 + $0x8] sm:$0xff]
    %v4606 = vld [vmem:[%s4603 + $0x10] sm:$0xff]
    %v4607 = vld [vmem:[%s4603 + $0x18] sm:$0xff]
    %v4608 = vld [vmem:[%s4603 + $0x20] sm:$0xff]
    %v4609 = vld [vmem:[%s4603 + $0x28] sm:$0xff]
    %v4610 = vld [vmem:[%s4603 + $0x30] sm:$0xff]
    %v4611 = vld [vmem:[%s4603 + $0x38] sm:$0xff]
    %v4612 = vld [vmem:[%s4603 + $0x40] sm:$0xff]
    %v4613 = vld [vmem:[%s4603 + $0x48] sm:$0xff]
    %v4614 = vld [vmem:[%s4603 + $0x50] sm:$0xff]
    %v4615 = vld [vmem:[%s4603 + $0x58] sm:$0xff]
    %v4616 = vld [vmem:[%s4603 + $0x60] sm:$0xff]
    %v4617 = vld [vmem:[%s4603 + $0x68] sm:$0xff]
    %v4618 = vld [vmem:[%s4603 + $0x70] sm:$0xff]
    %v4619 = vld [vmem:[%s4603 + $0x78] sm:$0xff]
    %v4620 = vld [vmem:[%s4603 + $0x90] sm:$0xff]
    %v4621 = vld [vmem:[%s4603 + $0x98] sm:$0xff]
    %v4622 = vld [vmem:[%s4603 + $0xa0] sm:$0xff]
    %v4623 = vld [vmem:[%s4603 + $0xa8] sm:$0xff]
    %v4624 = vld [vmem:[%s4603 + $0xb0] sm:$0xff]
    %v4625 = vld [vmem:[%s4603 + $0xb8] sm:$0xff]
    %v4626 = vld [vmem:[%s4603 + $0xc0] sm:$0xff]
    %v4627 = vld [vmem:[%s4603 + $0xc8] sm:$0xff]
    %v4628 = vld [vmem:[%s4603 + $0xd0] sm:$0xff]
    %v4629 = vld [vmem:[%s4603 + $0xd8] sm:$0xff]
    %v4630 = vld [vmem:[%s4603 + $0xe0] sm:$0xff]
    %v4631 = vld [vmem:[%s4603 + $0xe8] sm:$0xff]
    %v4632 = vld [vmem:[%s4603 + $0xf0] sm:$0xff]
    %v4633 = vld [vmem:[%s4603 + $0xf8] sm:$0xff]
    %v4634 = vld [vmem:[%s4603 + $0x100] sm:$0xff]
    %v4635 = vld [vmem:[%s4603 + $0x108] sm:$0xff]
    %v4636 = vunpack.c.l.bf16 %v4604
    %v4637 = vunpack.c.h.bf16 %v4604
    %v4638 = vunpack.c.l.bf16 %v4605
    %v4639 = vunpack.c.h.bf16 %v4605
    %v4640 = vunpack.c.l.bf16 %v4606
    %v4641 = vunpack.c.h.bf16 %v4606
    %v4642 = vunpack.c.l.bf16 %v4607
    %v4643 = vunpack.c.h.bf16 %v4607
    %v4644 = vunpack.c.l.bf16 %v4608
    %v4645 = vunpack.c.h.bf16 %v4608
    %v4646 = vunpack.c.l.bf16 %v4609
    %v4647 = vunpack.c.h.bf16 %v4609
    %v4648 = vunpack.c.l.bf16 %v4610
    %v4649 = vunpack.c.h.bf16 %v4610
    %v4650 = vunpack.c.l.bf16 %v4611
    %v4651 = vunpack.c.h.bf16 %v4611
    %v4652 = vunpack.c.l.bf16 %v4612
    %v4653 = vunpack.c.h.bf16 %v4612
    %v4654 = vunpack.c.l.bf16 %v4613
    %v4655 = vunpack.c.h.bf16 %v4613
    %v4656 = vunpack.c.l.bf16 %v4614
    %v4657 = vunpack.c.h.bf16 %v4614
    %v4658 = vunpack.c.l.bf16 %v4615
    %v4659 = vunpack.c.h.bf16 %v4615
    %v4660 = vunpack.c.l.bf16 %v4616
    %v4661 = vunpack.c.h.bf16 %v4616
    %v4662 = vunpack.c.l.bf16 %v4617
    %v4663 = vunpack.c.h.bf16 %v4617
    %v4664 = vunpack.c.l.bf16 %v4618
    %v4665 = vunpack.c.h.bf16 %v4618
    %v4666 = vunpack.c.l.bf16 %v4619
    %v4667 = vunpack.c.h.bf16 %v4619
    %v4668 = vunpack.c.l.bf16 %v4620
    %v4669 = vunpack.c.h.bf16 %v4620
    %v4670 = vunpack.c.l.bf16 %v4621
    %v4671 = vunpack.c.h.bf16 %v4621
    %v4672 = vunpack.c.l.bf16 %v4622
    %v4673 = vunpack.c.h.bf16 %v4622
    %v4674 = vunpack.c.l.bf16 %v4623
    %v4675 = vunpack.c.h.bf16 %v4623
    %v4676 = vunpack.c.l.bf16 %v4624
    %v4677 = vunpack.c.h.bf16 %v4624
    %v4678 = vunpack.c.l.bf16 %v4625
    %v4679 = vunpack.c.h.bf16 %v4625
    %v4680 = vunpack.c.l.bf16 %v4626
    %v4681 = vunpack.c.h.bf16 %v4626
    %v4682 = vunpack.c.l.bf16 %v4627
    %v4683 = vunpack.c.h.bf16 %v4627
    %v4684 = vunpack.c.l.bf16 %v4628
    %v4685 = vunpack.c.h.bf16 %v4628
    %v4686 = vunpack.c.l.bf16 %v4629
    %v4687 = vunpack.c.h.bf16 %v4629
    %v4688 = vunpack.c.l.bf16 %v4630
    %v4689 = vunpack.c.h.bf16 %v4630
    %v4690 = vunpack.c.l.bf16 %v4631
    %v4691 = vunpack.c.h.bf16 %v4631
    %v4692 = vunpack.c.l.bf16 %v4632
    %v4693 = vunpack.c.h.bf16 %v4632
    %v4694 = vunpack.c.l.bf16 %v4633
    %v4695 = vunpack.c.h.bf16 %v4633
    %v4696 = vunpack.c.l.bf16 %v4634
    %v4697 = vunpack.c.h.bf16 %v4634
    %v4698 = vunpack.c.l.bf16 %v4635
    %v4699 = vunpack.c.h.bf16 %v4635
    %v4700 = vpack.c.bf16 %v4640, %v4636
    %v4701 = vpack.c.bf16 %v4641, %v4637
    %v4702 = vpack.c.bf16 %v4642, %v4638
    %v4703 = vpack.c.bf16 %v4643, %v4639
    %v4704 = vpack.c.bf16 %v4648, %v4644
    %v4705 = vpack.c.bf16 %v4649, %v4645
    %v4706 = vpack.c.bf16 %v4650, %v4646
    %v4707 = vpack.c.bf16 %v4651, %v4647
    %v4708 = vpack.c.bf16 %v4656, %v4652
    %v4709 = vpack.c.bf16 %v4657, %v4653
    %v4710 = vpack.c.bf16 %v4658, %v4654
    %v4711 = vpack.c.bf16 %v4659, %v4655
    %v4712 = vpack.c.bf16 %v4664, %v4660
    %v4713 = vpack.c.bf16 %v4665, %v4661
    %v4714 = vpack.c.bf16 %v4666, %v4662
    %v4715 = vpack.c.bf16 %v4667, %v4663
    %v4716 = vpack.c.bf16 %v4672, %v4668
    %v4717 = vpack.c.bf16 %v4673, %v4669
    %v4718 = vpack.c.bf16 %v4674, %v4670
    %v4719 = vpack.c.bf16 %v4675, %v4671
    %v4720 = vpack.c.bf16 %v4680, %v4676
    %v4721 = vpack.c.bf16 %v4681, %v4677
    %v4722 = vpack.c.bf16 %v4682, %v4678
    %v4723 = vpack.c.bf16 %v4683, %v4679
    %v4724 = vpack.c.bf16 %v4688, %v4684
    %v4725 = vpack.c.bf16 %v4689, %v4685
    %v4726 = vpack.c.bf16 %v4690, %v4686
    %v4727 = vpack.c.bf16 %v4691, %v4687
    %v4728 = vpack.c.bf16 %v4696, %v4692
    %v4729 = vpack.c.bf16 %v4697, %v4693
    %v4730 = vpack.c.bf16 %v4698, %v4694
    %v4731 = vpack.c.bf16 %v4699, %v4695
    %s4732 = scalar_lea.vmem %s1, 3072
    %v4733 = vld [vmem:[%s4732] sm:$0xff]
    %v4734 = vld [vmem:[%s4732 + $0x8] sm:$0xff]
    %v4735 = vld [vmem:[%s4732 + $0x10] sm:$0xff]
    %v4736 = vld [vmem:[%s4732 + $0x18] sm:$0xff]
    %v4737 = vld [vmem:[%s4732 + $0x20] sm:$0xff]
    %v4738 = vld [vmem:[%s4732 + $0x28] sm:$0xff]
    %v4739 = vld [vmem:[%s4732 + $0x30] sm:$0xff]
    %v4740 = vld [vmem:[%s4732 + $0x38] sm:$0xff]
    %v4741 = vld [vmem:[%s4732 + $0x40] sm:$0xff]
    %v4742 = vld [vmem:[%s4732 + $0x48] sm:$0xff]
    %v4743 = vld [vmem:[%s4732 + $0x50] sm:$0xff]
    %v4744 = vld [vmem:[%s4732 + $0x58] sm:$0xff]
    %v4745 = vld [vmem:[%s4732 + $0x60] sm:$0xff]
    %v4746 = vld [vmem:[%s4732 + $0x68] sm:$0xff]
    %v4747 = vld [vmem:[%s4732 + $0x70] sm:$0xff]
    %v4748 = vld [vmem:[%s4732 + $0x78] sm:$0xff]
    %v4749 = vld [vmem:[%s4732 + $0x80] sm:$0xff]
    %v4750 = vld [vmem:[%s4732 + $0x88] sm:$0xff]
    %v4751 = vld [vmem:[%s4732 + $0x90] sm:$0xff]
    %v4752 = vld [vmem:[%s4732 + $0x98] sm:$0xff]
    %v4753 = vld [vmem:[%s4732 + $0xa0] sm:$0xff]
    %v4754 = vld [vmem:[%s4732 + $0xa8] sm:$0xff]
    %v4755 = vld [vmem:[%s4732 + $0xb0] sm:$0xff]
    %v4756 = vld [vmem:[%s4732 + $0xb8] sm:$0xff]
    %v4757 = vld [vmem:[%s4732 + $0xc0] sm:$0xff]
    %v4758 = vld [vmem:[%s4732 + $0xc8] sm:$0xff]
    %v4759 = vld [vmem:[%s4732 + $0xd0] sm:$0xff]
    %v4760 = vld [vmem:[%s4732 + $0xd8] sm:$0xff]
    %v4761 = vld [vmem:[%s4732 + $0xe0] sm:$0xff]
    %v4762 = vld [vmem:[%s4732 + $0xe8] sm:$0xff]
    %v4763 = vld [vmem:[%s4732 + $0xf0] sm:$0xff]
    %v4764 = vld [vmem:[%s4732 + $0xf8] sm:$0xff]
    %v4765 = vld [vmem:[%s4732 + $0x100] sm:$0xff]
    %v4766 = vld [vmem:[%s4732 + $0x108] sm:$0xff]
    %v4767 = vld [vmem:[%s4732 + $0x110] sm:$0xff]
    %v4768 = vld [vmem:[%s4732 + $0x118] sm:$0xff]
    %v4769 = vld [vmem:[%s4732 + $0x120] sm:$0xff]
    %v4770 = vld [vmem:[%s4732 + $0x128] sm:$0xff]
    %v4771 = vld [vmem:[%s4732 + $0x130] sm:$0xff]
    %v4772 = vld [vmem:[%s4732 + $0x138] sm:$0xff]
    %v4773 = vld [vmem:[%s4732 + $0x140] sm:$0xff]
    %v4774 = vld [vmem:[%s4732 + $0x148] sm:$0xff]
    %v4775 = vld [vmem:[%s4732 + $0x150] sm:$0xff]
    %v4776 = vld [vmem:[%s4732 + $0x158] sm:$0xff]
    %v4777 = vld [vmem:[%s4732 + $0x160] sm:$0xff]
    %v4778 = vld [vmem:[%s4732 + $0x168] sm:$0xff]
    %v4779 = vld [vmem:[%s4732 + $0x170] sm:$0xff]
    %v4780 = vld [vmem:[%s4732 + $0x178] sm:$0xff]
    %v4781 = vld [vmem:[%s4732 + $0x180] sm:$0xff]
    %v4782 = vld [vmem:[%s4732 + $0x188] sm:$0xff]
    %v4783 = vld [vmem:[%s4732 + $0x190] sm:$0xff]
    %v4784 = vld [vmem:[%s4732 + $0x198] sm:$0xff]
    %v4785 = vld [vmem:[%s4732 + $0x1a0] sm:$0xff]
    %v4786 = vld [vmem:[%s4732 + $0x1a8] sm:$0xff]
    %v4787 = vld [vmem:[%s4732 + $0x1b0] sm:$0xff]
    %v4788 = vld [vmem:[%s4732 + $0x1b8] sm:$0xff]
    %v4789 = vld [vmem:[%s4732 + $0x1c0] sm:$0xff]
    %v4790 = vld [vmem:[%s4732 + $0x1c8] sm:$0xff]
    %v4791 = vld [vmem:[%s4732 + $0x1d0] sm:$0xff]
    %v4792 = vld [vmem:[%s4732 + $0x1d8] sm:$0xff]
    %v4793 = vld [vmem:[%s4732 + $0x1e0] sm:$0xff]
    %v4794 = vld [vmem:[%s4732 + $0x1e8] sm:$0xff]
    %v4795 = vld [vmem:[%s4732 + $0x1f0] sm:$0xff]
    %v4796 = vld [vmem:[%s4732 + $0x1f8] sm:$0xff]
    %v4861 = vunpack.c.l.b16 %v4733
    %v4862 = vunpack.c.h.b16 %v4733
    %v4863 = vunpack.c.l.b16 %v4734
    %v4864 = vunpack.c.h.b16 %v4734
    %v4865 = vunpack.c.l.b16 %v4735
    %v4866 = vunpack.c.h.b16 %v4735
    %v4867 = vunpack.c.l.b16 %v4736
    %v4868 = vunpack.c.h.b16 %v4736
    %v4869 = vunpack.c.l.b16 %v4737
    %v4870 = vunpack.c.h.b16 %v4737
    %v4871 = vunpack.c.l.b16 %v4738
    %v4872 = vunpack.c.h.b16 %v4738
    %v4873 = vunpack.c.l.b16 %v4739
    %v4874 = vunpack.c.h.b16 %v4739
    %v4875 = vunpack.c.l.b16 %v4740
    %v4876 = vunpack.c.h.b16 %v4740
    %v4877 = vunpack.c.l.b16 %v4741
    %v4878 = vunpack.c.h.b16 %v4741
    %v4879 = vunpack.c.l.b16 %v4742
    %v4880 = vunpack.c.h.b16 %v4742
    %v4881 = vunpack.c.l.b16 %v4743
    %v4882 = vunpack.c.h.b16 %v4743
    %v4883 = vunpack.c.l.b16 %v4744
    %v4884 = vunpack.c.h.b16 %v4744
    %v4885 = vunpack.c.l.b16 %v4745
    %v4886 = vunpack.c.h.b16 %v4745
    %v4887 = vunpack.c.l.b16 %v4746
    %v4888 = vunpack.c.h.b16 %v4746
    %v4889 = vunpack.c.l.b16 %v4747
    %v4890 = vunpack.c.h.b16 %v4747
    %v4891 = vunpack.c.l.b16 %v4748
    %v4892 = vunpack.c.h.b16 %v4748
    %v4893 = vunpack.c.l.b16 %v4749
    %v4894 = vunpack.c.h.b16 %v4749
    %v4895 = vunpack.c.l.b16 %v4750
    %v4896 = vunpack.c.h.b16 %v4750
    %v4897 = vunpack.c.l.b16 %v4751
    %v4898 = vunpack.c.h.b16 %v4751
    %v4899 = vunpack.c.l.b16 %v4752
    %v4900 = vunpack.c.h.b16 %v4752
    %v4901 = vunpack.c.l.b16 %v4753
    %v4902 = vunpack.c.h.b16 %v4753
    %v4903 = vunpack.c.l.b16 %v4754
    %v4904 = vunpack.c.h.b16 %v4754
    %v4905 = vunpack.c.l.b16 %v4755
    %v4906 = vunpack.c.h.b16 %v4755
    %v4907 = vunpack.c.l.b16 %v4756
    %v4908 = vunpack.c.h.b16 %v4756
    %v4909 = vunpack.c.l.b16 %v4757
    %v4910 = vunpack.c.h.b16 %v4757
    %v4911 = vunpack.c.l.b16 %v4758
    %v4912 = vunpack.c.h.b16 %v4758
    %v4913 = vunpack.c.l.b16 %v4759
    %v4914 = vunpack.c.h.b16 %v4759
    %v4915 = vunpack.c.l.b16 %v4760
    %v4916 = vunpack.c.h.b16 %v4760
    %v4917 = vunpack.c.l.b16 %v4761
    %v4918 = vunpack.c.h.b16 %v4761
    %v4919 = vunpack.c.l.b16 %v4762
    %v4920 = vunpack.c.h.b16 %v4762
    %v4921 = vunpack.c.l.b16 %v4763
    %v4922 = vunpack.c.h.b16 %v4763
    %v4923 = vunpack.c.l.b16 %v4764
    %v4924 = vunpack.c.h.b16 %v4764
    %v4925 = vunpack.c.l.b16 %v4765
    %v4926 = vunpack.c.h.b16 %v4765
    %v4927 = vunpack.c.l.b16 %v4766
    %v4928 = vunpack.c.h.b16 %v4766
    %v4929 = vunpack.c.l.b16 %v4767
    %v4930 = vunpack.c.h.b16 %v4767
    %v4931 = vunpack.c.l.b16 %v4768
    %v4932 = vunpack.c.h.b16 %v4768
    %v4933 = vunpack.c.l.b16 %v4769
    %v4934 = vunpack.c.h.b16 %v4769
    %v4935 = vunpack.c.l.b16 %v4770
    %v4936 = vunpack.c.h.b16 %v4770
    %v4937 = vunpack.c.l.b16 %v4771
    %v4938 = vunpack.c.h.b16 %v4771
    %v4939 = vunpack.c.l.b16 %v4772
    %v4940 = vunpack.c.h.b16 %v4772
    %v4941 = vunpack.c.l.b16 %v4773
    %v4942 = vunpack.c.h.b16 %v4773
    %v4943 = vunpack.c.l.b16 %v4774
    %v4944 = vunpack.c.h.b16 %v4774
    %v4945 = vunpack.c.l.b16 %v4775
    %v4946 = vunpack.c.h.b16 %v4775
    %v4947 = vunpack.c.l.b16 %v4776
    %v4948 = vunpack.c.h.b16 %v4776
    %v4949 = vunpack.c.l.b16 %v4777
    %v4950 = vunpack.c.h.b16 %v4777
    %v4951 = vunpack.c.l.b16 %v4778
    %v4952 = vunpack.c.h.b16 %v4778
    %v4953 = vunpack.c.l.b16 %v4779
    %v4954 = vunpack.c.h.b16 %v4779
    %v4955 = vunpack.c.l.b16 %v4780
    %v4956 = vunpack.c.h.b16 %v4780
    %v4957 = vunpack.c.l.b16 %v4781
    %v4958 = vunpack.c.h.b16 %v4781
    %v4959 = vunpack.c.l.b16 %v4782
    %v4960 = vunpack.c.h.b16 %v4782
    %v4961 = vunpack.c.l.b16 %v4783
    %v4962 = vunpack.c.h.b16 %v4783
    %v4963 = vunpack.c.l.b16 %v4784
    %v4964 = vunpack.c.h.b16 %v4784
    %v4965 = vunpack.c.l.b16 %v4785
    %v4966 = vunpack.c.h.b16 %v4785
    %v4967 = vunpack.c.l.b16 %v4786
    %v4968 = vunpack.c.h.b16 %v4786
    %v4969 = vunpack.c.l.b16 %v4787
    %v4970 = vunpack.c.h.b16 %v4787
    %v4971 = vunpack.c.l.b16 %v4788
    %v4972 = vunpack.c.h.b16 %v4788
    %v4973 = vunpack.c.l.b16 %v4789
    %v4974 = vunpack.c.h.b16 %v4789
    %v4975 = vunpack.c.l.b16 %v4790
    %v4976 = vunpack.c.h.b16 %v4790
    %v4977 = vunpack.c.l.b16 %v4791
    %v4978 = vunpack.c.h.b16 %v4791
    %v4979 = vunpack.c.l.b16 %v4792
    %v4980 = vunpack.c.h.b16 %v4792
    %v4981 = vunpack.c.l.b16 %v4793
    %v4982 = vunpack.c.h.b16 %v4793
    %v4983 = vunpack.c.l.b16 %v4794
    %v4984 = vunpack.c.h.b16 %v4794
    %v4985 = vunpack.c.l.b16 %v4795
    %v4986 = vunpack.c.h.b16 %v4795
    %v4987 = vunpack.c.l.b16 %v4796
    %v4988 = vunpack.c.h.b16 %v4796
    %v4989 = vpack.c.b16 %v4863, %v4861
    %v4990 = vpack.c.b16 %v4864, %v4862
    %v4991 = vpack.c.b16 %v4867, %v4865
    %v4992 = vpack.c.b16 %v4868, %v4866
    %v4993 = vpack.c.b16 %v4871, %v4869
    %v4994 = vpack.c.b16 %v4872, %v4870
    %v4995 = vpack.c.b16 %v4875, %v4873
    %v4996 = vpack.c.b16 %v4876, %v4874
    %v4997 = vpack.c.b16 %v4879, %v4877
    %v4998 = vpack.c.b16 %v4880, %v4878
    %v4999 = vpack.c.b16 %v4883, %v4881
    %v5000 = vpack.c.b16 %v4884, %v4882
    %v5001 = vpack.c.b16 %v4887, %v4885
    %v5002 = vpack.c.b16 %v4888, %v4886
    %v5003 = vpack.c.b16 %v4891, %v4889
    %v5004 = vpack.c.b16 %v4892, %v4890
    %v5005 = vpack.c.b16 %v4895, %v4893
    %v5006 = vpack.c.b16 %v4896, %v4894
    %v5007 = vpack.c.b16 %v4899, %v4897
    %v5008 = vpack.c.b16 %v4900, %v4898
    %v5009 = vpack.c.b16 %v4903, %v4901
    %v5010 = vpack.c.b16 %v4904, %v4902
    %v5011 = vpack.c.b16 %v4907, %v4905
    %v5012 = vpack.c.b16 %v4908, %v4906
    %v5013 = vpack.c.b16 %v4911, %v4909
    %v5014 = vpack.c.b16 %v4912, %v4910
    %v5015 = vpack.c.b16 %v4915, %v4913
    %v5016 = vpack.c.b16 %v4916, %v4914
    %v5017 = vpack.c.b16 %v4919, %v4917
    %v5018 = vpack.c.b16 %v4920, %v4918
    %v5019 = vpack.c.b16 %v4923, %v4921
    %v5020 = vpack.c.b16 %v4924, %v4922
    %v5021 = vpack.c.b16 %v4927, %v4925
    %v5022 = vpack.c.b16 %v4928, %v4926
    %v5023 = vpack.c.b16 %v4931, %v4929
    %v5024 = vpack.c.b16 %v4932, %v4930
    %v5025 = vpack.c.b16 %v4935, %v4933
    %v5026 = vpack.c.b16 %v4936, %v4934
    %v5027 = vpack.c.b16 %v4939, %v4937
    %v5028 = vpack.c.b16 %v4940, %v4938
    %v5029 = vpack.c.b16 %v4943, %v4941
    %v5030 = vpack.c.b16 %v4944, %v4942
    %v5031 = vpack.c.b16 %v4947, %v4945
    %v5032 = vpack.c.b16 %v4948, %v4946
    %v5033 = vpack.c.b16 %v4951, %v4949
    %v5034 = vpack.c.b16 %v4952, %v4950
    %v5035 = vpack.c.b16 %v4955, %v4953
    %v5036 = vpack.c.b16 %v4956, %v4954
    %v5037 = vpack.c.b16 %v4959, %v4957
    %v5038 = vpack.c.b16 %v4960, %v4958
    %v5039 = vpack.c.b16 %v4963, %v4961
    %v5040 = vpack.c.b16 %v4964, %v4962
    %v5041 = vpack.c.b16 %v4967, %v4965
    %v5042 = vpack.c.b16 %v4968, %v4966
    %v5043 = vpack.c.b16 %v4971, %v4969
    %v5044 = vpack.c.b16 %v4972, %v4970
    %v5045 = vpack.c.b16 %v4975, %v4973
    %v5046 = vpack.c.b16 %v4976, %v4974
    %v5047 = vpack.c.b16 %v4979, %v4977
    %v5048 = vpack.c.b16 %v4980, %v4978
    %v5049 = vpack.c.b16 %v4983, %v4981
    %v5050 = vpack.c.b16 %v4984, %v4982
    %v5051 = vpack.c.b16 %v4987, %v4985
    %v5052 = vpack.c.b16 %v4988, %v4986
    %5117 = vmatprep.subr.bf16.mxu0 %v4990
    %5118 = vmatpush1.bf16.msra.mxu0 %v4989
    %5119 = vmatprep.subr.bf16.mxu0 %v4992
    %5120 = vmatpush1.bf16.msra.mxu0 %v4991
    %5121 = vmatprep.subr.bf16.mxu0 %v4994
    %5122 = vmatpush1.bf16.msra.mxu0 %v4993
    %5123 = vmatprep.subr.bf16.mxu0 %v4996
    %5124 = vmatpush1.bf16.msra.mxu0 %v4995
    %5125 = vmatprep.subr.bf16.mxu0 %v4998
    %5126 = vmatpush1.bf16.msra.mxu0 %v4997
    %5127 = vmatprep.subr.bf16.mxu0 %v5000
    %5128 = vmatpush1.bf16.msra.mxu0 %v4999
    %5129 = vmatprep.subr.bf16.mxu0 %v5002
    %5130 = vmatpush1.bf16.msra.mxu0 %v5001
    %5131 = vmatprep.subr.bf16.mxu0 %v5004
    %5132 = vmatpush1.bf16.msra.mxu0 %v5003
    %5133 = vmatprep.subr.bf16.mxu0 %v5006
    %5134 = vmatpush1.bf16.msra.mxu0 %v5005
    %5135 = vmatprep.subr.bf16.mxu0 %v5008
    %5136 = vmatpush1.bf16.msra.mxu0 %v5007
    %5137 = vmatprep.subr.bf16.mxu0 %v5010
    %5138 = vmatpush1.bf16.msra.mxu0 %v5009
    %5139 = vmatprep.subr.bf16.mxu0 %v5012
    %5140 = vmatpush1.bf16.msra.mxu0 %v5011
    %5141 = vmatprep.subr.bf16.mxu0 %v5014
    %5142 = vmatpush1.bf16.msra.mxu0 %v5013
    %5143 = vmatprep.subr.bf16.mxu0 %v5016
    %5144 = vmatpush1.bf16.msra.mxu0 %v5015
    %5145 = vmatprep.subr.bf16.mxu0 %v5018
    %5146 = vmatpush1.bf16.msra.mxu0 %v5017
    %5147 = vmatprep.subr.bf16.mxu0 %v5020
    %5148 = vmatpush1.bf16.msra.mxu0 %v5019
    %5149 = vmatprep.mubr.bf16.mxu0 %v4701
    %5150 = vmatmul.mubr.bf16.gmra.mrb[0].mxu0 %v4700
    %v5151 = vpop.f32.mrb[0].mxu0
    %v5152 = vadd.f32 0.0, %v5151
    %v5153 = vpop.f32.mrb[0].mxu0
    %v5154 = vadd.f32 0.0, %v5153
    %v5155 = vpop.f32.mrb[0].mxu0
    %v5156 = vadd.f32 0.0, %v5155
    %v5157 = vpop.f32.mrb[0].mxu0
    %v5158 = vadd.f32 0.0, %v5157
    %5159 = vmatprep.mubr.bf16.mxu0 %v4705
    %5160 = vmatmul.mubr.bf16.gmra.mrb[0].mxu0 %v4704
    %v5161 = vpop.f32.mrb[0].mxu0
    %v5162 = vadd.f32 0.0, %v5161
    %v5163 = vpop.f32.mrb[0].mxu0
    %v5164 = vadd.f32 0.0, %v5163
    %v5165 = vpop.f32.mrb[0].mxu0
    %v5166 = vadd.f32 0.0, %v5165
    %v5167 = vpop.f32.mrb[0].mxu0
    %v5168 = vadd.f32 0.0, %v5167
    %5169 = vmatprep.mubr.bf16.mxu0 %v4709
    %5170 = vmatmul.mubr.bf16.gmra.mrb[0].mxu0 %v4708
    %v5171 = vpop.f32.mrb[0].mxu0
    %v5172 = vadd.f32 0.0, %v5171
    %v5173 = vpop.f32.mrb[0].mxu0
    %v5174 = vadd.f32 0.0, %v5173
    %v5175 = vpop.f32.mrb[0].mxu0
    %v5176 = vadd.f32 0.0, %v5175
    %v5177 = vpop.f32.mrb[0].mxu0
    %v5178 = vadd.f32 0.0, %v5177
    %5179 = vmatprep.mubr.bf16.mxu0 %v4713
    %5180 = vmatmul.mubr.bf16.gmra.mrb[0].mxu0 %v4712
    %v5181 = vpop.f32.mrb[0].mxu0
    %v5182 = vadd.f32 0.0, %v5181
    %v5183 = vpop.f32.mrb[0].mxu0
    %v5184 = vadd.f32 0.0, %v5183
    %v5185 = vpop.f32.mrb[0].mxu0
    %v5186 = vadd.f32 0.0, %v5185
    %v5187 = vpop.f32.mrb[0].mxu0
    %v5188 = vadd.f32 0.0, %v5187
    %5189 = vmatprep.mubr.bf16.mxu0 %v4717
    %5190 = vmatmul.mubr.bf16.gmra.mrb[0].mxu0 %v4716
    %v5191 = vpop.f32.mrb[0].mxu0
    %v5192 = vadd.f32 0.0, %v5191
    %v5193 = vpop.f32.mrb[0].mxu0
    %v5194 = vadd.f32 0.0, %v5193
    %v5195 = vpop.f32.mrb[0].mxu0
    %v5196 = vadd.f32 0.0, %v5195
    %v5197 = vpop.f32.mrb[0].mxu0
    %v5198 = vadd.f32 0.0, %v5197
    %5199 = vmatprep.mubr.bf16.mxu0 %v4721
    %5200 = vmatmul.mubr.bf16.gmra.mrb[0].mxu0 %v4720
    %v5201 = vpop.f32.mrb[0].mxu0
    %v5202 = vadd.f32 0.0, %v5201
    %v5203 = vpop.f32.mrb[0].mxu0
    %v5204 = vadd.f32 0.0, %v5203
    %v5205 = vpop.f32.mrb[0].mxu0
    %v5206 = vadd.f32 0.0, %v5205
    %v5207 = vpop.f32.mrb[0].mxu0
    %v5208 = vadd.f32 0.0, %v5207
    %5209 = vmatprep.mubr.bf16.mxu0 %v4725
    %5210 = vmatmul.mubr.bf16.gmra.mrb[0].mxu0 %v4724
    %v5211 = vpop.f32.mrb[0].mxu0
    %v5212 = vadd.f32 0.0, %v5211
    %v5213 = vpop.f32.mrb[0].mxu0
    %v5214 = vadd.f32 0.0, %v5213
    %v5215 = vpop.f32.mrb[0].mxu0
    %v5216 = vadd.f32 0.0, %v5215
    %v5217 = vpop.f32.mrb[0].mxu0
    %v5218 = vadd.f32 0.0, %v5217
    %5219 = vmatprep.mubr.bf16.mxu0 %v4729
    %5220 = vmatmul.mubr.bf16.gmra.mrb[0].mxu0 %v4728
    %v5221 = vpop.f32.mrb[0].mxu0
    %v5222 = vadd.f32 0.0, %v5221
    %v5223 = vpop.f32.mrb[0].mxu0
    %v5224 = vadd.f32 0.0, %v5223
    %v5225 = vpop.f32.mrb[0].mxu0
    %v5226 = vadd.f32 0.0, %v5225
    %v5227 = vpop.f32.mrb[0].mxu0
    %v5228 = vadd.f32 0.0, %v5227
    %5229 = vdwg.mxu0
    %5230 = vmatprep.subr.bf16.mxu0 %v5022
    %5231 = vmatpush1.bf16.msra.mxu0 %v5021
    %5232 = vmatprep.subr.bf16.mxu0 %v5024
    %5233 = vmatpush1.bf16.msra.mxu0 %v5023
    %5234 = vmatprep.subr.bf16.mxu0 %v5026
    %5235 = vmatpush1.bf16.msra.mxu0 %v5025
    %5236 = vmatprep.subr.bf16.mxu0 %v5028
    %5237 = vmatpush1.bf16.msra.mxu0 %v5027
    %5238 = vmatprep.subr.bf16.mxu0 %v5030
    %5239 = vmatpush1.bf16.msra.mxu0 %v5029
    %5240 = vmatprep.subr.bf16.mxu0 %v5032
    %5241 = vmatpush1.bf16.msra.mxu0 %v5031
    %5242 = vmatprep.subr.bf16.mxu0 %v5034
    %5243 = vmatpush1.bf16.msra.mxu0 %v5033
    %5244 = vmatprep.subr.bf16.mxu0 %v5036
    %5245 = vmatpush1.bf16.msra.mxu0 %v5035
    %5246 = vmatprep.subr.bf16.mxu0 %v5038
    %5247 = vmatpush1.bf16.msra.mxu0 %v5037
    %5248 = vmatprep.subr.bf16.mxu0 %v5040
    %5249 = vmatpush1.bf16.msra.mxu0 %v5039
    %5250 = vmatprep.subr.bf16.mxu0 %v5042
    %5251 = vmatpush1.bf16.msra.mxu0 %v5041
    %5252 = vmatprep.subr.bf16.mxu0 %v5044
    %5253 = vmatpush1.bf16.msra.mxu0 %v5043
    %5254 = vmatprep.subr.bf16.mxu0 %v5046
    %5255 = vmatpush1.bf16.msra.mxu0 %v5045
    %5256 = vmatprep.subr.bf16.mxu0 %v5048
    %5257 = vmatpush1.bf16.msra.mxu0 %v5047
    %5258 = vmatprep.subr.bf16.mxu0 %v5050
    %5259 = vmatpush1.bf16.msra.mxu0 %v5049
    %5260 = vmatprep.subr.bf16.mxu0 %v5052
    %5261 = vmatpush1.bf16.msra.mxu0 %v5051
    %5262 = vmatprep.mubr.bf16.mxu0 %v4703
    %5263 = vmatmul.mubr.bf16.gmra.mrb[0].mxu0 %v4702
    %v5264 = vpop.f32.mrb[0].mxu0
    %v5265 = vadd.f32 %v5152, %v5264
    %v5266 = vpop.f32.mrb[0].mxu0
    %v5267 = vadd.f32 %v5154, %v5266
    %v5268 = vpop.f32.mrb[0].mxu0
    %v5269 = vadd.f32 %v5156, %v5268
    %v5270 = vpop.f32.mrb[0].mxu0
    %v5271 = vadd.f32 %v5158, %v5270
    %5272 = vmatprep.mubr.bf16.mxu0 %v4707
    %5273 = vmatmul.mubr.bf16.gmra.mrb[0].mxu0 %v4706
    %v5274 = vpop.f32.mrb[0].mxu0
    %v5275 = vadd.f32 %v5162, %v5274
    %v5276 = vpop.f32.mrb[0].mxu0
    %v5277 = vadd.f32 %v5164, %v5276
    %v5278 = vpop.f32.mrb[0].mxu0
    %v5279 = vadd.f32 %v5166, %v5278
    %v5280 = vpop.f32.mrb[0].mxu0
    %v5281 = vadd.f32 %v5168, %v5280
    %5282 = vmatprep.mubr.bf16.mxu0 %v4711
    %5283 = vmatmul.mubr.bf16.gmra.mrb[0].mxu0 %v4710
    %v5284 = vpop.f32.mrb[0].mxu0
    %v5285 = vadd.f32 %v5172, %v5284
    %v5286 = vpop.f32.mrb[0].mxu0
    %v5287 = vadd.f32 %v5174, %v5286
    %v5288 = vpop.f32.mrb[0].mxu0
    %v5289 = vadd.f32 %v5176, %v5288
    %v5290 = vpop.f32.mrb[0].mxu0
    %v5291 = vadd.f32 %v5178, %v5290
    %5292 = vmatprep.mubr.bf16.mxu0 %v4715
    %5293 = vmatmul.mubr.bf16.gmra.mrb[0].mxu0 %v4714
    %v5294 = vpop.f32.mrb[0].mxu0
    %v5295 = vadd.f32 %v5182, %v5294
    %v5296 = vpop.f32.mrb[0].mxu0
    %v5297 = vadd.f32 %v5184, %v5296
    %v5298 = vpop.f32.mrb[0].mxu0
    %v5299 = vadd.f32 %v5186, %v5298
    %v5300 = vpop.f32.mrb[0].mxu0
    %v5301 = vadd.f32 %v5188, %v5300
    %5302 = vmatprep.mubr.bf16.mxu0 %v4719
    %5303 = vmatmul.mubr.bf16.gmra.mrb[0].mxu0 %v4718
    %v5304 = vpop.f32.mrb[0].mxu0
    %v5305 = vadd.f32 %v5192, %v5304
    %v5306 = vpop.f32.mrb[0].mxu0
    %v5307 = vadd.f32 %v5194, %v5306
    %v5308 = vpop.f32.mrb[0].mxu0
    %v5309 = vadd.f32 %v5196, %v5308
    %v5310 = vpop.f32.mrb[0].mxu0
    %v5311 = vadd.f32 %v5198, %v5310
    %5312 = vmatprep.mubr.bf16.mxu0 %v4723
    %5313 = vmatmul.mubr.bf16.gmra.mrb[0].mxu0 %v4722
    %v5314 = vpop.f32.mrb[0].mxu0
    %v5315 = vadd.f32 %v5202, %v5314
    %v5316 = vpop.f32.mrb[0].mxu0
    %v5317 = vadd.f32 %v5204, %v5316
    %v5318 = vpop.f32.mrb[0].mxu0
    %v5319 = vadd.f32 %v5206, %v5318
    %v5320 = vpop.f32.mrb[0].mxu0
    %v5321 = vadd.f32 %v5208, %v5320
    %5322 = vmatprep.mubr.bf16.mxu0 %v4727
    %5323 = vmatmul.mubr.bf16.gmra.mrb[0].mxu0 %v4726
    %v5324 = vpop.f32.mrb[0].mxu0
    %v5325 = vadd.f32 %v5212, %v5324
    %v5326 = vpop.f32.mrb[0].mxu0
    %v5327 = vadd.f32 %v5214, %v5326
    %v5328 = vpop.f32.mrb[0].mxu0
    %v5329 = vadd.f32 %v5216, %v5328
    %v5330 = vpop.f32.mrb[0].mxu0
    %v5331 = vadd.f32 %v5218, %v5330
    %5332 = vmatprep.mubr.bf16.mxu0 %v4731
    %5333 = vmatmul.mubr.bf16.gmra.mrb[0].mxu0 %v4730
    %v5334 = vpop.f32.mrb[0].mxu0
    %v5335 = vadd.f32 %v5222, %v5334
    %v5336 = vpop.f32.mrb[0].mxu0
    %v5337 = vadd.f32 %v5224, %v5336
    %v5338 = vpop.f32.mrb[0].mxu0
    %v5339 = vadd.f32 %v5226, %v5338
    %v5340 = vpop.f32.mrb[0].mxu0
    %v5341 = vadd.f32 %v5228, %v5340
    %5342 = vdwg.mxu0
    %v5343 = vadd.f32 %v4571, %v5265
    %v5344 = vadd.f32 %v4572, %v5267
    %v5345 = vadd.f32 %v4573, %v5269
    %v5346 = vadd.f32 %v4574, %v5271
    %v5347 = vadd.f32 %v4575, %v5275
    %v5348 = vadd.f32 %v4576, %v5277
    %v5349 = vadd.f32 %v4577, %v5279
    %v5350 = vadd.f32 %v4578, %v5281
    %v5351 = vadd.f32 %v4579, %v5285
    %v5352 = vadd.f32 %v4580, %v5287
    %v5353 = vadd.f32 %v4581, %v5289
    %v5354 = vadd.f32 %v4582, %v5291
    %v5355 = vadd.f32 %v4583, %v5295
    %v5356 = vadd.f32 %v4584, %v5297
    %v5357 = vadd.f32 %v4585, %v5299
    %v5358 = vadd.f32 %v4586, %v5301
    %v5359 = vadd.f32 %v4587, %v5305
    %v5360 = vadd.f32 %v4588, %v5307
    %v5361 = vadd.f32 %v4589, %v5309
    %v5362 = vadd.f32 %v4590, %v5311
    %v5363 = vadd.f32 %v4591, %v5315
    %v5364 = vadd.f32 %v4592, %v5317
    %v5365 = vadd.f32 %v4593, %v5319
    %v5366 = vadd.f32 %v4594, %v5321
    %v5367 = vadd.f32 %v4595, %v5325
    %v5368 = vadd.f32 %v4596, %v5327
    %v5369 = vadd.f32 %v4597, %v5329
    %v5370 = vadd.f32 %v4598, %v5331
    %v5371 = vadd.f32 %v4599, %v5335
    %v5372 = vadd.f32 %v4600, %v5337
    %v5373 = vadd.f32 %v4601, %v5339
    %v5374 = vadd.f32 %v4602, %v5341
    %s5375 = scalar_lea.vmem %s0, 592
    %v5376 = vld [vmem:[%s5375] sm:$0xff]
    %v5377 = vld [vmem:[%s5375 + $0x8] sm:$0xff]
    %v5378 = vld [vmem:[%s5375 + $0x10] sm:$0xff]
    %v5379 = vld [vmem:[%s5375 + $0x18] sm:$0xff]
    %v5380 = vld [vmem:[%s5375 + $0x20] sm:$0xff]
    %v5381 = vld [vmem:[%s5375 + $0x28] sm:$0xff]
    %v5382 = vld [vmem:[%s5375 + $0x30] sm:$0xff]
    %v5383 = vld [vmem:[%s5375 + $0x38] sm:$0xff]
    %v5384 = vld [vmem:[%s5375 + $0x40] sm:$0xff]
    %v5385 = vld [vmem:[%s5375 + $0x48] sm:$0xff]
    %v5386 = vld [vmem:[%s5375 + $0x50] sm:$0xff]
    %v5387 = vld [vmem:[%s5375 + $0x58] sm:$0xff]
    %v5388 = vld [vmem:[%s5375 + $0x60] sm:$0xff]
    %v5389 = vld [vmem:[%s5375 + $0x68] sm:$0xff]
    %v5390 = vld [vmem:[%s5375 + $0x70] sm:$0xff]
    %v5391 = vld [vmem:[%s5375 + $0x78] sm:$0xff]
    %v5392 = vld [vmem:[%s5375 + $0x90] sm:$0xff]
    %v5393 = vld [vmem:[%s5375 + $0x98] sm:$0xff]
    %v5394 = vld [vmem:[%s5375 + $0xa0] sm:$0xff]
    %v5395 = vld [vmem:[%s5375 + $0xa8] sm:$0xff]
    %v5396 = vld [vmem:[%s5375 + $0xb0] sm:$0xff]
    %v5397 = vld [vmem:[%s5375 + $0xb8] sm:$0xff]
    %v5398 = vld [vmem:[%s5375 + $0xc0] sm:$0xff]
    %v5399 = vld [vmem:[%s5375 + $0xc8] sm:$0xff]
    %v5400 = vld [vmem:[%s5375 + $0xd0] sm:$0xff]
    %v5401 = vld [vmem:[%s5375 + $0xd8] sm:$0xff]
    %v5402 = vld [vmem:[%s5375 + $0xe0] sm:$0xff]
    %v5403 = vld [vmem:[%s5375 + $0xe8] sm:$0xff]
    %v5404 = vld [vmem:[%s5375 + $0xf0] sm:$0xff]
    %v5405 = vld [vmem:[%s5375 + $0xf8] sm:$0xff]
    %v5406 = vld [vmem:[%s5375 + $0x100] sm:$0xff]
    %v5407 = vld [vmem:[%s5375 + $0x108] sm:$0xff]
    %v5408 = vunpack.c.l.bf16 %v5376
    %v5409 = vunpack.c.h.bf16 %v5376
    %v5410 = vunpack.c.l.bf16 %v5377
    %v5411 = vunpack.c.h.bf16 %v5377
    %v5412 = vunpack.c.l.bf16 %v5378
    %v5413 = vunpack.c.h.bf16 %v5378
    %v5414 = vunpack.c.l.bf16 %v5379
    %v5415 = vunpack.c.h.bf16 %v5379
    %v5416 = vunpack.c.l.bf16 %v5380
    %v5417 = vunpack.c.h.bf16 %v5380
    %v5418 = vunpack.c.l.bf16 %v5381
    %v5419 = vunpack.c.h.bf16 %v5381
    %v5420 = vunpack.c.l.bf16 %v5382
    %v5421 = vunpack.c.h.bf16 %v5382
    %v5422 = vunpack.c.l.bf16 %v5383
    %v5423 = vunpack.c.h.bf16 %v5383
    %v5424 = vunpack.c.l.bf16 %v5384
    %v5425 = vunpack.c.h.bf16 %v5384
    %v5426 = vunpack.c.l.bf16 %v5385
    %v5427 = vunpack.c.h.bf16 %v5385
    %v5428 = vunpack.c.l.bf16 %v5386
    %v5429 = vunpack.c.h.bf16 %v5386
    %v5430 = vunpack.c.l.bf16 %v5387
    %v5431 = vunpack.c.h.bf16 %v5387
    %v5432 = vunpack.c.l.bf16 %v5388
    %v5433 = vunpack.c.h.bf16 %v5388
    %v5434 = vunpack.c.l.bf16 %v5389
    %v5435 = vunpack.c.h.bf16 %v5389
    %v5436 = vunpack.c.l.bf16 %v5390
    %v5437 = vunpack.c.h.bf16 %v5390
    %v5438 = vunpack.c.l.bf16 %v5391
    %v5439 = vunpack.c.h.bf16 %v5391
    %v5440 = vunpack.c.l.bf16 %v5392
    %v5441 = vunpack.c.h.bf16 %v5392
    %v5442 = vunpack.c.l.bf16 %v5393
    %v5443 = vunpack.c.h.bf16 %v5393
    %v5444 = vunpack.c.l.bf16 %v5394
    %v5445 = vunpack.c.h.bf16 %v5394
    %v5446 = vunpack.c.l.bf16 %v5395
    %v5447 = vunpack.c.h.bf16 %v5395
    %v5448 = vunpack.c.l.bf16 %v5396
    %v5449 = vunpack.c.h.bf16 %v5396
    %v5450 = vunpack.c.l.bf16 %v5397
    %v5451 = vunpack.c.h.bf16 %v5397
    %v5452 = vunpack.c.l.bf16 %v5398
    %v5453 = vunpack.c.h.bf16 %v5398
    %v5454 = vunpack.c.l.bf16 %v5399
    %v5455 = vunpack.c.h.bf16 %v5399
    %v5456 = vunpack.c.l.bf16 %v5400
    %v5457 = vunpack.c.h.bf16 %v5400
    %v5458 = vunpack.c.l.bf16 %v5401
    %v5459 = vunpack.c.h.bf16 %v5401
    %v5460 = vunpack.c.l.bf16 %v5402
    %v5461 = vunpack.c.h.bf16 %v5402
    %v5462 = vunpack.c.l.bf16 %v5403
    %v5463 = vunpack.c.h.bf16 %v5403
    %v5464 = vunpack.c.l.bf16 %v5404
    %v5465 = vunpack.c.h.bf16 %v5404
    %v5466 = vunpack.c.l.bf16 %v5405
    %v5467 = vunpack.c.h.bf16 %v5405
    %v5468 = vunpack.c.l.bf16 %v5406
    %v5469 = vunpack.c.h.bf16 %v5406
    %v5470 = vunpack.c.l.bf16 %v5407
    %v5471 = vunpack.c.h.bf16 %v5407
    %v5472 = vpack.c.bf16 %v5412, %v5408
    %v5473 = vpack.c.bf16 %v5413, %v5409
    %v5474 = vpack.c.bf16 %v5414, %v5410
    %v5475 = vpack.c.bf16 %v5415, %v5411
    %v5476 = vpack.c.bf16 %v5420, %v5416
    %v5477 = vpack.c.bf16 %v5421, %v5417
    %v5478 = vpack.c.bf16 %v5422, %v5418
    %v5479 = vpack.c.bf16 %v5423, %v5419
    %v5480 = vpack.c.bf16 %v5428, %v5424
    %v5481 = vpack.c.bf16 %v5429, %v5425
    %v5482 = vpack.c.bf16 %v5430, %v5426
    %v5483 = vpack.c.bf16 %v5431, %v5427
    %v5484 = vpack.c.bf16 %v5436, %v5432
    %v5485 = vpack.c.bf16 %v5437, %v5433
    %v5486 = vpack.c.bf16 %v5438, %v5434
    %v5487 = vpack.c.bf16 %v5439, %v5435
    %v5488 = vpack.c.bf16 %v5444, %v5440
    %v5489 = vpack.c.bf16 %v5445, %v5441
    %v5490 = vpack.c.bf16 %v5446, %v5442
    %v5491 = vpack.c.bf16 %v5447, %v5443
    %v5492 = vpack.c.bf16 %v5452, %v5448
    %v5493 = vpack.c.bf16 %v5453, %v5449
    %v5494 = vpack.c.bf16 %v5454, %v5450
    %v5495 = vpack.c.bf16 %v5455, %v5451
    %v5496 = vpack.c.bf16 %v5460, %v5456
    %v5497 = vpack.c.bf16 %v5461, %v5457
    %v5498 = vpack.c.bf16 %v5462, %v5458
    %v5499 = vpack.c.bf16 %v5463, %v5459
    %v5500 = vpack.c.bf16 %v5468, %v5464
    %v5501 = vpack.c.bf16 %v5469, %v5465
    %v5502 = vpack.c.bf16 %v5470, %v5466
    %v5503 = vpack.c.bf16 %v5471, %v5467
    %s5504 = scalar_lea.vmem %s1, 3584
    %v5505 = vld [vmem:[%s5504] sm:$0xff]
    %v5506 = vld [vmem:[%s5504 + $0x8] sm:$0xff]
    %v5507 = vld [vmem:[%s5504 + $0x10] sm:$0xff]
    %v5508 = vld [vmem:[%s5504 + $0x18] sm:$0xff]
    %v5509 = vld [vmem:[%s5504 + $0x20] sm:$0xff]
    %v5510 = vld [vmem:[%s5504 + $0x28] sm:$0xff]
    %v5511 = vld [vmem:[%s5504 + $0x30] sm:$0xff]
    %v5512 = vld [vmem:[%s5504 + $0x38] sm:$0xff]
    %v5513 = vld [vmem:[%s5504 + $0x40] sm:$0xff]
    %v5514 = vld [vmem:[%s5504 + $0x48] sm:$0xff]
    %v5515 = vld [vmem:[%s5504 + $0x50] sm:$0xff]
    %v5516 = vld [vmem:[%s5504 + $0x58] sm:$0xff]
    %v5517 = vld [vmem:[%s5504 + $0x60] sm:$0xff]
    %v5518 = vld [vmem:[%s5504 + $0x68] sm:$0xff]
    %v5519 = vld [vmem:[%s5504 + $0x70] sm:$0xff]
    %v5520 = vld [vmem:[%s5504 + $0x78] sm:$0xff]
    %v5521 = vld [vmem:[%s5504 + $0x80] sm:$0xff]
    %v5522 = vld [vmem:[%s5504 + $0x88] sm:$0xff]
    %v5523 = vld [vmem:[%s5504 + $0x90] sm:$0xff]
    %v5524 = vld [vmem:[%s5504 + $0x98] sm:$0xff]
    %v5525 = vld [vmem:[%s5504 + $0xa0] sm:$0xff]
    %v5526 = vld [vmem:[%s5504 + $0xa8] sm:$0xff]
    %v5527 = vld [vmem:[%s5504 + $0xb0] sm:$0xff]
    %v5528 = vld [vmem:[%s5504 + $0xb8] sm:$0xff]
    %v5529 = vld [vmem:[%s5504 + $0xc0] sm:$0xff]
    %v5530 = vld [vmem:[%s5504 + $0xc8] sm:$0xff]
    %v5531 = vld [vmem:[%s5504 + $0xd0] sm:$0xff]
    %v5532 = vld [vmem:[%s5504 + $0xd8] sm:$0xff]
    %v5533 = vld [vmem:[%s5504 + $0xe0] sm:$0xff]
    %v5534 = vld [vmem:[%s5504 + $0xe8] sm:$0xff]
    %v5535 = vld [vmem:[%s5504 + $0xf0] sm:$0xff]
    %v5536 = vld [vmem:[%s5504 + $0xf8] sm:$0xff]
    %v5537 = vld [vmem:[%s5504 + $0x100] sm:$0xff]
    %v5538 = vld [vmem:[%s5504 + $0x108] sm:$0xff]
    %v5539 = vld [vmem:[%s5504 + $0x110] sm:$0xff]
    %v5540 = vld [vmem:[%s5504 + $0x118] sm:$0xff]
    %v5541 = vld [vmem:[%s5504 + $0x120] sm:$0xff]
    %v5542 = vld [vmem:[%s5504 + $0x128] sm:$0xff]
    %v5543 = vld [vmem:[%s5504 + $0x130] sm:$0xff]
    %v5544 = vld [vmem:[%s5504 + $0x138] sm:$0xff]
    %v5545 = vld [vmem:[%s5504 + $0x140] sm:$0xff]
    %v5546 = vld [vmem:[%s5504 + $0x148] sm:$0xff]
    %v5547 = vld [vmem:[%s5504 + $0x150] sm:$0xff]
    %v5548 = vld [vmem:[%s5504 + $0x158] sm:$0xff]
    %v5549 = vld [vmem:[%s5504 + $0x160] sm:$0xff]
    %v5550 = vld [vmem:[%s5504 + $0x168] sm:$0xff]
    %v5551 = vld [vmem:[%s5504 + $0x170] sm:$0xff]
    %v5552 = vld [vmem:[%s5504 + $0x178] sm:$0xff]
    %v5553 = vld [vmem:[%s5504 + $0x180] sm:$0xff]
    %v5554 = vld [vmem:[%s5504 + $0x188] sm:$0xff]
    %v5555 = vld [vmem:[%s5504 + $0x190] sm:$0xff]
    %v5556 = vld [vmem:[%s5504 + $0x198] sm:$0xff]
    %v5557 = vld [vmem:[%s5504 + $0x1a0] sm:$0xff]
    %v5558 = vld [vmem:[%s5504 + $0x1a8] sm:$0xff]
    %v5559 = vld [vmem:[%s5504 + $0x1b0] sm:$0xff]
    %v5560 = vld [vmem:[%s5504 + $0x1b8] sm:$0xff]
    %v5561 = vld [vmem:[%s5504 + $0x1c0] sm:$0xff]
    %v5562 = vld [vmem:[%s5504 + $0x1c8] sm:$0xff]
    %v5563 = vld [vmem:[%s5504 + $0x1d0] sm:$0xff]
    %v5564 = vld [vmem:[%s5504 + $0x1d8] sm:$0xff]
    %v5565 = vld [vmem:[%s5504 + $0x1e0] sm:$0xff]
    %v5566 = vld [vmem:[%s5504 + $0x1e8] sm:$0xff]
    %v5567 = vld [vmem:[%s5504 + $0x1f0] sm:$0xff]
    %v5568 = vld [vmem:[%s5504 + $0x1f8] sm:$0xff]
    %v5633 = vunpack.c.l.b16 %v5505
    %v5634 = vunpack.c.h.b16 %v5505
    %v5635 = vunpack.c.l.b16 %v5506
    %v5636 = vunpack.c.h.b16 %v5506
    %v5637 = vunpack.c.l.b16 %v5507
    %v5638 = vunpack.c.h.b16 %v5507
    %v5639 = vunpack.c.l.b16 %v5508
    %v5640 = vunpack.c.h.b16 %v5508
    %v5641 = vunpack.c.l.b16 %v5509
    %v5642 = vunpack.c.h.b16 %v5509
    %v5643 = vunpack.c.l.b16 %v5510
    %v5644 = vunpack.c.h.b16 %v5510
    %v5645 = vunpack.c.l.b16 %v5511
    %v5646 = vunpack.c.h.b16 %v5511
    %v5647 = vunpack.c.l.b16 %v5512
    %v5648 = vunpack.c.h.b16 %v5512
    %v5649 = vunpack.c.l.b16 %v5513
    %v5650 = vunpack.c.h.b16 %v5513
    %v5651 = vunpack.c.l.b16 %v5514
    %v5652 = vunpack.c.h.b16 %v5514
    %v5653 = vunpack.c.l.b16 %v5515
    %v5654 = vunpack.c.h.b16 %v5515
    %v5655 = vunpack.c.l.b16 %v5516
    %v5656 = vunpack.c.h.b16 %v5516
    %v5657 = vunpack.c.l.b16 %v5517
    %v5658 = vunpack.c.h.b16 %v5517
    %v5659 = vunpack.c.l.b16 %v5518
    %v5660 = vunpack.c.h.b16 %v5518
    %v5661 = vunpack.c.l.b16 %v5519
    %v5662 = vunpack.c.h.b16 %v5519
    %v5663 = vunpack.c.l.b16 %v5520
    %v5664 = vunpack.c.h.b16 %v5520
    %v5665 = vunpack.c.l.b16 %v5521
    %v5666 = vunpack.c.h.b16 %v5521
    %v5667 = vunpack.c.l.b16 %v5522
    %v5668 = vunpack.c.h.b16 %v5522
    %v5669 = vunpack.c.l.b16 %v5523
    %v5670 = vunpack.c.h.b16 %v5523
    %v5671 = vunpack.c.l.b16 %v5524
    %v5672 = vunpack.c.h.b16 %v5524
    %v5673 = vunpack.c.l.b16 %v5525
    %v5674 = vunpack.c.h.b16 %v5525
    %v5675 = vunpack.c.l.b16 %v5526
    %v5676 = vunpack.c.h.b16 %v5526
    %v5677 = vunpack.c.l.b16 %v5527
    %v5678 = vunpack.c.h.b16 %v5527
    %v5679 = vunpack.c.l.b16 %v5528
    %v5680 = vunpack.c.h.b16 %v5528
    %v5681 = vunpack.c.l.b16 %v5529
    %v5682 = vunpack.c.h.b16 %v5529
    %v5683 = vunpack.c.l.b16 %v5530
    %v5684 = vunpack.c.h.b16 %v5530
    %v5685 = vunpack.c.l.b16 %v5531
    %v5686 = vunpack.c.h.b16 %v5531
    %v5687 = vunpack.c.l.b16 %v5532
    %v5688 = vunpack.c.h.b16 %v5532
    %v5689 = vunpack.c.l.b16 %v5533
    %v5690 = vunpack.c.h.b16 %v5533
    %v5691 = vunpack.c.l.b16 %v5534
    %v5692 = vunpack.c.h.b16 %v5534
    %v5693 = vunpack.c.l.b16 %v5535
    %v5694 = vunpack.c.h.b16 %v5535
    %v5695 = vunpack.c.l.b16 %v5536
    %v5696 = vunpack.c.h.b16 %v5536
    %v5697 = vunpack.c.l.b16 %v5537
    %v5698 = vunpack.c.h.b16 %v5537
    %v5699 = vunpack.c.l.b16 %v5538
    %v5700 = vunpack.c.h.b16 %v5538
    %v5701 = vunpack.c.l.b16 %v5539
    %v5702 = vunpack.c.h.b16 %v5539
    %v5703 = vunpack.c.l.b16 %v5540
    %v5704 = vunpack.c.h.b16 %v5540
    %v5705 = vunpack.c.l.b16 %v5541
    %v5706 = vunpack.c.h.b16 %v5541
    %v5707 = vunpack.c.l.b16 %v5542
    %v5708 = vunpack.c.h.b16 %v5542
    %v5709 = vunpack.c.l.b16 %v5543
    %v5710 = vunpack.c.h.b16 %v5543
    %v5711 = vunpack.c.l.b16 %v5544
    %v5712 = vunpack.c.h.b16 %v5544
    %v5713 = vunpack.c.l.b16 %v5545
    %v5714 = vunpack.c.h.b16 %v5545
    %v5715 = vunpack.c.l.b16 %v5546
    %v5716 = vunpack.c.h.b16 %v5546
    %v5717 = vunpack.c.l.b16 %v5547
    %v5718 = vunpack.c.h.b16 %v5547
    %v5719 = vunpack.c.l.b16 %v5548
    %v5720 = vunpack.c.h.b16 %v5548
    %v5721 = vunpack.c.l.b16 %v5549
    %v5722 = vunpack.c.h.b16 %v5549
    %v5723 = vunpack.c.l.b16 %v5550
    %v5724 = vunpack.c.h.b16 %v5550
    %v5725 = vunpack.c.l.b16 %v5551
    %v5726 = vunpack.c.h.b16 %v5551
    %v5727 = vunpack.c.l.b16 %v5552
    %v5728 = vunpack.c.h.b16 %v5552
    %v5729 = vunpack.c.l.b16 %v5553
    %v5730 = vunpack.c.h.b16 %v5553
    %v5731 = vunpack.c.l.b16 %v5554
    %v5732 = vunpack.c.h.b16 %v5554
    %v5733 = vunpack.c.l.b16 %v5555
    %v5734 = vunpack.c.h.b16 %v5555
    %v5735 = vunpack.c.l.b16 %v5556
    %v5736 = vunpack.c.h.b16 %v5556
    %v5737 = vunpack.c.l.b16 %v5557
    %v5738 = vunpack.c.h.b16 %v5557
    %v5739 = vunpack.c.l.b16 %v5558
    %v5740 = vunpack.c.h.b16 %v5558
    %v5741 = vunpack.c.l.b16 %v5559
    %v5742 = vunpack.c.h.b16 %v5559
    %v5743 = vunpack.c.l.b16 %v5560
    %v5744 = vunpack.c.h.b16 %v5560
    %v5745 = vunpack.c.l.b16 %v5561
    %v5746 = vunpack.c.h.b16 %v5561
    %v5747 = vunpack.c.l.b16 %v5562
    %v5748 = vunpack.c.h.b16 %v5562
    %v5749 = vunpack.c.l.b16 %v5563
    %v5750 = vunpack.c.h.b16 %v5563
    %v5751 = vunpack.c.l.b16 %v5564
    %v5752 = vunpack.c.h.b16 %v5564
    %v5753 = vunpack.c.l.b16 %v5565
    %v5754 = vunpack.c.h.b16 %v5565
    %v5755 = vunpack.c.l.b16 %v5566
    %v5756 = vunpack.c.h.b16 %v5566
    %v5757 = vunpack.c.l.b16 %v5567
    %v5758 = vunpack.c.h.b16 %v5567
    %v5759 = vunpack.c.l.b16 %v5568
    %v5760 = vunpack.c.h.b16 %v5568
    %v5761 = vpack.c.b16 %v5635, %v5633
    %v5762 = vpack.c.b16 %v5636, %v5634
    %v5763 = vpack.c.b16 %v5639, %v5637
    %v5764 = vpack.c.b16 %v5640, %v5638
    %v5765 = vpack.c.b16 %v5643, %v5641
    %v5766 = vpack.c.b16 %v5644, %v5642
    %v5767 = vpack.c.b16 %v5647, %v5645
    %v5768 = vpack.c.b16 %v5648, %v5646
    %v5769 = vpack.c.b16 %v5651, %v5649
    %v5770 = vpack.c.b16 %v5652, %v5650
    %v5771 = vpack.c.b16 %v5655, %v5653
    %v5772 = vpack.c.b16 %v5656, %v5654
    %v5773 = vpack.c.b16 %v5659, %v5657
    %v5774 = vpack.c.b16 %v5660, %v5658
    %v5775 = vpack.c.b16 %v5663, %v5661
    %v5776 = vpack.c.b16 %v5664, %v5662
    %v5777 = vpack.c.b16 %v5667, %v5665
    %v5778 = vpack.c.b16 %v5668, %v5666
    %v5779 = vpack.c.b16 %v5671, %v5669
    %v5780 = vpack.c.b16 %v5672, %v5670
    %v5781 = vpack.c.b16 %v5675, %v5673
    %v5782 = vpack.c.b16 %v5676, %v5674
    %v5783 = vpack.c.b16 %v5679, %v5677
    %v5784 = vpack.c.b16 %v5680, %v5678
    %v5785 = vpack.c.b16 %v5683, %v5681
    %v5786 = vpack.c.b16 %v5684, %v5682
    %v5787 = vpack.c.b16 %v5687, %v5685
    %v5788 = vpack.c.b16 %v5688, %v5686
    %v5789 = vpack.c.b16 %v5691, %v5689
    %v5790 = vpack.c.b16 %v5692, %v5690
    %v5791 = vpack.c.b16 %v5695, %v5693
    %v5792 = vpack.c.b16 %v5696, %v5694
    %v5793 = vpack.c.b16 %v5699, %v5697
    %v5794 = vpack.c.b16 %v5700, %v5698
    %v5795 = vpack.c.b16 %v5703, %v5701
    %v5796 = vpack.c.b16 %v5704, %v5702
    %v5797 = vpack.c.b16 %v5707, %v5705
    %v5798 = vpack.c.b16 %v5708, %v5706
    %v5799 = vpack.c.b16 %v5711, %v5709
    %v5800 = vpack.c.b16 %v5712, %v5710
    %v5801 = vpack.c.b16 %v5715, %v5713
    %v5802 = vpack.c.b16 %v5716, %v5714
    %v5803 = vpack.c.b16 %v5719, %v5717
    %v5804 = vpack.c.b16 %v5720, %v5718
    %v5805 = vpack.c.b16 %v5723, %v5721
    %v5806 = vpack.c.b16 %v5724, %v5722
    %v5807 = vpack.c.b16 %v5727, %v5725
    %v5808 = vpack.c.b16 %v5728, %v5726
    %v5809 = vpack.c.b16 %v5731, %v5729
    %v5810 = vpack.c.b16 %v5732, %v5730
    %v5811 = vpack.c.b16 %v5735, %v5733
    %v5812 = vpack.c.b16 %v5736, %v5734
    %v5813 = vpack.c.b16 %v5739, %v5737
    %v5814 = vpack.c.b16 %v5740, %v5738
    %v5815 = vpack.c.b16 %v5743, %v5741
    %v5816 = vpack.c.b16 %v5744, %v5742
    %v5817 = vpack.c.b16 %v5747, %v5745
    %v5818 = vpack.c.b16 %v5748, %v5746
    %v5819 = vpack.c.b16 %v5751, %v5749
    %v5820 = vpack.c.b16 %v5752, %v5750
    %v5821 = vpack.c.b16 %v5755, %v5753
    %v5822 = vpack.c.b16 %v5756, %v5754
    %v5823 = vpack.c.b16 %v5759, %v5757
    %v5824 = vpack.c.b16 %v5760, %v5758
    %5889 = vmatprep.subr.bf16.mxu0 %v5762
    %5890 = vmatpush1.bf16.msra.mxu0 %v5761
    %5891 = vmatprep.subr.bf16.mxu0 %v5764
    %5892 = vmatpush1.bf16.msra.mxu0 %v5763
    %5893 = vmatprep.subr.bf16.mxu0 %v5766
    %5894 = vmatpush1.bf16.msra.mxu0 %v5765
    %5895 = vmatprep.subr.bf16.mxu0 %v5768
    %5896 = vmatpush1.bf16.msra.mxu0 %v5767
    %5897 = vmatprep.subr.bf16.mxu0 %v5770
    %5898 = vmatpush1.bf16.msra.mxu0 %v5769
    %5899 = vmatprep.subr.bf16.mxu0 %v5772
    %5900 = vmatpush1.bf16.msra.mxu0 %v5771
    %5901 = vmatprep.subr.bf16.mxu0 %v5774
    %5902 = vmatpush1.bf16.msra.mxu0 %v5773
    %5903 = vmatprep.subr.bf16.mxu0 %v5776
    %5904 = vmatpush1.bf16.msra.mxu0 %v5775
    %5905 = vmatprep.subr.bf16.mxu0 %v5778
    %5906 = vmatpush1.bf16.msra.mxu0 %v5777
    %5907 = vmatprep.subr.bf16.mxu0 %v5780
    %5908 = vmatpush1.bf16.msra.mxu0 %v5779
    %5909 = vmatprep.subr.bf16.mxu0 %v5782
    %5910 = vmatpush1.bf16.msra.mxu0 %v5781
    %5911 = vmatprep.subr.bf16.mxu0 %v5784
    %5912 = vmatpush1.bf16.msra.mxu0 %v5783
    %5913 = vmatprep.subr.bf16.mxu0 %v5786
    %5914 = vmatpush1.bf16.msra.mxu0 %v5785
    %5915 = vmatprep.subr.bf16.mxu0 %v5788
    %5916 = vmatpush1.bf16.msra.mxu0 %v5787
    %5917 = vmatprep.subr.bf16.mxu0 %v5790
    %5918 = vmatpush1.bf16.msra.mxu0 %v5789
    %5919 = vmatprep.subr.bf16.mxu0 %v5792
    %5920 = vmatpush1.bf16.msra.mxu0 %v5791
    %5921 = vmatprep.mubr.bf16.mxu0 %v5473
    %5922 = vmatmul.mubr.bf16.gmra.mrb[0].mxu0 %v5472
    %v5923 = vpop.f32.mrb[0].mxu0
    %v5924 = vadd.f32 0.0, %v5923
    %v5925 = vpop.f32.mrb[0].mxu0
    %v5926 = vadd.f32 0.0, %v5925
    %v5927 = vpop.f32.mrb[0].mxu0
    %v5928 = vadd.f32 0.0, %v5927
    %v5929 = vpop.f32.mrb[0].mxu0
    %v5930 = vadd.f32 0.0, %v5929
    %5931 = vmatprep.mubr.bf16.mxu0 %v5477
    %5932 = vmatmul.mubr.bf16.gmra.mrb[0].mxu0 %v5476
    %v5933 = vpop.f32.mrb[0].mxu0
    %v5934 = vadd.f32 0.0, %v5933
    %v5935 = vpop.f32.mrb[0].mxu0
    %v5936 = vadd.f32 0.0, %v5935
    %v5937 = vpop.f32.mrb[0].mxu0
    %v5938 = vadd.f32 0.0, %v5937
    %v5939 = vpop.f32.mrb[0].mxu0
    %v5940 = vadd.f32 0.0, %v5939
    %5941 = vmatprep.mubr.bf16.mxu0 %v5481
    %5942 = vmatmul.mubr.bf16.gmra.mrb[0].mxu0 %v5480
    %v5943 = vpop.f32.mrb[0].mxu0
    %v5944 = vadd.f32 0.0, %v5943
    %v5945 = vpop.f32.mrb[0].mxu0
    %v5946 = vadd.f32 0.0, %v5945
    %v5947 = vpop.f32.mrb[0].mxu0
    %v5948 = vadd.f32 0.0, %v5947
    %v5949 = vpop.f32.mrb[0].mxu0
    %v5950 = vadd.f32 0.0, %v5949
    %5951 = vmatprep.mubr.bf16.mxu0 %v5485
    %5952 = vmatmul.mubr.bf16.gmra.mrb[0].mxu0 %v5484
    %v5953 = vpop.f32.mrb[0].mxu0
    %v5954 = vadd.f32 0.0, %v5953
    %v5955 = vpop.f32.mrb[0].mxu0
    %v5956 = vadd.f32 0.0, %v5955
    %v5957 = vpop.f32.mrb[0].mxu0
    %v5958 = vadd.f32 0.0, %v5957
    %v5959 = vpop.f32.mrb[0].mxu0
    %v5960 = vadd.f32 0.0, %v5959
    %5961 = vmatprep.mubr.bf16.mxu0 %v5489
    %5962 = vmatmul.mubr.bf16.gmra.mrb[0].mxu0 %v5488
    %v5963 = vpop.f32.mrb[0].mxu0
    %v5964 = vadd.f32 0.0, %v5963
    %v5965 = vpop.f32.mrb[0].mxu0
    %v5966 = vadd.f32 0.0, %v5965
    %v5967 = vpop.f32.mrb[0].mxu0
    %v5968 = vadd.f32 0.0, %v5967
    %v5969 = vpop.f32.mrb[0].mxu0
    %v5970 = vadd.f32 0.0, %v5969
    %5971 = vmatprep.mubr.bf16.mxu0 %v5493
    %5972 = vmatmul.mubr.bf16.gmra.mrb[0].mxu0 %v5492
    %v5973 = vpop.f32.mrb[0].mxu0
    %v5974 = vadd.f32 0.0, %v5973
    %v5975 = vpop.f32.mrb[0].mxu0
    %v5976 = vadd.f32 0.0, %v5975
    %v5977 = vpop.f32.mrb[0].mxu0
    %v5978 = vadd.f32 0.0, %v5977
    %v5979 = vpop.f32.mrb[0].mxu0
    %v5980 = vadd.f32 0.0, %v5979
    %5981 = vmatprep.mubr.bf16.mxu0 %v5497
    %5982 = vmatmul.mubr.bf16.gmra.mrb[0].mxu0 %v5496
    %v5983 = vpop.f32.mrb[0].mxu0
    %v5984 = vadd.f32 0.0, %v5983
    %v5985 = vpop.f32.mrb[0].mxu0
    %v5986 = vadd.f32 0.0, %v5985
    %v5987 = vpop.f32.mrb[0].mxu0
    %v5988 = vadd.f32 0.0, %v5987
    %v5989 = vpop.f32.mrb[0].mxu0
    %v5990 = vadd.f32 0.0, %v5989
    %5991 = vmatprep.mubr.bf16.mxu0 %v5501
    %5992 = vmatmul.mubr.bf16.gmra.mrb[0].mxu0 %v5500
    %v5993 = vpop.f32.mrb[0].mxu0
    %v5994 = vadd.f32 0.0, %v5993
    %v5995 = vpop.f32.mrb[0].mxu0
    %v5996 = vadd.f32 0.0, %v5995
    %v5997 = vpop.f32.mrb[0].mxu0
    %v5998 = vadd.f32 0.0, %v5997
    %v5999 = vpop.f32.mrb[0].mxu0
    %v6000 = vadd.f32 0.0, %v5999
    %6001 = vdwg.mxu0
    %6002 = vmatprep.subr.bf16.mxu0 %v5794
    %6003 = vmatpush1.bf16.msra.mxu0 %v5793
    %6004 = vmatprep.subr.bf16.mxu0 %v5796
    %6005 = vmatpush1.bf16.msra.mxu0 %v5795
    %6006 = vmatprep.subr.bf16.mxu0 %v5798
    %6007 = vmatpush1.bf16.msra.mxu0 %v5797
    %6008 = vmatprep.subr.bf16.mxu0 %v5800
    %6009 = vmatpush1.bf16.msra.mxu0 %v5799
    %6010 = vmatprep.subr.bf16.mxu0 %v5802
    %6011 = vmatpush1.bf16.msra.mxu0 %v5801
    %6012 = vmatprep.subr.bf16.mxu0 %v5804
    %6013 = vmatpush1.bf16.msra.mxu0 %v5803
    %6014 = vmatprep.subr.bf16.mxu0 %v5806
    %6015 = vmatpush1.bf16.msra.mxu0 %v5805
    %6016 = vmatprep.subr.bf16.mxu0 %v5808
    %6017 = vmatpush1.bf16.msra.mxu0 %v5807
    %6018 = vmatprep.subr.bf16.mxu0 %v5810
    %6019 = vmatpush1.bf16.msra.mxu0 %v5809
    %6020 = vmatprep.subr.bf16.mxu0 %v5812
    %6021 = vmatpush1.bf16.msra.mxu0 %v5811
    %6022 = vmatprep.subr.bf16.mxu0 %v5814
    %6023 = vmatpush1.bf16.msra.mxu0 %v5813
    %6024 = vmatprep.subr.bf16.mxu0 %v5816
    %6025 = vmatpush1.bf16.msra.mxu0 %v5815
    %6026 = vmatprep.subr.bf16.mxu0 %v5818
    %6027 = vmatpush1.bf16.msra.mxu0 %v5817
    %6028 = vmatprep.subr.bf16.mxu0 %v5820
    %6029 = vmatpush1.bf16.msra.mxu0 %v5819
    %6030 = vmatprep.subr.bf16.mxu0 %v5822
    %6031 = vmatpush1.bf16.msra.mxu0 %v5821
    %6032 = vmatprep.subr.bf16.mxu0 %v5824
    %6033 = vmatpush1.bf16.msra.mxu0 %v5823
    %6034 = vmatprep.mubr.bf16.mxu0 %v5475
    %6035 = vmatmul.mubr.bf16.gmra.mrb[0].mxu0 %v5474
    %v6036 = vpop.f32.mrb[0].mxu0
    %v6037 = vadd.f32 %v5924, %v6036
    %v6038 = vpop.f32.mrb[0].mxu0
    %v6039 = vadd.f32 %v5926, %v6038
    %v6040 = vpop.f32.mrb[0].mxu0
    %v6041 = vadd.f32 %v5928, %v6040
    %v6042 = vpop.f32.mrb[0].mxu0
    %v6043 = vadd.f32 %v5930, %v6042
    %6044 = vmatprep.mubr.bf16.mxu0 %v5479
    %6045 = vmatmul.mubr.bf16.gmra.mrb[0].mxu0 %v5478
    %v6046 = vpop.f32.mrb[0].mxu0
    %v6047 = vadd.f32 %v5934, %v6046
    %v6048 = vpop.f32.mrb[0].mxu0
    %v6049 = vadd.f32 %v5936, %v6048
    %v6050 = vpop.f32.mrb[0].mxu0
    %v6051 = vadd.f32 %v5938, %v6050
    %v6052 = vpop.f32.mrb[0].mxu0
    %v6053 = vadd.f32 %v5940, %v6052
    %6054 = vmatprep.mubr.bf16.mxu0 %v5483
    %6055 = vmatmul.mubr.bf16.gmra.mrb[0].mxu0 %v5482
    %v6056 = vpop.f32.mrb[0].mxu0
    %v6057 = vadd.f32 %v5944, %v6056
    %v6058 = vpop.f32.mrb[0].mxu0
    %v6059 = vadd.f32 %v5946, %v6058
    %v6060 = vpop.f32.mrb[0].mxu0
    %v6061 = vadd.f32 %v5948, %v6060
    %v6062 = vpop.f32.mrb[0].mxu0
    %v6063 = vadd.f32 %v5950, %v6062
    %6064 = vmatprep.mubr.bf16.mxu0 %v5487
    %6065 = vmatmul.mubr.bf16.gmra.mrb[0].mxu0 %v5486
    %v6066 = vpop.f32.mrb[0].mxu0
    %v6067 = vadd.f32 %v5954, %v6066
    %v6068 = vpop.f32.mrb[0].mxu0
    %v6069 = vadd.f32 %v5956, %v6068
    %v6070 = vpop.f32.mrb[0].mxu0
    %v6071 = vadd.f32 %v5958, %v6070
    %v6072 = vpop.f32.mrb[0].mxu0
    %v6073 = vadd.f32 %v5960, %v6072
    %6074 = vmatprep.mubr.bf16.mxu0 %v5491
    %6075 = vmatmul.mubr.bf16.gmra.mrb[0].mxu0 %v5490
    %v6076 = vpop.f32.mrb[0].mxu0
    %v6077 = vadd.f32 %v5964, %v6076
    %v6078 = vpop.f32.mrb[0].mxu0
    %v6079 = vadd.f32 %v5966, %v6078
    %v6080 = vpop.f32.mrb[0].mxu0
    %v6081 = vadd.f32 %v5968, %v6080
    %v6082 = vpop.f32.mrb[0].mxu0
    %v6083 = vadd.f32 %v5970, %v6082
    %6084 = vmatprep.mubr.bf16.mxu0 %v5495
    %6085 = vmatmul.mubr.bf16.gmra.mrb[0].mxu0 %v5494
    %v6086 = vpop.f32.mrb[0].mxu0
    %v6087 = vadd.f32 %v5974, %v6086
    %v6088 = vpop.f32.mrb[0].mxu0
    %v6089 = vadd.f32 %v5976, %v6088
    %v6090 = vpop.f32.mrb[0].mxu0
    %v6091 = vadd.f32 %v5978, %v6090
    %v6092 = vpop.f32.mrb[0].mxu0
    %v6093 = vadd.f32 %v5980, %v6092
    %6094 = vmatprep.mubr.bf16.mxu0 %v5499
    %6095 = vmatmul.mubr.bf16.gmra.mrb[0].mxu0 %v5498
    %v6096 = vpop.f32.mrb[0].mxu0
    %v6097 = vadd.f32 %v5984, %v6096
    %v6098 = vpop.f32.mrb[0].mxu0
    %v6099 = vadd.f32 %v5986, %v6098
    %v6100 = vpop.f32.mrb[0].mxu0
    %v6101 = vadd.f32 %v5988, %v6100
    %v6102 = vpop.f32.mrb[0].mxu0
    %v6103 = vadd.f32 %v5990, %v6102
    %6104 = vmatprep.mubr.bf16.mxu0 %v5503
    %6105 = vmatmul.mubr.bf16.gmra.mrb[0].mxu0 %v5502
    %v6106 = vpop.f32.mrb[0].mxu0
    %v6107 = vadd.f32 %v5994, %v6106
    %v6108 = vpop.f32.mrb[0].mxu0
    %v6109 = vadd.f32 %v5996, %v6108
    %v6110 = vpop.f32.mrb[0].mxu0
    %v6111 = vadd.f32 %v5998, %v6110
    %v6112 = vpop.f32.mrb[0].mxu0
    %v6113 = vadd.f32 %v6000, %v6112
    %6114 = vdwg.mxu0
    %v6115 = vadd.f32 %v5343, %v6037
    %v6116 = vadd.f32 %v5344, %v6039
    %v6117 = vadd.f32 %v5345, %v6041
    %v6118 = vadd.f32 %v5346, %v6043
    %v6119 = vadd.f32 %v5347, %v6047
    %v6120 = vadd.f32 %v5348, %v6049
    %v6121 = vadd.f32 %v5349, %v6051
    %v6122 = vadd.f32 %v5350, %v6053
    %v6123 = vadd.f32 %v5351, %v6057
    %v6124 = vadd.f32 %v5352, %v6059
    %v6125 = vadd.f32 %v5353, %v6061
    %v6126 = vadd.f32 %v5354, %v6063
    %v6127 = vadd.f32 %v5355, %v6067
    %v6128 = vadd.f32 %v5356, %v6069
    %v6129 = vadd.f32 %v5357, %v6071
    %v6130 = vadd.f32 %v5358, %v6073
    %v6131 = vadd.f32 %v5359, %v6077
    %v6132 = vadd.f32 %v5360, %v6079
    %v6133 = vadd.f32 %v5361, %v6081
    %v6134 = vadd.f32 %v5362, %v6083
    %v6135 = vadd.f32 %v5363, %v6087
    %v6136 = vadd.f32 %v5364, %v6089
    %v6137 = vadd.f32 %v5365, %v6091
    %v6138 = vadd.f32 %v5366, %v6093
    %v6139 = vadd.f32 %v5367, %v6097
    %v6140 = vadd.f32 %v5368, %v6099
    %v6141 = vadd.f32 %v5369, %v6101
    %v6142 = vadd.f32 %v5370, %v6103
    %v6143 = vadd.f32 %v5371, %v6107
    %v6144 = vadd.f32 %v5372, %v6109
    %v6145 = vadd.f32 %v5373, %v6111
    %v6146 = vadd.f32 %v5374, %v6113
    %s6147 = scalar_lea.vmem %s0, 1168
    %v6148 = vld [vmem:[%s6147] sm:$0xff]
    %v6149 = vld [vmem:[%s6147 + $0x8] sm:$0xff]
    %v6150 = vld [vmem:[%s6147 + $0x10] sm:$0xff]
    %v6151 = vld [vmem:[%s6147 + $0x18] sm:$0xff]
    %v6152 = vld [vmem:[%s6147 + $0x20] sm:$0xff]
    %v6153 = vld [vmem:[%s6147 + $0x28] sm:$0xff]
    %v6154 = vld [vmem:[%s6147 + $0x30] sm:$0xff]
    %v6155 = vld [vmem:[%s6147 + $0x38] sm:$0xff]
    %v6156 = vld [vmem:[%s6147 + $0x40] sm:$0xff]
    %v6157 = vld [vmem:[%s6147 + $0x48] sm:$0xff]
    %v6158 = vld [vmem:[%s6147 + $0x50] sm:$0xff]
    %v6159 = vld [vmem:[%s6147 + $0x58] sm:$0xff]
    %v6160 = vld [vmem:[%s6147 + $0x60] sm:$0xff]
    %v6161 = vld [vmem:[%s6147 + $0x68] sm:$0xff]
    %v6162 = vld [vmem:[%s6147 + $0x70] sm:$0xff]
    %v6163 = vld [vmem:[%s6147 + $0x78] sm:$0xff]
    %v6164 = vld [vmem:[%s6147 + $0x90] sm:$0xff]
    %v6165 = vld [vmem:[%s6147 + $0x98] sm:$0xff]
    %v6166 = vld [vmem:[%s6147 + $0xa0] sm:$0xff]
    %v6167 = vld [vmem:[%s6147 + $0xa8] sm:$0xff]
    %v6168 = vld [vmem:[%s6147 + $0xb0] sm:$0xff]
    %v6169 = vld [vmem:[%s6147 + $0xb8] sm:$0xff]
    %v6170 = vld [vmem:[%s6147 + $0xc0] sm:$0xff]
    %v6171 = vld [vmem:[%s6147 + $0xc8] sm:$0xff]
    %v6172 = vld [vmem:[%s6147 + $0xd0] sm:$0xff]
    %v6173 = vld [vmem:[%s6147 + $0xd8] sm:$0xff]
    %v6174 = vld [vmem:[%s6147 + $0xe0] sm:$0xff]
    %v6175 = vld [vmem:[%s6147 + $0xe8] sm:$0xff]
    %v6176 = vld [vmem:[%s6147 + $0xf0] sm:$0xff]
    %v6177 = vld [vmem:[%s6147 + $0xf8] sm:$0xff]
    %v6178 = vld [vmem:[%s6147 + $0x100] sm:$0xff]
    %v6179 = vld [vmem:[%s6147 + $0x108] sm:$0xff]
    %v6180 = vunpack.c.l.bf16 %v6148
    %v6181 = vunpack.c.h.bf16 %v6148
    %v6182 = vunpack.c.l.bf16 %v6149
    %v6183 = vunpack.c.h.bf16 %v6149
    %v6184 = vunpack.c.l.bf16 %v6150
    %v6185 = vunpack.c.h.bf16 %v6150
    %v6186 = vunpack.c.l.bf16 %v6151
    %v6187 = vunpack.c.h.bf16 %v6151
    %v6188 = vunpack.c.l.bf16 %v6152
    %v6189 = vunpack.c.h.bf16 %v6152
    %v6190 = vunpack.c.l.bf16 %v6153
    %v6191 = vunpack.c.h.bf16 %v6153
    %v6192 = vunpack.c.l.bf16 %v6154
    %v6193 = vunpack.c.h.bf16 %v6154
    %v6194 = vunpack.c.l.bf16 %v6155
    %v6195 = vunpack.c.h.bf16 %v6155
    %v6196 = vunpack.c.l.bf16 %v6156
    %v6197 = vunpack.c.h.bf16 %v6156
    %v6198 = vunpack.c.l.bf16 %v6157
    %v6199 = vunpack.c.h.bf16 %v6157
    %v6200 = vunpack.c.l.bf16 %v6158
    %v6201 = vunpack.c.h.bf16 %v6158
    %v6202 = vunpack.c.l.bf16 %v6159
    %v6203 = vunpack.c.h.bf16 %v6159
    %v6204 = vunpack.c.l.bf16 %v6160
    %v6205 = vunpack.c.h.bf16 %v6160
    %v6206 = vunpack.c.l.bf16 %v6161
    %v6207 = vunpack.c.h.bf16 %v6161
    %v6208 = vunpack.c.l.bf16 %v6162
    %v6209 = vunpack.c.h.bf16 %v6162
    %v6210 = vunpack.c.l.bf16 %v6163
    %v6211 = vunpack.c.h.bf16 %v6163
    %v6212 = vunpack.c.l.bf16 %v6164
    %v6213 = vunpack.c.h.bf16 %v6164
    %v6214 = vunpack.c.l.bf16 %v6165
    %v6215 = vunpack.c.h.bf16 %v6165
    %v6216 = vunpack.c.l.bf16 %v6166
    %v6217 = vunpack.c.h.bf16 %v6166
    %v6218 = vunpack.c.l.bf16 %v6167
    %v6219 = vunpack.c.h.bf16 %v6167
    %v6220 = vunpack.c.l.bf16 %v6168
    %v6221 = vunpack.c.h.bf16 %v6168
    %v6222 = vunpack.c.l.bf16 %v6169
    %v6223 = vunpack.c.h.bf16 %v6169
    %v6224 = vunpack.c.l.bf16 %v6170
    %v6225 = vunpack.c.h.bf16 %v6170
    %v6226 = vunpack.c.l.bf16 %v6171
    %v6227 = vunpack.c.h.bf16 %v6171
    %v6228 = vunpack.c.l.bf16 %v6172
    %v6229 = vunpack.c.h.bf16 %v6172
    %v6230 = vunpack.c.l.bf16 %v6173
    %v6231 = vunpack.c.h.bf16 %v6173
    %v6232 = vunpack.c.l.bf16 %v6174
    %v6233 = vunpack.c.h.bf16 %v6174
    %v6234 = vunpack.c.l.bf16 %v6175
    %v6235 = vunpack.c.h.bf16 %v6175
    %v6236 = vunpack.c.l.bf16 %v6176
    %v6237 = vunpack.c.h.bf16 %v6176
    %v6238 = vunpack.c.l.bf16 %v6177
    %v6239 = vunpack.c.h.bf16 %v6177
    %v6240 = vunpack.c.l.bf16 %v6178
    %v6241 = vunpack.c.h.bf16 %v6178
    %v6242 = vunpack.c.l.bf16 %v6179
    %v6243 = vunpack.c.h.bf16 %v6179
    %v6244 = vpack.c.bf16 %v6184, %v6180
    %v6245 = vpack.c.bf16 %v6185, %v6181
    %v6246 = vpack.c.bf16 %v6186, %v6182
    %v6247 = vpack.c.bf16 %v6187, %v6183
    %v6248 = vpack.c.bf16 %v6192, %v6188
    %v6249 = vpack.c.bf16 %v6193, %v6189
    %v6250 = vpack.c.bf16 %v6194, %v6190
    %v6251 = vpack.c.bf16 %v6195, %v6191
    %v6252 = vpack.c.bf16 %v6200, %v6196
    %v6253 = vpack.c.bf16 %v6201, %v6197
    %v6254 = vpack.c.bf16 %v6202, %v6198
    %v6255 = vpack.c.bf16 %v6203, %v6199
    %v6256 = vpack.c.bf16 %v6208, %v6204
    %v6257 = vpack.c.bf16 %v6209, %v6205
    %v6258 = vpack.c.bf16 %v6210, %v6206
    %v6259 = vpack.c.bf16 %v6211, %v6207
    %v6260 = vpack.c.bf16 %v6216, %v6212
    %v6261 = vpack.c.bf16 %v6217, %v6213
    %v6262 = vpack.c.bf16 %v6218, %v6214
    %v6263 = vpack.c.bf16 %v6219, %v6215
    %v6264 = vpack.c.bf16 %v6224, %v6220
    %v6265 = vpack.c.bf16 %v6225, %v6221
    %v6266 = vpack.c.bf16 %v6226, %v6222
    %v6267 = vpack.c.bf16 %v6227, %v6223
    %v6268 = vpack.c.bf16 %v6232, %v6228
    %v6269 = vpack.c.bf16 %v6233, %v6229
    %v6270 = vpack.c.bf16 %v6234, %v6230
    %v6271 = vpack.c.bf16 %v6235, %v6231
    %v6272 = vpack.c.bf16 %v6240, %v6236
    %v6273 = vpack.c.bf16 %v6241, %v6237
    %v6274 = vpack.c.bf16 %v6242, %v6238
    %v6275 = vpack.c.bf16 %v6243, %v6239
    %s6276 = scalar_lea.vmem %s1, 4096
    %v6277 = vld [vmem:[%s6276] sm:$0xff]
    %v6278 = vld [vmem:[%s6276 + $0x8] sm:$0xff]
    %v6279 = vld [vmem:[%s6276 + $0x10] sm:$0xff]
    %v6280 = vld [vmem:[%s6276 + $0x18] sm:$0xff]
    %v6281 = vld [vmem:[%s6276 + $0x20] sm:$0xff]
    %v6282 = vld [vmem:[%s6276 + $0x28] sm:$0xff]
    %v6283 = vld [vmem:[%s6276 + $0x30] sm:$0xff]
    %v6284 = vld [vmem:[%s6276 + $0x38] sm:$0xff]
    %v6285 = vld [vmem:[%s6276 + $0x40] sm:$0xff]
    %v6286 = vld [vmem:[%s6276 + $0x48] sm:$0xff]
    %v6287 = vld [vmem:[%s6276 + $0x50] sm:$0xff]
    %v6288 = vld [vmem:[%s6276 + $0x58] sm:$0xff]
    %v6289 = vld [vmem:[%s6276 + $0x60] sm:$0xff]
    %v6290 = vld [vmem:[%s6276 + $0x68] sm:$0xff]
    %v6291 = vld [vmem:[%s6276 + $0x70] sm:$0xff]
    %v6292 = vld [vmem:[%s6276 + $0x78] sm:$0xff]
    %v6293 = vld [vmem:[%s6276 + $0x80] sm:$0xff]
    %v6294 = vld [vmem:[%s6276 + $0x88] sm:$0xff]
    %v6295 = vld [vmem:[%s6276 + $0x90] sm:$0xff]
    %v6296 = vld [vmem:[%s6276 + $0x98] sm:$0xff]
    %v6297 = vld [vmem:[%s6276 + $0xa0] sm:$0xff]
    %v6298 = vld [vmem:[%s6276 + $0xa8] sm:$0xff]
    %v6299 = vld [vmem:[%s6276 + $0xb0] sm:$0xff]
    %v6300 = vld [vmem:[%s6276 + $0xb8] sm:$0xff]
    %v6301 = vld [vmem:[%s6276 + $0xc0] sm:$0xff]
    %v6302 = vld [vmem:[%s6276 + $0xc8] sm:$0xff]
    %v6303 = vld [vmem:[%s6276 + $0xd0] sm:$0xff]
    %v6304 = vld [vmem:[%s6276 + $0xd8] sm:$0xff]
    %v6305 = vld [vmem:[%s6276 + $0xe0] sm:$0xff]
    %v6306 = vld [vmem:[%s6276 + $0xe8] sm:$0xff]
    %v6307 = vld [vmem:[%s6276 + $0xf0] sm:$0xff]
    %v6308 = vld [vmem:[%s6276 + $0xf8] sm:$0xff]
    %v6309 = vld [vmem:[%s6276 + $0x100] sm:$0xff]
    %v6310 = vld [vmem:[%s6276 + $0x108] sm:$0xff]
    %v6311 = vld [vmem:[%s6276 + $0x110] sm:$0xff]
    %v6312 = vld [vmem:[%s6276 + $0x118] sm:$0xff]
    %v6313 = vld [vmem:[%s6276 + $0x120] sm:$0xff]
    %v6314 = vld [vmem:[%s6276 + $0x128] sm:$0xff]
    %v6315 = vld [vmem:[%s6276 + $0x130] sm:$0xff]
    %v6316 = vld [vmem:[%s6276 + $0x138] sm:$0xff]
    %v6317 = vld [vmem:[%s6276 + $0x140] sm:$0xff]
    %v6318 = vld [vmem:[%s6276 + $0x148] sm:$0xff]
    %v6319 = vld [vmem:[%s6276 + $0x150] sm:$0xff]
    %v6320 = vld [vmem:[%s6276 + $0x158] sm:$0xff]
    %v6321 = vld [vmem:[%s6276 + $0x160] sm:$0xff]
    %v6322 = vld [vmem:[%s6276 + $0x168] sm:$0xff]
    %v6323 = vld [vmem:[%s6276 + $0x170] sm:$0xff]
    %v6324 = vld [vmem:[%s6276 + $0x178] sm:$0xff]
    %v6325 = vld [vmem:[%s6276 + $0x180] sm:$0xff]
    %v6326 = vld [vmem:[%s6276 + $0x188] sm:$0xff]
    %v6327 = vld [vmem:[%s6276 + $0x190] sm:$0xff]
    %v6328 = vld [vmem:[%s6276 + $0x198] sm:$0xff]
    %v6329 = vld [vmem:[%s6276 + $0x1a0] sm:$0xff]
    %v6330 = vld [vmem:[%s6276 + $0x1a8] sm:$0xff]
    %v6331 = vld [vmem:[%s6276 + $0x1b0] sm:$0xff]
    %v6332 = vld [vmem:[%s6276 + $0x1b8] sm:$0xff]
    %v6333 = vld [vmem:[%s6276 + $0x1c0] sm:$0xff]
    %v6334 = vld [vmem:[%s6276 + $0x1c8] sm:$0xff]
    %v6335 = vld [vmem:[%s6276 + $0x1d0] sm:$0xff]
    %v6336 = vld [vmem:[%s6276 + $0x1d8] sm:$0xff]
    %v6337 = vld [vmem:[%s6276 + $0x1e0] sm:$0xff]
    %v6338 = vld [vmem:[%s6276 + $0x1e8] sm:$0xff]
    %v6339 = vld [vmem:[%s6276 + $0x1f0] sm:$0xff]
    %v6340 = vld [vmem:[%s6276 + $0x1f8] sm:$0xff]
    %v6405 = vunpack.c.l.b16 %v6277
    %v6406 = vunpack.c.h.b16 %v6277
    %v6407 = vunpack.c.l.b16 %v6278
    %v6408 = vunpack.c.h.b16 %v6278
    %v6409 = vunpack.c.l.b16 %v6279
    %v6410 = vunpack.c.h.b16 %v6279
    %v6411 = vunpack.c.l.b16 %v6280
    %v6412 = vunpack.c.h.b16 %v6280
    %v6413 = vunpack.c.l.b16 %v6281
    %v6414 = vunpack.c.h.b16 %v6281
    %v6415 = vunpack.c.l.b16 %v6282
    %v6416 = vunpack.c.h.b16 %v6282
    %v6417 = vunpack.c.l.b16 %v6283
    %v6418 = vunpack.c.h.b16 %v6283
    %v6419 = vunpack.c.l.b16 %v6284
    %v6420 = vunpack.c.h.b16 %v6284
    %v6421 = vunpack.c.l.b16 %v6285
    %v6422 = vunpack.c.h.b16 %v6285
    %v6423 = vunpack.c.l.b16 %v6286
    %v6424 = vunpack.c.h.b16 %v6286
    %v6425 = vunpack.c.l.b16 %v6287
    %v6426 = vunpack.c.h.b16 %v6287
    %v6427 = vunpack.c.l.b16 %v6288
    %v6428 = vunpack.c.h.b16 %v6288
    %v6429 = vunpack.c.l.b16 %v6289
    %v6430 = vunpack.c.h.b16 %v6289
    %v6431 = vunpack.c.l.b16 %v6290
    %v6432 = vunpack.c.h.b16 %v6290
    %v6433 = vunpack.c.l.b16 %v6291
    %v6434 = vunpack.c.h.b16 %v6291
    %v6435 = vunpack.c.l.b16 %v6292
    %v6436 = vunpack.c.h.b16 %v6292
    %v6437 = vunpack.c.l.b16 %v6293
    %v6438 = vunpack.c.h.b16 %v6293
    %v6439 = vunpack.c.l.b16 %v6294
    %v6440 = vunpack.c.h.b16 %v6294
    %v6441 = vunpack.c.l.b16 %v6295
    %v6442 = vunpack.c.h.b16 %v6295
    %v6443 = vunpack.c.l.b16 %v6296
    %v6444 = vunpack.c.h.b16 %v6296
    %v6445 = vunpack.c.l.b16 %v6297
    %v6446 = vunpack.c.h.b16 %v6297
    %v6447 = vunpack.c.l.b16 %v6298
    %v6448 = vunpack.c.h.b16 %v6298
    %v6449 = vunpack.c.l.b16 %v6299
    %v6450 = vunpack.c.h.b16 %v6299
    %v6451 = vunpack.c.l.b16 %v6300
    %v6452 = vunpack.c.h.b16 %v6300
    %v6453 = vunpack.c.l.b16 %v6301
    %v6454 = vunpack.c.h.b16 %v6301
    %v6455 = vunpack.c.l.b16 %v6302
    %v6456 = vunpack.c.h.b16 %v6302
    %v6457 = vunpack.c.l.b16 %v6303
    %v6458 = vunpack.c.h.b16 %v6303
    %v6459 = vunpack.c.l.b16 %v6304
    %v6460 = vunpack.c.h.b16 %v6304
    %v6461 = vunpack.c.l.b16 %v6305
    %v6462 = vunpack.c.h.b16 %v6305
    %v6463 = vunpack.c.l.b16 %v6306
    %v6464 = vunpack.c.h.b16 %v6306
    %v6465 = vunpack.c.l.b16 %v6307
    %v6466 = vunpack.c.h.b16 %v6307
    %v6467 = vunpack.c.l.b16 %v6308
    %v6468 = vunpack.c.h.b16 %v6308
    %v6469 = vunpack.c.l.b16 %v6309
    %v6470 = vunpack.c.h.b16 %v6309
    %v6471 = vunpack.c.l.b16 %v6310
    %v6472 = vunpack.c.h.b16 %v6310
    %v6473 = vunpack.c.l.b16 %v6311
    %v6474 = vunpack.c.h.b16 %v6311
    %v6475 = vunpack.c.l.b16 %v6312
    %v6476 = vunpack.c.h.b16 %v6312
    %v6477 = vunpack.c.l.b16 %v6313
    %v6478 = vunpack.c.h.b16 %v6313
    %v6479 = vunpack.c.l.b16 %v6314
    %v6480 = vunpack.c.h.b16 %v6314
    %v6481 = vunpack.c.l.b16 %v6315
    %v6482 = vunpack.c.h.b16 %v6315
    %v6483 = vunpack.c.l.b16 %v6316
    %v6484 = vunpack.c.h.b16 %v6316
    %v6485 = vunpack.c.l.b16 %v6317
    %v6486 = vunpack.c.h.b16 %v6317
    %v6487 = vunpack.c.l.b16 %v6318
    %v6488 = vunpack.c.h.b16 %v6318
    %v6489 = vunpack.c.l.b16 %v6319
    %v6490 = vunpack.c.h.b16 %v6319
    %v6491 = vunpack.c.l.b16 %v6320
    %v6492 = vunpack.c.h.b16 %v6320
    %v6493 = vunpack.c.l.b16 %v6321
    %v6494 = vunpack.c.h.b16 %v6321
    %v6495 = vunpack.c.l.b16 %v6322
    %v6496 = vunpack.c.h.b16 %v6322
    %v6497 = vunpack.c.l.b16 %v6323
    %v6498 = vunpack.c.h.b16 %v6323
    %v6499 = vunpack.c.l.b16 %v6324
    %v6500 = vunpack.c.h.b16 %v6324
    %v6501 = vunpack.c.l.b16 %v6325
    %v6502 = vunpack.c.h.b16 %v6325
    %v6503 = vunpack.c.l.b16 %v6326
    %v6504 = vunpack.c.h.b16 %v6326
    %v6505 = vunpack.c.l.b16 %v6327
    %v6506 = vunpack.c.h.b16 %v6327
    %v6507 = vunpack.c.l.b16 %v6328
    %v6508 = vunpack.c.h.b16 %v6328
    %v6509 = vunpack.c.l.b16 %v6329
    %v6510 = vunpack.c.h.b16 %v6329
    %v6511 = vunpack.c.l.b16 %v6330
    %v6512 = vunpack.c.h.b16 %v6330
    %v6513 = vunpack.c.l.b16 %v6331
    %v6514 = vunpack.c.h.b16 %v6331
    %v6515 = vunpack.c.l.b16 %v6332
    %v6516 = vunpack.c.h.b16 %v6332
    %v6517 = vunpack.c.l.b16 %v6333
    %v6518 = vunpack.c.h.b16 %v6333
    %v6519 = vunpack.c.l.b16 %v6334
    %v6520 = vunpack.c.h.b16 %v6334
    %v6521 = vunpack.c.l.b16 %v6335
    %v6522 = vunpack.c.h.b16 %v6335
    %v6523 = vunpack.c.l.b16 %v6336
    %v6524 = vunpack.c.h.b16 %v6336
    %v6525 = vunpack.c.l.b16 %v6337
    %v6526 = vunpack.c.h.b16 %v6337
    %v6527 = vunpack.c.l.b16 %v6338
    %v6528 = vunpack.c.h.b16 %v6338
    %v6529 = vunpack.c.l.b16 %v6339
    %v6530 = vunpack.c.h.b16 %v6339
    %v6531 = vunpack.c.l.b16 %v6340
    %v6532 = vunpack.c.h.b16 %v6340
    %v6533 = vpack.c.b16 %v6407, %v6405
    %v6534 = vpack.c.b16 %v6408, %v6406
    %v6535 = vpack.c.b16 %v6411, %v6409
    %v6536 = vpack.c.b16 %v6412, %v6410
    %v6537 = vpack.c.b16 %v6415, %v6413
    %v6538 = vpack.c.b16 %v6416, %v6414
    %v6539 = vpack.c.b16 %v6419, %v6417
    %v6540 = vpack.c.b16 %v6420, %v6418
    %v6541 = vpack.c.b16 %v6423, %v6421
    %v6542 = vpack.c.b16 %v6424, %v6422
    %v6543 = vpack.c.b16 %v6427, %v6425
    %v6544 = vpack.c.b16 %v6428, %v6426
    %v6545 = vpack.c.b16 %v6431, %v6429
    %v6546 = vpack.c.b16 %v6432, %v6430
    %v6547 = vpack.c.b16 %v6435, %v6433
    %v6548 = vpack.c.b16 %v6436, %v6434
    %v6549 = vpack.c.b16 %v6439, %v6437
    %v6550 = vpack.c.b16 %v6440, %v6438
    %v6551 = vpack.c.b16 %v6443, %v6441
    %v6552 = vpack.c.b16 %v6444, %v6442
    %v6553 = vpack.c.b16 %v6447, %v6445
    %v6554 = vpack.c.b16 %v6448, %v6446
    %v6555 = vpack.c.b16 %v6451, %v6449
    %v6556 = vpack.c.b16 %v6452, %v6450
    %v6557 = vpack.c.b16 %v6455, %v6453
    %v6558 = vpack.c.b16 %v6456, %v6454
    %v6559 = vpack.c.b16 %v6459, %v6457
    %v6560 = vpack.c.b16 %v6460, %v6458
    %v6561 = vpack.c.b16 %v6463, %v6461
    %v6562 = vpack.c.b16 %v6464, %v6462
    %v6563 = vpack.c.b16 %v6467, %v6465
    %v6564 = vpack.c.b16 %v6468, %v6466
    %v6565 = vpack.c.b16 %v6471, %v6469
    %v6566 = vpack.c.b16 %v6472, %v6470
    %v6567 = vpack.c.b16 %v6475, %v6473
    %v6568 = vpack.c.b16 %v6476, %v6474
    %v6569 = vpack.c.b16 %v6479, %v6477
    %v6570 = vpack.c.b16 %v6480, %v6478
    %v6571 = vpack.c.b16 %v6483, %v6481
    %v6572 = vpack.c.b16 %v6484, %v6482
    %v6573 = vpack.c.b16 %v6487, %v6485
    %v6574 = vpack.c.b16 %v6488, %v6486
    %v6575 = vpack.c.b16 %v6491, %v6489
    %v6576 = vpack.c.b16 %v6492, %v6490
    %v6577 = vpack.c.b16 %v6495, %v6493
    %v6578 = vpack.c.b16 %v6496, %v6494
    %v6579 = vpack.c.b16 %v6499, %v6497
    %v6580 = vpack.c.b16 %v6500, %v6498
    %v6581 = vpack.c.b16 %v6503, %v6501
    %v6582 = vpack.c.b16 %v6504, %v6502
    %v6583 = vpack.c.b16 %v6507, %v6505
    %v6584 = vpack.c.b16 %v6508, %v6506
    %v6585 = vpack.c.b16 %v6511, %v6509
    %v6586 = vpack.c.b16 %v6512, %v6510
    %v6587 = vpack.c.b16 %v6515, %v6513
    %v6588 = vpack.c.b16 %v6516, %v6514
    %v6589 = vpack.c.b16 %v6519, %v6517
    %v6590 = vpack.c.b16 %v6520, %v6518
    %v6591 = vpack.c.b16 %v6523, %v6521
    %v6592 = vpack.c.b16 %v6524, %v6522
    %v6593 = vpack.c.b16 %v6527, %v6525
    %v6594 = vpack.c.b16 %v6528, %v6526
    %v6595 = vpack.c.b16 %v6531, %v6529
    %v6596 = vpack.c.b16 %v6532, %v6530
    %6661 = vmatprep.subr.bf16.mxu0 %v6534
    %6662 = vmatpush1.bf16.msra.mxu0 %v6533
    %6663 = vmatprep.subr.bf16.mxu0 %v6536
    %6664 = vmatpush1.bf16.msra.mxu0 %v6535
    %6665 = vmatprep.subr.bf16.mxu0 %v6538
    %6666 = vmatpush1.bf16.msra.mxu0 %v6537
    %6667 = vmatprep.subr.bf16.mxu0 %v6540
    %6668 = vmatpush1.bf16.msra.mxu0 %v6539
    %6669 = vmatprep.subr.bf16.mxu0 %v6542
    %6670 = vmatpush1.bf16.msra.mxu0 %v6541
    %6671 = vmatprep.subr.bf16.mxu0 %v6544
    %6672 = vmatpush1.bf16.msra.mxu0 %v6543
    %6673 = vmatprep.subr.bf16.mxu0 %v6546
    %6674 = vmatpush1.bf16.msra.mxu0 %v6545
    %6675 = vmatprep.subr.bf16.mxu0 %v6548
    %6676 = vmatpush1.bf16.msra.mxu0 %v6547
    %6677 = vmatprep.subr.bf16.mxu0 %v6550
    %6678 = vmatpush1.bf16.msra.mxu0 %v6549
    %6679 = vmatprep.subr.bf16.mxu0 %v6552
    %6680 = vmatpush1.bf16.msra.mxu0 %v6551
    %6681 = vmatprep.subr.bf16.mxu0 %v6554
    %6682 = vmatpush1.bf16.msra.mxu0 %v6553
    %6683 = vmatprep.subr.bf16.mxu0 %v6556
    %6684 = vmatpush1.bf16.msra.mxu0 %v6555
    %6685 = vmatprep.subr.bf16.mxu0 %v6558
    %6686 = vmatpush1.bf16.msra.mxu0 %v6557
    %6687 = vmatprep.subr.bf16.mxu0 %v6560
    %6688 = vmatpush1.bf16.msra.mxu0 %v6559
    %6689 = vmatprep.subr.bf16.mxu0 %v6562
    %6690 = vmatpush1.bf16.msra.mxu0 %v6561
    %6691 = vmatprep.subr.bf16.mxu0 %v6564
    %6692 = vmatpush1.bf16.msra.mxu0 %v6563
    %6693 = vmatprep.mubr.bf16.mxu0 %v6245
    %6694 = vmatmul.mubr.bf16.gmra.mrb[0].mxu0 %v6244
    %v6695 = vpop.f32.mrb[0].mxu0
    %v6696 = vadd.f32 0.0, %v6695
    %v6697 = vpop.f32.mrb[0].mxu0
    %v6698 = vadd.f32 0.0, %v6697
    %v6699 = vpop.f32.mrb[0].mxu0
    %v6700 = vadd.f32 0.0, %v6699
    %v6701 = vpop.f32.mrb[0].mxu0
    %v6702 = vadd.f32 0.0, %v6701
    %6703 = vmatprep.mubr.bf16.mxu0 %v6249
    %6704 = vmatmul.mubr.bf16.gmra.mrb[0].mxu0 %v6248
    %v6705 = vpop.f32.mrb[0].mxu0
    %v6706 = vadd.f32 0.0, %v6705
    %v6707 = vpop.f32.mrb[0].mxu0
    %v6708 = vadd.f32 0.0, %v6707
    %v6709 = vpop.f32.mrb[0].mxu0
    %v6710 = vadd.f32 0.0, %v6709
    %v6711 = vpop.f32.mrb[0].mxu0
    %v6712 = vadd.f32 0.0, %v6711
    %6713 = vmatprep.mubr.bf16.mxu0 %v6253
    %6714 = vmatmul.mubr.bf16.gmra.mrb[0].mxu0 %v6252
    %v6715 = vpop.f32.mrb[0].mxu0
    %v6716 = vadd.f32 0.0, %v6715
    %v6717 = vpop.f32.mrb[0].mxu0
    %v6718 = vadd.f32 0.0, %v6717
    %v6719 = vpop.f32.mrb[0].mxu0
    %v6720 = vadd.f32 0.0, %v6719
    %v6721 = vpop.f32.mrb[0].mxu0
    %v6722 = vadd.f32 0.0, %v6721
    %6723 = vmatprep.mubr.bf16.mxu0 %v6257
    %6724 = vmatmul.mubr.bf16.gmra.mrb[0].mxu0 %v6256
    %v6725 = vpop.f32.mrb[0].mxu0
    %v6726 = vadd.f32 0.0, %v6725
    %v6727 = vpop.f32.mrb[0].mxu0
    %v6728 = vadd.f32 0.0, %v6727
    %v6729 = vpop.f32.mrb[0].mxu0
    %v6730 = vadd.f32 0.0, %v6729
    %v6731 = vpop.f32.mrb[0].mxu0
    %v6732 = vadd.f32 0.0, %v6731
    %6733 = vmatprep.mubr.bf16.mxu0 %v6261
    %6734 = vmatmul.mubr.bf16.gmra.mrb[0].mxu0 %v6260
    %v6735 = vpop.f32.mrb[0].mxu0
    %v6736 = vadd.f32 0.0, %v6735
    %v6737 = vpop.f32.mrb[0].mxu0
    %v6738 = vadd.f32 0.0, %v6737
    %v6739 = vpop.f32.mrb[0].mxu0
    %v6740 = vadd.f32 0.0, %v6739
    %v6741 = vpop.f32.mrb[0].mxu0
    %v6742 = vadd.f32 0.0, %v6741
    %6743 = vmatprep.mubr.bf16.mxu0 %v6265
    %6744 = vmatmul.mubr.bf16.gmra.mrb[0].mxu0 %v6264
    %v6745 = vpop.f32.mrb[0].mxu0
    %v6746 = vadd.f32 0.0, %v6745
    %v6747 = vpop.f32.mrb[0].mxu0
    %v6748 = vadd.f32 0.0, %v6747
    %v6749 = vpop.f32.mrb[0].mxu0
    %v6750 = vadd.f32 0.0, %v6749
    %v6751 = vpop.f32.mrb[0].mxu0
    %v6752 = vadd.f32 0.0, %v6751
    %6753 = vmatprep.mubr.bf16.mxu0 %v6269
    %6754 = vmatmul.mubr.bf16.gmra.mrb[0].mxu0 %v6268
    %v6755 = vpop.f32.mrb[0].mxu0
    %v6756 = vadd.f32 0.0, %v6755
    %v6757 = vpop.f32.mrb[0].mxu0
    %v6758 = vadd.f32 0.0, %v6757
    %v6759 = vpop.f32.mrb[0].mxu0
    %v6760 = vadd.f32 0.0, %v6759
    %v6761 = vpop.f32.mrb[0].mxu0
    %v6762 = vadd.f32 0.0, %v6761
    %6763 = vmatprep.mubr.bf16.mxu0 %v6273
    %6764 = vmatmul.mubr.bf16.gmra.mrb[0].mxu0 %v6272
    %v6765 = vpop.f32.mrb[0].mxu0
    %v6766 = vadd.f32 0.0, %v6765
    %v6767 = vpop.f32.mrb[0].mxu0
    %v6768 = vadd.f32 0.0, %v6767
    %v6769 = vpop.f32.mrb[0].mxu0
    %v6770 = vadd.f32 0.0, %v6769
    %v6771 = vpop.f32.mrb[0].mxu0
    %v6772 = vadd.f32 0.0, %v6771
    %6773 = vdwg.mxu0
    %6774 = vmatprep.subr.bf16.mxu0 %v6566
    %6775 = vmatpush1.bf16.msra.mxu0 %v6565
    %6776 = vmatprep.subr.bf16.mxu0 %v6568
    %6777 = vmatpush1.bf16.msra.mxu0 %v6567
    %6778 = vmatprep.subr.bf16.mxu0 %v6570
    %6779 = vmatpush1.bf16.msra.mxu0 %v6569
    %6780 = vmatprep.subr.bf16.mxu0 %v6572
    %6781 = vmatpush1.bf16.msra.mxu0 %v6571
    %6782 = vmatprep.subr.bf16.mxu0 %v6574
    %6783 = vmatpush1.bf16.msra.mxu0 %v6573
    %6784 = vmatprep.subr.bf16.mxu0 %v6576
    %6785 = vmatpush1.bf16.msra.mxu0 %v6575
    %6786 = vmatprep.subr.bf16.mxu0 %v6578
    %6787 = vmatpush1.bf16.msra.mxu0 %v6577
    %6788 = vmatprep.subr.bf16.mxu0 %v6580
    %6789 = vmatpush1.bf16.msra.mxu0 %v6579
    %6790 = vmatprep.subr.bf16.mxu0 %v6582
    %6791 = vmatpush1.bf16.msra.mxu0 %v6581
    %6792 = vmatprep.subr.bf16.mxu0 %v6584
    %6793 = vmatpush1.bf16.msra.mxu0 %v6583
    %6794 = vmatprep.subr.bf16.mxu0 %v6586
    %6795 = vmatpush1.bf16.msra.mxu0 %v6585
    %6796 = vmatprep.subr.bf16.mxu0 %v6588
    %6797 = vmatpush1.bf16.msra.mxu0 %v6587
    %6798 = vmatprep.subr.bf16.mxu0 %v6590
    %6799 = vmatpush1.bf16.msra.mxu0 %v6589
    %6800 = vmatprep.subr.bf16.mxu0 %v6592
    %6801 = vmatpush1.bf16.msra.mxu0 %v6591
    %6802 = vmatprep.subr.bf16.mxu0 %v6594
    %6803 = vmatpush1.bf16.msra.mxu0 %v6593
    %6804 = vmatprep.subr.bf16.mxu0 %v6596
    %6805 = vmatpush1.bf16.msra.mxu0 %v6595
    %6806 = vmatprep.mubr.bf16.mxu0 %v6247
    %6807 = vmatmul.mubr.bf16.gmra.mrb[0].mxu0 %v6246
    %v6808 = vpop.f32.mrb[0].mxu0
    %v6809 = vadd.f32 %v6696, %v6808
    %v6810 = vpop.f32.mrb[0].mxu0
    %v6811 = vadd.f32 %v6698, %v6810
    %v6812 = vpop.f32.mrb[0].mxu0
    %v6813 = vadd.f32 %v6700, %v6812
    %v6814 = vpop.f32.mrb[0].mxu0
    %v6815 = vadd.f32 %v6702, %v6814
    %6816 = vmatprep.mubr.bf16.mxu0 %v6251
    %6817 = vmatmul.mubr.bf16.gmra.mrb[0].mxu0 %v6250
    %v6818 = vpop.f32.mrb[0].mxu0
    %v6819 = vadd.f32 %v6706, %v6818
    %v6820 = vpop.f32.mrb[0].mxu0
    %v6821 = vadd.f32 %v6708, %v6820
    %v6822 = vpop.f32.mrb[0].mxu0
    %v6823 = vadd.f32 %v6710, %v6822
    %v6824 = vpop.f32.mrb[0].mxu0
    %v6825 = vadd.f32 %v6712, %v6824
    %6826 = vmatprep.mubr.bf16.mxu0 %v6255
    %6827 = vmatmul.mubr.bf16.gmra.mrb[0].mxu0 %v6254
    %v6828 = vpop.f32.mrb[0].mxu0
    %v6829 = vadd.f32 %v6716, %v6828
    %v6830 = vpop.f32.mrb[0].mxu0
    %v6831 = vadd.f32 %v6718, %v6830
    %v6832 = vpop.f32.mrb[0].mxu0
    %v6833 = vadd.f32 %v6720, %v6832
    %v6834 = vpop.f32.mrb[0].mxu0
    %v6835 = vadd.f32 %v6722, %v6834
    %6836 = vmatprep.mubr.bf16.mxu0 %v6259
    %6837 = vmatmul.mubr.bf16.gmra.mrb[0].mxu0 %v6258
    %v6838 = vpop.f32.mrb[0].mxu0
    %v6839 = vadd.f32 %v6726, %v6838
    %v6840 = vpop.f32.mrb[0].mxu0
    %v6841 = vadd.f32 %v6728, %v6840
    %v6842 = vpop.f32.mrb[0].mxu0
    %v6843 = vadd.f32 %v6730, %v6842
    %v6844 = vpop.f32.mrb[0].mxu0
    %v6845 = vadd.f32 %v6732, %v6844
    %6846 = vmatprep.mubr.bf16.mxu0 %v6263
    %6847 = vmatmul.mubr.bf16.gmra.mrb[0].mxu0 %v6262
    %v6848 = vpop.f32.mrb[0].mxu0
    %v6849 = vadd.f32 %v6736, %v6848
    %v6850 = vpop.f32.mrb[0].mxu0
    %v6851 = vadd.f32 %v6738, %v6850
    %v6852 = vpop.f32.mrb[0].mxu0
    %v6853 = vadd.f32 %v6740, %v6852
    %v6854 = vpop.f32.mrb[0].mxu0
    %v6855 = vadd.f32 %v6742, %v6854
    %6856 = vmatprep.mubr.bf16.mxu0 %v6267
    %6857 = vmatmul.mubr.bf16.gmra.mrb[0].mxu0 %v6266
    %v6858 = vpop.f32.mrb[0].mxu0
    %v6859 = vadd.f32 %v6746, %v6858
    %v6860 = vpop.f32.mrb[0].mxu0
    %v6861 = vadd.f32 %v6748, %v6860
    %v6862 = vpop.f32.mrb[0].mxu0
    %v6863 = vadd.f32 %v6750, %v6862
    %v6864 = vpop.f32.mrb[0].mxu0
    %v6865 = vadd.f32 %v6752, %v6864
    %6866 = vmatprep.mubr.bf16.mxu0 %v6271
    %6867 = vmatmul.mubr.bf16.gmra.mrb[0].mxu0 %v6270
    %v6868 = vpop.f32.mrb[0].mxu0
    %v6869 = vadd.f32 %v6756, %v6868
    %v6870 = vpop.f32.mrb[0].mxu0
    %v6871 = vadd.f32 %v6758, %v6870
    %v6872 = vpop.f32.mrb[0].mxu0
    %v6873 = vadd.f32 %v6760, %v6872
    %v6874 = vpop.f32.mrb[0].mxu0
    %v6875 = vadd.f32 %v6762, %v6874
    %6876 = vmatprep.mubr.bf16.mxu0 %v6275
    %6877 = vmatmul.mubr.bf16.gmra.mrb[0].mxu0 %v6274
    %v6878 = vpop.f32.mrb[0].mxu0
    %v6879 = vadd.f32 %v6766, %v6878
    %v6880 = vpop.f32.mrb[0].mxu0
    %v6881 = vadd.f32 %v6768, %v6880
    %v6882 = vpop.f32.mrb[0].mxu0
    %v6883 = vadd.f32 %v6770, %v6882
    %v6884 = vpop.f32.mrb[0].mxu0
    %v6885 = vadd.f32 %v6772, %v6884
    %6886 = vdwg.mxu0
    %v6887 = vadd.f32 %v6115, %v6809
    %v6888 = vadd.f32 %v6116, %v6811
    %v6889 = vadd.f32 %v6117, %v6813
    %v6890 = vadd.f32 %v6118, %v6815
    %v6891 = vadd.f32 %v6119, %v6819
    %v6892 = vadd.f32 %v6120, %v6821
    %v6893 = vadd.f32 %v6121, %v6823
    %v6894 = vadd.f32 %v6122, %v6825
    %v6895 = vadd.f32 %v6123, %v6829
    %v6896 = vadd.f32 %v6124, %v6831
    %v6897 = vadd.f32 %v6125, %v6833
    %v6898 = vadd.f32 %v6126, %v6835
    %v6899 = vadd.f32 %v6127, %v6839
    %v6900 = vadd.f32 %v6128, %v6841
    %v6901 = vadd.f32 %v6129, %v6843
    %v6902 = vadd.f32 %v6130, %v6845
    %v6903 = vadd.f32 %v6131, %v6849
    %v6904 = vadd.f32 %v6132, %v6851
    %v6905 = vadd.f32 %v6133, %v6853
    %v6906 = vadd.f32 %v6134, %v6855
    %v6907 = vadd.f32 %v6135, %v6859
    %v6908 = vadd.f32 %v6136, %v6861
    %v6909 = vadd.f32 %v6137, %v6863
    %v6910 = vadd.f32 %v6138, %v6865
    %v6911 = vadd.f32 %v6139, %v6869
    %v6912 = vadd.f32 %v6140, %v6871
    %v6913 = vadd.f32 %v6141, %v6873
    %v6914 = vadd.f32 %v6142, %v6875
    %v6915 = vadd.f32 %v6143, %v6879
    %v6916 = vadd.f32 %v6144, %v6881
    %v6917 = vadd.f32 %v6145, %v6883
    %v6918 = vadd.f32 %v6146, %v6885
    %v6919 = vld [vmem:[%s2] sm:$0x3]
    %v6921 = vlaneseq
    %v6922 = vshrl.u32 %v6921, 7
    %v6923 = vsub.s32 0, %v6922
    %v6924 = vrot.slane %v6919, %v6923
    %v6925 = vlaneseq
    %v6926 = vshrl.u32 %v6925, 7
    %v6927 = vsub.s32 1, %v6926
    %v6928 = vrot.slane %v6919, %v6927
    %v6931 = vadd.f32 %v6887, %v6924
    %v6932 = vadd.f32 %v6888, %v6928
    %v6933 = vadd.f32 %v6889, %v6924
    %v6934 = vadd.f32 %v6890, %v6928
    %v6935 = vadd.f32 %v6891, %v6924
    %v6936 = vadd.f32 %v6892, %v6928
    %v6937 = vadd.f32 %v6893, %v6924
    %v6938 = vadd.f32 %v6894, %v6928
    %v6939 = vadd.f32 %v6895, %v6924
    %v6940 = vadd.f32 %v6896, %v6928
    %v6941 = vadd.f32 %v6897, %v6924
    %v6942 = vadd.f32 %v6898, %v6928
    %v6943 = vadd.f32 %v6899, %v6924
    %v6944 = vadd.f32 %v6900, %v6928
    %v6945 = vadd.f32 %v6901, %v6924
    %v6946 = vadd.f32 %v6902, %v6928
    %v6947 = vadd.f32 %v6903, %v6924
    %v6948 = vadd.f32 %v6904, %v6928
    %v6949 = vadd.f32 %v6905, %v6924
    %v6950 = vadd.f32 %v6906, %v6928
    %v6951 = vadd.f32 %v6907, %v6924
    %v6952 = vadd.f32 %v6908, %v6928
    %v6953 = vadd.f32 %v6909, %v6924
    %v6954 = vadd.f32 %v6910, %v6928
    %v6955 = vadd.f32 %v6911, %v6924
    %v6956 = vadd.f32 %v6912, %v6928
    %v6957 = vadd.f32 %v6913, %v6924
    %v6958 = vadd.f32 %v6914, %v6928
    %v6959 = vadd.f32 %v6915, %v6924
    %v6960 = vadd.f32 %v6916, %v6928
    %v6961 = vadd.f32 %v6917, %v6924
    %v6962 = vadd.f32 %v6918, %v6928
    %v6963 = vmax.f32 %v6931, 0.0
    %v6964 = vmax.f32 %v6932, 0.0
    %v6965 = vmax.f32 %v6933, 0.0
    %v6966 = vmax.f32 %v6934, 0.0
    %v6967 = vmax.f32 %v6935, 0.0
    %v6968 = vmax.f32 %v6936, 0.0
    %v6969 = vmax.f32 %v6937, 0.0
    %v6970 = vmax.f32 %v6938, 0.0
    %v6971 = vmax.f32 %v6939, 0.0
    %v6972 = vmax.f32 %v6940, 0.0
    %v6973 = vmax.f32 %v6941, 0.0
    %v6974 = vmax.f32 %v6942, 0.0
    %v6975 = vmax.f32 %v6943, 0.0
    %v6976 = vmax.f32 %v6944, 0.0
    %v6977 = vmax.f32 %v6945, 0.0
    %v6978 = vmax.f32 %v6946, 0.0
    %v6979 = vmax.f32 %v6947, 0.0
    %v6980 = vmax.f32 %v6948, 0.0
    %v6981 = vmax.f32 %v6949, 0.0
    %v6982 = vmax.f32 %v6950, 0.0
    %v6983 = vmax.f32 %v6951, 0.0
    %v6984 = vmax.f32 %v6952, 0.0
    %v6985 = vmax.f32 %v6953, 0.0
    %v6986 = vmax.f32 %v6954, 0.0
    %v6987 = vmax.f32 %v6955, 0.0
    %v6988 = vmax.f32 %v6956, 0.0
    %v6989 = vmax.f32 %v6957, 0.0
    %v6990 = vmax.f32 %v6958, 0.0
    %v6991 = vmax.f32 %v6959, 0.0
    %v6992 = vmax.f32 %v6960, 0.0
    %v6993 = vmax.f32 %v6961, 0.0
    %v6994 = vmax.f32 %v6962, 0.0
    %v6995 = vpack.c.bf16 %v6965, %v6963
    %v6996 = vpack.c.bf16 %v6966, %v6964
    %v6997 = vpack.c.bf16 %v6969, %v6967
    %v6998 = vpack.c.bf16 %v6970, %v6968
    %v6999 = vpack.c.bf16 %v6973, %v6971
    %v7000 = vpack.c.bf16 %v6974, %v6972
    %v7001 = vpack.c.bf16 %v6977, %v6975
    %v7002 = vpack.c.bf16 %v6978, %v6976
    %v7003 = vpack.c.bf16 %v6981, %v6979
    %v7004 = vpack.c.bf16 %v6982, %v6980
    %v7005 = vpack.c.bf16 %v6985, %v6983
    %v7006 = vpack.c.bf16 %v6986, %v6984
    %v7007 = vpack.c.bf16 %v6989, %v6987
    %v7008 = vpack.c.bf16 %v6990, %v6988
    %v7009 = vpack.c.bf16 %v6993, %v6991
    %v7010 = vpack.c.bf16 %v6994, %v6992
    %v7011 = vlaneseq
    %v7012 = vshrl.u32 %v7011, 7
    %v7013 = vadd.s32 %v7012, 8
    %v7014 = vadd.s32 %v7012, 16
    %v7015 = vadd.s32 %v7012, 24
    %v7016 = vlaneseq
    %v7017 = vand.u32 %v7016, 127
    %v7018 = vshra.s32 %v7012, 4
    %v7019 = vshra.s32 %v7013, 4
    %v7020 = vshra.s32 %v7014, 4
    %v7021 = vshra.s32 %v7015, 4
    %v7022 = vand.u32 %v7012, 15
    %v7023 = vand.u32 %v7013, 15
    %v7024 = vand.u32 %v7014, 15
    %v7025 = vand.u32 %v7015, 15
    %v7026 = vshra.s32 %v7022, 2
    %v7027 = vshra.s32 %v7023, 2
    %v7028 = vshra.s32 %v7024, 2
    %v7029 = vshra.s32 %v7025, 2
    %v7030 = vand.u32 %v7022, 3
    %v7031 = vand.u32 %v7023, 3
    %v7032 = vand.u32 %v7024, 3
    %v7033 = vand.u32 %v7025, 3
    %v7034 = vmul.u32 %v7026, 2
    %v7035 = vmul.u32 %v7027, 2
    %v7036 = vmul.u32 %v7028, 2
    %v7037 = vmul.u32 %v7029, 2
    %v7038 = vsub.s32 %v7034, 1
    %v7039 = vsub.s32 %v7035, 1
    %v7040 = vsub.s32 %v7036, 1
    %v7041 = vsub.s32 %v7037, 1
    %v7042 = vmul.u32 %v7030, 2
    %v7043 = vmul.u32 %v7031, 2
    %v7044 = vmul.u32 %v7032, 2
    %v7045 = vmul.u32 %v7033, 2
    %v7046 = vsub.s32 %v7042, 1
    %v7047 = vsub.s32 %v7043, 1
    %v7048 = vsub.s32 %v7044, 1
    %v7049 = vsub.s32 %v7045, 1
    %vm7050 = vcmp.ge.s32.totalorder %v7038, 0
    %vm7051 = vcmp.ge.s32.totalorder %v7039, 0
    %vm7052 = vcmp.ge.s32.totalorder %v7040, 0
    %vm7053 = vcmp.ge.s32.totalorder %v7041, 0
    %vm7054 = vcmp.lt.s32.totalorder %v7038, 8
    %vm7055 = vcmp.lt.s32.totalorder %v7039, 8
    %vm7056 = vcmp.lt.s32.totalorder %v7040, 8
    %vm7057 = vcmp.lt.s32.totalorder %v7041, 8
    %vm7058 = vmand %vm7050, %vm7054
    %vm7059 = vmand %vm7051, %vm7055
    %vm7060 = vmand %vm7052, %vm7056
    %vm7061 = vmand %vm7053, %vm7057
    %vm7062 = vcmp.ge.s32.totalorder %v7046, 0
    %vm7063 = vcmp.ge.s32.totalorder %v7047, 0
    %vm7064 = vcmp.ge.s32.totalorder %v7048, 0
    %vm7065 = vcmp.ge.s32.totalorder %v7049, 0
    %vm7066 = vmand %vm7058, %vm7062
    %vm7067 = vmand %vm7059, %vm7063
    %vm7068 = vmand %vm7060, %vm7064
    %vm7069 = vmand %vm7061, %vm7065
    %vm7070 = vcmp.lt.s32.totalorder %v7046, 8
    %vm7071 = vcmp.lt.s32.totalorder %v7047, 8
    %vm7072 = vcmp.lt.s32.totalorder %v7048, 8
    %vm7073 = vcmp.lt.s32.totalorder %v7049, 8
    %vm7074 = vmand %vm7066, %vm7070
    %vm7075 = vmand %vm7067, %vm7071
    %vm7076 = vmand %vm7068, %vm7072
    %vm7077 = vmand %vm7069, %vm7073
    %v7078 = vmul.u32 %v7018, 64
    %v7079 = vmul.u32 %v7019, 64
    %v7080 = vmul.u32 %v7020, 64
    %v7081 = vmul.u32 %v7021, 64
    %v7082 = vmul.u32 %v7038, 8
    %v7083 = vmul.u32 %v7039, 8
    %v7084 = vmul.u32 %v7040, 8
    %v7085 = vmul.u32 %v7041, 8
    %v7086 = vadd.s32 %v7078, %v7082
    %v7087 = vadd.s32 %v7079, %v7083
    %v7088 = vadd.s32 %v7080, %v7084
    %v7089 = vadd.s32 %v7081, %v7085
    %v7090 = vadd.s32 %v7086, %v7046
    %v7091 = vadd.s32 %v7087, %v7047
    %v7092 = vadd.s32 %v7088, %v7048
    %v7093 = vadd.s32 %v7089, %v7049
    %vm7094 = vcmp.eq.s32.totalorder %v7017, %v7090
    %vm7095 = vcmp.eq.s32.totalorder %v7017, %v7091
    %vm7096 = vcmp.eq.s32.totalorder %v7017, %v7092
    %vm7097 = vcmp.eq.s32.totalorder %v7017, %v7093
    %vm7098 = vmand %vm7074, %vm7094
    %vm7099 = vmand %vm7075, %vm7095
    %vm7100 = vmand %vm7076, %vm7096
    %vm7101 = vmand %vm7077, %vm7097
    %v7102 = vsel %vm7098, 1.0, 0.0
    %v7103 = vsel %vm7099, 1.0, 0.0
    %v7104 = vsel %vm7100, 1.0, 0.0
    %v7105 = vsel %vm7101, 1.0, 0.0
    %v7106 = vpack.c.bf16 %v7103, %v7102
    %v7107 = vpack.c.bf16 %v7105, %v7104
    %7108 = vmatprep.subr.bf16.mxu0 %v6996
    %7109 = vmatpush1.bf16.msra.mxu0 %v6995
    %7110 = vmatprep.subr.bf16.mxu0 %v6998
    %7111 = vmatpush1.bf16.msra.mxu0 %v6997
    %7112 = vmatprep.subr.bf16.mxu0 %v7000
    %7113 = vmatpush1.bf16.msra.mxu0 %v6999
    %7114 = vmatprep.subr.bf16.mxu0 %v7002
    %7115 = vmatpush1.bf16.msra.mxu0 %v7001
    %7116 = vmatprep.subr.bf16.mxu0 %v7004
    %7117 = vmatpush1.bf16.msra.mxu0 %v7003
    %7118 = vmatprep.subr.bf16.mxu0 %v7006
    %7119 = vmatpush1.bf16.msra.mxu0 %v7005
    %7120 = vmatprep.subr.bf16.mxu0 %v7008
    %7121 = vmatpush1.bf16.msra.mxu0 %v7007
    %7122 = vmatprep.subr.bf16.mxu0 %v7010
    %7123 = vmatpush1.bf16.msra.mxu0 %v7009
    %7124 = vmatprep.subr.bf16.mxu0 0
    %7125 = vmatpush1.bf16.msra.mxu0 0
    %7126 = vmatprep.subr.bf16.mxu0 0
    %7127 = vmatpush1.bf16.msra.mxu0 0
    %7128 = vmatprep.subr.bf16.mxu0 0
    %7129 = vmatpush1.bf16.msra.mxu0 0
    %7130 = vmatprep.subr.bf16.mxu0 0
    %7131 = vmatpush1.bf16.msra.mxu0 0
    %7132 = vmatprep.subr.bf16.mxu0 0
    %7133 = vmatpush1.bf16.msra.mxu0 0
    %7134 = vmatprep.subr.bf16.mxu0 0
    %7135 = vmatpush1.bf16.msra.mxu0 0
    %7136 = vmatprep.subr.bf16.mxu0 0
    %7137 = vmatpush1.bf16.msra.mxu0 0
    %7138 = vmatprep.subr.bf16.mxu0 0
    %7139 = vmatpush1.bf16.msra.mxu0 0
    %7140 = vmatprep.mubr.bf16.mxu0 0
    %7141 = vmatmul.mubr.bf16.gmra.mrb[0].mxu0 %v7106
    %v7142 = vpop.f32.mrb[0].mxu0
    %v7143 = vadd.f32 0.0, %v7142
    %v7144 = vpop.f32.mrb[0].mxu0
    %v7145 = vadd.f32 0.0, %v7144
    %v7146 = vpop.f32.mrb[0].mxu0
    %v7147 = vadd.f32 0.0, %v7146
    %v7148 = vpop.f32.mrb[0].mxu0
    %v7149 = vadd.f32 0.0, %v7148
    %7150 = vmatprep.mubr.bf16.mxu0 0
    %7151 = vmatmul.mubr.bf16.gmra.mrb[0].mxu0 %v7107
    %v7152 = vpop.f32.mrb[0].mxu0
    %v7153 = vadd.f32 0.0, %v7152
    %v7154 = vpop.f32.mrb[0].mxu0
    %v7155 = vadd.f32 0.0, %v7154
    %v7156 = vpop.f32.mrb[0].mxu0
    %v7157 = vadd.f32 0.0, %v7156
    %v7158 = vpop.f32.mrb[0].mxu0
    %v7159 = vadd.f32 0.0, %v7158
    %7160 = vdwg.mxu0
    %v7161 = vpack.c.bf16 %v7147, %v7143
    %v7162 = vpack.c.bf16 %v7149, %v7145
    %v7163 = vpack.c.bf16 %v7157, %v7153
    %v7164 = vpack.c.bf16 %v7159, %v7155
    %v7165 = vld [vmem:[%s3] sm:$0xf]
    %v7166 = vld [vmem:[%s3 + $0x4] sm:$0xf]
    %v7167 = vld [vmem:[%s3 + $0x8] sm:$0xf]
    %v7168 = vld [vmem:[%s3 + $0xc] sm:$0xf]
    %v7169 = vld [vmem:[%s3 + $0x10] sm:$0xf]
    %v7170 = vld [vmem:[%s3 + $0x14] sm:$0xf]
    %v7171 = vld [vmem:[%s3 + $0x18] sm:$0xf]
    %v7172 = vld [vmem:[%s3 + $0x1c] sm:$0xf]
    %v7173 = vld [vmem:[%s3 + $0x20] sm:$0xf]
    %v7174 = vld [vmem:[%s3 + $0x24] sm:$0xf]
    %v7175 = vld [vmem:[%s3 + $0x28] sm:$0xf]
    %v7176 = vld [vmem:[%s3 + $0x2c] sm:$0xf]
    %v7177 = vld [vmem:[%s3 + $0x30] sm:$0xf]
    %v7178 = vld [vmem:[%s3 + $0x34] sm:$0xf]
    %v7179 = vld [vmem:[%s3 + $0x38] sm:$0xf]
    %v7180 = vld [vmem:[%s3 + $0x3c] sm:$0xf]
    %v7181 = vld [vmem:[%s3 + $0x40] sm:$0xf]
    %v7182 = vld [vmem:[%s3 + $0x44] sm:$0xf]
    %v7183 = vld [vmem:[%s3 + $0x48] sm:$0xf]
    %v7184 = vld [vmem:[%s3 + $0x4c] sm:$0xf]
    %v7185 = vld [vmem:[%s3 + $0x50] sm:$0xf]
    %v7186 = vld [vmem:[%s3 + $0x54] sm:$0xf]
    %v7187 = vld [vmem:[%s3 + $0x58] sm:$0xf]
    %v7188 = vld [vmem:[%s3 + $0x5c] sm:$0xf]
    %v7189 = vld [vmem:[%s3 + $0x60] sm:$0xf]
    %v7190 = vld [vmem:[%s3 + $0x64] sm:$0xf]
    %v7191 = vld [vmem:[%s3 + $0x68] sm:$0xf]
    %v7192 = vld [vmem:[%s3 + $0x6c] sm:$0xf]
    %v7193 = vld [vmem:[%s3 + $0x70] sm:$0xf]
    %v7194 = vld [vmem:[%s3 + $0x74] sm:$0xf]
    %v7195 = vld [vmem:[%s3 + $0x78] sm:$0xf]
    %v7196 = vld [vmem:[%s3 + $0x7c] sm:$0xf]
    %vm7197 = vcmp.ge.s32.totalorder %v7042, 0
    %vm7198 = vcmp.ge.s32.totalorder %v7043, 0
    %vm7199 = vcmp.ge.s32.totalorder %v7044, 0
    %vm7200 = vcmp.ge.s32.totalorder %v7045, 0
    %vm7201 = vmand %vm7058, %vm7197
    %vm7202 = vmand %vm7059, %vm7198
    %vm7203 = vmand %vm7060, %vm7199
    %vm7204 = vmand %vm7061, %vm7200
    %vm7205 = vcmp.lt.s32.totalorder %v7042, 8
    %vm7206 = vcmp.lt.s32.totalorder %v7043, 8
    %vm7207 = vcmp.lt.s32.totalorder %v7044, 8
    %vm7208 = vcmp.lt.s32.totalorder %v7045, 8
    %vm7209 = vmand %vm7201, %vm7205
    %vm7210 = vmand %vm7202, %vm7206
    %vm7211 = vmand %vm7203, %vm7207
    %vm7212 = vmand %vm7204, %vm7208
    %v7213 = vadd.s32 %v7086, %v7042
    %v7214 = vadd.s32 %v7087, %v7043
    %v7215 = vadd.s32 %v7088, %v7044
    %v7216 = vadd.s32 %v7089, %v7045
    %vm7217 = vcmp.eq.s32.totalorder %v7017, %v7213
    %vm7218 = vcmp.eq.s32.totalorder %v7017, %v7214
    %vm7219 = vcmp.eq.s32.totalorder %v7017, %v7215
    %vm7220 = vcmp.eq.s32.totalorder %v7017, %v7216
    %vm7221 = vmand %vm7209, %vm7217
    %vm7222 = vmand %vm7210, %vm7218
    %vm7223 = vmand %vm7211, %vm7219
    %vm7224 = vmand %vm7212, %vm7220
    %v7225 = vsel %vm7221, 1.0, 0.0
    %v7226 = vsel %vm7222, 1.0, 0.0
    %v7227 = vsel %vm7223, 1.0, 0.0
    %v7228 = vsel %vm7224, 1.0, 0.0
    %v7229 = vpack.c.bf16 %v7226, %v7225
    %v7230 = vpack.c.bf16 %v7228, %v7227
    %7231 = vmatprep.subr.bf16.mxu0 %v6996
    %7232 = vmatpush1.bf16.msra.mxu0 %v6995
    %7233 = vmatprep.subr.bf16.mxu0 %v6998
    %7234 = vmatpush1.bf16.msra.mxu0 %v6997
    %7235 = vmatprep.subr.bf16.mxu0 %v7000
    %7236 = vmatpush1.bf16.msra.mxu0 %v6999
    %7237 = vmatprep.subr.bf16.mxu0 %v7002
    %7238 = vmatpush1.bf16.msra.mxu0 %v7001
    %7239 = vmatprep.subr.bf16.mxu0 %v7004
    %7240 = vmatpush1.bf16.msra.mxu0 %v7003
    %7241 = vmatprep.subr.bf16.mxu0 %v7006
    %7242 = vmatpush1.bf16.msra.mxu0 %v7005
    %7243 = vmatprep.subr.bf16.mxu0 %v7008
    %7244 = vmatpush1.bf16.msra.mxu0 %v7007
    %7245 = vmatprep.subr.bf16.mxu0 %v7010
    %7246 = vmatpush1.bf16.msra.mxu0 %v7009
    %7247 = vmatprep.subr.bf16.mxu0 0
    %7248 = vmatpush1.bf16.msra.mxu0 0
    %7249 = vmatprep.subr.bf16.mxu0 0
    %7250 = vmatpush1.bf16.msra.mxu0 0
    %7251 = vmatprep.subr.bf16.mxu0 0
    %7252 = vmatpush1.bf16.msra.mxu0 0
    %7253 = vmatprep.subr.bf16.mxu0 0
    %7254 = vmatpush1.bf16.msra.mxu0 0
    %7255 = vmatprep.subr.bf16.mxu0 0
    %7256 = vmatpush1.bf16.msra.mxu0 0
    %7257 = vmatprep.subr.bf16.mxu0 0
    %7258 = vmatpush1.bf16.msra.mxu0 0
    %7259 = vmatprep.subr.bf16.mxu0 0
    %7260 = vmatpush1.bf16.msra.mxu0 0
    %7261 = vmatprep.subr.bf16.mxu0 0
    %7262 = vmatpush1.bf16.msra.mxu0 0
    %7263 = vmatprep.mubr.bf16.mxu0 0
    %7264 = vmatmul.mubr.bf16.gmra.mrb[0].mxu0 %v7229
    %v7265 = vpop.f32.mrb[0].mxu0
    %v7266 = vadd.f32 0.0, %v7265
    %v7267 = vpop.f32.mrb[0].mxu0
    %v7268 = vadd.f32 0.0, %v7267
    %v7269 = vpop.f32.mrb[0].mxu0
    %v7270 = vadd.f32 0.0, %v7269
    %v7271 = vpop.f32.mrb[0].mxu0
    %v7272 = vadd.f32 0.0, %v7271
    %7273 = vmatprep.mubr.bf16.mxu0 0
    %7274 = vmatmul.mubr.bf16.gmra.mrb[0].mxu0 %v7230
    %v7275 = vpop.f32.mrb[0].mxu0
    %v7276 = vadd.f32 0.0, %v7275
    %v7277 = vpop.f32.mrb[0].mxu0
    %v7278 = vadd.f32 0.0, %v7277
    %v7279 = vpop.f32.mrb[0].mxu0
    %v7280 = vadd.f32 0.0, %v7279
    %v7281 = vpop.f32.mrb[0].mxu0
    %v7282 = vadd.f32 0.0, %v7281
    %7283 = vdwg.mxu0
    %v7284 = vpack.c.bf16 %v7270, %v7266
    %v7285 = vpack.c.bf16 %v7272, %v7268
    %v7286 = vpack.c.bf16 %v7280, %v7276
    %v7287 = vpack.c.bf16 %v7282, %v7278
    %s7288 = scalar_lea.vmem %s3, 128
    %v7289 = vld [vmem:[%s7288] sm:$0xf]
    %v7290 = vld [vmem:[%s7288 + $0x4] sm:$0xf]
    %v7291 = vld [vmem:[%s7288 + $0x8] sm:$0xf]
    %v7292 = vld [vmem:[%s7288 + $0xc] sm:$0xf]
    %v7293 = vld [vmem:[%s7288 + $0x10] sm:$0xf]
    %v7294 = vld [vmem:[%s7288 + $0x14] sm:$0xf]
    %v7295 = vld [vmem:[%s7288 + $0x18] sm:$0xf]
    %v7296 = vld [vmem:[%s7288 + $0x1c] sm:$0xf]
    %v7297 = vld [vmem:[%s7288 + $0x20] sm:$0xf]
    %v7298 = vld [vmem:[%s7288 + $0x24] sm:$0xf]
    %v7299 = vld [vmem:[%s7288 + $0x28] sm:$0xf]
    %v7300 = vld [vmem:[%s7288 + $0x2c] sm:$0xf]
    %v7301 = vld [vmem:[%s7288 + $0x30] sm:$0xf]
    %v7302 = vld [vmem:[%s7288 + $0x34] sm:$0xf]
    %v7303 = vld [vmem:[%s7288 + $0x38] sm:$0xf]
    %v7304 = vld [vmem:[%s7288 + $0x3c] sm:$0xf]
    %v7305 = vld [vmem:[%s7288 + $0x40] sm:$0xf]
    %v7306 = vld [vmem:[%s7288 + $0x44] sm:$0xf]
    %v7307 = vld [vmem:[%s7288 + $0x48] sm:$0xf]
    %v7308 = vld [vmem:[%s7288 + $0x4c] sm:$0xf]
    %v7309 = vld [vmem:[%s7288 + $0x50] sm:$0xf]
    %v7310 = vld [vmem:[%s7288 + $0x54] sm:$0xf]
    %v7311 = vld [vmem:[%s7288 + $0x58] sm:$0xf]
    %v7312 = vld [vmem:[%s7288 + $0x5c] sm:$0xf]
    %v7313 = vld [vmem:[%s7288 + $0x60] sm:$0xf]
    %v7314 = vld [vmem:[%s7288 + $0x64] sm:$0xf]
    %v7315 = vld [vmem:[%s7288 + $0x68] sm:$0xf]
    %v7316 = vld [vmem:[%s7288 + $0x6c] sm:$0xf]
    %v7317 = vld [vmem:[%s7288 + $0x70] sm:$0xf]
    %v7318 = vld [vmem:[%s7288 + $0x74] sm:$0xf]
    %v7319 = vld [vmem:[%s7288 + $0x78] sm:$0xf]
    %v7320 = vld [vmem:[%s7288 + $0x7c] sm:$0xf]
    %v7353 = vunpack.c.l.b16 %v7289
    %v7354 = vunpack.c.l.b16 %v7290
    %v7355 = vunpack.c.l.b16 %v7291
    %v7356 = vunpack.c.l.b16 %v7292
    %v7357 = vunpack.c.l.b16 %v7293
    %v7358 = vunpack.c.l.b16 %v7294
    %v7359 = vunpack.c.l.b16 %v7295
    %v7360 = vunpack.c.l.b16 %v7296
    %v7361 = vunpack.c.l.b16 %v7297
    %v7362 = vunpack.c.l.b16 %v7298
    %v7363 = vunpack.c.l.b16 %v7299
    %v7364 = vunpack.c.l.b16 %v7300
    %v7365 = vunpack.c.l.b16 %v7301
    %v7366 = vunpack.c.l.b16 %v7302
    %v7367 = vunpack.c.l.b16 %v7303
    %v7368 = vunpack.c.l.b16 %v7304
    %v7369 = vunpack.c.l.b16 %v7305
    %v7370 = vunpack.c.l.b16 %v7306
    %v7371 = vunpack.c.l.b16 %v7307
    %v7372 = vunpack.c.l.b16 %v7308
    %v7373 = vunpack.c.l.b16 %v7309
    %v7374 = vunpack.c.l.b16 %v7310
    %v7375 = vunpack.c.l.b16 %v7311
    %v7376 = vunpack.c.l.b16 %v7312
    %v7377 = vunpack.c.l.b16 %v7313
    %v7378 = vunpack.c.l.b16 %v7314
    %v7379 = vunpack.c.l.b16 %v7315
    %v7380 = vunpack.c.l.b16 %v7316
    %v7381 = vunpack.c.l.b16 %v7317
    %v7382 = vunpack.c.l.b16 %v7318
    %v7383 = vunpack.c.l.b16 %v7319
    %v7384 = vunpack.c.l.b16 %v7320
    %v7385 = vpack.c.b16 %v7354, %v7353
    %v7386 = vpack.c.b16 %v7356, %v7355
    %v7387 = vpack.c.b16 %v7358, %v7357
    %v7388 = vpack.c.b16 %v7360, %v7359
    %v7389 = vpack.c.b16 %v7362, %v7361
    %v7390 = vpack.c.b16 %v7364, %v7363
    %v7391 = vpack.c.b16 %v7366, %v7365
    %v7392 = vpack.c.b16 %v7368, %v7367
    %v7393 = vpack.c.b16 %v7370, %v7369
    %v7394 = vpack.c.b16 %v7372, %v7371
    %v7395 = vpack.c.b16 %v7374, %v7373
    %v7396 = vpack.c.b16 %v7376, %v7375
    %v7397 = vpack.c.b16 %v7378, %v7377
    %v7398 = vpack.c.b16 %v7380, %v7379
    %v7399 = vpack.c.b16 %v7382, %v7381
    %v7400 = vpack.c.b16 %v7384, %v7383
    %7417 = vmatprep.subr.bf16.mxu0 0
    %7418 = vmatpush1.bf16.msra.mxu0 %v7385
    %7419 = vmatprep.subr.bf16.mxu0 0
    %7420 = vmatpush1.bf16.msra.mxu0 %v7386
    %7421 = vmatprep.subr.bf16.mxu0 0
    %7422 = vmatpush1.bf16.msra.mxu0 %v7387
    %7423 = vmatprep.subr.bf16.mxu0 0
    %7424 = vmatpush1.bf16.msra.mxu0 %v7388
    %7425 = vmatprep.subr.bf16.mxu0 0
    %7426 = vmatpush1.bf16.msra.mxu0 %v7389
    %7427 = vmatprep.subr.bf16.mxu0 0
    %7428 = vmatpush1.bf16.msra.mxu0 %v7390
    %7429 = vmatprep.subr.bf16.mxu0 0
    %7430 = vmatpush1.bf16.msra.mxu0 %v7391
    %7431 = vmatprep.subr.bf16.mxu0 0
    %7432 = vmatpush1.bf16.msra.mxu0 %v7392
    %7433 = vmatprep.subr.bf16.mxu0 0
    %7434 = vmatpush1.bf16.msra.mxu0 %v7393
    %7435 = vmatprep.subr.bf16.mxu0 0
    %7436 = vmatpush1.bf16.msra.mxu0 %v7394
    %7437 = vmatprep.subr.bf16.mxu0 0
    %7438 = vmatpush1.bf16.msra.mxu0 %v7395
    %7439 = vmatprep.subr.bf16.mxu0 0
    %7440 = vmatpush1.bf16.msra.mxu0 %v7396
    %7441 = vmatprep.subr.bf16.mxu0 0
    %7442 = vmatpush1.bf16.msra.mxu0 %v7397
    %7443 = vmatprep.subr.bf16.mxu0 0
    %7444 = vmatpush1.bf16.msra.mxu0 %v7398
    %7445 = vmatprep.subr.bf16.mxu0 0
    %7446 = vmatpush1.bf16.msra.mxu0 %v7399
    %7447 = vmatprep.subr.bf16.mxu0 0
    %7448 = vmatpush1.bf16.msra.mxu0 %v7400
    %7449 = vmatprep.mubr.bf16.mxu0 %v7285
    %7450 = vmatmul.mubr.bf16.gmra.mrb[0].mxu0 %v7284
    %v7451 = vpop.f32.mrb[0].mxu0
    %v7452 = vadd.f32 0.0, %v7451
    %v7453 = vpop.f32.mrb[0].mxu0
    %v7454 = vpop.f32.mrb[0].mxu0
    %v7455 = vadd.f32 0.0, %v7454
    %v7456 = vpop.f32.mrb[0].mxu0
    %7457 = vmatprep.mubr.bf16.mxu0 %v7287
    %7458 = vmatmul.mubr.bf16.gmra.mrb[0].mxu0 %v7286
    %v7459 = vpop.f32.mrb[0].mxu0
    %v7460 = vadd.f32 0.0, %v7459
    %v7461 = vpop.f32.mrb[0].mxu0
    %v7462 = vpop.f32.mrb[0].mxu0
    %v7463 = vadd.f32 0.0, %v7462
    %v7464 = vpop.f32.mrb[0].mxu0
    %7465 = vdwg.mxu0
    %v7498 = vunpack.c.l.b16 %v7165
    %v7499 = vunpack.c.l.b16 %v7166
    %v7500 = vunpack.c.l.b16 %v7167
    %v7501 = vunpack.c.l.b16 %v7168
    %v7502 = vunpack.c.l.b16 %v7169
    %v7503 = vunpack.c.l.b16 %v7170
    %v7504 = vunpack.c.l.b16 %v7171
    %v7505 = vunpack.c.l.b16 %v7172
    %v7506 = vunpack.c.l.b16 %v7173
    %v7507 = vunpack.c.l.b16 %v7174
    %v7508 = vunpack.c.l.b16 %v7175
    %v7509 = vunpack.c.l.b16 %v7176
    %v7510 = vunpack.c.l.b16 %v7177
    %v7511 = vunpack.c.l.b16 %v7178
    %v7512 = vunpack.c.l.b16 %v7179
    %v7513 = vunpack.c.l.b16 %v7180
    %v7514 = vunpack.c.l.b16 %v7181
    %v7515 = vunpack.c.l.b16 %v7182
    %v7516 = vunpack.c.l.b16 %v7183
    %v7517 = vunpack.c.l.b16 %v7184
    %v7518 = vunpack.c.l.b16 %v7185
    %v7519 = vunpack.c.l.b16 %v7186
    %v7520 = vunpack.c.l.b16 %v7187
    %v7521 = vunpack.c.l.b16 %v7188
    %v7522 = vunpack.c.l.b16 %v7189
    %v7523 = vunpack.c.l.b16 %v7190
    %v7524 = vunpack.c.l.b16 %v7191
    %v7525 = vunpack.c.l.b16 %v7192
    %v7526 = vunpack.c.l.b16 %v7193
    %v7527 = vunpack.c.l.b16 %v7194
    %v7528 = vunpack.c.l.b16 %v7195
    %v7529 = vunpack.c.l.b16 %v7196
    %v7530 = vpack.c.b16 %v7499, %v7498
    %v7531 = vpack.c.b16 %v7501, %v7500
    %v7532 = vpack.c.b16 %v7503, %v7502
    %v7533 = vpack.c.b16 %v7505, %v7504
    %v7534 = vpack.c.b16 %v7507, %v7506
    %v7535 = vpack.c.b16 %v7509, %v7508
    %v7536 = vpack.c.b16 %v7511, %v7510
    %v7537 = vpack.c.b16 %v7513, %v7512
    %v7538 = vpack.c.b16 %v7515, %v7514
    %v7539 = vpack.c.b16 %v7517, %v7516
    %v7540 = vpack.c.b16 %v7519, %v7518
    %v7541 = vpack.c.b16 %v7521, %v7520
    %v7542 = vpack.c.b16 %v7523, %v7522
    %v7543 = vpack.c.b16 %v7525, %v7524
    %v7544 = vpack.c.b16 %v7527, %v7526
    %v7545 = vpack.c.b16 %v7529, %v7528
    %7562 = vmatprep.subr.bf16.mxu0 0
    %7563 = vmatpush1.bf16.msra.mxu0 %v7530
    %7564 = vmatprep.subr.bf16.mxu0 0
    %7565 = vmatpush1.bf16.msra.mxu0 %v7531
    %7566 = vmatprep.subr.bf16.mxu0 0
    %7567 = vmatpush1.bf16.msra.mxu0 %v7532
    %7568 = vmatprep.subr.bf16.mxu0 0
    %7569 = vmatpush1.bf16.msra.mxu0 %v7533
    %7570 = vmatprep.subr.bf16.mxu0 0
    %7571 = vmatpush1.bf16.msra.mxu0 %v7534
    %7572 = vmatprep.subr.bf16.mxu0 0
    %7573 = vmatpush1.bf16.msra.mxu0 %v7535
    %7574 = vmatprep.subr.bf16.mxu0 0
    %7575 = vmatpush1.bf16.msra.mxu0 %v7536
    %7576 = vmatprep.subr.bf16.mxu0 0
    %7577 = vmatpush1.bf16.msra.mxu0 %v7537
    %7578 = vmatprep.subr.bf16.mxu0 0
    %7579 = vmatpush1.bf16.msra.mxu0 %v7538
    %7580 = vmatprep.subr.bf16.mxu0 0
    %7581 = vmatpush1.bf16.msra.mxu0 %v7539
    %7582 = vmatprep.subr.bf16.mxu0 0
    %7583 = vmatpush1.bf16.msra.mxu0 %v7540
    %7584 = vmatprep.subr.bf16.mxu0 0
    %7585 = vmatpush1.bf16.msra.mxu0 %v7541
    %7586 = vmatprep.subr.bf16.mxu0 0
    %7587 = vmatpush1.bf16.msra.mxu0 %v7542
    %7588 = vmatprep.subr.bf16.mxu0 0
    %7589 = vmatpush1.bf16.msra.mxu0 %v7543
    %7590 = vmatprep.subr.bf16.mxu0 0
    %7591 = vmatpush1.bf16.msra.mxu0 %v7544
    %7592 = vmatprep.subr.bf16.mxu0 0
    %7593 = vmatpush1.bf16.msra.mxu0 %v7545
    %7594 = vmatprep.mubr.bf16.mxu0 %v7162
    %7595 = vmatmul.mubr.bf16.gmra.mrb[0].mxu0 %v7161
    %v7596 = vpop.f32.mrb[0].mxu0
    %v7597 = vadd.f32 %v7452, %v7596
    %v7598 = vpop.f32.mrb[0].mxu0
    %v7599 = vpop.f32.mrb[0].mxu0
    %v7600 = vadd.f32 %v7455, %v7599
    %v7601 = vpop.f32.mrb[0].mxu0
    %7602 = vmatprep.mubr.bf16.mxu0 %v7164
    %7603 = vmatmul.mubr.bf16.gmra.mrb[0].mxu0 %v7163
    %v7604 = vpop.f32.mrb[0].mxu0
    %v7605 = vadd.f32 %v7460, %v7604
    %v7606 = vpop.f32.mrb[0].mxu0
    %v7607 = vpop.f32.mrb[0].mxu0
    %v7608 = vadd.f32 %v7463, %v7607
    %v7609 = vpop.f32.mrb[0].mxu0
    %7610 = vdwg.mxu0
    %v7611 = vadd.s32 %v7046, 2
    %v7612 = vadd.s32 %v7047, 2
    %v7613 = vadd.s32 %v7048, 2
    %v7614 = vadd.s32 %v7049, 2
    %vm7615 = vcmp.ge.s32.totalorder %v7611, 0
    %vm7616 = vcmp.ge.s32.totalorder %v7612, 0
    %vm7617 = vcmp.ge.s32.totalorder %v7613, 0
    %vm7618 = vcmp.ge.s32.totalorder %v7614, 0
    %vm7619 = vmand %vm7058, %vm7615
    %vm7620 = vmand %vm7059, %vm7616
    %vm7621 = vmand %vm7060, %vm7617
    %vm7622 = vmand %vm7061, %vm7618
    %vm7623 = vcmp.lt.s32.totalorder %v7611, 8
    %vm7624 = vcmp.lt.s32.totalorder %v7612, 8
    %vm7625 = vcmp.lt.s32.totalorder %v7613, 8
    %vm7626 = vcmp.lt.s32.totalorder %v7614, 8
    %vm7627 = vmand %vm7619, %vm7623
    %vm7628 = vmand %vm7620, %vm7624
    %vm7629 = vmand %vm7621, %vm7625
    %vm7630 = vmand %vm7622, %vm7626
    %v7631 = vadd.s32 %v7086, %v7611
    %v7632 = vadd.s32 %v7087, %v7612
    %v7633 = vadd.s32 %v7088, %v7613
    %v7634 = vadd.s32 %v7089, %v7614
    %vm7635 = vcmp.eq.s32.totalorder %v7017, %v7631
    %vm7636 = vcmp.eq.s32.totalorder %v7017, %v7632
    %vm7637 = vcmp.eq.s32.totalorder %v7017, %v7633
    %vm7638 = vcmp.eq.s32.totalorder %v7017, %v7634
    %vm7639 = vmand %vm7627, %vm7635
    %vm7640 = vmand %vm7628, %vm7636
    %vm7641 = vmand %vm7629, %vm7637
    %vm7642 = vmand %vm7630, %vm7638
    %v7643 = vsel %vm7639, 1.0, 0.0
    %v7644 = vsel %vm7640, 1.0, 0.0
    %v7645 = vsel %vm7641, 1.0, 0.0
    %v7646 = vsel %vm7642, 1.0, 0.0
    %v7647 = vpack.c.bf16 %v7644, %v7643
    %v7648 = vpack.c.bf16 %v7646, %v7645
    %7649 = vmatprep.subr.bf16.mxu0 %v6996
    %7650 = vmatpush1.bf16.msra.mxu0 %v6995
    %7651 = vmatprep.subr.bf16.mxu0 %v6998
    %7652 = vmatpush1.bf16.msra.mxu0 %v6997
    %7653 = vmatprep.subr.bf16.mxu0 %v7000
    %7654 = vmatpush1.bf16.msra.mxu0 %v6999
    %7655 = vmatprep.subr.bf16.mxu0 %v7002
    %7656 = vmatpush1.bf16.msra.mxu0 %v7001
    %7657 = vmatprep.subr.bf16.mxu0 %v7004
    %7658 = vmatpush1.bf16.msra.mxu0 %v7003
    %7659 = vmatprep.subr.bf16.mxu0 %v7006
    %7660 = vmatpush1.bf16.msra.mxu0 %v7005
    %7661 = vmatprep.subr.bf16.mxu0 %v7008
    %7662 = vmatpush1.bf16.msra.mxu0 %v7007
    %7663 = vmatprep.subr.bf16.mxu0 %v7010
    %7664 = vmatpush1.bf16.msra.mxu0 %v7009
    %7665 = vmatprep.subr.bf16.mxu0 0
    %7666 = vmatpush1.bf16.msra.mxu0 0
    %7667 = vmatprep.subr.bf16.mxu0 0
    %7668 = vmatpush1.bf16.msra.mxu0 0
    %7669 = vmatprep.subr.bf16.mxu0 0
    %7670 = vmatpush1.bf16.msra.mxu0 0
    %7671 = vmatprep.subr.bf16.mxu0 0
    %7672 = vmatpush1.bf16.msra.mxu0 0
    %7673 = vmatprep.subr.bf16.mxu0 0
    %7674 = vmatpush1.bf16.msra.mxu0 0
    %7675 = vmatprep.subr.bf16.mxu0 0
    %7676 = vmatpush1.bf16.msra.mxu0 0
    %7677 = vmatprep.subr.bf16.mxu0 0
    %7678 = vmatpush1.bf16.msra.mxu0 0
    %7679 = vmatprep.subr.bf16.mxu0 0
    %7680 = vmatpush1.bf16.msra.mxu0 0
    %7681 = vmatprep.mubr.bf16.mxu0 0
    %7682 = vmatmul.mubr.bf16.gmra.mrb[0].mxu0 %v7647
    %v7683 = vpop.f32.mrb[0].mxu0
    %v7684 = vadd.f32 0.0, %v7683
    %v7685 = vpop.f32.mrb[0].mxu0
    %v7686 = vadd.f32 0.0, %v7685
    %v7687 = vpop.f32.mrb[0].mxu0
    %v7688 = vadd.f32 0.0, %v7687
    %v7689 = vpop.f32.mrb[0].mxu0
    %v7690 = vadd.f32 0.0, %v7689
    %7691 = vmatprep.mubr.bf16.mxu0 0
    %7692 = vmatmul.mubr.bf16.gmra.mrb[0].mxu0 %v7648
    %v7693 = vpop.f32.mrb[0].mxu0
    %v7694 = vadd.f32 0.0, %v7693
    %v7695 = vpop.f32.mrb[0].mxu0
    %v7696 = vadd.f32 0.0, %v7695
    %v7697 = vpop.f32.mrb[0].mxu0
    %v7698 = vadd.f32 0.0, %v7697
    %v7699 = vpop.f32.mrb[0].mxu0
    %v7700 = vadd.f32 0.0, %v7699
    %7701 = vdwg.mxu0
    %v7702 = vpack.c.bf16 %v7688, %v7684
    %v7703 = vpack.c.bf16 %v7690, %v7686
    %v7704 = vpack.c.bf16 %v7698, %v7694
    %v7705 = vpack.c.bf16 %v7700, %v7696
    %s7706 = scalar_lea.vmem %s3, 256
    %v7707 = vld [vmem:[%s7706] sm:$0xf]
    %v7708 = vld [vmem:[%s7706 + $0x4] sm:$0xf]
    %v7709 = vld [vmem:[%s7706 + $0x8] sm:$0xf]
    %v7710 = vld [vmem:[%s7706 + $0xc] sm:$0xf]
    %v7711 = vld [vmem:[%s7706 + $0x10] sm:$0xf]
    %v7712 = vld [vmem:[%s7706 + $0x14] sm:$0xf]
    %v7713 = vld [vmem:[%s7706 + $0x18] sm:$0xf]
    %v7714 = vld [vmem:[%s7706 + $0x1c] sm:$0xf]
    %v7715 = vld [vmem:[%s7706 + $0x20] sm:$0xf]
    %v7716 = vld [vmem:[%s7706 + $0x24] sm:$0xf]
    %v7717 = vld [vmem:[%s7706 + $0x28] sm:$0xf]
    %v7718 = vld [vmem:[%s7706 + $0x2c] sm:$0xf]
    %v7719 = vld [vmem:[%s7706 + $0x30] sm:$0xf]
    %v7720 = vld [vmem:[%s7706 + $0x34] sm:$0xf]
    %v7721 = vld [vmem:[%s7706 + $0x38] sm:$0xf]
    %v7722 = vld [vmem:[%s7706 + $0x3c] sm:$0xf]
    %v7723 = vld [vmem:[%s7706 + $0x40] sm:$0xf]
    %v7724 = vld [vmem:[%s7706 + $0x44] sm:$0xf]
    %v7725 = vld [vmem:[%s7706 + $0x48] sm:$0xf]
    %v7726 = vld [vmem:[%s7706 + $0x4c] sm:$0xf]
    %v7727 = vld [vmem:[%s7706 + $0x50] sm:$0xf]
    %v7728 = vld [vmem:[%s7706 + $0x54] sm:$0xf]
    %v7729 = vld [vmem:[%s7706 + $0x58] sm:$0xf]
    %v7730 = vld [vmem:[%s7706 + $0x5c] sm:$0xf]
    %v7731 = vld [vmem:[%s7706 + $0x60] sm:$0xf]
    %v7732 = vld [vmem:[%s7706 + $0x64] sm:$0xf]
    %v7733 = vld [vmem:[%s7706 + $0x68] sm:$0xf]
    %v7734 = vld [vmem:[%s7706 + $0x6c] sm:$0xf]
    %v7735 = vld [vmem:[%s7706 + $0x70] sm:$0xf]
    %v7736 = vld [vmem:[%s7706 + $0x74] sm:$0xf]
    %v7737 = vld [vmem:[%s7706 + $0x78] sm:$0xf]
    %v7738 = vld [vmem:[%s7706 + $0x7c] sm:$0xf]
    %v7771 = vunpack.c.l.b16 %v7707
    %v7772 = vunpack.c.l.b16 %v7708
    %v7773 = vunpack.c.l.b16 %v7709
    %v7774 = vunpack.c.l.b16 %v7710
    %v7775 = vunpack.c.l.b16 %v7711
    %v7776 = vunpack.c.l.b16 %v7712
    %v7777 = vunpack.c.l.b16 %v7713
    %v7778 = vunpack.c.l.b16 %v7714
    %v7779 = vunpack.c.l.b16 %v7715
    %v7780 = vunpack.c.l.b16 %v7716
    %v7781 = vunpack.c.l.b16 %v7717
    %v7782 = vunpack.c.l.b16 %v7718
    %v7783 = vunpack.c.l.b16 %v7719
    %v7784 = vunpack.c.l.b16 %v7720
    %v7785 = vunpack.c.l.b16 %v7721
    %v7786 = vunpack.c.l.b16 %v7722
    %v7787 = vunpack.c.l.b16 %v7723
    %v7788 = vunpack.c.l.b16 %v7724
    %v7789 = vunpack.c.l.b16 %v7725
    %v7790 = vunpack.c.l.b16 %v7726
    %v7791 = vunpack.c.l.b16 %v7727
    %v7792 = vunpack.c.l.b16 %v7728
    %v7793 = vunpack.c.l.b16 %v7729
    %v7794 = vunpack.c.l.b16 %v7730
    %v7795 = vunpack.c.l.b16 %v7731
    %v7796 = vunpack.c.l.b16 %v7732
    %v7797 = vunpack.c.l.b16 %v7733
    %v7798 = vunpack.c.l.b16 %v7734
    %v7799 = vunpack.c.l.b16 %v7735
    %v7800 = vunpack.c.l.b16 %v7736
    %v7801 = vunpack.c.l.b16 %v7737
    %v7802 = vunpack.c.l.b16 %v7738
    %v7803 = vpack.c.b16 %v7772, %v7771
    %v7804 = vpack.c.b16 %v7774, %v7773
    %v7805 = vpack.c.b16 %v7776, %v7775
    %v7806 = vpack.c.b16 %v7778, %v7777
    %v7807 = vpack.c.b16 %v7780, %v7779
    %v7808 = vpack.c.b16 %v7782, %v7781
    %v7809 = vpack.c.b16 %v7784, %v7783
    %v7810 = vpack.c.b16 %v7786, %v7785
    %v7811 = vpack.c.b16 %v7788, %v7787
    %v7812 = vpack.c.b16 %v7790, %v7789
    %v7813 = vpack.c.b16 %v7792, %v7791
    %v7814 = vpack.c.b16 %v7794, %v7793
    %v7815 = vpack.c.b16 %v7796, %v7795
    %v7816 = vpack.c.b16 %v7798, %v7797
    %v7817 = vpack.c.b16 %v7800, %v7799
    %v7818 = vpack.c.b16 %v7802, %v7801
    %7835 = vmatprep.subr.bf16.mxu0 0
    %7836 = vmatpush1.bf16.msra.mxu0 %v7803
    %7837 = vmatprep.subr.bf16.mxu0 0
    %7838 = vmatpush1.bf16.msra.mxu0 %v7804
    %7839 = vmatprep.subr.bf16.mxu0 0
    %7840 = vmatpush1.bf16.msra.mxu0 %v7805
    %7841 = vmatprep.subr.bf16.mxu0 0
    %7842 = vmatpush1.bf16.msra.mxu0 %v7806
    %7843 = vmatprep.subr.bf16.mxu0 0
    %7844 = vmatpush1.bf16.msra.mxu0 %v7807
    %7845 = vmatprep.subr.bf16.mxu0 0
    %7846 = vmatpush1.bf16.msra.mxu0 %v7808
    %7847 = vmatprep.subr.bf16.mxu0 0
    %7848 = vmatpush1.bf16.msra.mxu0 %v7809
    %7849 = vmatprep.subr.bf16.mxu0 0
    %7850 = vmatpush1.bf16.msra.mxu0 %v7810
    %7851 = vmatprep.subr.bf16.mxu0 0
    %7852 = vmatpush1.bf16.msra.mxu0 %v7811
    %7853 = vmatprep.subr.bf16.mxu0 0
    %7854 = vmatpush1.bf16.msra.mxu0 %v7812
    %7855 = vmatprep.subr.bf16.mxu0 0
    %7856 = vmatpush1.bf16.msra.mxu0 %v7813
    %7857 = vmatprep.subr.bf16.mxu0 0
    %7858 = vmatpush1.bf16.msra.mxu0 %v7814
    %7859 = vmatprep.subr.bf16.mxu0 0
    %7860 = vmatpush1.bf16.msra.mxu0 %v7815
    %7861 = vmatprep.subr.bf16.mxu0 0
    %7862 = vmatpush1.bf16.msra.mxu0 %v7816
    %7863 = vmatprep.subr.bf16.mxu0 0
    %7864 = vmatpush1.bf16.msra.mxu0 %v7817
    %7865 = vmatprep.subr.bf16.mxu0 0
    %7866 = vmatpush1.bf16.msra.mxu0 %v7818
    %7867 = vmatprep.mubr.bf16.mxu0 %v7703
    %7868 = vmatmul.mubr.bf16.gmra.mrb[0].mxu0 %v7702
    %v7869 = vpop.f32.mrb[0].mxu0
    %v7870 = vadd.f32 0.0, %v7869
    %v7871 = vpop.f32.mrb[0].mxu0
    %v7872 = vpop.f32.mrb[0].mxu0
    %v7873 = vadd.f32 0.0, %v7872
    %v7874 = vpop.f32.mrb[0].mxu0
    %7875 = vmatprep.mubr.bf16.mxu0 %v7705
    %7876 = vmatmul.mubr.bf16.gmra.mrb[0].mxu0 %v7704
    %v7877 = vpop.f32.mrb[0].mxu0
    %v7878 = vadd.f32 0.0, %v7877
    %v7879 = vpop.f32.mrb[0].mxu0
    %v7880 = vpop.f32.mrb[0].mxu0
    %v7881 = vadd.f32 0.0, %v7880
    %v7882 = vpop.f32.mrb[0].mxu0
    %7883 = vdwg.mxu0
    %v7884 = vadd.f32 %v7597, %v7870
    %v7885 = vadd.f32 %v7600, %v7873
    %v7886 = vadd.f32 %v7605, %v7878
    %v7887 = vadd.f32 %v7608, %v7881
    %vm7888 = vcmp.ge.s32.totalorder %v7034, 0
    %vm7889 = vcmp.ge.s32.totalorder %v7035, 0
    %vm7890 = vcmp.ge.s32.totalorder %v7036, 0
    %vm7891 = vcmp.ge.s32.totalorder %v7037, 0
    %vm7892 = vcmp.lt.s32.totalorder %v7034, 8
    %vm7893 = vcmp.lt.s32.totalorder %v7035, 8
    %vm7894 = vcmp.lt.s32.totalorder %v7036, 8
    %vm7895 = vcmp.lt.s32.totalorder %v7037, 8
    %vm7896 = vmand %vm7888, %vm7892
    %vm7897 = vmand %vm7889, %vm7893
    %vm7898 = vmand %vm7890, %vm7894
    %vm7899 = vmand %vm7891, %vm7895
    %vm7900 = vmand %vm7896, %vm7062
    %vm7901 = vmand %vm7897, %vm7063
    %vm7902 = vmand %vm7898, %vm7064
    %vm7903 = vmand %vm7899, %vm7065
    %vm7904 = vmand %vm7900, %vm7070
    %vm7905 = vmand %vm7901, %vm7071
    %vm7906 = vmand %vm7902, %vm7072
    %vm7907 = vmand %vm7903, %vm7073
    %v7908 = vmul.u32 %v7034, 8
    %v7909 = vmul.u32 %v7035, 8
    %v7910 = vmul.u32 %v7036, 8
    %v7911 = vmul.u32 %v7037, 8
    %v7912 = vadd.s32 %v7078, %v7908
    %v7913 = vadd.s32 %v7079, %v7909
    %v7914 = vadd.s32 %v7080, %v7910
    %v7915 = vadd.s32 %v7081, %v7911
    %v7916 = vadd.s32 %v7912, %v7046
    %v7917 = vadd.s32 %v7913, %v7047
    %v7918 = vadd.s32 %v7914, %v7048
    %v7919 = vadd.s32 %v7915, %v7049
    %vm7920 = vcmp.eq.s32.totalorder %v7017, %v7916
    %vm7921 = vcmp.eq.s32.totalorder %v7017, %v7917
    %vm7922 = vcmp.eq.s32.totalorder %v7017, %v7918
    %vm7923 = vcmp.eq.s32.totalorder %v7017, %v7919
    %vm7924 = vmand %vm7904, %vm7920
    %vm7925 = vmand %vm7905, %vm7921
    %vm7926 = vmand %vm7906, %vm7922
    %vm7927 = vmand %vm7907, %vm7923
    %v7928 = vsel %vm7924, 1.0, 0.0
    %v7929 = vsel %vm7925, 1.0, 0.0
    %v7930 = vsel %vm7926, 1.0, 0.0
    %v7931 = vsel %vm7927, 1.0, 0.0
    %v7932 = vpack.c.bf16 %v7929, %v7928
    %v7933 = vpack.c.bf16 %v7931, %v7930
    %7934 = vmatprep.subr.bf16.mxu0 %v6996
    %7935 = vmatpush1.bf16.msra.mxu0 %v6995
    %7936 = vmatprep.subr.bf16.mxu0 %v6998
    %7937 = vmatpush1.bf16.msra.mxu0 %v6997
    %7938 = vmatprep.subr.bf16.mxu0 %v7000
    %7939 = vmatpush1.bf16.msra.mxu0 %v6999
    %7940 = vmatprep.subr.bf16.mxu0 %v7002
    %7941 = vmatpush1.bf16.msra.mxu0 %v7001
    %7942 = vmatprep.subr.bf16.mxu0 %v7004
    %7943 = vmatpush1.bf16.msra.mxu0 %v7003
    %7944 = vmatprep.subr.bf16.mxu0 %v7006
    %7945 = vmatpush1.bf16.msra.mxu0 %v7005
    %7946 = vmatprep.subr.bf16.mxu0 %v7008
    %7947 = vmatpush1.bf16.msra.mxu0 %v7007
    %7948 = vmatprep.subr.bf16.mxu0 %v7010
    %7949 = vmatpush1.bf16.msra.mxu0 %v7009
    %7950 = vmatprep.subr.bf16.mxu0 0
    %7951 = vmatpush1.bf16.msra.mxu0 0
    %7952 = vmatprep.subr.bf16.mxu0 0
    %7953 = vmatpush1.bf16.msra.mxu0 0
    %7954 = vmatprep.subr.bf16.mxu0 0
    %7955 = vmatpush1.bf16.msra.mxu0 0
    %7956 = vmatprep.subr.bf16.mxu0 0
    %7957 = vmatpush1.bf16.msra.mxu0 0
    %7958 = vmatprep.subr.bf16.mxu0 0
    %7959 = vmatpush1.bf16.msra.mxu0 0
    %7960 = vmatprep.subr.bf16.mxu0 0
    %7961 = vmatpush1.bf16.msra.mxu0 0
    %7962 = vmatprep.subr.bf16.mxu0 0
    %7963 = vmatpush1.bf16.msra.mxu0 0
    %7964 = vmatprep.subr.bf16.mxu0 0
    %7965 = vmatpush1.bf16.msra.mxu0 0
    %7966 = vmatprep.mubr.bf16.mxu0 0
    %7967 = vmatmul.mubr.bf16.gmra.mrb[0].mxu0 %v7932
    %v7968 = vpop.f32.mrb[0].mxu0
    %v7969 = vadd.f32 0.0, %v7968
    %v7970 = vpop.f32.mrb[0].mxu0
    %v7971 = vadd.f32 0.0, %v7970
    %v7972 = vpop.f32.mrb[0].mxu0
    %v7973 = vadd.f32 0.0, %v7972
    %v7974 = vpop.f32.mrb[0].mxu0
    %v7975 = vadd.f32 0.0, %v7974
    %7976 = vmatprep.mubr.bf16.mxu0 0
    %7977 = vmatmul.mubr.bf16.gmra.mrb[0].mxu0 %v7933
    %v7978 = vpop.f32.mrb[0].mxu0
    %v7979 = vadd.f32 0.0, %v7978
    %v7980 = vpop.f32.mrb[0].mxu0
    %v7981 = vadd.f32 0.0, %v7980
    %v7982 = vpop.f32.mrb[0].mxu0
    %v7983 = vadd.f32 0.0, %v7982
    %v7984 = vpop.f32.mrb[0].mxu0
    %v7985 = vadd.f32 0.0, %v7984
    %7986 = vdwg.mxu0
    %v7987 = vpack.c.bf16 %v7973, %v7969
    %v7988 = vpack.c.bf16 %v7975, %v7971
    %v7989 = vpack.c.bf16 %v7983, %v7979
    %v7990 = vpack.c.bf16 %v7985, %v7981
    %s7991 = scalar_lea.vmem %s3, 384
    %v7992 = vld [vmem:[%s7991] sm:$0xf]
    %v7993 = vld [vmem:[%s7991 + $0x4] sm:$0xf]
    %v7994 = vld [vmem:[%s7991 + $0x8] sm:$0xf]
    %v7995 = vld [vmem:[%s7991 + $0xc] sm:$0xf]
    %v7996 = vld [vmem:[%s7991 + $0x10] sm:$0xf]
    %v7997 = vld [vmem:[%s7991 + $0x14] sm:$0xf]
    %v7998 = vld [vmem:[%s7991 + $0x18] sm:$0xf]
    %v7999 = vld [vmem:[%s7991 + $0x1c] sm:$0xf]
    %v8000 = vld [vmem:[%s7991 + $0x20] sm:$0xf]
    %v8001 = vld [vmem:[%s7991 + $0x24] sm:$0xf]
    %v8002 = vld [vmem:[%s7991 + $0x28] sm:$0xf]
    %v8003 = vld [vmem:[%s7991 + $0x2c] sm:$0xf]
    %v8004 = vld [vmem:[%s7991 + $0x30] sm:$0xf]
    %v8005 = vld [vmem:[%s7991 + $0x34] sm:$0xf]
    %v8006 = vld [vmem:[%s7991 + $0x38] sm:$0xf]
    %v8007 = vld [vmem:[%s7991 + $0x3c] sm:$0xf]
    %v8008 = vld [vmem:[%s7991 + $0x40] sm:$0xf]
    %v8009 = vld [vmem:[%s7991 + $0x44] sm:$0xf]
    %v8010 = vld [vmem:[%s7991 + $0x48] sm:$0xf]
    %v8011 = vld [vmem:[%s7991 + $0x4c] sm:$0xf]
    %v8012 = vld [vmem:[%s7991 + $0x50] sm:$0xf]
    %v8013 = vld [vmem:[%s7991 + $0x54] sm:$0xf]
    %v8014 = vld [vmem:[%s7991 + $0x58] sm:$0xf]
    %v8015 = vld [vmem:[%s7991 + $0x5c] sm:$0xf]
    %v8016 = vld [vmem:[%s7991 + $0x60] sm:$0xf]
    %v8017 = vld [vmem:[%s7991 + $0x64] sm:$0xf]
    %v8018 = vld [vmem:[%s7991 + $0x68] sm:$0xf]
    %v8019 = vld [vmem:[%s7991 + $0x6c] sm:$0xf]
    %v8020 = vld [vmem:[%s7991 + $0x70] sm:$0xf]
    %v8021 = vld [vmem:[%s7991 + $0x74] sm:$0xf]
    %v8022 = vld [vmem:[%s7991 + $0x78] sm:$0xf]
    %v8023 = vld [vmem:[%s7991 + $0x7c] sm:$0xf]
    %v8056 = vunpack.c.l.b16 %v7992
    %v8057 = vunpack.c.l.b16 %v7993
    %v8058 = vunpack.c.l.b16 %v7994
    %v8059 = vunpack.c.l.b16 %v7995
    %v8060 = vunpack.c.l.b16 %v7996
    %v8061 = vunpack.c.l.b16 %v7997
    %v8062 = vunpack.c.l.b16 %v7998
    %v8063 = vunpack.c.l.b16 %v7999
    %v8064 = vunpack.c.l.b16 %v8000
    %v8065 = vunpack.c.l.b16 %v8001
    %v8066 = vunpack.c.l.b16 %v8002
    %v8067 = vunpack.c.l.b16 %v8003
    %v8068 = vunpack.c.l.b16 %v8004
    %v8069 = vunpack.c.l.b16 %v8005
    %v8070 = vunpack.c.l.b16 %v8006
    %v8071 = vunpack.c.l.b16 %v8007
    %v8072 = vunpack.c.l.b16 %v8008
    %v8073 = vunpack.c.l.b16 %v8009
    %v8074 = vunpack.c.l.b16 %v8010
    %v8075 = vunpack.c.l.b16 %v8011
    %v8076 = vunpack.c.l.b16 %v8012
    %v8077 = vunpack.c.l.b16 %v8013
    %v8078 = vunpack.c.l.b16 %v8014
    %v8079 = vunpack.c.l.b16 %v8015
    %v8080 = vunpack.c.l.b16 %v8016
    %v8081 = vunpack.c.l.b16 %v8017
    %v8082 = vunpack.c.l.b16 %v8018
    %v8083 = vunpack.c.l.b16 %v8019
    %v8084 = vunpack.c.l.b16 %v8020
    %v8085 = vunpack.c.l.b16 %v8021
    %v8086 = vunpack.c.l.b16 %v8022
    %v8087 = vunpack.c.l.b16 %v8023
    %v8088 = vpack.c.b16 %v8057, %v8056
    %v8089 = vpack.c.b16 %v8059, %v8058
    %v8090 = vpack.c.b16 %v8061, %v8060
    %v8091 = vpack.c.b16 %v8063, %v8062
    %v8092 = vpack.c.b16 %v8065, %v8064
    %v8093 = vpack.c.b16 %v8067, %v8066
    %v8094 = vpack.c.b16 %v8069, %v8068
    %v8095 = vpack.c.b16 %v8071, %v8070
    %v8096 = vpack.c.b16 %v8073, %v8072
    %v8097 = vpack.c.b16 %v8075, %v8074
    %v8098 = vpack.c.b16 %v8077, %v8076
    %v8099 = vpack.c.b16 %v8079, %v8078
    %v8100 = vpack.c.b16 %v8081, %v8080
    %v8101 = vpack.c.b16 %v8083, %v8082
    %v8102 = vpack.c.b16 %v8085, %v8084
    %v8103 = vpack.c.b16 %v8087, %v8086
    %8120 = vmatprep.subr.bf16.mxu0 0
    %8121 = vmatpush1.bf16.msra.mxu0 %v8088
    %8122 = vmatprep.subr.bf16.mxu0 0
    %8123 = vmatpush1.bf16.msra.mxu0 %v8089
    %8124 = vmatprep.subr.bf16.mxu0 0
    %8125 = vmatpush1.bf16.msra.mxu0 %v8090
    %8126 = vmatprep.subr.bf16.mxu0 0
    %8127 = vmatpush1.bf16.msra.mxu0 %v8091
    %8128 = vmatprep.subr.bf16.mxu0 0
    %8129 = vmatpush1.bf16.msra.mxu0 %v8092
    %8130 = vmatprep.subr.bf16.mxu0 0
    %8131 = vmatpush1.bf16.msra.mxu0 %v8093
    %8132 = vmatprep.subr.bf16.mxu0 0
    %8133 = vmatpush1.bf16.msra.mxu0 %v8094
    %8134 = vmatprep.subr.bf16.mxu0 0
    %8135 = vmatpush1.bf16.msra.mxu0 %v8095
    %8136 = vmatprep.subr.bf16.mxu0 0
    %8137 = vmatpush1.bf16.msra.mxu0 %v8096
    %8138 = vmatprep.subr.bf16.mxu0 0
    %8139 = vmatpush1.bf16.msra.mxu0 %v8097
    %8140 = vmatprep.subr.bf16.mxu0 0
    %8141 = vmatpush1.bf16.msra.mxu0 %v8098
    %8142 = vmatprep.subr.bf16.mxu0 0
    %8143 = vmatpush1.bf16.msra.mxu0 %v8099
    %8144 = vmatprep.subr.bf16.mxu0 0
    %8145 = vmatpush1.bf16.msra.mxu0 %v8100
    %8146 = vmatprep.subr.bf16.mxu0 0
    %8147 = vmatpush1.bf16.msra.mxu0 %v8101
    %8148 = vmatprep.subr.bf16.mxu0 0
    %8149 = vmatpush1.bf16.msra.mxu0 %v8102
    %8150 = vmatprep.subr.bf16.mxu0 0
    %8151 = vmatpush1.bf16.msra.mxu0 %v8103
    %8152 = vmatprep.mubr.bf16.mxu0 %v7988
    %8153 = vmatmul.mubr.bf16.gmra.mrb[0].mxu0 %v7987
    %v8154 = vpop.f32.mrb[0].mxu0
    %v8155 = vadd.f32 0.0, %v8154
    %v8156 = vpop.f32.mrb[0].mxu0
    %v8157 = vpop.f32.mrb[0].mxu0
    %v8158 = vadd.f32 0.0, %v8157
    %v8159 = vpop.f32.mrb[0].mxu0
    %8160 = vmatprep.mubr.bf16.mxu0 %v7990
    %8161 = vmatmul.mubr.bf16.gmra.mrb[0].mxu0 %v7989
    %v8162 = vpop.f32.mrb[0].mxu0
    %v8163 = vadd.f32 0.0, %v8162
    %v8164 = vpop.f32.mrb[0].mxu0
    %v8165 = vpop.f32.mrb[0].mxu0
    %v8166 = vadd.f32 0.0, %v8165
    %v8167 = vpop.f32.mrb[0].mxu0
    %8168 = vdwg.mxu0
    %v8169 = vadd.f32 %v7884, %v8155
    %v8170 = vadd.f32 %v7885, %v8158
    %v8171 = vadd.f32 %v7886, %v8163
    %v8172 = vadd.f32 %v7887, %v8166
    %vm8173 = vmand %vm7896, %vm7197
    %vm8174 = vmand %vm7897, %vm7198
    %vm8175 = vmand %vm7898, %vm7199
    %vm8176 = vmand %vm7899, %vm7200
    %vm8177 = vmand %vm8173, %vm7205
    %vm8178 = vmand %vm8174, %vm7206
    %vm8179 = vmand %vm8175, %vm7207
    %vm8180 = vmand %vm8176, %vm7208
    %v8181 = vadd.s32 %v7912, %v7042
    %v8182 = vadd.s32 %v7913, %v7043
    %v8183 = vadd.s32 %v7914, %v7044
    %v8184 = vadd.s32 %v7915, %v7045
    %vm8185 = vcmp.eq.s32.totalorder %v7017, %v8181
    %vm8186 = vcmp.eq.s32.totalorder %v7017, %v8182
    %vm8187 = vcmp.eq.s32.totalorder %v7017, %v8183
    %vm8188 = vcmp.eq.s32.totalorder %v7017, %v8184
    %vm8189 = vmand %vm8177, %vm8185
    %vm8190 = vmand %vm8178, %vm8186
    %vm8191 = vmand %vm8179, %vm8187
    %vm8192 = vmand %vm8180, %vm8188
    %v8193 = vsel %vm8189, 1.0, 0.0
    %v8194 = vsel %vm8190, 1.0, 0.0
    %v8195 = vsel %vm8191, 1.0, 0.0
    %v8196 = vsel %vm8192, 1.0, 0.0
    %v8197 = vpack.c.bf16 %v8194, %v8193
    %v8198 = vpack.c.bf16 %v8196, %v8195
    %8199 = vmatprep.subr.bf16.mxu0 %v6996
    %8200 = vmatpush1.bf16.msra.mxu0 %v6995
    %8201 = vmatprep.subr.bf16.mxu0 %v6998
    %8202 = vmatpush1.bf16.msra.mxu0 %v6997
    %8203 = vmatprep.subr.bf16.mxu0 %v7000
    %8204 = vmatpush1.bf16.msra.mxu0 %v6999
    %8205 = vmatprep.subr.bf16.mxu0 %v7002
    %8206 = vmatpush1.bf16.msra.mxu0 %v7001
    %8207 = vmatprep.subr.bf16.mxu0 %v7004
    %8208 = vmatpush1.bf16.msra.mxu0 %v7003
    %8209 = vmatprep.subr.bf16.mxu0 %v7006
    %8210 = vmatpush1.bf16.msra.mxu0 %v7005
    %8211 = vmatprep.subr.bf16.mxu0 %v7008
    %8212 = vmatpush1.bf16.msra.mxu0 %v7007
    %8213 = vmatprep.subr.bf16.mxu0 %v7010
    %8214 = vmatpush1.bf16.msra.mxu0 %v7009
    %8215 = vmatprep.subr.bf16.mxu0 0
    %8216 = vmatpush1.bf16.msra.mxu0 0
    %8217 = vmatprep.subr.bf16.mxu0 0
    %8218 = vmatpush1.bf16.msra.mxu0 0
    %8219 = vmatprep.subr.bf16.mxu0 0
    %8220 = vmatpush1.bf16.msra.mxu0 0
    %8221 = vmatprep.subr.bf16.mxu0 0
    %8222 = vmatpush1.bf16.msra.mxu0 0
    %8223 = vmatprep.subr.bf16.mxu0 0
    %8224 = vmatpush1.bf16.msra.mxu0 0
    %8225 = vmatprep.subr.bf16.mxu0 0
    %8226 = vmatpush1.bf16.msra.mxu0 0
    %8227 = vmatprep.subr.bf16.mxu0 0
    %8228 = vmatpush1.bf16.msra.mxu0 0
    %8229 = vmatprep.subr.bf16.mxu0 0
    %8230 = vmatpush1.bf16.msra.mxu0 0
    %8231 = vmatprep.mubr.bf16.mxu0 0
    %8232 = vmatmul.mubr.bf16.gmra.mrb[0].mxu0 %v8197
    %v8233 = vpop.f32.mrb[0].mxu0
    %v8234 = vadd.f32 0.0, %v8233
    %v8235 = vpop.f32.mrb[0].mxu0
    %v8236 = vadd.f32 0.0, %v8235
    %v8237 = vpop.f32.mrb[0].mxu0
    %v8238 = vadd.f32 0.0, %v8237
    %v8239 = vpop.f32.mrb[0].mxu0
    %v8240 = vadd.f32 0.0, %v8239
    %8241 = vmatprep.mubr.bf16.mxu0 0
    %8242 = vmatmul.mubr.bf16.gmra.mrb[0].mxu0 %v8198
    %v8243 = vpop.f32.mrb[0].mxu0
    %v8244 = vadd.f32 0.0, %v8243
    %v8245 = vpop.f32.mrb[0].mxu0
    %v8246 = vadd.f32 0.0, %v8245
    %v8247 = vpop.f32.mrb[0].mxu0
    %v8248 = vadd.f32 0.0, %v8247
    %v8249 = vpop.f32.mrb[0].mxu0
    %v8250 = vadd.f32 0.0, %v8249
    %8251 = vdwg.mxu0
    %v8252 = vpack.c.bf16 %v8238, %v8234
    %v8253 = vpack.c.bf16 %v8240, %v8236
    %v8254 = vpack.c.bf16 %v8248, %v8244
    %v8255 = vpack.c.bf16 %v8250, %v8246
    %s8256 = scalar_lea.vmem %s3, 512
    %v8257 = vld [vmem:[%s8256] sm:$0xf]
    %v8258 = vld [vmem:[%s8256 + $0x4] sm:$0xf]
    %v8259 = vld [vmem:[%s8256 + $0x8] sm:$0xf]
    %v8260 = vld [vmem:[%s8256 + $0xc] sm:$0xf]
    %v8261 = vld [vmem:[%s8256 + $0x10] sm:$0xf]
    %v8262 = vld [vmem:[%s8256 + $0x14] sm:$0xf]
    %v8263 = vld [vmem:[%s8256 + $0x18] sm:$0xf]
    %v8264 = vld [vmem:[%s8256 + $0x1c] sm:$0xf]
    %v8265 = vld [vmem:[%s8256 + $0x20] sm:$0xf]
    %v8266 = vld [vmem:[%s8256 + $0x24] sm:$0xf]
    %v8267 = vld [vmem:[%s8256 + $0x28] sm:$0xf]
    %v8268 = vld [vmem:[%s8256 + $0x2c] sm:$0xf]
    %v8269 = vld [vmem:[%s8256 + $0x30] sm:$0xf]
    %v8270 = vld [vmem:[%s8256 + $0x34] sm:$0xf]
    %v8271 = vld [vmem:[%s8256 + $0x38] sm:$0xf]
    %v8272 = vld [vmem:[%s8256 + $0x3c] sm:$0xf]
    %v8273 = vld [vmem:[%s8256 + $0x40] sm:$0xf]
    %v8274 = vld [vmem:[%s8256 + $0x44] sm:$0xf]
    %v8275 = vld [vmem:[%s8256 + $0x48] sm:$0xf]
    %v8276 = vld [vmem:[%s8256 + $0x4c] sm:$0xf]
    %v8277 = vld [vmem:[%s8256 + $0x50] sm:$0xf]
    %v8278 = vld [vmem:[%s8256 + $0x54] sm:$0xf]
    %v8279 = vld [vmem:[%s8256 + $0x58] sm:$0xf]
    %v8280 = vld [vmem:[%s8256 + $0x5c] sm:$0xf]
    %v8281 = vld [vmem:[%s8256 + $0x60] sm:$0xf]
    %v8282 = vld [vmem:[%s8256 + $0x64] sm:$0xf]
    %v8283 = vld [vmem:[%s8256 + $0x68] sm:$0xf]
    %v8284 = vld [vmem:[%s8256 + $0x6c] sm:$0xf]
    %v8285 = vld [vmem:[%s8256 + $0x70] sm:$0xf]
    %v8286 = vld [vmem:[%s8256 + $0x74] sm:$0xf]
    %v8287 = vld [vmem:[%s8256 + $0x78] sm:$0xf]
    %v8288 = vld [vmem:[%s8256 + $0x7c] sm:$0xf]
    %v8321 = vunpack.c.l.b16 %v8257
    %v8322 = vunpack.c.l.b16 %v8258
    %v8323 = vunpack.c.l.b16 %v8259
    %v8324 = vunpack.c.l.b16 %v8260
    %v8325 = vunpack.c.l.b16 %v8261
    %v8326 = vunpack.c.l.b16 %v8262
    %v8327 = vunpack.c.l.b16 %v8263
    %v8328 = vunpack.c.l.b16 %v8264
    %v8329 = vunpack.c.l.b16 %v8265
    %v8330 = vunpack.c.l.b16 %v8266
    %v8331 = vunpack.c.l.b16 %v8267
    %v8332 = vunpack.c.l.b16 %v8268
    %v8333 = vunpack.c.l.b16 %v8269
    %v8334 = vunpack.c.l.b16 %v8270
    %v8335 = vunpack.c.l.b16 %v8271
    %v8336 = vunpack.c.l.b16 %v8272
    %v8337 = vunpack.c.l.b16 %v8273
    %v8338 = vunpack.c.l.b16 %v8274
    %v8339 = vunpack.c.l.b16 %v8275
    %v8340 = vunpack.c.l.b16 %v8276
    %v8341 = vunpack.c.l.b16 %v8277
    %v8342 = vunpack.c.l.b16 %v8278
    %v8343 = vunpack.c.l.b16 %v8279
    %v8344 = vunpack.c.l.b16 %v8280
    %v8345 = vunpack.c.l.b16 %v8281
    %v8346 = vunpack.c.l.b16 %v8282
    %v8347 = vunpack.c.l.b16 %v8283
    %v8348 = vunpack.c.l.b16 %v8284
    %v8349 = vunpack.c.l.b16 %v8285
    %v8350 = vunpack.c.l.b16 %v8286
    %v8351 = vunpack.c.l.b16 %v8287
    %v8352 = vunpack.c.l.b16 %v8288
    %v8353 = vpack.c.b16 %v8322, %v8321
    %v8354 = vpack.c.b16 %v8324, %v8323
    %v8355 = vpack.c.b16 %v8326, %v8325
    %v8356 = vpack.c.b16 %v8328, %v8327
    %v8357 = vpack.c.b16 %v8330, %v8329
    %v8358 = vpack.c.b16 %v8332, %v8331
    %v8359 = vpack.c.b16 %v8334, %v8333
    %v8360 = vpack.c.b16 %v8336, %v8335
    %v8361 = vpack.c.b16 %v8338, %v8337
    %v8362 = vpack.c.b16 %v8340, %v8339
    %v8363 = vpack.c.b16 %v8342, %v8341
    %v8364 = vpack.c.b16 %v8344, %v8343
    %v8365 = vpack.c.b16 %v8346, %v8345
    %v8366 = vpack.c.b16 %v8348, %v8347
    %v8367 = vpack.c.b16 %v8350, %v8349
    %v8368 = vpack.c.b16 %v8352, %v8351
    %8385 = vmatprep.subr.bf16.mxu0 0
    %8386 = vmatpush1.bf16.msra.mxu0 %v8353
    %8387 = vmatprep.subr.bf16.mxu0 0
    %8388 = vmatpush1.bf16.msra.mxu0 %v8354
    %8389 = vmatprep.subr.bf16.mxu0 0
    %8390 = vmatpush1.bf16.msra.mxu0 %v8355
    %8391 = vmatprep.subr.bf16.mxu0 0
    %8392 = vmatpush1.bf16.msra.mxu0 %v8356
    %8393 = vmatprep.subr.bf16.mxu0 0
    %8394 = vmatpush1.bf16.msra.mxu0 %v8357
    %8395 = vmatprep.subr.bf16.mxu0 0
    %8396 = vmatpush1.bf16.msra.mxu0 %v8358
    %8397 = vmatprep.subr.bf16.mxu0 0
    %8398 = vmatpush1.bf16.msra.mxu0 %v8359
    %8399 = vmatprep.subr.bf16.mxu0 0
    %8400 = vmatpush1.bf16.msra.mxu0 %v8360
    %8401 = vmatprep.subr.bf16.mxu0 0
    %8402 = vmatpush1.bf16.msra.mxu0 %v8361
    %8403 = vmatprep.subr.bf16.mxu0 0
    %8404 = vmatpush1.bf16.msra.mxu0 %v8362
    %8405 = vmatprep.subr.bf16.mxu0 0
    %8406 = vmatpush1.bf16.msra.mxu0 %v8363
    %8407 = vmatprep.subr.bf16.mxu0 0
    %8408 = vmatpush1.bf16.msra.mxu0 %v8364
    %8409 = vmatprep.subr.bf16.mxu0 0
    %8410 = vmatpush1.bf16.msra.mxu0 %v8365
    %8411 = vmatprep.subr.bf16.mxu0 0
    %8412 = vmatpush1.bf16.msra.mxu0 %v8366
    %8413 = vmatprep.subr.bf16.mxu0 0
    %8414 = vmatpush1.bf16.msra.mxu0 %v8367
    %8415 = vmatprep.subr.bf16.mxu0 0
    %8416 = vmatpush1.bf16.msra.mxu0 %v8368
    %8417 = vmatprep.mubr.bf16.mxu0 %v8253
    %8418 = vmatmul.mubr.bf16.gmra.mrb[0].mxu0 %v8252
    %v8419 = vpop.f32.mrb[0].mxu0
    %v8420 = vadd.f32 0.0, %v8419
    %v8421 = vpop.f32.mrb[0].mxu0
    %v8422 = vpop.f32.mrb[0].mxu0
    %v8423 = vadd.f32 0.0, %v8422
    %v8424 = vpop.f32.mrb[0].mxu0
    %8425 = vmatprep.mubr.bf16.mxu0 %v8255
    %8426 = vmatmul.mubr.bf16.gmra.mrb[0].mxu0 %v8254
    %v8427 = vpop.f32.mrb[0].mxu0
    %v8428 = vadd.f32 0.0, %v8427
    %v8429 = vpop.f32.mrb[0].mxu0
    %v8430 = vpop.f32.mrb[0].mxu0
    %v8431 = vadd.f32 0.0, %v8430
    %v8432 = vpop.f32.mrb[0].mxu0
    %8433 = vdwg.mxu0
    %v8434 = vadd.f32 %v8169, %v8420
    %v8435 = vadd.f32 %v8170, %v8423
    %v8436 = vadd.f32 %v8171, %v8428
    %v8437 = vadd.f32 %v8172, %v8431
    %vm8438 = vmand %vm7896, %vm7615
    %vm8439 = vmand %vm7897, %vm7616
    %vm8440 = vmand %vm7898, %vm7617
    %vm8441 = vmand %vm7899, %vm7618
    %vm8442 = vmand %vm8438, %vm7623
    %vm8443 = vmand %vm8439, %vm7624
    %vm8444 = vmand %vm8440, %vm7625
    %vm8445 = vmand %vm8441, %vm7626
    %v8446 = vadd.s32 %v7912, %v7611
    %v8447 = vadd.s32 %v7913, %v7612
    %v8448 = vadd.s32 %v7914, %v7613
    %v8449 = vadd.s32 %v7915, %v7614
    %vm8450 = vcmp.eq.s32.totalorder %v7017, %v8446
    %vm8451 = vcmp.eq.s32.totalorder %v7017, %v8447
    %vm8452 = vcmp.eq.s32.totalorder %v7017, %v8448
    %vm8453 = vcmp.eq.s32.totalorder %v7017, %v8449
    %vm8454 = vmand %vm8442, %vm8450
    %vm8455 = vmand %vm8443, %vm8451
    %vm8456 = vmand %vm8444, %vm8452
    %vm8457 = vmand %vm8445, %vm8453
    %v8458 = vsel %vm8454, 1.0, 0.0
    %v8459 = vsel %vm8455, 1.0, 0.0
    %v8460 = vsel %vm8456, 1.0, 0.0
    %v8461 = vsel %vm8457, 1.0, 0.0
    %v8462 = vpack.c.bf16 %v8459, %v8458
    %v8463 = vpack.c.bf16 %v8461, %v8460
    %8464 = vmatprep.subr.bf16.mxu0 %v6996
    %8465 = vmatpush1.bf16.msra.mxu0 %v6995
    %8466 = vmatprep.subr.bf16.mxu0 %v6998
    %8467 = vmatpush1.bf16.msra.mxu0 %v6997
    %8468 = vmatprep.subr.bf16.mxu0 %v7000
    %8469 = vmatpush1.bf16.msra.mxu0 %v6999
    %8470 = vmatprep.subr.bf16.mxu0 %v7002
    %8471 = vmatpush1.bf16.msra.mxu0 %v7001
    %8472 = vmatprep.subr.bf16.mxu0 %v7004
    %8473 = vmatpush1.bf16.msra.mxu0 %v7003
    %8474 = vmatprep.subr.bf16.mxu0 %v7006
    %8475 = vmatpush1.bf16.msra.mxu0 %v7005
    %8476 = vmatprep.subr.bf16.mxu0 %v7008
    %8477 = vmatpush1.bf16.msra.mxu0 %v7007
    %8478 = vmatprep.subr.bf16.mxu0 %v7010
    %8479 = vmatpush1.bf16.msra.mxu0 %v7009
    %8480 = vmatprep.subr.bf16.mxu0 0
    %8481 = vmatpush1.bf16.msra.mxu0 0
    %8482 = vmatprep.subr.bf16.mxu0 0
    %8483 = vmatpush1.bf16.msra.mxu0 0
    %8484 = vmatprep.subr.bf16.mxu0 0
    %8485 = vmatpush1.bf16.msra.mxu0 0
    %8486 = vmatprep.subr.bf16.mxu0 0
    %8487 = vmatpush1.bf16.msra.mxu0 0
    %8488 = vmatprep.subr.bf16.mxu0 0
    %8489 = vmatpush1.bf16.msra.mxu0 0
    %8490 = vmatprep.subr.bf16.mxu0 0
    %8491 = vmatpush1.bf16.msra.mxu0 0
    %8492 = vmatprep.subr.bf16.mxu0 0
    %8493 = vmatpush1.bf16.msra.mxu0 0
    %8494 = vmatprep.subr.bf16.mxu0 0
    %8495 = vmatpush1.bf16.msra.mxu0 0
    %8496 = vmatprep.mubr.bf16.mxu0 0
    %8497 = vmatmul.mubr.bf16.gmra.mrb[0].mxu0 %v8462
    %v8498 = vpop.f32.mrb[0].mxu0
    %v8499 = vadd.f32 0.0, %v8498
    %v8500 = vpop.f32.mrb[0].mxu0
    %v8501 = vadd.f32 0.0, %v8500
    %v8502 = vpop.f32.mrb[0].mxu0
    %v8503 = vadd.f32 0.0, %v8502
    %v8504 = vpop.f32.mrb[0].mxu0
    %v8505 = vadd.f32 0.0, %v8504
    %8506 = vmatprep.mubr.bf16.mxu0 0
    %8507 = vmatmul.mubr.bf16.gmra.mrb[0].mxu0 %v8463
    %v8508 = vpop.f32.mrb[0].mxu0
    %v8509 = vadd.f32 0.0, %v8508
    %v8510 = vpop.f32.mrb[0].mxu0
    %v8511 = vadd.f32 0.0, %v8510
    %v8512 = vpop.f32.mrb[0].mxu0
    %v8513 = vadd.f32 0.0, %v8512
    %v8514 = vpop.f32.mrb[0].mxu0
    %v8515 = vadd.f32 0.0, %v8514
    %8516 = vdwg.mxu0
    %v8517 = vpack.c.bf16 %v8503, %v8499
    %v8518 = vpack.c.bf16 %v8505, %v8501
    %v8519 = vpack.c.bf16 %v8513, %v8509
    %v8520 = vpack.c.bf16 %v8515, %v8511
    %s8521 = scalar_lea.vmem %s3, 640
    %v8522 = vld [vmem:[%s8521] sm:$0xf]
    %v8523 = vld [vmem:[%s8521 + $0x4] sm:$0xf]
    %v8524 = vld [vmem:[%s8521 + $0x8] sm:$0xf]
    %v8525 = vld [vmem:[%s8521 + $0xc] sm:$0xf]
    %v8526 = vld [vmem:[%s8521 + $0x10] sm:$0xf]
    %v8527 = vld [vmem:[%s8521 + $0x14] sm:$0xf]
    %v8528 = vld [vmem:[%s8521 + $0x18] sm:$0xf]
    %v8529 = vld [vmem:[%s8521 + $0x1c] sm:$0xf]
    %v8530 = vld [vmem:[%s8521 + $0x20] sm:$0xf]
    %v8531 = vld [vmem:[%s8521 + $0x24] sm:$0xf]
    %v8532 = vld [vmem:[%s8521 + $0x28] sm:$0xf]
    %v8533 = vld [vmem:[%s8521 + $0x2c] sm:$0xf]
    %v8534 = vld [vmem:[%s8521 + $0x30] sm:$0xf]
    %v8535 = vld [vmem:[%s8521 + $0x34] sm:$0xf]
    %v8536 = vld [vmem:[%s8521 + $0x38] sm:$0xf]
    %v8537 = vld [vmem:[%s8521 + $0x3c] sm:$0xf]
    %v8538 = vld [vmem:[%s8521 + $0x40] sm:$0xf]
    %v8539 = vld [vmem:[%s8521 + $0x44] sm:$0xf]
    %v8540 = vld [vmem:[%s8521 + $0x48] sm:$0xf]
    %v8541 = vld [vmem:[%s8521 + $0x4c] sm:$0xf]
    %v8542 = vld [vmem:[%s8521 + $0x50] sm:$0xf]
    %v8543 = vld [vmem:[%s8521 + $0x54] sm:$0xf]
    %v8544 = vld [vmem:[%s8521 + $0x58] sm:$0xf]
    %v8545 = vld [vmem:[%s8521 + $0x5c] sm:$0xf]
    %v8546 = vld [vmem:[%s8521 + $0x60] sm:$0xf]
    %v8547 = vld [vmem:[%s8521 + $0x64] sm:$0xf]
    %v8548 = vld [vmem:[%s8521 + $0x68] sm:$0xf]
    %v8549 = vld [vmem:[%s8521 + $0x6c] sm:$0xf]
    %v8550 = vld [vmem:[%s8521 + $0x70] sm:$0xf]
    %v8551 = vld [vmem:[%s8521 + $0x74] sm:$0xf]
    %v8552 = vld [vmem:[%s8521 + $0x78] sm:$0xf]
    %v8553 = vld [vmem:[%s8521 + $0x7c] sm:$0xf]
    %v8586 = vunpack.c.l.b16 %v8522
    %v8587 = vunpack.c.l.b16 %v8523
    %v8588 = vunpack.c.l.b16 %v8524
    %v8589 = vunpack.c.l.b16 %v8525
    %v8590 = vunpack.c.l.b16 %v8526
    %v8591 = vunpack.c.l.b16 %v8527
    %v8592 = vunpack.c.l.b16 %v8528
    %v8593 = vunpack.c.l.b16 %v8529
    %v8594 = vunpack.c.l.b16 %v8530
    %v8595 = vunpack.c.l.b16 %v8531
    %v8596 = vunpack.c.l.b16 %v8532
    %v8597 = vunpack.c.l.b16 %v8533
    %v8598 = vunpack.c.l.b16 %v8534
    %v8599 = vunpack.c.l.b16 %v8535
    %v8600 = vunpack.c.l.b16 %v8536
    %v8601 = vunpack.c.l.b16 %v8537
    %v8602 = vunpack.c.l.b16 %v8538
    %v8603 = vunpack.c.l.b16 %v8539
    %v8604 = vunpack.c.l.b16 %v8540
    %v8605 = vunpack.c.l.b16 %v8541
    %v8606 = vunpack.c.l.b16 %v8542
    %v8607 = vunpack.c.l.b16 %v8543
    %v8608 = vunpack.c.l.b16 %v8544
    %v8609 = vunpack.c.l.b16 %v8545
    %v8610 = vunpack.c.l.b16 %v8546
    %v8611 = vunpack.c.l.b16 %v8547
    %v8612 = vunpack.c.l.b16 %v8548
    %v8613 = vunpack.c.l.b16 %v8549
    %v8614 = vunpack.c.l.b16 %v8550
    %v8615 = vunpack.c.l.b16 %v8551
    %v8616 = vunpack.c.l.b16 %v8552
    %v8617 = vunpack.c.l.b16 %v8553
    %v8618 = vpack.c.b16 %v8587, %v8586
    %v8619 = vpack.c.b16 %v8589, %v8588
    %v8620 = vpack.c.b16 %v8591, %v8590
    %v8621 = vpack.c.b16 %v8593, %v8592
    %v8622 = vpack.c.b16 %v8595, %v8594
    %v8623 = vpack.c.b16 %v8597, %v8596
    %v8624 = vpack.c.b16 %v8599, %v8598
    %v8625 = vpack.c.b16 %v8601, %v8600
    %v8626 = vpack.c.b16 %v8603, %v8602
    %v8627 = vpack.c.b16 %v8605, %v8604
    %v8628 = vpack.c.b16 %v8607, %v8606
    %v8629 = vpack.c.b16 %v8609, %v8608
    %v8630 = vpack.c.b16 %v8611, %v8610
    %v8631 = vpack.c.b16 %v8613, %v8612
    %v8632 = vpack.c.b16 %v8615, %v8614
    %v8633 = vpack.c.b16 %v8617, %v8616
    %8650 = vmatprep.subr.bf16.mxu0 0
    %8651 = vmatpush1.bf16.msra.mxu0 %v8618
    %8652 = vmatprep.subr.bf16.mxu0 0
    %8653 = vmatpush1.bf16.msra.mxu0 %v8619
    %8654 = vmatprep.subr.bf16.mxu0 0
    %8655 = vmatpush1.bf16.msra.mxu0 %v8620
    %8656 = vmatprep.subr.bf16.mxu0 0
    %8657 = vmatpush1.bf16.msra.mxu0 %v8621
    %8658 = vmatprep.subr.bf16.mxu0 0
    %8659 = vmatpush1.bf16.msra.mxu0 %v8622
    %8660 = vmatprep.subr.bf16.mxu0 0
    %8661 = vmatpush1.bf16.msra.mxu0 %v8623
    %8662 = vmatprep.subr.bf16.mxu0 0
    %8663 = vmatpush1.bf16.msra.mxu0 %v8624
    %8664 = vmatprep.subr.bf16.mxu0 0
    %8665 = vmatpush1.bf16.msra.mxu0 %v8625
    %8666 = vmatprep.subr.bf16.mxu0 0
    %8667 = vmatpush1.bf16.msra.mxu0 %v8626
    %8668 = vmatprep.subr.bf16.mxu0 0
    %8669 = vmatpush1.bf16.msra.mxu0 %v8627
    %8670 = vmatprep.subr.bf16.mxu0 0
    %8671 = vmatpush1.bf16.msra.mxu0 %v8628
    %8672 = vmatprep.subr.bf16.mxu0 0
    %8673 = vmatpush1.bf16.msra.mxu0 %v8629
    %8674 = vmatprep.subr.bf16.mxu0 0
    %8675 = vmatpush1.bf16.msra.mxu0 %v8630
    %8676 = vmatprep.subr.bf16.mxu0 0
    %8677 = vmatpush1.bf16.msra.mxu0 %v8631
    %8678 = vmatprep.subr.bf16.mxu0 0
    %8679 = vmatpush1.bf16.msra.mxu0 %v8632
    %8680 = vmatprep.subr.bf16.mxu0 0
    %8681 = vmatpush1.bf16.msra.mxu0 %v8633
    %8682 = vmatprep.mubr.bf16.mxu0 %v8518
    %8683 = vmatmul.mubr.bf16.gmra.mrb[0].mxu0 %v8517
    %v8684 = vpop.f32.mrb[0].mxu0
    %v8685 = vadd.f32 0.0, %v8684
    %v8686 = vpop.f32.mrb[0].mxu0
    %v8687 = vpop.f32.mrb[0].mxu0
    %v8688 = vadd.f32 0.0, %v8687
    %v8689 = vpop.f32.mrb[0].mxu0
    %8690 = vmatprep.mubr.bf16.mxu0 %v8520
    %8691 = vmatmul.mubr.bf16.gmra.mrb[0].mxu0 %v8519
    %v8692 = vpop.f32.mrb[0].mxu0
    %v8693 = vadd.f32 0.0, %v8692
    %v8694 = vpop.f32.mrb[0].mxu0
    %v8695 = vpop.f32.mrb[0].mxu0
    %v8696 = vadd.f32 0.0, %v8695
    %v8697 = vpop.f32.mrb[0].mxu0
    %8698 = vdwg.mxu0
    %v8699 = vadd.f32 %v8434, %v8685
    %v8700 = vadd.f32 %v8435, %v8688
    %v8701 = vadd.f32 %v8436, %v8693
    %v8702 = vadd.f32 %v8437, %v8696
    %v8703 = vadd.s32 %v7038, 2
    %v8704 = vadd.s32 %v7039, 2
    %v8705 = vadd.s32 %v7040, 2
    %v8706 = vadd.s32 %v7041, 2
    %vm8707 = vcmp.ge.s32.totalorder %v8703, 0
    %vm8708 = vcmp.ge.s32.totalorder %v8704, 0
    %vm8709 = vcmp.ge.s32.totalorder %v8705, 0
    %vm8710 = vcmp.ge.s32.totalorder %v8706, 0
    %vm8711 = vcmp.lt.s32.totalorder %v8703, 8
    %vm8712 = vcmp.lt.s32.totalorder %v8704, 8
    %vm8713 = vcmp.lt.s32.totalorder %v8705, 8
    %vm8714 = vcmp.lt.s32.totalorder %v8706, 8
    %vm8715 = vmand %vm8707, %vm8711
    %vm8716 = vmand %vm8708, %vm8712
    %vm8717 = vmand %vm8709, %vm8713
    %vm8718 = vmand %vm8710, %vm8714
    %vm8719 = vmand %vm8715, %vm7062
    %vm8720 = vmand %vm8716, %vm7063
    %vm8721 = vmand %vm8717, %vm7064
    %vm8722 = vmand %vm8718, %vm7065
    %vm8723 = vmand %vm8719, %vm7070
    %vm8724 = vmand %vm8720, %vm7071
    %vm8725 = vmand %vm8721, %vm7072
    %vm8726 = vmand %vm8722, %vm7073
    %v8727 = vmul.u32 %v8703, 8
    %v8728 = vmul.u32 %v8704, 8
    %v8729 = vmul.u32 %v8705, 8
    %v8730 = vmul.u32 %v8706, 8
    %v8731 = vadd.s32 %v7078, %v8727
    %v8732 = vadd.s32 %v7079, %v8728
    %v8733 = vadd.s32 %v7080, %v8729
    %v8734 = vadd.s32 %v7081, %v8730
    %v8735 = vadd.s32 %v8731, %v7046
    %v8736 = vadd.s32 %v8732, %v7047
    %v8737 = vadd.s32 %v8733, %v7048
    %v8738 = vadd.s32 %v8734, %v7049
    %vm8739 = vcmp.eq.s32.totalorder %v7017, %v8735
    %vm8740 = vcmp.eq.s32.totalorder %v7017, %v8736
    %vm8741 = vcmp.eq.s32.totalorder %v7017, %v8737
    %vm8742 = vcmp.eq.s32.totalorder %v7017, %v8738
    %vm8743 = vmand %vm8723, %vm8739
    %vm8744 = vmand %vm8724, %vm8740
    %vm8745 = vmand %vm8725, %vm8741
    %vm8746 = vmand %vm8726, %vm8742
    %v8747 = vsel %vm8743, 1.0, 0.0
    %v8748 = vsel %vm8744, 1.0, 0.0
    %v8749 = vsel %vm8745, 1.0, 0.0
    %v8750 = vsel %vm8746, 1.0, 0.0
    %v8751 = vpack.c.bf16 %v8748, %v8747
    %v8752 = vpack.c.bf16 %v8750, %v8749
    %8753 = vmatprep.subr.bf16.mxu0 %v6996
    %8754 = vmatpush1.bf16.msra.mxu0 %v6995
    %8755 = vmatprep.subr.bf16.mxu0 %v6998
    %8756 = vmatpush1.bf16.msra.mxu0 %v6997
    %8757 = vmatprep.subr.bf16.mxu0 %v7000
    %8758 = vmatpush1.bf16.msra.mxu0 %v6999
    %8759 = vmatprep.subr.bf16.mxu0 %v7002
    %8760 = vmatpush1.bf16.msra.mxu0 %v7001
    %8761 = vmatprep.subr.bf16.mxu0 %v7004
    %8762 = vmatpush1.bf16.msra.mxu0 %v7003
    %8763 = vmatprep.subr.bf16.mxu0 %v7006
    %8764 = vmatpush1.bf16.msra.mxu0 %v7005
    %8765 = vmatprep.subr.bf16.mxu0 %v7008
    %8766 = vmatpush1.bf16.msra.mxu0 %v7007
    %8767 = vmatprep.subr.bf16.mxu0 %v7010
    %8768 = vmatpush1.bf16.msra.mxu0 %v7009
    %8769 = vmatprep.subr.bf16.mxu0 0
    %8770 = vmatpush1.bf16.msra.mxu0 0
    %8771 = vmatprep.subr.bf16.mxu0 0
    %8772 = vmatpush1.bf16.msra.mxu0 0
    %8773 = vmatprep.subr.bf16.mxu0 0
    %8774 = vmatpush1.bf16.msra.mxu0 0
    %8775 = vmatprep.subr.bf16.mxu0 0
    %8776 = vmatpush1.bf16.msra.mxu0 0
    %8777 = vmatprep.subr.bf16.mxu0 0
    %8778 = vmatpush1.bf16.msra.mxu0 0
    %8779 = vmatprep.subr.bf16.mxu0 0
    %8780 = vmatpush1.bf16.msra.mxu0 0
    %8781 = vmatprep.subr.bf16.mxu0 0
    %8782 = vmatpush1.bf16.msra.mxu0 0
    %8783 = vmatprep.subr.bf16.mxu0 0
    %8784 = vmatpush1.bf16.msra.mxu0 0
    %8785 = vmatprep.mubr.bf16.mxu0 0
    %8786 = vmatmul.mubr.bf16.gmra.mrb[0].mxu0 %v8751
    %v8787 = vpop.f32.mrb[0].mxu0
    %v8788 = vadd.f32 0.0, %v8787
    %v8789 = vpop.f32.mrb[0].mxu0
    %v8790 = vadd.f32 0.0, %v8789
    %v8791 = vpop.f32.mrb[0].mxu0
    %v8792 = vadd.f32 0.0, %v8791
    %v8793 = vpop.f32.mrb[0].mxu0
    %v8794 = vadd.f32 0.0, %v8793
    %8795 = vmatprep.mubr.bf16.mxu0 0
    %8796 = vmatmul.mubr.bf16.gmra.mrb[0].mxu0 %v8752
    %v8797 = vpop.f32.mrb[0].mxu0
    %v8798 = vadd.f32 0.0, %v8797
    %v8799 = vpop.f32.mrb[0].mxu0
    %v8800 = vadd.f32 0.0, %v8799
    %v8801 = vpop.f32.mrb[0].mxu0
    %v8802 = vadd.f32 0.0, %v8801
    %v8803 = vpop.f32.mrb[0].mxu0
    %v8804 = vadd.f32 0.0, %v8803
    %8805 = vdwg.mxu0
    %v8806 = vpack.c.bf16 %v8792, %v8788
    %v8807 = vpack.c.bf16 %v8794, %v8790
    %v8808 = vpack.c.bf16 %v8802, %v8798
    %v8809 = vpack.c.bf16 %v8804, %v8800
    %s8810 = scalar_lea.vmem %s3, 768
    %v8811 = vld [vmem:[%s8810] sm:$0xf]
    %v8812 = vld [vmem:[%s8810 + $0x4] sm:$0xf]
    %v8813 = vld [vmem:[%s8810 + $0x8] sm:$0xf]
    %v8814 = vld [vmem:[%s8810 + $0xc] sm:$0xf]
    %v8815 = vld [vmem:[%s8810 + $0x10] sm:$0xf]
    %v8816 = vld [vmem:[%s8810 + $0x14] sm:$0xf]
    %v8817 = vld [vmem:[%s8810 + $0x18] sm:$0xf]
    %v8818 = vld [vmem:[%s8810 + $0x1c] sm:$0xf]
    %v8819 = vld [vmem:[%s8810 + $0x20] sm:$0xf]
    %v8820 = vld [vmem:[%s8810 + $0x24] sm:$0xf]
    %v8821 = vld [vmem:[%s8810 + $0x28] sm:$0xf]
    %v8822 = vld [vmem:[%s8810 + $0x2c] sm:$0xf]
    %v8823 = vld [vmem:[%s8810 + $0x30] sm:$0xf]
    %v8824 = vld [vmem:[%s8810 + $0x34] sm:$0xf]
    %v8825 = vld [vmem:[%s8810 + $0x38] sm:$0xf]
    %v8826 = vld [vmem:[%s8810 + $0x3c] sm:$0xf]
    %v8827 = vld [vmem:[%s8810 + $0x40] sm:$0xf]
    %v8828 = vld [vmem:[%s8810 + $0x44] sm:$0xf]
    %v8829 = vld [vmem:[%s8810 + $0x48] sm:$0xf]
    %v8830 = vld [vmem:[%s8810 + $0x4c] sm:$0xf]
    %v8831 = vld [vmem:[%s8810 + $0x50] sm:$0xf]
    %v8832 = vld [vmem:[%s8810 + $0x54] sm:$0xf]
    %v8833 = vld [vmem:[%s8810 + $0x58] sm:$0xf]
    %v8834 = vld [vmem:[%s8810 + $0x5c] sm:$0xf]
    %v8835 = vld [vmem:[%s8810 + $0x60] sm:$0xf]
    %v8836 = vld [vmem:[%s8810 + $0x64] sm:$0xf]
    %v8837 = vld [vmem:[%s8810 + $0x68] sm:$0xf]
    %v8838 = vld [vmem:[%s8810 + $0x6c] sm:$0xf]
    %v8839 = vld [vmem:[%s8810 + $0x70] sm:$0xf]
    %v8840 = vld [vmem:[%s8810 + $0x74] sm:$0xf]
    %v8841 = vld [vmem:[%s8810 + $0x78] sm:$0xf]
    %v8842 = vld [vmem:[%s8810 + $0x7c] sm:$0xf]
    %v8875 = vunpack.c.l.b16 %v8811
    %v8876 = vunpack.c.l.b16 %v8812
    %v8877 = vunpack.c.l.b16 %v8813
    %v8878 = vunpack.c.l.b16 %v8814
    %v8879 = vunpack.c.l.b16 %v8815
    %v8880 = vunpack.c.l.b16 %v8816
    %v8881 = vunpack.c.l.b16 %v8817
    %v8882 = vunpack.c.l.b16 %v8818
    %v8883 = vunpack.c.l.b16 %v8819
    %v8884 = vunpack.c.l.b16 %v8820
    %v8885 = vunpack.c.l.b16 %v8821
    %v8886 = vunpack.c.l.b16 %v8822
    %v8887 = vunpack.c.l.b16 %v8823
    %v8888 = vunpack.c.l.b16 %v8824
    %v8889 = vunpack.c.l.b16 %v8825
    %v8890 = vunpack.c.l.b16 %v8826
    %v8891 = vunpack.c.l.b16 %v8827
    %v8892 = vunpack.c.l.b16 %v8828
    %v8893 = vunpack.c.l.b16 %v8829
    %v8894 = vunpack.c.l.b16 %v8830
    %v8895 = vunpack.c.l.b16 %v8831
    %v8896 = vunpack.c.l.b16 %v8832
    %v8897 = vunpack.c.l.b16 %v8833
    %v8898 = vunpack.c.l.b16 %v8834
    %v8899 = vunpack.c.l.b16 %v8835
    %v8900 = vunpack.c.l.b16 %v8836
    %v8901 = vunpack.c.l.b16 %v8837
    %v8902 = vunpack.c.l.b16 %v8838
    %v8903 = vunpack.c.l.b16 %v8839
    %v8904 = vunpack.c.l.b16 %v8840
    %v8905 = vunpack.c.l.b16 %v8841
    %v8906 = vunpack.c.l.b16 %v8842
    %v8907 = vpack.c.b16 %v8876, %v8875
    %v8908 = vpack.c.b16 %v8878, %v8877
    %v8909 = vpack.c.b16 %v8880, %v8879
    %v8910 = vpack.c.b16 %v8882, %v8881
    %v8911 = vpack.c.b16 %v8884, %v8883
    %v8912 = vpack.c.b16 %v8886, %v8885
    %v8913 = vpack.c.b16 %v8888, %v8887
    %v8914 = vpack.c.b16 %v8890, %v8889
    %v8915 = vpack.c.b16 %v8892, %v8891
    %v8916 = vpack.c.b16 %v8894, %v8893
    %v8917 = vpack.c.b16 %v8896, %v8895
    %v8918 = vpack.c.b16 %v8898, %v8897
    %v8919 = vpack.c.b16 %v8900, %v8899
    %v8920 = vpack.c.b16 %v8902, %v8901
    %v8921 = vpack.c.b16 %v8904, %v8903
    %v8922 = vpack.c.b16 %v8906, %v8905
    %8939 = vmatprep.subr.bf16.mxu0 0
    %8940 = vmatpush1.bf16.msra.mxu0 %v8907
    %8941 = vmatprep.subr.bf16.mxu0 0
    %8942 = vmatpush1.bf16.msra.mxu0 %v8908
    %8943 = vmatprep.subr.bf16.mxu0 0
    %8944 = vmatpush1.bf16.msra.mxu0 %v8909
    %8945 = vmatprep.subr.bf16.mxu0 0
    %8946 = vmatpush1.bf16.msra.mxu0 %v8910
    %8947 = vmatprep.subr.bf16.mxu0 0
    %8948 = vmatpush1.bf16.msra.mxu0 %v8911
    %8949 = vmatprep.subr.bf16.mxu0 0
    %8950 = vmatpush1.bf16.msra.mxu0 %v8912
    %8951 = vmatprep.subr.bf16.mxu0 0
    %8952 = vmatpush1.bf16.msra.mxu0 %v8913
    %8953 = vmatprep.subr.bf16.mxu0 0
    %8954 = vmatpush1.bf16.msra.mxu0 %v8914
    %8955 = vmatprep.subr.bf16.mxu0 0
    %8956 = vmatpush1.bf16.msra.mxu0 %v8915
    %8957 = vmatprep.subr.bf16.mxu0 0
    %8958 = vmatpush1.bf16.msra.mxu0 %v8916
    %8959 = vmatprep.subr.bf16.mxu0 0
    %8960 = vmatpush1.bf16.msra.mxu0 %v8917
    %8961 = vmatprep.subr.bf16.mxu0 0
    %8962 = vmatpush1.bf16.msra.mxu0 %v8918
    %8963 = vmatprep.subr.bf16.mxu0 0
    %8964 = vmatpush1.bf16.msra.mxu0 %v8919
    %8965 = vmatprep.subr.bf16.mxu0 0
    %8966 = vmatpush1.bf16.msra.mxu0 %v8920
    %8967 = vmatprep.subr.bf16.mxu0 0
    %8968 = vmatpush1.bf16.msra.mxu0 %v8921
    %8969 = vmatprep.subr.bf16.mxu0 0
    %8970 = vmatpush1.bf16.msra.mxu0 %v8922
    %8971 = vmatprep.mubr.bf16.mxu0 %v8807
    %8972 = vmatmul.mubr.bf16.gmra.mrb[0].mxu0 %v8806
    %v8973 = vpop.f32.mrb[0].mxu0
    %v8974 = vadd.f32 0.0, %v8973
    %v8975 = vpop.f32.mrb[0].mxu0
    %v8976 = vpop.f32.mrb[0].mxu0
    %v8977 = vadd.f32 0.0, %v8976
    %v8978 = vpop.f32.mrb[0].mxu0
    %8979 = vmatprep.mubr.bf16.mxu0 %v8809
    %8980 = vmatmul.mubr.bf16.gmra.mrb[0].mxu0 %v8808
    %v8981 = vpop.f32.mrb[0].mxu0
    %v8982 = vadd.f32 0.0, %v8981
    %v8983 = vpop.f32.mrb[0].mxu0
    %v8984 = vpop.f32.mrb[0].mxu0
    %v8985 = vadd.f32 0.0, %v8984
    %v8986 = vpop.f32.mrb[0].mxu0
    %8987 = vdwg.mxu0
    %v8988 = vadd.f32 %v8699, %v8974
    %v8989 = vadd.f32 %v8700, %v8977
    %v8990 = vadd.f32 %v8701, %v8982
    %v8991 = vadd.f32 %v8702, %v8985
    %vm8992 = vmand %vm8715, %vm7197
    %vm8993 = vmand %vm8716, %vm7198
    %vm8994 = vmand %vm8717, %vm7199
    %vm8995 = vmand %vm8718, %vm7200
    %vm8996 = vmand %vm8992, %vm7205
    %vm8997 = vmand %vm8993, %vm7206
    %vm8998 = vmand %vm8994, %vm7207
    %vm8999 = vmand %vm8995, %vm7208
    %v9000 = vadd.s32 %v8731, %v7042
    %v9001 = vadd.s32 %v8732, %v7043
    %v9002 = vadd.s32 %v8733, %v7044
    %v9003 = vadd.s32 %v8734, %v7045
    %vm9004 = vcmp.eq.s32.totalorder %v7017, %v9000
    %vm9005 = vcmp.eq.s32.totalorder %v7017, %v9001
    %vm9006 = vcmp.eq.s32.totalorder %v7017, %v9002
    %vm9007 = vcmp.eq.s32.totalorder %v7017, %v9003
    %vm9008 = vmand %vm8996, %vm9004
    %vm9009 = vmand %vm8997, %vm9005
    %vm9010 = vmand %vm8998, %vm9006
    %vm9011 = vmand %vm8999, %vm9007
    %v9012 = vsel %vm9008, 1.0, 0.0
    %v9013 = vsel %vm9009, 1.0, 0.0
    %v9014 = vsel %vm9010, 1.0, 0.0
    %v9015 = vsel %vm9011, 1.0, 0.0
    %v9016 = vpack.c.bf16 %v9013, %v9012
    %v9017 = vpack.c.bf16 %v9015, %v9014
    %9018 = vmatprep.subr.bf16.mxu0 %v6996
    %9019 = vmatpush1.bf16.msra.mxu0 %v6995
    %9020 = vmatprep.subr.bf16.mxu0 %v6998
    %9021 = vmatpush1.bf16.msra.mxu0 %v6997
    %9022 = vmatprep.subr.bf16.mxu0 %v7000
    %9023 = vmatpush1.bf16.msra.mxu0 %v6999
    %9024 = vmatprep.subr.bf16.mxu0 %v7002
    %9025 = vmatpush1.bf16.msra.mxu0 %v7001
    %9026 = vmatprep.subr.bf16.mxu0 %v7004
    %9027 = vmatpush1.bf16.msra.mxu0 %v7003
    %9028 = vmatprep.subr.bf16.mxu0 %v7006
    %9029 = vmatpush1.bf16.msra.mxu0 %v7005
    %9030 = vmatprep.subr.bf16.mxu0 %v7008
    %9031 = vmatpush1.bf16.msra.mxu0 %v7007
    %9032 = vmatprep.subr.bf16.mxu0 %v7010
    %9033 = vmatpush1.bf16.msra.mxu0 %v7009
    %9034 = vmatprep.subr.bf16.mxu0 0
    %9035 = vmatpush1.bf16.msra.mxu0 0
    %9036 = vmatprep.subr.bf16.mxu0 0
    %9037 = vmatpush1.bf16.msra.mxu0 0
    %9038 = vmatprep.subr.bf16.mxu0 0
    %9039 = vmatpush1.bf16.msra.mxu0 0
    %9040 = vmatprep.subr.bf16.mxu0 0
    %9041 = vmatpush1.bf16.msra.mxu0 0
    %9042 = vmatprep.subr.bf16.mxu0 0
    %9043 = vmatpush1.bf16.msra.mxu0 0
    %9044 = vmatprep.subr.bf16.mxu0 0
    %9045 = vmatpush1.bf16.msra.mxu0 0
    %9046 = vmatprep.subr.bf16.mxu0 0
    %9047 = vmatpush1.bf16.msra.mxu0 0
    %9048 = vmatprep.subr.bf16.mxu0 0
    %9049 = vmatpush1.bf16.msra.mxu0 0
    %9050 = vmatprep.mubr.bf16.mxu0 0
    %9051 = vmatmul.mubr.bf16.gmra.mrb[0].mxu0 %v9016
    %v9052 = vpop.f32.mrb[0].mxu0
    %v9053 = vadd.f32 0.0, %v9052
    %v9054 = vpop.f32.mrb[0].mxu0
    %v9055 = vadd.f32 0.0, %v9054
    %v9056 = vpop.f32.mrb[0].mxu0
    %v9057 = vadd.f32 0.0, %v9056
    %v9058 = vpop.f32.mrb[0].mxu0
    %v9059 = vadd.f32 0.0, %v9058
    %9060 = vmatprep.mubr.bf16.mxu0 0
    %9061 = vmatmul.mubr.bf16.gmra.mrb[0].mxu0 %v9017
    %v9062 = vpop.f32.mrb[0].mxu0
    %v9063 = vadd.f32 0.0, %v9062
    %v9064 = vpop.f32.mrb[0].mxu0
    %v9065 = vadd.f32 0.0, %v9064
    %v9066 = vpop.f32.mrb[0].mxu0
    %v9067 = vadd.f32 0.0, %v9066
    %v9068 = vpop.f32.mrb[0].mxu0
    %v9069 = vadd.f32 0.0, %v9068
    %9070 = vdwg.mxu0
    %v9071 = vpack.c.bf16 %v9057, %v9053
    %v9072 = vpack.c.bf16 %v9059, %v9055
    %v9073 = vpack.c.bf16 %v9067, %v9063
    %v9074 = vpack.c.bf16 %v9069, %v9065
    %s9075 = scalar_lea.vmem %s3, 896
    %v9076 = vld [vmem:[%s9075] sm:$0xf]
    %v9077 = vld [vmem:[%s9075 + $0x4] sm:$0xf]
    %v9078 = vld [vmem:[%s9075 + $0x8] sm:$0xf]
    %v9079 = vld [vmem:[%s9075 + $0xc] sm:$0xf]
    %v9080 = vld [vmem:[%s9075 + $0x10] sm:$0xf]
    %v9081 = vld [vmem:[%s9075 + $0x14] sm:$0xf]
    %v9082 = vld [vmem:[%s9075 + $0x18] sm:$0xf]
    %v9083 = vld [vmem:[%s9075 + $0x1c] sm:$0xf]
    %v9084 = vld [vmem:[%s9075 + $0x20] sm:$0xf]
    %v9085 = vld [vmem:[%s9075 + $0x24] sm:$0xf]
    %v9086 = vld [vmem:[%s9075 + $0x28] sm:$0xf]
    %v9087 = vld [vmem:[%s9075 + $0x2c] sm:$0xf]
    %v9088 = vld [vmem:[%s9075 + $0x30] sm:$0xf]
    %v9089 = vld [vmem:[%s9075 + $0x34] sm:$0xf]
    %v9090 = vld [vmem:[%s9075 + $0x38] sm:$0xf]
    %v9091 = vld [vmem:[%s9075 + $0x3c] sm:$0xf]
    %v9092 = vld [vmem:[%s9075 + $0x40] sm:$0xf]
    %v9093 = vld [vmem:[%s9075 + $0x44] sm:$0xf]
    %v9094 = vld [vmem:[%s9075 + $0x48] sm:$0xf]
    %v9095 = vld [vmem:[%s9075 + $0x4c] sm:$0xf]
    %v9096 = vld [vmem:[%s9075 + $0x50] sm:$0xf]
    %v9097 = vld [vmem:[%s9075 + $0x54] sm:$0xf]
    %v9098 = vld [vmem:[%s9075 + $0x58] sm:$0xf]
    %v9099 = vld [vmem:[%s9075 + $0x5c] sm:$0xf]
    %v9100 = vld [vmem:[%s9075 + $0x60] sm:$0xf]
    %v9101 = vld [vmem:[%s9075 + $0x64] sm:$0xf]
    %v9102 = vld [vmem:[%s9075 + $0x68] sm:$0xf]
    %v9103 = vld [vmem:[%s9075 + $0x6c] sm:$0xf]
    %v9104 = vld [vmem:[%s9075 + $0x70] sm:$0xf]
    %v9105 = vld [vmem:[%s9075 + $0x74] sm:$0xf]
    %v9106 = vld [vmem:[%s9075 + $0x78] sm:$0xf]
    %v9107 = vld [vmem:[%s9075 + $0x7c] sm:$0xf]
    %v9140 = vunpack.c.l.b16 %v9076
    %v9141 = vunpack.c.l.b16 %v9077
    %v9142 = vunpack.c.l.b16 %v9078
    %v9143 = vunpack.c.l.b16 %v9079
    %v9144 = vunpack.c.l.b16 %v9080
    %v9145 = vunpack.c.l.b16 %v9081
    %v9146 = vunpack.c.l.b16 %v9082
    %v9147 = vunpack.c.l.b16 %v9083
    %v9148 = vunpack.c.l.b16 %v9084
    %v9149 = vunpack.c.l.b16 %v9085
    %v9150 = vunpack.c.l.b16 %v9086
    %v9151 = vunpack.c.l.b16 %v9087
    %v9152 = vunpack.c.l.b16 %v9088
    %v9153 = vunpack.c.l.b16 %v9089
    %v9154 = vunpack.c.l.b16 %v9090
    %v9155 = vunpack.c.l.b16 %v9091
    %v9156 = vunpack.c.l.b16 %v9092
    %v9157 = vunpack.c.l.b16 %v9093
    %v9158 = vunpack.c.l.b16 %v9094
    %v9159 = vunpack.c.l.b16 %v9095
    %v9160 = vunpack.c.l.b16 %v9096
    %v9161 = vunpack.c.l.b16 %v9097
    %v9162 = vunpack.c.l.b16 %v9098
    %v9163 = vunpack.c.l.b16 %v9099
    %v9164 = vunpack.c.l.b16 %v9100
    %v9165 = vunpack.c.l.b16 %v9101
    %v9166 = vunpack.c.l.b16 %v9102
    %v9167 = vunpack.c.l.b16 %v9103
    %v9168 = vunpack.c.l.b16 %v9104
    %v9169 = vunpack.c.l.b16 %v9105
    %v9170 = vunpack.c.l.b16 %v9106
    %v9171 = vunpack.c.l.b16 %v9107
    %v9172 = vpack.c.b16 %v9141, %v9140
    %v9173 = vpack.c.b16 %v9143, %v9142
    %v9174 = vpack.c.b16 %v9145, %v9144
    %v9175 = vpack.c.b16 %v9147, %v9146
    %v9176 = vpack.c.b16 %v9149, %v9148
    %v9177 = vpack.c.b16 %v9151, %v9150
    %v9178 = vpack.c.b16 %v9153, %v9152
    %v9179 = vpack.c.b16 %v9155, %v9154
    %v9180 = vpack.c.b16 %v9157, %v9156
    %v9181 = vpack.c.b16 %v9159, %v9158
    %v9182 = vpack.c.b16 %v9161, %v9160
    %v9183 = vpack.c.b16 %v9163, %v9162
    %v9184 = vpack.c.b16 %v9165, %v9164
    %v9185 = vpack.c.b16 %v9167, %v9166
    %v9186 = vpack.c.b16 %v9169, %v9168
    %v9187 = vpack.c.b16 %v9171, %v9170
    %9204 = vmatprep.subr.bf16.mxu0 0
    %9205 = vmatpush1.bf16.msra.mxu0 %v9172
    %9206 = vmatprep.subr.bf16.mxu0 0
    %9207 = vmatpush1.bf16.msra.mxu0 %v9173
    %9208 = vmatprep.subr.bf16.mxu0 0
    %9209 = vmatpush1.bf16.msra.mxu0 %v9174
    %9210 = vmatprep.subr.bf16.mxu0 0
    %9211 = vmatpush1.bf16.msra.mxu0 %v9175
    %9212 = vmatprep.subr.bf16.mxu0 0
    %9213 = vmatpush1.bf16.msra.mxu0 %v9176
    %9214 = vmatprep.subr.bf16.mxu0 0
    %9215 = vmatpush1.bf16.msra.mxu0 %v9177
    %9216 = vmatprep.subr.bf16.mxu0 0
    %9217 = vmatpush1.bf16.msra.mxu0 %v9178
    %9218 = vmatprep.subr.bf16.mxu0 0
    %9219 = vmatpush1.bf16.msra.mxu0 %v9179
    %9220 = vmatprep.subr.bf16.mxu0 0
    %9221 = vmatpush1.bf16.msra.mxu0 %v9180
    %9222 = vmatprep.subr.bf16.mxu0 0
    %9223 = vmatpush1.bf16.msra.mxu0 %v9181
    %9224 = vmatprep.subr.bf16.mxu0 0
    %9225 = vmatpush1.bf16.msra.mxu0 %v9182
    %9226 = vmatprep.subr.bf16.mxu0 0
    %9227 = vmatpush1.bf16.msra.mxu0 %v9183
    %9228 = vmatprep.subr.bf16.mxu0 0
    %9229 = vmatpush1.bf16.msra.mxu0 %v9184
    %9230 = vmatprep.subr.bf16.mxu0 0
    %9231 = vmatpush1.bf16.msra.mxu0 %v9185
    %9232 = vmatprep.subr.bf16.mxu0 0
    %9233 = vmatpush1.bf16.msra.mxu0 %v9186
    %9234 = vmatprep.subr.bf16.mxu0 0
    %9235 = vmatpush1.bf16.msra.mxu0 %v9187
    %9236 = vmatprep.mubr.bf16.mxu0 %v9072
    %9237 = vmatmul.mubr.bf16.gmra.mrb[0].mxu0 %v9071
    %v9238 = vpop.f32.mrb[0].mxu0
    %v9239 = vadd.f32 0.0, %v9238
    %v9240 = vpop.f32.mrb[0].mxu0
    %v9241 = vpop.f32.mrb[0].mxu0
    %v9242 = vadd.f32 0.0, %v9241
    %v9243 = vpop.f32.mrb[0].mxu0
    %9244 = vmatprep.mubr.bf16.mxu0 %v9074
    %9245 = vmatmul.mubr.bf16.gmra.mrb[0].mxu0 %v9073
    %v9246 = vpop.f32.mrb[0].mxu0
    %v9247 = vadd.f32 0.0, %v9246
    %v9248 = vpop.f32.mrb[0].mxu0
    %v9249 = vpop.f32.mrb[0].mxu0
    %v9250 = vadd.f32 0.0, %v9249
    %v9251 = vpop.f32.mrb[0].mxu0
    %9252 = vdwg.mxu0
    %v9253 = vadd.f32 %v8988, %v9239
    %v9254 = vadd.f32 %v8989, %v9242
    %v9255 = vadd.f32 %v8990, %v9247
    %v9256 = vadd.f32 %v8991, %v9250
    %vm9257 = vmand %vm8715, %vm7615
    %vm9258 = vmand %vm8716, %vm7616
    %vm9259 = vmand %vm8717, %vm7617
    %vm9260 = vmand %vm8718, %vm7618
    %vm9261 = vmand %vm9257, %vm7623
    %vm9262 = vmand %vm9258, %vm7624
    %vm9263 = vmand %vm9259, %vm7625
    %vm9264 = vmand %vm9260, %vm7626
    %v9265 = vadd.s32 %v8731, %v7611
    %v9266 = vadd.s32 %v8732, %v7612
    %v9267 = vadd.s32 %v8733, %v7613
    %v9268 = vadd.s32 %v8734, %v7614
    %vm9269 = vcmp.eq.s32.totalorder %v7017, %v9265
    %vm9270 = vcmp.eq.s32.totalorder %v7017, %v9266
    %vm9271 = vcmp.eq.s32.totalorder %v7017, %v9267
    %vm9272 = vcmp.eq.s32.totalorder %v7017, %v9268
    %vm9273 = vmand %vm9261, %vm9269
    %vm9274 = vmand %vm9262, %vm9270
    %vm9275 = vmand %vm9263, %vm9271
    %vm9276 = vmand %vm9264, %vm9272
    %v9277 = vsel %vm9273, 1.0, 0.0
    %v9278 = vsel %vm9274, 1.0, 0.0
    %v9279 = vsel %vm9275, 1.0, 0.0
    %v9280 = vsel %vm9276, 1.0, 0.0
    %v9281 = vpack.c.bf16 %v9278, %v9277
    %v9282 = vpack.c.bf16 %v9280, %v9279
    %9283 = vmatprep.subr.bf16.mxu0 %v6996
    %9284 = vmatpush1.bf16.msra.mxu0 %v6995
    %9285 = vmatprep.subr.bf16.mxu0 %v6998
    %9286 = vmatpush1.bf16.msra.mxu0 %v6997
    %9287 = vmatprep.subr.bf16.mxu0 %v7000
    %9288 = vmatpush1.bf16.msra.mxu0 %v6999
    %9289 = vmatprep.subr.bf16.mxu0 %v7002
    %9290 = vmatpush1.bf16.msra.mxu0 %v7001
    %9291 = vmatprep.subr.bf16.mxu0 %v7004
    %9292 = vmatpush1.bf16.msra.mxu0 %v7003
    %9293 = vmatprep.subr.bf16.mxu0 %v7006
    %9294 = vmatpush1.bf16.msra.mxu0 %v7005
    %9295 = vmatprep.subr.bf16.mxu0 %v7008
    %9296 = vmatpush1.bf16.msra.mxu0 %v7007
    %9297 = vmatprep.subr.bf16.mxu0 %v7010
    %9298 = vmatpush1.bf16.msra.mxu0 %v7009
    %9299 = vmatprep.subr.bf16.mxu0 0
    %9300 = vmatpush1.bf16.msra.mxu0 0
    %9301 = vmatprep.subr.bf16.mxu0 0
    %9302 = vmatpush1.bf16.msra.mxu0 0
    %9303 = vmatprep.subr.bf16.mxu0 0
    %9304 = vmatpush1.bf16.msra.mxu0 0
    %9305 = vmatprep.subr.bf16.mxu0 0
    %9306 = vmatpush1.bf16.msra.mxu0 0
    %9307 = vmatprep.subr.bf16.mxu0 0
    %9308 = vmatpush1.bf16.msra.mxu0 0
    %9309 = vmatprep.subr.bf16.mxu0 0
    %9310 = vmatpush1.bf16.msra.mxu0 0
    %9311 = vmatprep.subr.bf16.mxu0 0
    %9312 = vmatpush1.bf16.msra.mxu0 0
    %9313 = vmatprep.subr.bf16.mxu0 0
    %9314 = vmatpush1.bf16.msra.mxu0 0
    %9315 = vmatprep.mubr.bf16.mxu0 0
    %9316 = vmatmul.mubr.bf16.gmra.mrb[0].mxu0 %v9281
    %v9317 = vpop.f32.mrb[0].mxu0
    %v9318 = vadd.f32 0.0, %v9317
    %v9319 = vpop.f32.mrb[0].mxu0
    %v9320 = vadd.f32 0.0, %v9319
    %v9321 = vpop.f32.mrb[0].mxu0
    %v9322 = vadd.f32 0.0, %v9321
    %v9323 = vpop.f32.mrb[0].mxu0
    %v9324 = vadd.f32 0.0, %v9323
    %9325 = vmatprep.mubr.bf16.mxu0 0
    %9326 = vmatmul.mubr.bf16.gmra.mrb[0].mxu0 %v9282
    %v9327 = vpop.f32.mrb[0].mxu0
    %v9328 = vadd.f32 0.0, %v9327
    %v9329 = vpop.f32.mrb[0].mxu0
    %v9330 = vadd.f32 0.0, %v9329
    %v9331 = vpop.f32.mrb[0].mxu0
    %v9332 = vadd.f32 0.0, %v9331
    %v9333 = vpop.f32.mrb[0].mxu0
    %v9334 = vadd.f32 0.0, %v9333
    %9335 = vdwg.mxu0
    %v9336 = vpack.c.bf16 %v9322, %v9318
    %v9337 = vpack.c.bf16 %v9324, %v9320
    %v9338 = vpack.c.bf16 %v9332, %v9328
    %v9339 = vpack.c.bf16 %v9334, %v9330
    %s9340 = scalar_lea.vmem %s3, 1024
    %v9341 = vld [vmem:[%s9340] sm:$0xf]
    %v9342 = vld [vmem:[%s9340 + $0x4] sm:$0xf]
    %v9343 = vld [vmem:[%s9340 + $0x8] sm:$0xf]
    %v9344 = vld [vmem:[%s9340 + $0xc] sm:$0xf]
    %v9345 = vld [vmem:[%s9340 + $0x10] sm:$0xf]
    %v9346 = vld [vmem:[%s9340 + $0x14] sm:$0xf]
    %v9347 = vld [vmem:[%s9340 + $0x18] sm:$0xf]
    %v9348 = vld [vmem:[%s9340 + $0x1c] sm:$0xf]
    %v9349 = vld [vmem:[%s9340 + $0x20] sm:$0xf]
    %v9350 = vld [vmem:[%s9340 + $0x24] sm:$0xf]
    %v9351 = vld [vmem:[%s9340 + $0x28] sm:$0xf]
    %v9352 = vld [vmem:[%s9340 + $0x2c] sm:$0xf]
    %v9353 = vld [vmem:[%s9340 + $0x30] sm:$0xf]
    %v9354 = vld [vmem:[%s9340 + $0x34] sm:$0xf]
    %v9355 = vld [vmem:[%s9340 + $0x38] sm:$0xf]
    %v9356 = vld [vmem:[%s9340 + $0x3c] sm:$0xf]
    %v9357 = vld [vmem:[%s9340 + $0x40] sm:$0xf]
    %v9358 = vld [vmem:[%s9340 + $0x44] sm:$0xf]
    %v9359 = vld [vmem:[%s9340 + $0x48] sm:$0xf]
    %v9360 = vld [vmem:[%s9340 + $0x4c] sm:$0xf]
    %v9361 = vld [vmem:[%s9340 + $0x50] sm:$0xf]
    %v9362 = vld [vmem:[%s9340 + $0x54] sm:$0xf]
    %v9363 = vld [vmem:[%s9340 + $0x58] sm:$0xf]
    %v9364 = vld [vmem:[%s9340 + $0x5c] sm:$0xf]
    %v9365 = vld [vmem:[%s9340 + $0x60] sm:$0xf]
    %v9366 = vld [vmem:[%s9340 + $0x64] sm:$0xf]
    %v9367 = vld [vmem:[%s9340 + $0x68] sm:$0xf]
    %v9368 = vld [vmem:[%s9340 + $0x6c] sm:$0xf]
    %v9369 = vld [vmem:[%s9340 + $0x70] sm:$0xf]
    %v9370 = vld [vmem:[%s9340 + $0x74] sm:$0xf]
    %v9371 = vld [vmem:[%s9340 + $0x78] sm:$0xf]
    %v9372 = vld [vmem:[%s9340 + $0x7c] sm:$0xf]
    %v9405 = vunpack.c.l.b16 %v9341
    %v9406 = vunpack.c.l.b16 %v9342
    %v9407 = vunpack.c.l.b16 %v9343
    %v9408 = vunpack.c.l.b16 %v9344
    %v9409 = vunpack.c.l.b16 %v9345
    %v9410 = vunpack.c.l.b16 %v9346
    %v9411 = vunpack.c.l.b16 %v9347
    %v9412 = vunpack.c.l.b16 %v9348
    %v9413 = vunpack.c.l.b16 %v9349
    %v9414 = vunpack.c.l.b16 %v9350
    %v9415 = vunpack.c.l.b16 %v9351
    %v9416 = vunpack.c.l.b16 %v9352
    %v9417 = vunpack.c.l.b16 %v9353
    %v9418 = vunpack.c.l.b16 %v9354
    %v9419 = vunpack.c.l.b16 %v9355
    %v9420 = vunpack.c.l.b16 %v9356
    %v9421 = vunpack.c.l.b16 %v9357
    %v9422 = vunpack.c.l.b16 %v9358
    %v9423 = vunpack.c.l.b16 %v9359
    %v9424 = vunpack.c.l.b16 %v9360
    %v9425 = vunpack.c.l.b16 %v9361
    %v9426 = vunpack.c.l.b16 %v9362
    %v9427 = vunpack.c.l.b16 %v9363
    %v9428 = vunpack.c.l.b16 %v9364
    %v9429 = vunpack.c.l.b16 %v9365
    %v9430 = vunpack.c.l.b16 %v9366
    %v9431 = vunpack.c.l.b16 %v9367
    %v9432 = vunpack.c.l.b16 %v9368
    %v9433 = vunpack.c.l.b16 %v9369
    %v9434 = vunpack.c.l.b16 %v9370
    %v9435 = vunpack.c.l.b16 %v9371
    %v9436 = vunpack.c.l.b16 %v9372
    %v9437 = vpack.c.b16 %v9406, %v9405
    %v9438 = vpack.c.b16 %v9408, %v9407
    %v9439 = vpack.c.b16 %v9410, %v9409
    %v9440 = vpack.c.b16 %v9412, %v9411
    %v9441 = vpack.c.b16 %v9414, %v9413
    %v9442 = vpack.c.b16 %v9416, %v9415
    %v9443 = vpack.c.b16 %v9418, %v9417
    %v9444 = vpack.c.b16 %v9420, %v9419
    %v9445 = vpack.c.b16 %v9422, %v9421
    %v9446 = vpack.c.b16 %v9424, %v9423
    %v9447 = vpack.c.b16 %v9426, %v9425
    %v9448 = vpack.c.b16 %v9428, %v9427
    %v9449 = vpack.c.b16 %v9430, %v9429
    %v9450 = vpack.c.b16 %v9432, %v9431
    %v9451 = vpack.c.b16 %v9434, %v9433
    %v9452 = vpack.c.b16 %v9436, %v9435
    %9469 = vmatprep.subr.bf16.mxu0 0
    %9470 = vmatpush1.bf16.msra.mxu0 %v9437
    %9471 = vmatprep.subr.bf16.mxu0 0
    %9472 = vmatpush1.bf16.msra.mxu0 %v9438
    %9473 = vmatprep.subr.bf16.mxu0 0
    %9474 = vmatpush1.bf16.msra.mxu0 %v9439
    %9475 = vmatprep.subr.bf16.mxu0 0
    %9476 = vmatpush1.bf16.msra.mxu0 %v9440
    %9477 = vmatprep.subr.bf16.mxu0 0
    %9478 = vmatpush1.bf16.msra.mxu0 %v9441
    %9479 = vmatprep.subr.bf16.mxu0 0
    %9480 = vmatpush1.bf16.msra.mxu0 %v9442
    %9481 = vmatprep.subr.bf16.mxu0 0
    %9482 = vmatpush1.bf16.msra.mxu0 %v9443
    %9483 = vmatprep.subr.bf16.mxu0 0
    %9484 = vmatpush1.bf16.msra.mxu0 %v9444
    %9485 = vmatprep.subr.bf16.mxu0 0
    %9486 = vmatpush1.bf16.msra.mxu0 %v9445
    %9487 = vmatprep.subr.bf16.mxu0 0
    %9488 = vmatpush1.bf16.msra.mxu0 %v9446
    %9489 = vmatprep.subr.bf16.mxu0 0
    %9490 = vmatpush1.bf16.msra.mxu0 %v9447
    %9491 = vmatprep.subr.bf16.mxu0 0
    %9492 = vmatpush1.bf16.msra.mxu0 %v9448
    %9493 = vmatprep.subr.bf16.mxu0 0
    %9494 = vmatpush1.bf16.msra.mxu0 %v9449
    %9495 = vmatprep.subr.bf16.mxu0 0
    %9496 = vmatpush1.bf16.msra.mxu0 %v9450
    %9497 = vmatprep.subr.bf16.mxu0 0
    %9498 = vmatpush1.bf16.msra.mxu0 %v9451
    %9499 = vmatprep.subr.bf16.mxu0 0
    %9500 = vmatpush1.bf16.msra.mxu0 %v9452
    %9501 = vmatprep.mubr.bf16.mxu0 %v9337
    %9502 = vmatmul.mubr.bf16.gmra.mrb[0].mxu0 %v9336
    %v9503 = vpop.f32.mrb[0].mxu0
    %v9504 = vadd.f32 0.0, %v9503
    %v9505 = vpop.f32.mrb[0].mxu0
    %v9506 = vpop.f32.mrb[0].mxu0
    %v9507 = vadd.f32 0.0, %v9506
    %v9508 = vpop.f32.mrb[0].mxu0
    %9509 = vmatprep.mubr.bf16.mxu0 %v9339
    %9510 = vmatmul.mubr.bf16.gmra.mrb[0].mxu0 %v9338
    %v9511 = vpop.f32.mrb[0].mxu0
    %v9512 = vadd.f32 0.0, %v9511
    %v9513 = vpop.f32.mrb[0].mxu0
    %v9514 = vpop.f32.mrb[0].mxu0
    %v9515 = vadd.f32 0.0, %v9514
    %v9516 = vpop.f32.mrb[0].mxu0
    %9517 = vdwg.mxu0
    %v9518 = vadd.f32 %v9253, %v9504
    %v9519 = vadd.f32 %v9254, %v9507
    %v9520 = vadd.f32 %v9255, %v9512
    %v9521 = vadd.f32 %v9256, %v9515
    %v9522 = vld [vmem:[%s4] sm:$0x1]
    %v9524 = vlaneseq
    %v9525 = vshrl.u32 %v9524, 7
    %v9526 = vsub.s32 0, %v9525
    %v9527 = vrot.slane %v9522, %v9526
    %v9529 = vadd.f32 %v9518, %v9527
    %v9530 = vadd.f32 %v9519, %v9527
    %v9531 = vadd.f32 %v9520, %v9527
    %v9532 = vadd.f32 %v9521, %v9527
    %v9533 = vmax.f32 %v9529, 0.0
    %v9534 = vmax.f32 %v9530, 0.0
    %v9535 = vmax.f32 %v9531, 0.0
    %v9536 = vmax.f32 %v9532, 0.0
    %v9537 = vpack.c.bf16 %v9534, %v9533
    %v9538 = vpack.c.bf16 %v9536, %v9535
    %v9539 = vshra.s32 %v7012, 2
    %v9540 = vand.u32 %v7012, 3
    %v9541 = vshra.s32 %v9540, 1
    %v9542 = vand.u32 %v9540, 1
    %v9543 = vmul.u32 %v9541, 2
    %v9544 = vsub.s32 %v9543, 1
    %v9545 = vmul.u32 %v9542, 2
    %v9546 = vsub.s32 %v9545, 1
    %vm9547 = vcmp.ge.s32.totalorder %v9544, 0
    %vm9548 = vcmp.lt.s32.totalorder %v9544, 4
    %vm9549 = vmand %vm9547, %vm9548
    %vm9550 = vcmp.ge.s32.totalorder %v9546, 0
    %vm9551 = vmand %vm9549, %vm9550
    %vm9552 = vcmp.lt.s32.totalorder %v9546, 4
    %vm9553 = vmand %vm9551, %vm9552
    %v9554 = vmul.u32 %v9539, 16
    %v9555 = vmul.u32 %v9544, 4
    %v9556 = vadd.s32 %v9554, %v9555
    %v9557 = vadd.s32 %v9556, %v9546
    %vm9558 = vcmp.eq.s32.totalorder %v7017, %v9557
    %vm9559 = vmand %vm9553, %vm9558
    %v9560 = vsel %vm9559, 1.0, 0.0
    %v9561 = vpack.c.bf16 %v9560, %v9560
    %vm9562 = vcmask 261120
    %v9564 = vsel %vm9562, %v9561, 0
    %9566 = vmatprep.subr.bf16.mxu0 0
    %9567 = vmatpush1.bf16.msra.mxu0 %v9537
    %9568 = vmatprep.subr.bf16.mxu0 0
    %9569 = vmatpush1.bf16.msra.mxu0 %v9538
    %9570 = vmatprep.subr.bf16.mxu0 0
    %9571 = vmatpush1.bf16.msra.mxu0 0
    %9572 = vmatprep.subr.bf16.mxu0 0
    %9573 = vmatpush1.bf16.msra.mxu0 0
    %9574 = vmatprep.subr.bf16.mxu0 0
    %9575 = vmatpush1.bf16.msra.mxu0 0
    %9576 = vmatprep.subr.bf16.mxu0 0
    %9577 = vmatpush1.bf16.msra.mxu0 0
    %9578 = vmatprep.subr.bf16.mxu0 0
    %9579 = vmatpush1.bf16.msra.mxu0 0
    %9580 = vmatprep.subr.bf16.mxu0 0
    %9581 = vmatpush1.bf16.msra.mxu0 0
    %9582 = vmatprep.subr.bf16.mxu0 0
    %9583 = vmatpush1.bf16.msra.mxu0 0
    %9584 = vmatprep.subr.bf16.mxu0 0
    %9585 = vmatpush1.bf16.msra.mxu0 0
    %9586 = vmatprep.subr.bf16.mxu0 0
    %9587 = vmatpush1.bf16.msra.mxu0 0
    %9588 = vmatprep.subr.bf16.mxu0 0
    %9589 = vmatpush1.bf16.msra.mxu0 0
    %9590 = vmatprep.subr.bf16.mxu0 0
    %9591 = vmatpush1.bf16.msra.mxu0 0
    %9592 = vmatprep.subr.bf16.mxu0 0
    %9593 = vmatpush1.bf16.msra.mxu0 0
    %9594 = vmatprep.subr.bf16.mxu0 0
    %9595 = vmatpush1.bf16.msra.mxu0 0
    %9596 = vmatprep.subr.bf16.mxu0 0
    %9597 = vmatpush1.bf16.msra.mxu0 0
    %9598 = vmatprep.mubr.bf16.mxu0 0
    %9599 = vmatmul.mubr.bf16.gmra.mrb[0].mxu0 %v9564
    %v9600 = vpop.f32.mrb[0].mxu0
    %v9601 = vadd.f32 0.0, %v9600
    %v9602 = vpop.f32.mrb[0].mxu0
    %v9603 = vpop.f32.mrb[0].mxu0
    %v9604 = vpop.f32.mrb[0].mxu0
    %9605 = vdwg.mxu0
    %v9606 = vpack.c.bf16 %v9601, %v9601
    %v9607 = vld [vmem:[%s5] sm:$0xf]
    %v9608 = vld [vmem:[%s5 + $0x4] sm:$0xf]
    %v9609 = vld [vmem:[%s5 + $0x8] sm:$0xf]
    %v9610 = vld [vmem:[%s5 + $0xc] sm:$0xf]
    %v9611 = vld [vmem:[%s5 + $0x10] sm:$0xf]
    %v9612 = vld [vmem:[%s5 + $0x14] sm:$0xf]
    %v9613 = vld [vmem:[%s5 + $0x18] sm:$0xf]
    %v9614 = vld [vmem:[%s5 + $0x1c] sm:$0xf]
    %v9615 = vld [vmem:[%s5 + $0x20] sm:$0xf]
    %v9616 = vld [vmem:[%s5 + $0x24] sm:$0xf]
    %v9617 = vld [vmem:[%s5 + $0x28] sm:$0xf]
    %v9618 = vld [vmem:[%s5 + $0x2c] sm:$0xf]
    %v9619 = vld [vmem:[%s5 + $0x30] sm:$0xf]
    %v9620 = vld [vmem:[%s5 + $0x34] sm:$0xf]
    %v9621 = vld [vmem:[%s5 + $0x38] sm:$0xf]
    %v9622 = vld [vmem:[%s5 + $0x3c] sm:$0xf]
    %vm9623 = vcmp.ge.s32.totalorder %v9545, 0
    %vm9624 = vmand %vm9549, %vm9623
    %vm9625 = vcmp.lt.s32.totalorder %v9545, 4
    %vm9626 = vmand %vm9624, %vm9625
    %v9627 = vadd.s32 %v9556, %v9545
    %vm9628 = vcmp.eq.s32.totalorder %v7017, %v9627
    %vm9629 = vmand %vm9626, %vm9628
    %v9630 = vsel %vm9629, 1.0, 0.0
    %v9631 = vpack.c.bf16 %v9630, %v9630
    %v9633 = vsel %vm9562, %v9631, 0
    %9635 = vmatprep.subr.bf16.mxu0 0
    %9636 = vmatpush1.bf16.msra.mxu0 %v9537
    %9637 = vmatprep.subr.bf16.mxu0 0
    %9638 = vmatpush1.bf16.msra.mxu0 %v9538
    %9639 = vmatprep.subr.bf16.mxu0 0
    %9640 = vmatpush1.bf16.msra.mxu0 0
    %9641 = vmatprep.subr.bf16.mxu0 0
    %9642 = vmatpush1.bf16.msra.mxu0 0
    %9643 = vmatprep.subr.bf16.mxu0 0
    %9644 = vmatpush1.bf16.msra.mxu0 0
    %9645 = vmatprep.subr.bf16.mxu0 0
    %9646 = vmatpush1.bf16.msra.mxu0 0
    %9647 = vmatprep.subr.bf16.mxu0 0
    %9648 = vmatpush1.bf16.msra.mxu0 0
    %9649 = vmatprep.subr.bf16.mxu0 0
    %9650 = vmatpush1.bf16.msra.mxu0 0
    %9651 = vmatprep.subr.bf16.mxu0 0
    %9652 = vmatpush1.bf16.msra.mxu0 0
    %9653 = vmatprep.subr.bf16.mxu0 0
    %9654 = vmatpush1.bf16.msra.mxu0 0
    %9655 = vmatprep.subr.bf16.mxu0 0
    %9656 = vmatpush1.bf16.msra.mxu0 0
    %9657 = vmatprep.subr.bf16.mxu0 0
    %9658 = vmatpush1.bf16.msra.mxu0 0
    %9659 = vmatprep.subr.bf16.mxu0 0
    %9660 = vmatpush1.bf16.msra.mxu0 0
    %9661 = vmatprep.subr.bf16.mxu0 0
    %9662 = vmatpush1.bf16.msra.mxu0 0
    %9663 = vmatprep.subr.bf16.mxu0 0
    %9664 = vmatpush1.bf16.msra.mxu0 0
    %9665 = vmatprep.subr.bf16.mxu0 0
    %9666 = vmatpush1.bf16.msra.mxu0 0
    %9667 = vmatprep.mubr.bf16.mxu0 0
    %9668 = vmatmul.mubr.bf16.gmra.mrb[0].mxu0 %v9633
    %v9669 = vpop.f32.mrb[0].mxu0
    %v9670 = vadd.f32 0.0, %v9669
    %v9671 = vpop.f32.mrb[0].mxu0
    %v9672 = vpop.f32.mrb[0].mxu0
    %v9673 = vpop.f32.mrb[0].mxu0
    %9674 = vdwg.mxu0
    %v9675 = vpack.c.bf16 %v9670, %v9670
    %s9676 = scalar_lea.vmem %s5, 64
    %v9677 = vld [vmem:[%s9676] sm:$0xf]
    %v9678 = vld [vmem:[%s9676 + $0x4] sm:$0xf]
    %v9679 = vld [vmem:[%s9676 + $0x8] sm:$0xf]
    %v9680 = vld [vmem:[%s9676 + $0xc] sm:$0xf]
    %v9681 = vld [vmem:[%s9676 + $0x10] sm:$0xf]
    %v9682 = vld [vmem:[%s9676 + $0x14] sm:$0xf]
    %v9683 = vld [vmem:[%s9676 + $0x18] sm:$0xf]
    %v9684 = vld [vmem:[%s9676 + $0x1c] sm:$0xf]
    %v9685 = vld [vmem:[%s9676 + $0x20] sm:$0xf]
    %v9686 = vld [vmem:[%s9676 + $0x24] sm:$0xf]
    %v9687 = vld [vmem:[%s9676 + $0x28] sm:$0xf]
    %v9688 = vld [vmem:[%s9676 + $0x2c] sm:$0xf]
    %v9689 = vld [vmem:[%s9676 + $0x30] sm:$0xf]
    %v9690 = vld [vmem:[%s9676 + $0x34] sm:$0xf]
    %v9691 = vld [vmem:[%s9676 + $0x38] sm:$0xf]
    %v9692 = vld [vmem:[%s9676 + $0x3c] sm:$0xf]
    %v9709 = vunpack.c.l.b16 %v9677
    %v9710 = vunpack.c.l.b16 %v9678
    %v9711 = vunpack.c.l.b16 %v9679
    %v9712 = vunpack.c.l.b16 %v9680
    %v9713 = vunpack.c.l.b16 %v9681
    %v9714 = vunpack.c.l.b16 %v9682
    %v9715 = vunpack.c.l.b16 %v9683
    %v9716 = vunpack.c.l.b16 %v9684
    %v9717 = vunpack.c.l.b16 %v9685
    %v9718 = vunpack.c.l.b16 %v9686
    %v9719 = vunpack.c.l.b16 %v9687
    %v9720 = vunpack.c.l.b16 %v9688
    %v9721 = vunpack.c.l.b16 %v9689
    %v9722 = vunpack.c.l.b16 %v9690
    %v9723 = vunpack.c.l.b16 %v9691
    %v9724 = vunpack.c.l.b16 %v9692
    %v9725 = vpack.c.b16 %v9710, %v9709
    %v9726 = vpack.c.b16 %v9712, %v9711
    %v9727 = vpack.c.b16 %v9714, %v9713
    %v9728 = vpack.c.b16 %v9716, %v9715
    %v9729 = vpack.c.b16 %v9718, %v9717
    %v9730 = vpack.c.b16 %v9720, %v9719
    %v9731 = vpack.c.b16 %v9722, %v9721
    %v9732 = vpack.c.b16 %v9724, %v9723
    %9741 = vmatprep.subr.bf16.mxu0 0
    %9742 = vmatpush1.bf16.msra.mxu0 %v9725
    %9743 = vmatprep.subr.bf16.mxu0 0
    %9744 = vmatpush1.bf16.msra.mxu0 %v9726
    %9745 = vmatprep.subr.bf16.mxu0 0
    %9746 = vmatpush1.bf16.msra.mxu0 %v9727
    %9747 = vmatprep.subr.bf16.mxu0 0
    %9748 = vmatpush1.bf16.msra.mxu0 %v9728
    %9749 = vmatprep.subr.bf16.mxu0 0
    %9750 = vmatpush1.bf16.msra.mxu0 %v9729
    %9751 = vmatprep.subr.bf16.mxu0 0
    %9752 = vmatpush1.bf16.msra.mxu0 %v9730
    %9753 = vmatprep.subr.bf16.mxu0 0
    %9754 = vmatpush1.bf16.msra.mxu0 %v9731
    %9755 = vmatprep.subr.bf16.mxu0 0
    %9756 = vmatpush1.bf16.msra.mxu0 %v9732
    %9757 = vmatprep.subr.bf16.mxu0 0
    %9758 = vmatpush1.bf16.msra.mxu0 0
    %9759 = vmatprep.subr.bf16.mxu0 0
    %9760 = vmatpush1.bf16.msra.mxu0 0
    %9761 = vmatprep.subr.bf16.mxu0 0
    %9762 = vmatpush1.bf16.msra.mxu0 0
    %9763 = vmatprep.subr.bf16.mxu0 0
    %9764 = vmatpush1.bf16.msra.mxu0 0
    %9765 = vmatprep.subr.bf16.mxu0 0
    %9766 = vmatpush1.bf16.msra.mxu0 0
    %9767 = vmatprep.subr.bf16.mxu0 0
    %9768 = vmatpush1.bf16.msra.mxu0 0
    %9769 = vmatprep.subr.bf16.mxu0 0
    %9770 = vmatpush1.bf16.msra.mxu0 0
    %9771 = vmatprep.subr.bf16.mxu0 0
    %9772 = vmatpush1.bf16.msra.mxu0 0
    %9773 = vmatprep.mubr.bf16.mxu0 0
    %9774 = vmatmul.mubr.bf16.gmra.mrb[0].mxu0 %v9675
    %v9775 = vpop.f32.mrb[0].mxu0
    %v9776 = vadd.f32 0.0, %v9775
    %v9777 = vpop.f32.mrb[0].mxu0
    %v9778 = vpop.f32.mrb[0].mxu0
    %v9779 = vpop.f32.mrb[0].mxu0
    %9780 = vdwg.mxu0
    %v9797 = vunpack.c.l.b16 %v9607
    %v9798 = vunpack.c.l.b16 %v9608
    %v9799 = vunpack.c.l.b16 %v9609
    %v9800 = vunpack.c.l.b16 %v9610
    %v9801 = vunpack.c.l.b16 %v9611
    %v9802 = vunpack.c.l.b16 %v9612
    %v9803 = vunpack.c.l.b16 %v9613
    %v9804 = vunpack.c.l.b16 %v9614
    %v9805 = vunpack.c.l.b16 %v9615
    %v9806 = vunpack.c.l.b16 %v9616
    %v9807 = vunpack.c.l.b16 %v9617
    %v9808 = vunpack.c.l.b16 %v9618
    %v9809 = vunpack.c.l.b16 %v9619
    %v9810 = vunpack.c.l.b16 %v9620
    %v9811 = vunpack.c.l.b16 %v9621
    %v9812 = vunpack.c.l.b16 %v9622
    %v9813 = vpack.c.b16 %v9798, %v9797
    %v9814 = vpack.c.b16 %v9800, %v9799
    %v9815 = vpack.c.b16 %v9802, %v9801
    %v9816 = vpack.c.b16 %v9804, %v9803
    %v9817 = vpack.c.b16 %v9806, %v9805
    %v9818 = vpack.c.b16 %v9808, %v9807
    %v9819 = vpack.c.b16 %v9810, %v9809
    %v9820 = vpack.c.b16 %v9812, %v9811
    %9829 = vmatprep.subr.bf16.mxu0 0
    %9830 = vmatpush1.bf16.msra.mxu0 %v9813
    %9831 = vmatprep.subr.bf16.mxu0 0
    %9832 = vmatpush1.bf16.msra.mxu0 %v9814
    %9833 = vmatprep.subr.bf16.mxu0 0
    %9834 = vmatpush1.bf16.msra.mxu0 %v9815
    %9835 = vmatprep.subr.bf16.mxu0 0
    %9836 = vmatpush1.bf16.msra.mxu0 %v9816
    %9837 = vmatprep.subr.bf16.mxu0 0
    %9838 = vmatpush1.bf16.msra.mxu0 %v9817
    %9839 = vmatprep.subr.bf16.mxu0 0
    %9840 = vmatpush1.bf16.msra.mxu0 %v9818
    %9841 = vmatprep.subr.bf16.mxu0 0
    %9842 = vmatpush1.bf16.msra.mxu0 %v9819
    %9843 = vmatprep.subr.bf16.mxu0 0
    %9844 = vmatpush1.bf16.msra.mxu0 %v9820
    %9845 = vmatprep.subr.bf16.mxu0 0
    %9846 = vmatpush1.bf16.msra.mxu0 0
    %9847 = vmatprep.subr.bf16.mxu0 0
    %9848 = vmatpush1.bf16.msra.mxu0 0
    %9849 = vmatprep.subr.bf16.mxu0 0
    %9850 = vmatpush1.bf16.msra.mxu0 0
    %9851 = vmatprep.subr.bf16.mxu0 0
    %9852 = vmatpush1.bf16.msra.mxu0 0
    %9853 = vmatprep.subr.bf16.mxu0 0
    %9854 = vmatpush1.bf16.msra.mxu0 0
    %9855 = vmatprep.subr.bf16.mxu0 0
    %9856 = vmatpush1.bf16.msra.mxu0 0
    %9857 = vmatprep.subr.bf16.mxu0 0
    %9858 = vmatpush1.bf16.msra.mxu0 0
    %9859 = vmatprep.subr.bf16.mxu0 0
    %9860 = vmatpush1.bf16.msra.mxu0 0
    %9861 = vmatprep.mubr.bf16.mxu0 0
    %9862 = vmatmul.mubr.bf16.gmra.mrb[0].mxu0 %v9606
    %v9863 = vpop.f32.mrb[0].mxu0
    %v9864 = vadd.f32 %v9776, %v9863
    %v9865 = vpop.f32.mrb[0].mxu0
    %v9866 = vpop.f32.mrb[0].mxu0
    %v9867 = vpop.f32.mrb[0].mxu0
    %9868 = vdwg.mxu0
    %v9869 = vadd.s32 %v9546, 2
    %vm9870 = vcmp.ge.s32.totalorder %v9869, 0
    %vm9871 = vmand %vm9549, %vm9870
    %vm9872 = vcmp.lt.s32.totalorder %v9869, 4
    %vm9873 = vmand %vm9871, %vm9872
    %v9874 = vadd.s32 %v9556, %v9869
    %vm9875 = vcmp.eq.s32.totalorder %v7017, %v9874
    %vm9876 = vmand %vm9873, %vm9875
    %v9877 = vsel %vm9876, 1.0, 0.0
    %v9878 = vpack.c.bf16 %v9877, %v9877
    %v9880 = vsel %vm9562, %v9878, 0
    %9882 = vmatprep.subr.bf16.mxu0 0
    %9883 = vmatpush1.bf16.msra.mxu0 %v9537
    %9884 = vmatprep.subr.bf16.mxu0 0
    %9885 = vmatpush1.bf16.msra.mxu0 %v9538
    %9886 = vmatprep.subr.bf16.mxu0 0
    %9887 = vmatpush1.bf16.msra.mxu0 0
    %9888 = vmatprep.subr.bf16.mxu0 0
    %9889 = vmatpush1.bf16.msra.mxu0 0
    %9890 = vmatprep.subr.bf16.mxu0 0
    %9891 = vmatpush1.bf16.msra.mxu0 0
    %9892 = vmatprep.subr.bf16.mxu0 0
    %9893 = vmatpush1.bf16.msra.mxu0 0
    %9894 = vmatprep.subr.bf16.mxu0 0
    %9895 = vmatpush1.bf16.msra.mxu0 0
    %9896 = vmatprep.subr.bf16.mxu0 0
    %9897 = vmatpush1.bf16.msra.mxu0 0
    %9898 = vmatprep.subr.bf16.mxu0 0
    %9899 = vmatpush1.bf16.msra.mxu0 0
    %9900 = vmatprep.subr.bf16.mxu0 0
    %9901 = vmatpush1.bf16.msra.mxu0 0
    %9902 = vmatprep.subr.bf16.mxu0 0
    %9903 = vmatpush1.bf16.msra.mxu0 0
    %9904 = vmatprep.subr.bf16.mxu0 0
    %9905 = vmatpush1.bf16.msra.mxu0 0
    %9906 = vmatprep.subr.bf16.mxu0 0
    %9907 = vmatpush1.bf16.msra.mxu0 0
    %9908 = vmatprep.subr.bf16.mxu0 0
    %9909 = vmatpush1.bf16.msra.mxu0 0
    %9910 = vmatprep.subr.bf16.mxu0 0
    %9911 = vmatpush1.bf16.msra.mxu0 0
    %9912 = vmatprep.subr.bf16.mxu0 0
    %9913 = vmatpush1.bf16.msra.mxu0 0
    %9914 = vmatprep.mubr.bf16.mxu0 0
    %9915 = vmatmul.mubr.bf16.gmra.mrb[0].mxu0 %v9880
    %v9916 = vpop.f32.mrb[0].mxu0
    %v9917 = vadd.f32 0.0, %v9916
    %v9918 = vpop.f32.mrb[0].mxu0
    %v9919 = vpop.f32.mrb[0].mxu0
    %v9920 = vpop.f32.mrb[0].mxu0
    %9921 = vdwg.mxu0
    %v9922 = vpack.c.bf16 %v9917, %v9917
    %s9923 = scalar_lea.vmem %s5, 128
    %v9924 = vld [vmem:[%s9923] sm:$0xf]
    %v9925 = vld [vmem:[%s9923 + $0x4] sm:$0xf]
    %v9926 = vld [vmem:[%s9923 + $0x8] sm:$0xf]
    %v9927 = vld [vmem:[%s9923 + $0xc] sm:$0xf]
    %v9928 = vld [vmem:[%s9923 + $0x10] sm:$0xf]
    %v9929 = vld [vmem:[%s9923 + $0x14] sm:$0xf]
    %v9930 = vld [vmem:[%s9923 + $0x18] sm:$0xf]
    %v9931 = vld [vmem:[%s9923 + $0x1c] sm:$0xf]
    %v9932 = vld [vmem:[%s9923 + $0x20] sm:$0xf]
    %v9933 = vld [vmem:[%s9923 + $0x24] sm:$0xf]
    %v9934 = vld [vmem:[%s9923 + $0x28] sm:$0xf]
    %v9935 = vld [vmem:[%s9923 + $0x2c] sm:$0xf]
    %v9936 = vld [vmem:[%s9923 + $0x30] sm:$0xf]
    %v9937 = vld [vmem:[%s9923 + $0x34] sm:$0xf]
    %v9938 = vld [vmem:[%s9923 + $0x38] sm:$0xf]
    %v9939 = vld [vmem:[%s9923 + $0x3c] sm:$0xf]
    %v9956 = vunpack.c.l.b16 %v9924
    %v9957 = vunpack.c.l.b16 %v9925
    %v9958 = vunpack.c.l.b16 %v9926
    %v9959 = vunpack.c.l.b16 %v9927
    %v9960 = vunpack.c.l.b16 %v9928
    %v9961 = vunpack.c.l.b16 %v9929
    %v9962 = vunpack.c.l.b16 %v9930
    %v9963 = vunpack.c.l.b16 %v9931
    %v9964 = vunpack.c.l.b16 %v9932
    %v9965 = vunpack.c.l.b16 %v9933
    %v9966 = vunpack.c.l.b16 %v9934
    %v9967 = vunpack.c.l.b16 %v9935
    %v9968 = vunpack.c.l.b16 %v9936
    %v9969 = vunpack.c.l.b16 %v9937
    %v9970 = vunpack.c.l.b16 %v9938
    %v9971 = vunpack.c.l.b16 %v9939
    %v9972 = vpack.c.b16 %v9957, %v9956
    %v9973 = vpack.c.b16 %v9959, %v9958
    %v9974 = vpack.c.b16 %v9961, %v9960
    %v9975 = vpack.c.b16 %v9963, %v9962
    %v9976 = vpack.c.b16 %v9965, %v9964
    %v9977 = vpack.c.b16 %v9967, %v9966
    %v9978 = vpack.c.b16 %v9969, %v9968
    %v9979 = vpack.c.b16 %v9971, %v9970
    %9988 = vmatprep.subr.bf16.mxu0 0
    %9989 = vmatpush1.bf16.msra.mxu0 %v9972
    %9990 = vmatprep.subr.bf16.mxu0 0
    %9991 = vmatpush1.bf16.msra.mxu0 %v9973
    %9992 = vmatprep.subr.bf16.mxu0 0
    %9993 = vmatpush1.bf16.msra.mxu0 %v9974
    %9994 = vmatprep.subr.bf16.mxu0 0
    %9995 = vmatpush1.bf16.msra.mxu0 %v9975
    %9996 = vmatprep.subr.bf16.mxu0 0
    %9997 = vmatpush1.bf16.msra.mxu0 %v9976
    %9998 = vmatprep.subr.bf16.mxu0 0
    %9999 = vmatpush1.bf16.msra.mxu0 %v9977
    %10000 = vmatprep.subr.bf16.mxu0 0
    %10001 = vmatpush1.bf16.msra.mxu0 %v9978
    %10002 = vmatprep.subr.bf16.mxu0 0
    %10003 = vmatpush1.bf16.msra.mxu0 %v9979
    %10004 = vmatprep.subr.bf16.mxu0 0
    %10005 = vmatpush1.bf16.msra.mxu0 0
    %10006 = vmatprep.subr.bf16.mxu0 0
    %10007 = vmatpush1.bf16.msra.mxu0 0
    %10008 = vmatprep.subr.bf16.mxu0 0
    %10009 = vmatpush1.bf16.msra.mxu0 0
    %10010 = vmatprep.subr.bf16.mxu0 0
    %10011 = vmatpush1.bf16.msra.mxu0 0
    %10012 = vmatprep.subr.bf16.mxu0 0
    %10013 = vmatpush1.bf16.msra.mxu0 0
    %10014 = vmatprep.subr.bf16.mxu0 0
    %10015 = vmatpush1.bf16.msra.mxu0 0
    %10016 = vmatprep.subr.bf16.mxu0 0
    %10017 = vmatpush1.bf16.msra.mxu0 0
    %10018 = vmatprep.subr.bf16.mxu0 0
    %10019 = vmatpush1.bf16.msra.mxu0 0
    %10020 = vmatprep.mubr.bf16.mxu0 0
    %10021 = vmatmul.mubr.bf16.gmra.mrb[0].mxu0 %v9922
    %v10022 = vpop.f32.mrb[0].mxu0
    %v10023 = vadd.f32 0.0, %v10022
    %v10024 = vpop.f32.mrb[0].mxu0
    %v10025 = vpop.f32.mrb[0].mxu0
    %v10026 = vpop.f32.mrb[0].mxu0
    %10027 = vdwg.mxu0
    %v10028 = vadd.f32 %v9864, %v10023
    %vm10029 = vcmp.ge.s32.totalorder %v9543, 0
    %vm10030 = vcmp.lt.s32.totalorder %v9543, 4
    %vm10031 = vmand %vm10029, %vm10030
    %vm10032 = vmand %vm10031, %vm9550
    %vm10033 = vmand %vm10032, %vm9552
    %v10034 = vmul.u32 %v9543, 4
    %v10035 = vadd.s32 %v9554, %v10034
    %v10036 = vadd.s32 %v10035, %v9546
    %vm10037 = vcmp.eq.s32.totalorder %v7017, %v10036
    %vm10038 = vmand %vm10033, %vm10037
    %v10039 = vsel %vm10038, 1.0, 0.0
    %v10040 = vpack.c.bf16 %v10039, %v10039
    %v10042 = vsel %vm9562, %v10040, 0
    %10044 = vmatprep.subr.bf16.mxu0 0
    %10045 = vmatpush1.bf16.msra.mxu0 %v9537
    %10046 = vmatprep.subr.bf16.mxu0 0
    %10047 = vmatpush1.bf16.msra.mxu0 %v9538
    %10048 = vmatprep.subr.bf16.mxu0 0
    %10049 = vmatpush1.bf16.msra.mxu0 0
    %10050 = vmatprep.subr.bf16.mxu0 0
    %10051 = vmatpush1.bf16.msra.mxu0 0
    %10052 = vmatprep.subr.bf16.mxu0 0
    %10053 = vmatpush1.bf16.msra.mxu0 0
    %10054 = vmatprep.subr.bf16.mxu0 0
    %10055 = vmatpush1.bf16.msra.mxu0 0
    %10056 = vmatprep.subr.bf16.mxu0 0
    %10057 = vmatpush1.bf16.msra.mxu0 0
    %10058 = vmatprep.subr.bf16.mxu0 0
    %10059 = vmatpush1.bf16.msra.mxu0 0
    %10060 = vmatprep.subr.bf16.mxu0 0
    %10061 = vmatpush1.bf16.msra.mxu0 0
    %10062 = vmatprep.subr.bf16.mxu0 0
    %10063 = vmatpush1.bf16.msra.mxu0 0
    %10064 = vmatprep.subr.bf16.mxu0 0
    %10065 = vmatpush1.bf16.msra.mxu0 0
    %10066 = vmatprep.subr.bf16.mxu0 0
    %10067 = vmatpush1.bf16.msra.mxu0 0
    %10068 = vmatprep.subr.bf16.mxu0 0
    %10069 = vmatpush1.bf16.msra.mxu0 0
    %10070 = vmatprep.subr.bf16.mxu0 0
    %10071 = vmatpush1.bf16.msra.mxu0 0
    %10072 = vmatprep.subr.bf16.mxu0 0
    %10073 = vmatpush1.bf16.msra.mxu0 0
    %10074 = vmatprep.subr.bf16.mxu0 0
    %10075 = vmatpush1.bf16.msra.mxu0 0
    %10076 = vmatprep.mubr.bf16.mxu0 0
    %10077 = vmatmul.mubr.bf16.gmra.mrb[0].mxu0 %v10042
    %v10078 = vpop.f32.mrb[0].mxu0
    %v10079 = vadd.f32 0.0, %v10078
    %v10080 = vpop.f32.mrb[0].mxu0
    %v10081 = vpop.f32.mrb[0].mxu0
    %v10082 = vpop.f32.mrb[0].mxu0
    %10083 = vdwg.mxu0
    %v10084 = vpack.c.bf16 %v10079, %v10079
    %s10085 = scalar_lea.vmem %s5, 192
    %v10086 = vld [vmem:[%s10085] sm:$0xf]
    %v10087 = vld [vmem:[%s10085 + $0x4] sm:$0xf]
    %v10088 = vld [vmem:[%s10085 + $0x8] sm:$0xf]
    %v10089 = vld [vmem:[%s10085 + $0xc] sm:$0xf]
    %v10090 = vld [vmem:[%s10085 + $0x10] sm:$0xf]
    %v10091 = vld [vmem:[%s10085 + $0x14] sm:$0xf]
    %v10092 = vld [vmem:[%s10085 + $0x18] sm:$0xf]
    %v10093 = vld [vmem:[%s10085 + $0x1c] sm:$0xf]
    %v10094 = vld [vmem:[%s10085 + $0x20] sm:$0xf]
    %v10095 = vld [vmem:[%s10085 + $0x24] sm:$0xf]
    %v10096 = vld [vmem:[%s10085 + $0x28] sm:$0xf]
    %v10097 = vld [vmem:[%s10085 + $0x2c] sm:$0xf]
    %v10098 = vld [vmem:[%s10085 + $0x30] sm:$0xf]
    %v10099 = vld [vmem:[%s10085 + $0x34] sm:$0xf]
    %v10100 = vld [vmem:[%s10085 + $0x38] sm:$0xf]
    %v10101 = vld [vmem:[%s10085 + $0x3c] sm:$0xf]
    %v10118 = vunpack.c.l.b16 %v10086
    %v10119 = vunpack.c.l.b16 %v10087
    %v10120 = vunpack.c.l.b16 %v10088
    %v10121 = vunpack.c.l.b16 %v10089
    %v10122 = vunpack.c.l.b16 %v10090
    %v10123 = vunpack.c.l.b16 %v10091
    %v10124 = vunpack.c.l.b16 %v10092
    %v10125 = vunpack.c.l.b16 %v10093
    %v10126 = vunpack.c.l.b16 %v10094
    %v10127 = vunpack.c.l.b16 %v10095
    %v10128 = vunpack.c.l.b16 %v10096
    %v10129 = vunpack.c.l.b16 %v10097
    %v10130 = vunpack.c.l.b16 %v10098
    %v10131 = vunpack.c.l.b16 %v10099
    %v10132 = vunpack.c.l.b16 %v10100
    %v10133 = vunpack.c.l.b16 %v10101
    %v10134 = vpack.c.b16 %v10119, %v10118
    %v10135 = vpack.c.b16 %v10121, %v10120
    %v10136 = vpack.c.b16 %v10123, %v10122
    %v10137 = vpack.c.b16 %v10125, %v10124
    %v10138 = vpack.c.b16 %v10127, %v10126
    %v10139 = vpack.c.b16 %v10129, %v10128
    %v10140 = vpack.c.b16 %v10131, %v10130
    %v10141 = vpack.c.b16 %v10133, %v10132
    %10150 = vmatprep.subr.bf16.mxu0 0
    %10151 = vmatpush1.bf16.msra.mxu0 %v10134
    %10152 = vmatprep.subr.bf16.mxu0 0
    %10153 = vmatpush1.bf16.msra.mxu0 %v10135
    %10154 = vmatprep.subr.bf16.mxu0 0
    %10155 = vmatpush1.bf16.msra.mxu0 %v10136
    %10156 = vmatprep.subr.bf16.mxu0 0
    %10157 = vmatpush1.bf16.msra.mxu0 %v10137
    %10158 = vmatprep.subr.bf16.mxu0 0
    %10159 = vmatpush1.bf16.msra.mxu0 %v10138
    %10160 = vmatprep.subr.bf16.mxu0 0
    %10161 = vmatpush1.bf16.msra.mxu0 %v10139
    %10162 = vmatprep.subr.bf16.mxu0 0
    %10163 = vmatpush1.bf16.msra.mxu0 %v10140
    %10164 = vmatprep.subr.bf16.mxu0 0
    %10165 = vmatpush1.bf16.msra.mxu0 %v10141
    %10166 = vmatprep.subr.bf16.mxu0 0
    %10167 = vmatpush1.bf16.msra.mxu0 0
    %10168 = vmatprep.subr.bf16.mxu0 0
    %10169 = vmatpush1.bf16.msra.mxu0 0
    %10170 = vmatprep.subr.bf16.mxu0 0
    %10171 = vmatpush1.bf16.msra.mxu0 0
    %10172 = vmatprep.subr.bf16.mxu0 0
    %10173 = vmatpush1.bf16.msra.mxu0 0
    %10174 = vmatprep.subr.bf16.mxu0 0
    %10175 = vmatpush1.bf16.msra.mxu0 0
    %10176 = vmatprep.subr.bf16.mxu0 0
    %10177 = vmatpush1.bf16.msra.mxu0 0
    %10178 = vmatprep.subr.bf16.mxu0 0
    %10179 = vmatpush1.bf16.msra.mxu0 0
    %10180 = vmatprep.subr.bf16.mxu0 0
    %10181 = vmatpush1.bf16.msra.mxu0 0
    %10182 = vmatprep.mubr.bf16.mxu0 0
    %10183 = vmatmul.mubr.bf16.gmra.mrb[0].mxu0 %v10084
    %v10184 = vpop.f32.mrb[0].mxu0
    %v10185 = vadd.f32 0.0, %v10184
    %v10186 = vpop.f32.mrb[0].mxu0
    %v10187 = vpop.f32.mrb[0].mxu0
    %v10188 = vpop.f32.mrb[0].mxu0
    %10189 = vdwg.mxu0
    %v10190 = vadd.f32 %v10028, %v10185
    %vm10191 = vmand %vm10031, %vm9623
    %vm10192 = vmand %vm10191, %vm9625
    %v10193 = vadd.s32 %v10035, %v9545
    %vm10194 = vcmp.eq.s32.totalorder %v7017, %v10193
    %vm10195 = vmand %vm10192, %vm10194
    %v10196 = vsel %vm10195, 1.0, 0.0
    %v10197 = vpack.c.bf16 %v10196, %v10196
    %v10199 = vsel %vm9562, %v10197, 0
    %10201 = vmatprep.subr.bf16.mxu0 0
    %10202 = vmatpush1.bf16.msra.mxu0 %v9537
    %10203 = vmatprep.subr.bf16.mxu0 0
    %10204 = vmatpush1.bf16.msra.mxu0 %v9538
    %10205 = vmatprep.subr.bf16.mxu0 0
    %10206 = vmatpush1.bf16.msra.mxu0 0
    %10207 = vmatprep.subr.bf16.mxu0 0
    %10208 = vmatpush1.bf16.msra.mxu0 0
    %10209 = vmatprep.subr.bf16.mxu0 0
    %10210 = vmatpush1.bf16.msra.mxu0 0
    %10211 = vmatprep.subr.bf16.mxu0 0
    %10212 = vmatpush1.bf16.msra.mxu0 0
    %10213 = vmatprep.subr.bf16.mxu0 0
    %10214 = vmatpush1.bf16.msra.mxu0 0
    %10215 = vmatprep.subr.bf16.mxu0 0
    %10216 = vmatpush1.bf16.msra.mxu0 0
    %10217 = vmatprep.subr.bf16.mxu0 0
    %10218 = vmatpush1.bf16.msra.mxu0 0
    %10219 = vmatprep.subr.bf16.mxu0 0
    %10220 = vmatpush1.bf16.msra.mxu0 0
    %10221 = vmatprep.subr.bf16.mxu0 0
    %10222 = vmatpush1.bf16.msra.mxu0 0
    %10223 = vmatprep.subr.bf16.mxu0 0
    %10224 = vmatpush1.bf16.msra.mxu0 0
    %10225 = vmatprep.subr.bf16.mxu0 0
    %10226 = vmatpush1.bf16.msra.mxu0 0
    %10227 = vmatprep.subr.bf16.mxu0 0
    %10228 = vmatpush1.bf16.msra.mxu0 0
    %10229 = vmatprep.subr.bf16.mxu0 0
    %10230 = vmatpush1.bf16.msra.mxu0 0
    %10231 = vmatprep.subr.bf16.mxu0 0
    %10232 = vmatpush1.bf16.msra.mxu0 0
    %10233 = vmatprep.mubr.bf16.mxu0 0
    %10234 = vmatmul.mubr.bf16.gmra.mrb[0].mxu0 %v10199
    %v10235 = vpop.f32.mrb[0].mxu0
    %v10236 = vadd.f32 0.0, %v10235
    %v10237 = vpop.f32.mrb[0].mxu0
    %v10238 = vpop.f32.mrb[0].mxu0
    %v10239 = vpop.f32.mrb[0].mxu0
    %10240 = vdwg.mxu0
    %v10241 = vpack.c.bf16 %v10236, %v10236
    %s10242 = scalar_lea.vmem %s5, 256
    %v10243 = vld [vmem:[%s10242] sm:$0xf]
    %v10244 = vld [vmem:[%s10242 + $0x4] sm:$0xf]
    %v10245 = vld [vmem:[%s10242 + $0x8] sm:$0xf]
    %v10246 = vld [vmem:[%s10242 + $0xc] sm:$0xf]
    %v10247 = vld [vmem:[%s10242 + $0x10] sm:$0xf]
    %v10248 = vld [vmem:[%s10242 + $0x14] sm:$0xf]
    %v10249 = vld [vmem:[%s10242 + $0x18] sm:$0xf]
    %v10250 = vld [vmem:[%s10242 + $0x1c] sm:$0xf]
    %v10251 = vld [vmem:[%s10242 + $0x20] sm:$0xf]
    %v10252 = vld [vmem:[%s10242 + $0x24] sm:$0xf]
    %v10253 = vld [vmem:[%s10242 + $0x28] sm:$0xf]
    %v10254 = vld [vmem:[%s10242 + $0x2c] sm:$0xf]
    %v10255 = vld [vmem:[%s10242 + $0x30] sm:$0xf]
    %v10256 = vld [vmem:[%s10242 + $0x34] sm:$0xf]
    %v10257 = vld [vmem:[%s10242 + $0x38] sm:$0xf]
    %v10258 = vld [vmem:[%s10242 + $0x3c] sm:$0xf]
    %v10275 = vunpack.c.l.b16 %v10243
    %v10276 = vunpack.c.l.b16 %v10244
    %v10277 = vunpack.c.l.b16 %v10245
    %v10278 = vunpack.c.l.b16 %v10246
    %v10279 = vunpack.c.l.b16 %v10247
    %v10280 = vunpack.c.l.b16 %v10248
    %v10281 = vunpack.c.l.b16 %v10249
    %v10282 = vunpack.c.l.b16 %v10250
    %v10283 = vunpack.c.l.b16 %v10251
    %v10284 = vunpack.c.l.b16 %v10252
    %v10285 = vunpack.c.l.b16 %v10253
    %v10286 = vunpack.c.l.b16 %v10254
    %v10287 = vunpack.c.l.b16 %v10255
    %v10288 = vunpack.c.l.b16 %v10256
    %v10289 = vunpack.c.l.b16 %v10257
    %v10290 = vunpack.c.l.b16 %v10258
    %v10291 = vpack.c.b16 %v10276, %v10275
    %v10292 = vpack.c.b16 %v10278, %v10277
    %v10293 = vpack.c.b16 %v10280, %v10279
    %v10294 = vpack.c.b16 %v10282, %v10281
    %v10295 = vpack.c.b16 %v10284, %v10283
    %v10296 = vpack.c.b16 %v10286, %v10285
    %v10297 = vpack.c.b16 %v10288, %v10287
    %v10298 = vpack.c.b16 %v10290, %v10289
    %10307 = vmatprep.subr.bf16.mxu0 0
    %10308 = vmatpush1.bf16.msra.mxu0 %v10291
    %10309 = vmatprep.subr.bf16.mxu0 0
    %10310 = vmatpush1.bf16.msra.mxu0 %v10292
    %10311 = vmatprep.subr.bf16.mxu0 0
    %10312 = vmatpush1.bf16.msra.mxu0 %v10293
    %10313 = vmatprep.subr.bf16.mxu0 0
    %10314 = vmatpush1.bf16.msra.mxu0 %v10294
    %10315 = vmatprep.subr.bf16.mxu0 0
    %10316 = vmatpush1.bf16.msra.mxu0 %v10295
    %10317 = vmatprep.subr.bf16.mxu0 0
    %10318 = vmatpush1.bf16.msra.mxu0 %v10296
    %10319 = vmatprep.subr.bf16.mxu0 0
    %10320 = vmatpush1.bf16.msra.mxu0 %v10297
    %10321 = vmatprep.subr.bf16.mxu0 0
    %10322 = vmatpush1.bf16.msra.mxu0 %v10298
    %10323 = vmatprep.subr.bf16.mxu0 0
    %10324 = vmatpush1.bf16.msra.mxu0 0
    %10325 = vmatprep.subr.bf16.mxu0 0
    %10326 = vmatpush1.bf16.msra.mxu0 0
    %10327 = vmatprep.subr.bf16.mxu0 0
    %10328 = vmatpush1.bf16.msra.mxu0 0
    %10329 = vmatprep.subr.bf16.mxu0 0
    %10330 = vmatpush1.bf16.msra.mxu0 0
    %10331 = vmatprep.subr.bf16.mxu0 0
    %10332 = vmatpush1.bf16.msra.mxu0 0
    %10333 = vmatprep.subr.bf16.mxu0 0
    %10334 = vmatpush1.bf16.msra.mxu0 0
    %10335 = vmatprep.subr.bf16.mxu0 0
    %10336 = vmatpush1.bf16.msra.mxu0 0
    %10337 = vmatprep.subr.bf16.mxu0 0
    %10338 = vmatpush1.bf16.msra.mxu0 0
    %10339 = vmatprep.mubr.bf16.mxu0 0
    %10340 = vmatmul.mubr.bf16.gmra.mrb[0].mxu0 %v10241
    %v10341 = vpop.f32.mrb[0].mxu0
    %v10342 = vadd.f32 0.0, %v10341
    %v10343 = vpop.f32.mrb[0].mxu0
    %v10344 = vpop.f32.mrb[0].mxu0
    %v10345 = vpop.f32.mrb[0].mxu0
    %10346 = vdwg.mxu0
    %v10347 = vadd.f32 %v10190, %v10342
    %vm10348 = vmand %vm10031, %vm9870
    %vm10349 = vmand %vm10348, %vm9872
    %v10350 = vadd.s32 %v10035, %v9869
    %vm10351 = vcmp.eq.s32.totalorder %v7017, %v10350
    %vm10352 = vmand %vm10349, %vm10351
    %v10353 = vsel %vm10352, 1.0, 0.0
    %v10354 = vpack.c.bf16 %v10353, %v10353
    %v10356 = vsel %vm9562, %v10354, 0
    %10358 = vmatprep.subr.bf16.mxu0 0
    %10359 = vmatpush1.bf16.msra.mxu0 %v9537
    %10360 = vmatprep.subr.bf16.mxu0 0
    %10361 = vmatpush1.bf16.msra.mxu0 %v9538
    %10362 = vmatprep.subr.bf16.mxu0 0
    %10363 = vmatpush1.bf16.msra.mxu0 0
    %10364 = vmatprep.subr.bf16.mxu0 0
    %10365 = vmatpush1.bf16.msra.mxu0 0
    %10366 = vmatprep.subr.bf16.mxu0 0
    %10367 = vmatpush1.bf16.msra.mxu0 0
    %10368 = vmatprep.subr.bf16.mxu0 0
    %10369 = vmatpush1.bf16.msra.mxu0 0
    %10370 = vmatprep.subr.bf16.mxu0 0
    %10371 = vmatpush1.bf16.msra.mxu0 0
    %10372 = vmatprep.subr.bf16.mxu0 0
    %10373 = vmatpush1.bf16.msra.mxu0 0
    %10374 = vmatprep.subr.bf16.mxu0 0
    %10375 = vmatpush1.bf16.msra.mxu0 0
    %10376 = vmatprep.subr.bf16.mxu0 0
    %10377 = vmatpush1.bf16.msra.mxu0 0
    %10378 = vmatprep.subr.bf16.mxu0 0
    %10379 = vmatpush1.bf16.msra.mxu0 0
    %10380 = vmatprep.subr.bf16.mxu0 0
    %10381 = vmatpush1.bf16.msra.mxu0 0
    %10382 = vmatprep.subr.bf16.mxu0 0
    %10383 = vmatpush1.bf16.msra.mxu0 0
    %10384 = vmatprep.subr.bf16.mxu0 0
    %10385 = vmatpush1.bf16.msra.mxu0 0
    %10386 = vmatprep.subr.bf16.mxu0 0
    %10387 = vmatpush1.bf16.msra.mxu0 0
    %10388 = vmatprep.subr.bf16.mxu0 0
    %10389 = vmatpush1.bf16.msra.mxu0 0
    %10390 = vmatprep.mubr.bf16.mxu0 0
    %10391 = vmatmul.mubr.bf16.gmra.mrb[0].mxu0 %v10356
    %v10392 = vpop.f32.mrb[0].mxu0
    %v10393 = vadd.f32 0.0, %v10392
    %v10394 = vpop.f32.mrb[0].mxu0
    %v10395 = vpop.f32.mrb[0].mxu0
    %v10396 = vpop.f32.mrb[0].mxu0
    %10397 = vdwg.mxu0
    %v10398 = vpack.c.bf16 %v10393, %v10393
    %s10399 = scalar_lea.vmem %s5, 320
    %v10400 = vld [vmem:[%s10399] sm:$0xf]
    %v10401 = vld [vmem:[%s10399 + $0x4] sm:$0xf]
    %v10402 = vld [vmem:[%s10399 + $0x8] sm:$0xf]
    %v10403 = vld [vmem:[%s10399 + $0xc] sm:$0xf]
    %v10404 = vld [vmem:[%s10399 + $0x10] sm:$0xf]
    %v10405 = vld [vmem:[%s10399 + $0x14] sm:$0xf]
    %v10406 = vld [vmem:[%s10399 + $0x18] sm:$0xf]
    %v10407 = vld [vmem:[%s10399 + $0x1c] sm:$0xf]
    %v10408 = vld [vmem:[%s10399 + $0x20] sm:$0xf]
    %v10409 = vld [vmem:[%s10399 + $0x24] sm:$0xf]
    %v10410 = vld [vmem:[%s10399 + $0x28] sm:$0xf]
    %v10411 = vld [vmem:[%s10399 + $0x2c] sm:$0xf]
    %v10412 = vld [vmem:[%s10399 + $0x30] sm:$0xf]
    %v10413 = vld [vmem:[%s10399 + $0x34] sm:$0xf]
    %v10414 = vld [vmem:[%s10399 + $0x38] sm:$0xf]
    %v10415 = vld [vmem:[%s10399 + $0x3c] sm:$0xf]
    %v10432 = vunpack.c.l.b16 %v10400
    %v10433 = vunpack.c.l.b16 %v10401
    %v10434 = vunpack.c.l.b16 %v10402
    %v10435 = vunpack.c.l.b16 %v10403
    %v10436 = vunpack.c.l.b16 %v10404
    %v10437 = vunpack.c.l.b16 %v10405
    %v10438 = vunpack.c.l.b16 %v10406
    %v10439 = vunpack.c.l.b16 %v10407
    %v10440 = vunpack.c.l.b16 %v10408
    %v10441 = vunpack.c.l.b16 %v10409
    %v10442 = vunpack.c.l.b16 %v10410
    %v10443 = vunpack.c.l.b16 %v10411
    %v10444 = vunpack.c.l.b16 %v10412
    %v10445 = vunpack.c.l.b16 %v10413
    %v10446 = vunpack.c.l.b16 %v10414
    %v10447 = vunpack.c.l.b16 %v10415
    %v10448 = vpack.c.b16 %v10433, %v10432
    %v10449 = vpack.c.b16 %v10435, %v10434
    %v10450 = vpack.c.b16 %v10437, %v10436
    %v10451 = vpack.c.b16 %v10439, %v10438
    %v10452 = vpack.c.b16 %v10441, %v10440
    %v10453 = vpack.c.b16 %v10443, %v10442
    %v10454 = vpack.c.b16 %v10445, %v10444
    %v10455 = vpack.c.b16 %v10447, %v10446
    %10464 = vmatprep.subr.bf16.mxu0 0
    %10465 = vmatpush1.bf16.msra.mxu0 %v10448
    %10466 = vmatprep.subr.bf16.mxu0 0
    %10467 = vmatpush1.bf16.msra.mxu0 %v10449
    %10468 = vmatprep.subr.bf16.mxu0 0
    %10469 = vmatpush1.bf16.msra.mxu0 %v10450
    %10470 = vmatprep.subr.bf16.mxu0 0
    %10471 = vmatpush1.bf16.msra.mxu0 %v10451
    %10472 = vmatprep.subr.bf16.mxu0 0
    %10473 = vmatpush1.bf16.msra.mxu0 %v10452
    %10474 = vmatprep.subr.bf16.mxu0 0
    %10475 = vmatpush1.bf16.msra.mxu0 %v10453
    %10476 = vmatprep.subr.bf16.mxu0 0
    %10477 = vmatpush1.bf16.msra.mxu0 %v10454
    %10478 = vmatprep.subr.bf16.mxu0 0
    %10479 = vmatpush1.bf16.msra.mxu0 %v10455
    %10480 = vmatprep.subr.bf16.mxu0 0
    %10481 = vmatpush1.bf16.msra.mxu0 0
    %10482 = vmatprep.subr.bf16.mxu0 0
    %10483 = vmatpush1.bf16.msra.mxu0 0
    %10484 = vmatprep.subr.bf16.mxu0 0
    %10485 = vmatpush1.bf16.msra.mxu0 0
    %10486 = vmatprep.subr.bf16.mxu0 0
    %10487 = vmatpush1.bf16.msra.mxu0 0
    %10488 = vmatprep.subr.bf16.mxu0 0
    %10489 = vmatpush1.bf16.msra.mxu0 0
    %10490 = vmatprep.subr.bf16.mxu0 0
    %10491 = vmatpush1.bf16.msra.mxu0 0
    %10492 = vmatprep.subr.bf16.mxu0 0
    %10493 = vmatpush1.bf16.msra.mxu0 0
    %10494 = vmatprep.subr.bf16.mxu0 0
    %10495 = vmatpush1.bf16.msra.mxu0 0
    %10496 = vmatprep.mubr.bf16.mxu0 0
    %10497 = vmatmul.mubr.bf16.gmra.mrb[0].mxu0 %v10398
    %v10498 = vpop.f32.mrb[0].mxu0
    %v10499 = vadd.f32 0.0, %v10498
    %v10500 = vpop.f32.mrb[0].mxu0
    %v10501 = vpop.f32.mrb[0].mxu0
    %v10502 = vpop.f32.mrb[0].mxu0
    %10503 = vdwg.mxu0
    %v10504 = vadd.f32 %v10347, %v10499
    %v10505 = vadd.s32 %v9544, 2
    %vm10506 = vcmp.ge.s32.totalorder %v10505, 0
    %vm10507 = vcmp.lt.s32.totalorder %v10505, 4
    %vm10508 = vmand %vm10506, %vm10507
    %vm10509 = vmand %vm10508, %vm9550
    %vm10510 = vmand %vm10509, %vm9552
    %v10511 = vmul.u32 %v10505, 4
    %v10512 = vadd.s32 %v9554, %v10511
    %v10513 = vadd.s32 %v10512, %v9546
    %vm10514 = vcmp.eq.s32.totalorder %v7017, %v10513
    %vm10515 = vmand %vm10510, %vm10514
    %v10516 = vsel %vm10515, 1.0, 0.0
    %v10517 = vpack.c.bf16 %v10516, %v10516
    %v10519 = vsel %vm9562, %v10517, 0
    %10521 = vmatprep.subr.bf16.mxu0 0
    %10522 = vmatpush1.bf16.msra.mxu0 %v9537
    %10523 = vmatprep.subr.bf16.mxu0 0
    %10524 = vmatpush1.bf16.msra.mxu0 %v9538
    %10525 = vmatprep.subr.bf16.mxu0 0
    %10526 = vmatpush1.bf16.msra.mxu0 0
    %10527 = vmatprep.subr.bf16.mxu0 0
    %10528 = vmatpush1.bf16.msra.mxu0 0
    %10529 = vmatprep.subr.bf16.mxu0 0
    %10530 = vmatpush1.bf16.msra.mxu0 0
    %10531 = vmatprep.subr.bf16.mxu0 0
    %10532 = vmatpush1.bf16.msra.mxu0 0
    %10533 = vmatprep.subr.bf16.mxu0 0
    %10534 = vmatpush1.bf16.msra.mxu0 0
    %10535 = vmatprep.subr.bf16.mxu0 0
    %10536 = vmatpush1.bf16.msra.mxu0 0
    %10537 = vmatprep.subr.bf16.mxu0 0
    %10538 = vmatpush1.bf16.msra.mxu0 0
    %10539 = vmatprep.subr.bf16.mxu0 0
    %10540 = vmatpush1.bf16.msra.mxu0 0
    %10541 = vmatprep.subr.bf16.mxu0 0
    %10542 = vmatpush1.bf16.msra.mxu0 0
    %10543 = vmatprep.subr.bf16.mxu0 0
    %10544 = vmatpush1.bf16.msra.mxu0 0
    %10545 = vmatprep.subr.bf16.mxu0 0
    %10546 = vmatpush1.bf16.msra.mxu0 0
    %10547 = vmatprep.subr.bf16.mxu0 0
    %10548 = vmatpush1.bf16.msra.mxu0 0
    %10549 = vmatprep.subr.bf16.mxu0 0
    %10550 = vmatpush1.bf16.msra.mxu0 0
    %10551 = vmatprep.subr.bf16.mxu0 0
    %10552 = vmatpush1.bf16.msra.mxu0 0
    %10553 = vmatprep.mubr.bf16.mxu0 0
    %10554 = vmatmul.mubr.bf16.gmra.mrb[0].mxu0 %v10519
    %v10555 = vpop.f32.mrb[0].mxu0
    %v10556 = vadd.f32 0.0, %v10555
    %v10557 = vpop.f32.mrb[0].mxu0
    %v10558 = vpop.f32.mrb[0].mxu0
    %v10559 = vpop.f32.mrb[0].mxu0
    %10560 = vdwg.mxu0
    %v10561 = vpack.c.bf16 %v10556, %v10556
    %s10562 = scalar_lea.vmem %s5, 384
    %v10563 = vld [vmem:[%s10562] sm:$0xf]
    %v10564 = vld [vmem:[%s10562 + $0x4] sm:$0xf]
    %v10565 = vld [vmem:[%s10562 + $0x8] sm:$0xf]
    %v10566 = vld [vmem:[%s10562 + $0xc] sm:$0xf]
    %v10567 = vld [vmem:[%s10562 + $0x10] sm:$0xf]
    %v10568 = vld [vmem:[%s10562 + $0x14] sm:$0xf]
    %v10569 = vld [vmem:[%s10562 + $0x18] sm:$0xf]
    %v10570 = vld [vmem:[%s10562 + $0x1c] sm:$0xf]
    %v10571 = vld [vmem:[%s10562 + $0x20] sm:$0xf]
    %v10572 = vld [vmem:[%s10562 + $0x24] sm:$0xf]
    %v10573 = vld [vmem:[%s10562 + $0x28] sm:$0xf]
    %v10574 = vld [vmem:[%s10562 + $0x2c] sm:$0xf]
    %v10575 = vld [vmem:[%s10562 + $0x30] sm:$0xf]
    %v10576 = vld [vmem:[%s10562 + $0x34] sm:$0xf]
    %v10577 = vld [vmem:[%s10562 + $0x38] sm:$0xf]
    %v10578 = vld [vmem:[%s10562 + $0x3c] sm:$0xf]
    %v10595 = vunpack.c.l.b16 %v10563
    %v10596 = vunpack.c.l.b16 %v10564
    %v10597 = vunpack.c.l.b16 %v10565
    %v10598 = vunpack.c.l.b16 %v10566
    %v10599 = vunpack.c.l.b16 %v10567
    %v10600 = vunpack.c.l.b16 %v10568
    %v10601 = vunpack.c.l.b16 %v10569
    %v10602 = vunpack.c.l.b16 %v10570
    %v10603 = vunpack.c.l.b16 %v10571
    %v10604 = vunpack.c.l.b16 %v10572
    %v10605 = vunpack.c.l.b16 %v10573
    %v10606 = vunpack.c.l.b16 %v10574
    %v10607 = vunpack.c.l.b16 %v10575
    %v10608 = vunpack.c.l.b16 %v10576
    %v10609 = vunpack.c.l.b16 %v10577
    %v10610 = vunpack.c.l.b16 %v10578
    %v10611 = vpack.c.b16 %v10596, %v10595
    %v10612 = vpack.c.b16 %v10598, %v10597
    %v10613 = vpack.c.b16 %v10600, %v10599
    %v10614 = vpack.c.b16 %v10602, %v10601
    %v10615 = vpack.c.b16 %v10604, %v10603
    %v10616 = vpack.c.b16 %v10606, %v10605
    %v10617 = vpack.c.b16 %v10608, %v10607
    %v10618 = vpack.c.b16 %v10610, %v10609
    %10627 = vmatprep.subr.bf16.mxu0 0
    %10628 = vmatpush1.bf16.msra.mxu0 %v10611
    %10629 = vmatprep.subr.bf16.mxu0 0
    %10630 = vmatpush1.bf16.msra.mxu0 %v10612
    %10631 = vmatprep.subr.bf16.mxu0 0
    %10632 = vmatpush1.bf16.msra.mxu0 %v10613
    %10633 = vmatprep.subr.bf16.mxu0 0
    %10634 = vmatpush1.bf16.msra.mxu0 %v10614
    %10635 = vmatprep.subr.bf16.mxu0 0
    %10636 = vmatpush1.bf16.msra.mxu0 %v10615
    %10637 = vmatprep.subr.bf16.mxu0 0
    %10638 = vmatpush1.bf16.msra.mxu0 %v10616
    %10639 = vmatprep.subr.bf16.mxu0 0
    %10640 = vmatpush1.bf16.msra.mxu0 %v10617
    %10641 = vmatprep.subr.bf16.mxu0 0
    %10642 = vmatpush1.bf16.msra.mxu0 %v10618
    %10643 = vmatprep.subr.bf16.mxu0 0
    %10644 = vmatpush1.bf16.msra.mxu0 0
    %10645 = vmatprep.subr.bf16.mxu0 0
    %10646 = vmatpush1.bf16.msra.mxu0 0
    %10647 = vmatprep.subr.bf16.mxu0 0
    %10648 = vmatpush1.bf16.msra.mxu0 0
    %10649 = vmatprep.subr.bf16.mxu0 0
    %10650 = vmatpush1.bf16.msra.mxu0 0
    %10651 = vmatprep.subr.bf16.mxu0 0
    %10652 = vmatpush1.bf16.msra.mxu0 0
    %10653 = vmatprep.subr.bf16.mxu0 0
    %10654 = vmatpush1.bf16.msra.mxu0 0
    %10655 = vmatprep.subr.bf16.mxu0 0
    %10656 = vmatpush1.bf16.msra.mxu0 0
    %10657 = vmatprep.subr.bf16.mxu0 0
    %10658 = vmatpush1.bf16.msra.mxu0 0
    %10659 = vmatprep.mubr.bf16.mxu0 0
    %10660 = vmatmul.mubr.bf16.gmra.mrb[0].mxu0 %v10561
    %v10661 = vpop.f32.mrb[0].mxu0
    %v10662 = vadd.f32 0.0, %v10661
    %v10663 = vpop.f32.mrb[0].mxu0
    %v10664 = vpop.f32.mrb[0].mxu0
    %v10665 = vpop.f32.mrb[0].mxu0
    %10666 = vdwg.mxu0
    %v10667 = vadd.f32 %v10504, %v10662
    %vm10668 = vmand %vm10508, %vm9623
    %vm10669 = vmand %vm10668, %vm9625
    %v10670 = vadd.s32 %v10512, %v9545
    %vm10671 = vcmp.eq.s32.totalorder %v7017, %v10670
    %vm10672 = vmand %vm10669, %vm10671
    %v10673 = vsel %vm10672, 1.0, 0.0
    %v10674 = vpack.c.bf16 %v10673, %v10673
    %v10676 = vsel %vm9562, %v10674, 0
    %10678 = vmatprep.subr.bf16.mxu0 0
    %10679 = vmatpush1.bf16.msra.mxu0 %v9537
    %10680 = vmatprep.subr.bf16.mxu0 0
    %10681 = vmatpush1.bf16.msra.mxu0 %v9538
    %10682 = vmatprep.subr.bf16.mxu0 0
    %10683 = vmatpush1.bf16.msra.mxu0 0
    %10684 = vmatprep.subr.bf16.mxu0 0
    %10685 = vmatpush1.bf16.msra.mxu0 0
    %10686 = vmatprep.subr.bf16.mxu0 0
    %10687 = vmatpush1.bf16.msra.mxu0 0
    %10688 = vmatprep.subr.bf16.mxu0 0
    %10689 = vmatpush1.bf16.msra.mxu0 0
    %10690 = vmatprep.subr.bf16.mxu0 0
    %10691 = vmatpush1.bf16.msra.mxu0 0
    %10692 = vmatprep.subr.bf16.mxu0 0
    %10693 = vmatpush1.bf16.msra.mxu0 0
    %10694 = vmatprep.subr.bf16.mxu0 0
    %10695 = vmatpush1.bf16.msra.mxu0 0
    %10696 = vmatprep.subr.bf16.mxu0 0
    %10697 = vmatpush1.bf16.msra.mxu0 0
    %10698 = vmatprep.subr.bf16.mxu0 0
    %10699 = vmatpush1.bf16.msra.mxu0 0
    %10700 = vmatprep.subr.bf16.mxu0 0
    %10701 = vmatpush1.bf16.msra.mxu0 0
    %10702 = vmatprep.subr.bf16.mxu0 0
    %10703 = vmatpush1.bf16.msra.mxu0 0
    %10704 = vmatprep.subr.bf16.mxu0 0
    %10705 = vmatpush1.bf16.msra.mxu0 0
    %10706 = vmatprep.subr.bf16.mxu0 0
    %10707 = vmatpush1.bf16.msra.mxu0 0
    %10708 = vmatprep.subr.bf16.mxu0 0
    %10709 = vmatpush1.bf16.msra.mxu0 0
    %10710 = vmatprep.mubr.bf16.mxu0 0
    %10711 = vmatmul.mubr.bf16.gmra.mrb[0].mxu0 %v10676
    %v10712 = vpop.f32.mrb[0].mxu0
    %v10713 = vadd.f32 0.0, %v10712
    %v10714 = vpop.f32.mrb[0].mxu0
    %v10715 = vpop.f32.mrb[0].mxu0
    %v10716 = vpop.f32.mrb[0].mxu0
    %10717 = vdwg.mxu0
    %v10718 = vpack.c.bf16 %v10713, %v10713
    %s10719 = scalar_lea.vmem %s5, 448
    %v10720 = vld [vmem:[%s10719] sm:$0xf]
    %v10721 = vld [vmem:[%s10719 + $0x4] sm:$0xf]
    %v10722 = vld [vmem:[%s10719 + $0x8] sm:$0xf]
    %v10723 = vld [vmem:[%s10719 + $0xc] sm:$0xf]
    %v10724 = vld [vmem:[%s10719 + $0x10] sm:$0xf]
    %v10725 = vld [vmem:[%s10719 + $0x14] sm:$0xf]
    %v10726 = vld [vmem:[%s10719 + $0x18] sm:$0xf]
    %v10727 = vld [vmem:[%s10719 + $0x1c] sm:$0xf]
    %v10728 = vld [vmem:[%s10719 + $0x20] sm:$0xf]
    %v10729 = vld [vmem:[%s10719 + $0x24] sm:$0xf]
    %v10730 = vld [vmem:[%s10719 + $0x28] sm:$0xf]
    %v10731 = vld [vmem:[%s10719 + $0x2c] sm:$0xf]
    %v10732 = vld [vmem:[%s10719 + $0x30] sm:$0xf]
    %v10733 = vld [vmem:[%s10719 + $0x34] sm:$0xf]
    %v10734 = vld [vmem:[%s10719 + $0x38] sm:$0xf]
    %v10735 = vld [vmem:[%s10719 + $0x3c] sm:$0xf]
    %v10752 = vunpack.c.l.b16 %v10720
    %v10753 = vunpack.c.l.b16 %v10721
    %v10754 = vunpack.c.l.b16 %v10722
    %v10755 = vunpack.c.l.b16 %v10723
    %v10756 = vunpack.c.l.b16 %v10724
    %v10757 = vunpack.c.l.b16 %v10725
    %v10758 = vunpack.c.l.b16 %v10726
    %v10759 = vunpack.c.l.b16 %v10727
    %v10760 = vunpack.c.l.b16 %v10728
    %v10761 = vunpack.c.l.b16 %v10729
    %v10762 = vunpack.c.l.b16 %v10730
    %v10763 = vunpack.c.l.b16 %v10731
    %v10764 = vunpack.c.l.b16 %v10732
    %v10765 = vunpack.c.l.b16 %v10733
    %v10766 = vunpack.c.l.b16 %v10734
    %v10767 = vunpack.c.l.b16 %v10735
    %v10768 = vpack.c.b16 %v10753, %v10752
    %v10769 = vpack.c.b16 %v10755, %v10754
    %v10770 = vpack.c.b16 %v10757, %v10756
    %v10771 = vpack.c.b16 %v10759, %v10758
    %v10772 = vpack.c.b16 %v10761, %v10760
    %v10773 = vpack.c.b16 %v10763, %v10762
    %v10774 = vpack.c.b16 %v10765, %v10764
    %v10775 = vpack.c.b16 %v10767, %v10766
    %10784 = vmatprep.subr.bf16.mxu0 0
    %10785 = vmatpush1.bf16.msra.mxu0 %v10768
    %10786 = vmatprep.subr.bf16.mxu0 0
    %10787 = vmatpush1.bf16.msra.mxu0 %v10769
    %10788 = vmatprep.subr.bf16.mxu0 0
    %10789 = vmatpush1.bf16.msra.mxu0 %v10770
    %10790 = vmatprep.subr.bf16.mxu0 0
    %10791 = vmatpush1.bf16.msra.mxu0 %v10771
    %10792 = vmatprep.subr.bf16.mxu0 0
    %10793 = vmatpush1.bf16.msra.mxu0 %v10772
    %10794 = vmatprep.subr.bf16.mxu0 0
    %10795 = vmatpush1.bf16.msra.mxu0 %v10773
    %10796 = vmatprep.subr.bf16.mxu0 0
    %10797 = vmatpush1.bf16.msra.mxu0 %v10774
    %10798 = vmatprep.subr.bf16.mxu0 0
    %10799 = vmatpush1.bf16.msra.mxu0 %v10775
    %10800 = vmatprep.subr.bf16.mxu0 0
    %10801 = vmatpush1.bf16.msra.mxu0 0
    %10802 = vmatprep.subr.bf16.mxu0 0
    %10803 = vmatpush1.bf16.msra.mxu0 0
    %10804 = vmatprep.subr.bf16.mxu0 0
    %10805 = vmatpush1.bf16.msra.mxu0 0
    %10806 = vmatprep.subr.bf16.mxu0 0
    %10807 = vmatpush1.bf16.msra.mxu0 0
    %10808 = vmatprep.subr.bf16.mxu0 0
    %10809 = vmatpush1.bf16.msra.mxu0 0
    %10810 = vmatprep.subr.bf16.mxu0 0
    %10811 = vmatpush1.bf16.msra.mxu0 0
    %10812 = vmatprep.subr.bf16.mxu0 0
    %10813 = vmatpush1.bf16.msra.mxu0 0
    %10814 = vmatprep.subr.bf16.mxu0 0
    %10815 = vmatpush1.bf16.msra.mxu0 0
    %10816 = vmatprep.mubr.bf16.mxu0 0
    %10817 = vmatmul.mubr.bf16.gmra.mrb[0].mxu0 %v10718
    %v10818 = vpop.f32.mrb[0].mxu0
    %v10819 = vadd.f32 0.0, %v10818
    %v10820 = vpop.f32.mrb[0].mxu0
    %v10821 = vpop.f32.mrb[0].mxu0
    %v10822 = vpop.f32.mrb[0].mxu0
    %10823 = vdwg.mxu0
    %v10824 = vadd.f32 %v10667, %v10819
    %vm10825 = vmand %vm10508, %vm9870
    %vm10826 = vmand %vm10825, %vm9872
    %v10827 = vadd.s32 %v10512, %v9869
    %vm10828 = vcmp.eq.s32.totalorder %v7017, %v10827
    %vm10829 = vmand %vm10826, %vm10828
    %v10830 = vsel %vm10829, 1.0, 0.0
    %v10831 = vpack.c.bf16 %v10830, %v10830
    %v10833 = vsel %vm9562, %v10831, 0
    %10835 = vmatprep.subr.bf16.mxu0 0
    %10836 = vmatpush1.bf16.msra.mxu0 %v9537
    %10837 = vmatprep.subr.bf16.mxu0 0
    %10838 = vmatpush1.bf16.msra.mxu0 %v9538
    %10839 = vmatprep.subr.bf16.mxu0 0
    %10840 = vmatpush1.bf16.msra.mxu0 0
    %10841 = vmatprep.subr.bf16.mxu0 0
    %10842 = vmatpush1.bf16.msra.mxu0 0
    %10843 = vmatprep.subr.bf16.mxu0 0
    %10844 = vmatpush1.bf16.msra.mxu0 0
    %10845 = vmatprep.subr.bf16.mxu0 0
    %10846 = vmatpush1.bf16.msra.mxu0 0
    %10847 = vmatprep.subr.bf16.mxu0 0
    %10848 = vmatpush1.bf16.msra.mxu0 0
    %10849 = vmatprep.subr.bf16.mxu0 0
    %10850 = vmatpush1.bf16.msra.mxu0 0
    %10851 = vmatprep.subr.bf16.mxu0 0
    %10852 = vmatpush1.bf16.msra.mxu0 0
    %10853 = vmatprep.subr.bf16.mxu0 0
    %10854 = vmatpush1.bf16.msra.mxu0 0
    %10855 = vmatprep.subr.bf16.mxu0 0
    %10856 = vmatpush1.bf16.msra.mxu0 0
    %10857 = vmatprep.subr.bf16.mxu0 0
    %10858 = vmatpush1.bf16.msra.mxu0 0
    %10859 = vmatprep.subr.bf16.mxu0 0
    %10860 = vmatpush1.bf16.msra.mxu0 0
    %10861 = vmatprep.subr.bf16.mxu0 0
    %10862 = vmatpush1.bf16.msra.mxu0 0
    %10863 = vmatprep.subr.bf16.mxu0 0
    %10864 = vmatpush1.bf16.msra.mxu0 0
    %10865 = vmatprep.subr.bf16.mxu0 0
    %10866 = vmatpush1.bf16.msra.mxu0 0
    %10867 = vmatprep.mubr.bf16.mxu0 0
    %10868 = vmatmul.mubr.bf16.gmra.mrb[0].mxu0 %v10833
    %v10869 = vpop.f32.mrb[0].mxu0
    %v10870 = vadd.f32 0.0, %v10869
    %v10871 = vpop.f32.mrb[0].mxu0
    %v10872 = vpop.f32.mrb[0].mxu0
    %v10873 = vpop.f32.mrb[0].mxu0
    %10874 = vdwg.mxu0
    %v10875 = vpack.c.bf16 %v10870, %v10870
    %s10876 = scalar_lea.vmem %s5, 512
    %v10877 = vld [vmem:[%s10876] sm:$0xf]
    %v10878 = vld [vmem:[%s10876 + $0x4] sm:$0xf]
    %v10879 = vld [vmem:[%s10876 + $0x8] sm:$0xf]
    %v10880 = vld [vmem:[%s10876 + $0xc] sm:$0xf]
    %v10881 = vld [vmem:[%s10876 + $0x10] sm:$0xf]
    %v10882 = vld [vmem:[%s10876 + $0x14] sm:$0xf]
    %v10883 = vld [vmem:[%s10876 + $0x18] sm:$0xf]
    %v10884 = vld [vmem:[%s10876 + $0x1c] sm:$0xf]
    %v10885 = vld [vmem:[%s10876 + $0x20] sm:$0xf]
    %v10886 = vld [vmem:[%s10876 + $0x24] sm:$0xf]
    %v10887 = vld [vmem:[%s10876 + $0x28] sm:$0xf]
    %v10888 = vld [vmem:[%s10876 + $0x2c] sm:$0xf]
    %v10889 = vld [vmem:[%s10876 + $0x30] sm:$0xf]
    %v10890 = vld [vmem:[%s10876 + $0x34] sm:$0xf]
    %v10891 = vld [vmem:[%s10876 + $0x38] sm:$0xf]
    %v10892 = vld [vmem:[%s10876 + $0x3c] sm:$0xf]
    %v10909 = vunpack.c.l.b16 %v10877
    %v10910 = vunpack.c.l.b16 %v10878
    %v10911 = vunpack.c.l.b16 %v10879
    %v10912 = vunpack.c.l.b16 %v10880
    %v10913 = vunpack.c.l.b16 %v10881
    %v10914 = vunpack.c.l.b16 %v10882
    %v10915 = vunpack.c.l.b16 %v10883
    %v10916 = vunpack.c.l.b16 %v10884
    %v10917 = vunpack.c.l.b16 %v10885
    %v10918 = vunpack.c.l.b16 %v10886
    %v10919 = vunpack.c.l.b16 %v10887
    %v10920 = vunpack.c.l.b16 %v10888
    %v10921 = vunpack.c.l.b16 %v10889
    %v10922 = vunpack.c.l.b16 %v10890
    %v10923 = vunpack.c.l.b16 %v10891
    %v10924 = vunpack.c.l.b16 %v10892
    %v10925 = vpack.c.b16 %v10910, %v10909
    %v10926 = vpack.c.b16 %v10912, %v10911
    %v10927 = vpack.c.b16 %v10914, %v10913
    %v10928 = vpack.c.b16 %v10916, %v10915
    %v10929 = vpack.c.b16 %v10918, %v10917
    %v10930 = vpack.c.b16 %v10920, %v10919
    %v10931 = vpack.c.b16 %v10922, %v10921
    %v10932 = vpack.c.b16 %v10924, %v10923
    %10941 = vmatprep.subr.bf16.mxu0 0
    %10942 = vmatpush1.bf16.msra.mxu0 %v10925
    %10943 = vmatprep.subr.bf16.mxu0 0
    %10944 = vmatpush1.bf16.msra.mxu0 %v10926
    %10945 = vmatprep.subr.bf16.mxu0 0
    %10946 = vmatpush1.bf16.msra.mxu0 %v10927
    %10947 = vmatprep.subr.bf16.mxu0 0
    %10948 = vmatpush1.bf16.msra.mxu0 %v10928
    %10949 = vmatprep.subr.bf16.mxu0 0
    %10950 = vmatpush1.bf16.msra.mxu0 %v10929
    %10951 = vmatprep.subr.bf16.mxu0 0
    %10952 = vmatpush1.bf16.msra.mxu0 %v10930
    %10953 = vmatprep.subr.bf16.mxu0 0
    %10954 = vmatpush1.bf16.msra.mxu0 %v10931
    %10955 = vmatprep.subr.bf16.mxu0 0
    %10956 = vmatpush1.bf16.msra.mxu0 %v10932
    %10957 = vmatprep.subr.bf16.mxu0 0
    %10958 = vmatpush1.bf16.msra.mxu0 0
    %10959 = vmatprep.subr.bf16.mxu0 0
    %10960 = vmatpush1.bf16.msra.mxu0 0
    %10961 = vmatprep.subr.bf16.mxu0 0
    %10962 = vmatpush1.bf16.msra.mxu0 0
    %10963 = vmatprep.subr.bf16.mxu0 0
    %10964 = vmatpush1.bf16.msra.mxu0 0
    %10965 = vmatprep.subr.bf16.mxu0 0
    %10966 = vmatpush1.bf16.msra.mxu0 0
    %10967 = vmatprep.subr.bf16.mxu0 0
    %10968 = vmatpush1.bf16.msra.mxu0 0
    %10969 = vmatprep.subr.bf16.mxu0 0
    %10970 = vmatpush1.bf16.msra.mxu0 0
    %10971 = vmatprep.subr.bf16.mxu0 0
    %10972 = vmatpush1.bf16.msra.mxu0 0
    %10973 = vmatprep.mubr.bf16.mxu0 0
    %10974 = vmatmul.mubr.bf16.gmra.mrb[0].mxu0 %v10875
    %v10975 = vpop.f32.mrb[0].mxu0
    %v10976 = vadd.f32 0.0, %v10975
    %v10977 = vpop.f32.mrb[0].mxu0
    %v10978 = vpop.f32.mrb[0].mxu0
    %v10979 = vpop.f32.mrb[0].mxu0
    %10980 = vdwg.mxu0
    %v10981 = vadd.f32 %v10824, %v10976
    %v10982 = vld [vmem:[%s6] sm:$0x1]
    %v10984 = vlaneseq
    %v10985 = vshrl.u32 %v10984, 7
    %v10986 = vsub.s32 0, %v10985
    %v10987 = vrot.slane %v10982, %v10986
    %v10989 = vadd.f32 %v10981, %v10987
    %v10990 = vmax.f32 %v10989, 0.0
    %v10991 = vshra.s32 %v7017, 2
    %vm10992 = vcmp.eq.s32.totalorder %v10991, %v7012
    %v10993 = vsel %vm10992, 0.25, 0.0
    %vm10994 = vcmask 64512
    %v10996 = vsel %vm10994, %v10993, 0
    %10998 = vmatprep.subr.mxu0 0.0
    %10999 = vmatpush1.msra.mxu0 %v10990
    %11000 = vmatprep.subr.mxu0 0.0
    %11001 = vmatpush1.msra.mxu0 0.0
    %11002 = vmatprep.subr.mxu0 0.0
    %11003 = vmatpush1.msra.mxu0 0.0
    %11004 = vmatprep.subr.mxu0 0.0
    %11005 = vmatpush1.msra.mxu0 0.0
    %11006 = vmatprep.subr.mxu0 0.0
    %11007 = vmatpush1.msra.mxu0 0.0
    %11008 = vmatprep.subr.mxu0 0.0
    %11009 = vmatpush1.msra.mxu0 0.0
    %11010 = vmatprep.subr.mxu0 0.0
    %11011 = vmatpush1.msra.mxu0 0.0
    %11012 = vmatprep.subr.mxu0 0.0
    %11013 = vmatpush1.msra.mxu0 0.0
    %11014 = vmatprep.subr.mxu0 0.0
    %11015 = vmatpush1.msra.mxu0 0.0
    %11016 = vmatprep.subr.mxu0 0.0
    %11017 = vmatpush1.msra.mxu0 0.0
    %11018 = vmatprep.subr.mxu0 0.0
    %11019 = vmatpush1.msra.mxu0 0.0
    %11020 = vmatprep.subr.mxu0 0.0
    %11021 = vmatpush1.msra.mxu0 0.0
    %11022 = vmatprep.subr.mxu0 0.0
    %11023 = vmatpush1.msra.mxu0 0.0
    %11024 = vmatprep.subr.mxu0 0.0
    %11025 = vmatpush1.msra.mxu0 0.0
    %11026 = vmatprep.subr.mxu0 0.0
    %11027 = vmatpush1.msra.mxu0 0.0
    %11028 = vmatprep.subr.mxu0 0.0
    %11029 = vmatpush1.msra.mxu0 0.0
    %11030 = vmatprep.subr.mxu0 0.0
    %11031 = vmatpush1.msra.mxu0 0.0
    %11032 = vmatprep.subr.mxu0 0.0
    %11033 = vmatpush1.msra.mxu0 0.0
    %11034 = vmatprep.subr.mxu0 0.0
    %11035 = vmatpush1.msra.mxu0 0.0
    %11036 = vmatprep.subr.mxu0 0.0
    %11037 = vmatpush1.msra.mxu0 0.0
    %11038 = vmatprep.subr.mxu0 0.0
    %11039 = vmatpush1.msra.mxu0 0.0
    %11040 = vmatprep.subr.mxu0 0.0
    %11041 = vmatpush1.msra.mxu0 0.0
    %11042 = vmatprep.subr.mxu0 0.0
    %11043 = vmatpush1.msra.mxu0 0.0
    %11044 = vmatprep.subr.mxu0 0.0
    %11045 = vmatpush1.msra.mxu0 0.0
    %11046 = vmatprep.subr.mxu0 0.0
    %11047 = vmatpush1.msra.mxu0 0.0
    %11048 = vmatprep.subr.mxu0 0.0
    %11049 = vmatpush1.msra.mxu0 0.0
    %11050 = vmatprep.subr.mxu0 0.0
    %11051 = vmatpush1.msra.mxu0 0.0
    %11052 = vmatprep.subr.mxu0 0.0
    %11053 = vmatpush1.msra.mxu0 0.0
    %11054 = vmatprep.subr.mxu0 0.0
    %11055 = vmatpush1.msra.mxu0 0.0
    %11056 = vmatprep.subr.mxu0 0.0
    %11057 = vmatpush1.msra.mxu0 0.0
    %11058 = vmatprep.subr.mxu0 0.0
    %11059 = vmatpush1.msra.mxu0 0.0
    %11060 = vmatprep.subr.mxu0 0.0
    %11061 = vmatpush1.msra.mxu0 0.0
    %11062 = vmatprep.mubr.f32.mxu0 0.0
    %11063 = vmatmul.mubr.f32.gmra.mrb[0].mxu0 %v10996
    %v11064 = vpop.f32.mrb[0].mxu0
    %v11065 = vadd.f32 0.0, %v11064
    %v11066 = vpop.f32.mrb[0].mxu0
    %11067 = vdwg.mxu0
    %11068 = vst [vmem:[#allocation4] sm:$0x3] %v11065
    %v11069 = vld [vmem:[%s7] sm:$0xff]
    %v11070 = vld [vmem:[%s7 + $0x8] sm:$0xff]
    %v11071 = vld [vmem:[%s7 + $0x10] sm:$0xff]
    %v11072 = vld [vmem:[%s7 + $0x18] sm:$0xff]
    %v11073 = vld [vmem:[%s7 + $0x20] sm:$0xff]
    %v11074 = vld [vmem:[%s7 + $0x28] sm:$0xff]
    %v11075 = vld [vmem:[%s7 + $0x30] sm:$0xff]
    %v11076 = vld [vmem:[%s7 + $0x38] sm:$0xff]
    %v11077 = vld [vmem:[%s7 + $0x40] sm:$0xff]
    %v11078 = vld [vmem:[%s7 + $0x48] sm:$0xff]
    %v11079 = vld [vmem:[%s7 + $0x50] sm:$0xff]
    %v11080 = vld [vmem:[%s7 + $0x58] sm:$0xff]
    %v11081 = vld [vmem:[%s7 + $0x60] sm:$0xff]
    %v11082 = vld [vmem:[%s7 + $0x68] sm:$0xff]
    %v11083 = vld [vmem:[%s7 + $0x70] sm:$0xff]
    %v11084 = vld [vmem:[%s7 + $0x78] sm:$0xff]
    %v11085 = vld [vmem:[%s8] sm:$0x1]
    %v11087 = vlaneseq
    %v11088 = vshrl.u32 %v11087, 7
    %v11089 = vsub.s32 0, %v11088
    %v11090 = vrot.slane %v11085, %v11089
    %11092 = vmatprep.subr.mxu0 0.0
    %11093 = vmatpush1.msra.mxu0 %v11069
    %11094 = vmatprep.subr.mxu0 0.0
    %11095 = vmatpush1.msra.mxu0 %v11070
    %11096 = vmatprep.subr.mxu0 0.0
    %11097 = vmatpush1.msra.mxu0 %v11071
    %11098 = vmatprep.subr.mxu0 0.0
    %11099 = vmatpush1.msra.mxu0 %v11072
    %11100 = vmatprep.subr.mxu0 0.0
    %11101 = vmatpush1.msra.mxu0 %v11073
    %11102 = vmatprep.subr.mxu0 0.0
    %11103 = vmatpush1.msra.mxu0 %v11074
    %11104 = vmatprep.subr.mxu0 0.0
    %11105 = vmatpush1.msra.mxu0 %v11075
    %11106 = vmatprep.subr.mxu0 0.0
    %11107 = vmatpush1.msra.mxu0 %v11076
    %11108 = vmatprep.subr.mxu0 0.0
    %11109 = vmatpush1.msra.mxu0 %v11077
    %11110 = vmatprep.subr.mxu0 0.0
    %11111 = vmatpush1.msra.mxu0 %v11078
    %11112 = vmatprep.subr.mxu0 0.0
    %11113 = vmatpush1.msra.mxu0 %v11079
    %11114 = vmatprep.subr.mxu0 0.0
    %11115 = vmatpush1.msra.mxu0 %v11080
    %11116 = vmatprep.subr.mxu0 0.0
    %11117 = vmatpush1.msra.mxu0 %v11081
    %11118 = vmatprep.subr.mxu0 0.0
    %11119 = vmatpush1.msra.mxu0 %v11082
    %11120 = vmatprep.subr.mxu0 0.0
    %11121 = vmatpush1.msra.mxu0 %v11083
    %11122 = vmatprep.subr.mxu0 0.0
    %11123 = vmatpush1.msra.mxu0 %v11084
    %11124 = vmatprep.subr.mxu0 0.0
    %11125 = vmatpush1.msra.mxu0 0.0
    %11126 = vmatprep.subr.mxu0 0.0
    %11127 = vmatpush1.msra.mxu0 0.0
    %11128 = vmatprep.subr.mxu0 0.0
    %11129 = vmatpush1.msra.mxu0 0.0
    %11130 = vmatprep.subr.mxu0 0.0
    %11131 = vmatpush1.msra.mxu0 0.0
    %11132 = vmatprep.subr.mxu0 0.0
    %11133 = vmatpush1.msra.mxu0 0.0
    %11134 = vmatprep.subr.mxu0 0.0
    %11135 = vmatpush1.msra.mxu0 0.0
    %11136 = vmatprep.subr.mxu0 0.0
    %11137 = vmatpush1.msra.mxu0 0.0
    %11138 = vmatprep.subr.mxu0 0.0
    %11139 = vmatpush1.msra.mxu0 0.0
    %11140 = vmatprep.subr.mxu0 0.0
    %11141 = vmatpush1.msra.mxu0 0.0
    %11142 = vmatprep.subr.mxu0 0.0
    %11143 = vmatpush1.msra.mxu0 0.0
    %11144 = vmatprep.subr.mxu0 0.0
    %11145 = vmatpush1.msra.mxu0 0.0
    %11146 = vmatprep.subr.mxu0 0.0
    %11147 = vmatpush1.msra.mxu0 0.0
    %11148 = vmatprep.subr.mxu0 0.0
    %11149 = vmatpush1.msra.mxu0 0.0
    %11150 = vmatprep.subr.mxu0 0.0
    %11151 = vmatpush1.msra.mxu0 0.0
    %11152 = vmatprep.subr.mxu0 0.0
    %11153 = vmatpush1.msra.mxu0 0.0
    %11154 = vmatprep.subr.mxu0 0.0
    %11155 = vmatpush1.msra.mxu0 0.0
    %11156 = vmatprep.mubr.f32.mxu0 0.0
    %11157 = vmatmul.mubr.f32.gmra.mrb[0].mxu0 %v11065
    %v11158 = vpop.f32.mrb[0].mxu0
    %v11159 = vadd.f32 %v11090, %v11158
    %v11160 = vpop.f32.mrb[0].mxu0
    %11161 = vdwg.mxu0
    %vm11162 = vcmask 9216
    %11163 = vst.msk [vmem:[#allocation2] sm:$0x3] %vm11162, %v11159
    // Predicated region
    $region38: #{netD_forward.1} parent=1 // pred_check
      _
    $region39: #{netD_forward.1} parent=1 // pred_check_branch
      %11165 = sbr.rel (0) target = $region41
    $region40: #{netD_forward.1} parent=1 // pred_region
      %s11167 = ssub.s32 32, 32
      %11168 = vsyncadd [#allocation3], %s11167
      %s11170 = sshll.u32 [#allocation2], 4
      %s11171 = int_to_ptr.vmem [resolvable:$true] %s11170
      %11173 = dma.vmem_to_hbm [thread:$0]  %s11171, 32, %s9, [#allocation3]
    $region41: #{netD_forward.1} parent=1 // pred_fallthru
      _
    // Predicated region
    $region42: #{netD_forward.1} parent=1 // pred_check
      _
    $region43: #{netD_forward.1} parent=1 // pred_check_branch
      %11175 = sbr.rel (0) target = $region45
    $region44: #{netD_forward.1} parent=1 // pred_region
      %s11177 = ssub.s32 32, 32
      %11178 = vsyncadd [#allocation5], %s11177
      %s11180 = sshll.u32 [#allocation4], 4
      %s11181 = int_to_ptr.vmem [resolvable:$true] %s11180
      %11183 = dma.vmem_to_hbm [thread:$0]  %s11181, 32, %s10, [#allocation5]
    $region45: #{netD_forward.1} parent=1 // pred_fallthru
      _
    // Predicated region
    $region46: #{netD_forward.1} parent=1 // pred_check
      _
    $region47: #{netD_forward.1} parent=1 // pred_check_branch
      %11185 = sbr.rel (0) target = $region49
    $region48: #{netD_forward.1} parent=1 // pred_region
      %11186 = dma.done [#allocation3], 32
    $region49: #{netD_forward.1} parent=1 // pred_fallthru
      _
    // Predicated region
    $region50: #{netD_forward.1} parent=1 // pred_check
      _
    $region51: #{netD_forward.1} parent=1 // pred_check_branch
      %11188 = sbr.rel (0) target = $region53
    $region52: #{netD_forward.1} parent=1 // pred_region
      %11189 = dma.done [#allocation5], 32
    $region53: #{netD_forward.1} parent=1 // pred_fallthru
      _
    %11190 = vsyncpa [#allocation3], 1
    %11191 = vsyncpa [#allocation5], 1

</llo_original>
